<compile_context>
chip_gen: v7x
topology: tpu7x:2x2x1
jax: 0.10.0
libtpu: 0.0.40
codegen_flags: <defaults>
</compile_context>

<pallas_src>
import math
import functools

import jax
import jax.numpy as jnp
from jax.experimental import pallas as pl
from jax.experimental.pallas import tpu as pltpu


# ----------------------------------------------------------------------------
# small helpers used inside the kernel (traced jnp code)
# ----------------------------------------------------------------------------
def _layer_norm(v, g, b, eps=1e-5):
    mu = jnp.mean(v, axis=-1, keepdims=True)
    var = jnp.mean(jnp.square(v - mu), axis=-1, keepdims=True)
    return (v - mu) * jax.lax.rsqrt(var + eps) * g + b


def _softmax_last(s):
    s = s - jnp.max(s, axis=-1, keepdims=True)
    p = jnp.exp(s)
    return p * pl.reciprocal(jnp.sum(p, axis=-1, keepdims=True), approx=True)


# packed-operand layouts (shared by wrapper packing and kernel slicing)
def _col_pairs(dm, d_ff):
    return [("wqkv", 3 * dm), ("wo_t", dm), ("w11", d_ff), ("wsr", 3 * dm),
            ("wo_s", dm), ("wkv_r", 2 * dm), ("wo_r", dm), ("w21", d_ff)]


def _vec_pairs(dm, d_ff):
    return [("bqkv", 3 * dm), ("bo_t", dm), ("g1", dm), ("be1", dm),
            ("b11", d_ff), ("b12", dm), ("g2", dm), ("be2", dm),
            ("bsr", 3 * dm), ("bo_s", dm), ("bkv_r", 2 * dm), ("bo_r", dm),
            ("g3", dm), ("be3", dm), ("b21", d_ff), ("b22", dm),
            ("g4", dm), ("be4", dm)]


def _offsets(pairs):
    off, o = {}, 0
    for name, w in pairs:
        off[name] = (o, w)
        o += w
    return off, o


# ----------------------------------------------------------------------------
# fused TwoStageAttention kernel: one grid step == b_tile outer batch elements
# ----------------------------------------------------------------------------
def _tsa_kernel(x_ref, qrouter_ref, wcol_ref, wdff_ref, vec_ref, o_ref,
                piv_ref, *, b_tile, n_data, seg_num, n_heads, factor, d_ff):
    f32, bf16 = jnp.float32, jnp.bfloat16
    dm = x_ref.shape[-1]
    H, dk = n_heads, dm // n_heads
    D, S, F = n_data, seg_num, factor
    B1 = b_tile * D                      # stage-1 attention batch (b, D)
    B2 = b_tile * S                      # stage-2 attention batch (b, seg)
    M = B1 * S                           # rows of every row-wise matmul
    scale = 1.0 / math.sqrt(dk)

    col_off, _ = _offsets(_col_pairs(dm, d_ff))
    vec_off, _ = _offsets(_vec_pairs(dm, d_ff))

    def W(name):                         # (dm, w) bf16 weight slab
        a, w = col_off[name]
        return wcol_ref[:, a:a + w]

    def V(name):                         # (1, w) f32 bias / LayerNorm param
        a, w = vec_off[name]
        return vec_ref[:, a:a + w]

    def heads_to_batch(t, base):
        # lane-slice each head and fold it onto the leading (batch) axis
        return jnp.concatenate(
            [t[:, :, base + h * dk: base + (h + 1) * dk] for h in range(H)],
            axis=0)

    def batch_to_lanes(t, nb):
        # inverse on the context result: (H*nb, L, dk) -> (nb, L, dm)
        return jnp.concatenate([t[h * nb:(h + 1) * nb] for h in range(H)],
                               axis=-1)

    def attention(q, k, v):
        # q: (HB, Lq, dk), k/v: (HB, Lk, dk): one batched score einsum + one
        # batched context einsum (heads folded into the batch dimension)
        s = jnp.einsum('bqe,bke->bqk', q.astype(bf16), k.astype(bf16),
                       preferred_element_type=f32) * scale
        a = _softmax_last(s)
        return jnp.einsum('bqk,bke->bqe', a.astype(bf16), v.astype(bf16),
                          preferred_element_type=f32)

    # -------------------- stage 1: time attention over seg, batched over (b,D)
    x2 = x_ref[...].reshape(M, dm)                       # rows ordered (b, D, S)
    qkv = jnp.dot(x2.astype(bf16), W('wqkv'),
                  preferred_element_type=f32) + V('bqkv')        # (M, 3*dm)
    qkv3 = qkv.reshape(B1, S, 3 * dm)
    ctx1 = attention(heads_to_batch(qkv3, 0),
                     heads_to_batch(qkv3, dm),
                     heads_to_batch(qkv3, 2 * dm))               # (H*B1, S, dk)
    ctx1 = batch_to_lanes(ctx1, B1).reshape(M, dm)
    attn1 = jnp.dot(ctx1.astype(bf16), W('wo_t'),
                    preferred_element_type=f32) + V('bo_t')

    # block 1: residual + LN1 + MLP1 + (out + dropout(out)) + LN2
    y = _layer_norm(x2 + attn1, V('g1'), V('be1'))
    z = jnp.dot(y.astype(bf16), W('w11'), preferred_element_type=f32) + V('b11')
    # TODO(synk): PyTorch nn.GELU() default is erf-exact; tanh approximation is
    # used (no guaranteed erf lowering in Mosaic); the reference matches it.
    z = jax.nn.gelu(z, approximate=True)
    z = jnp.dot(z.astype(bf16), wdff_ref[:, 0:dm],
                preferred_element_type=f32) + V('b12')
    z = z + z            # module does `out + dropout(out)`; dropout = identity
    time_out = _layer_norm(z, V('g2'), V('be2'))         # (M, dm), (b,D,S) rows

    # stage-2 row-wise projections (dim_sender K,V | dim_receiver Q) on the same
    # D-major rows, then pivot (b,D,S) -> (b,S,D) rows once through a lane-dense
    # (4*dm lanes) VMEM scratch with strided sublane reads.
    # TODO(synk): a value-level transpose would avoid the scratch, but Mosaic
    # does not reliably lower transposes that move a non-minormost axis.
    p2 = jnp.dot(time_out.astype(bf16), W('wsr'),
                 preferred_element_type=f32) + V('bsr')          # (M, 3*dm)
    piv_ref[...] = jnp.concatenate([time_out, p2], axis=-1)      # one bulk store
    xs = jnp.stack(
        [piv_ref[pl.ds(bb * D * S + s, D, stride=S), :]
         for bb in range(b_tile) for s in range(S)], axis=0)     # (B2, D, 4*dm)

    # -------------------- stage 2: router attention over D, batched over (b,S)
    qrt = qrouter_ref[...]                                       # (S, F, dm)
    qrb = jnp.broadcast_to(qrt[None], (b_tile, S, F, dm)).reshape(B2, F, dm)

    # dim_sender: (pre-projected, batch-independent) router queries attend over D
    ctx2 = attention(heads_to_batch(qrb, 0),
                     heads_to_batch(xs, dm),
                     heads_to_batch(xs, 2 * dm))                 # (H*B2, F, dk)
    ctx2 = batch_to_lanes(ctx2, B2).reshape(B2 * F, dm)
    dim_agg = jnp.dot(ctx2.astype(bf16), W('wo_s'),
                      preferred_element_type=f32) + V('bo_s')    # (B2*F, dm)

    # dim_receiver: keys/values from dim_agg, queries from dim_send
    kv_r = (jnp.dot(dim_agg.astype(bf16), W('wkv_r'),
                    preferred_element_type=f32) + V('bkv_r')
            ).reshape(B2, F, 2 * dm)
    ctx3 = attention(heads_to_batch(xs, 3 * dm),
                     heads_to_batch(kv_r, 0),
                     heads_to_batch(kv_r, dm))                   # (H*B2, D, dk)
    ctx3 = batch_to_lanes(ctx3, B2).reshape(M, dm)
    dim_recv = jnp.dot(ctx3.astype(bf16), W('wo_r'),
                       preferred_element_type=f32) + V('bo_r')   # (M, dm)

    # block 2: residual + LN3 + MLP2 + (out + dropout(out)) + LN4
    send2 = xs[:, :, 0:dm].reshape(M, dm)                # dim_send, (b,S,D) rows
    ys = _layer_norm(send2 + dim_recv, V('g3'), V('be3'))
    z = jnp.dot(ys.astype(bf16), W('w21'), preferred_element_type=f32) + V('b21')
    z = jax.nn.gelu(z, approximate=True)
    z = jnp.dot(z.astype(bf16), wdff_ref[:, dm:2 * dm],
                preferred_element_type=f32) + V('b22')
    z = z + z
    dim_enc = _layer_norm(z, V('g4'), V('be4'))          # (M, dm), (b,S,D) rows

    # single bulk store in (b, S, D) row order; the tiny seg<->D swap of the
    # final result is done by the wrapper on a few-KiB tensor.
    o_ref[...] = dim_enc.reshape(b_tile, S * D, dm)


# ----------------------------------------------------------------------------
# Wrapper: parameter packing + single pallas_call
# ----------------------------------------------------------------------------
def _full_spec(a):
    zeros = (0,) * a.ndim
    return pl.BlockSpec(a.shape, lambda i: zeros)


def _pick_b_tile(b, rows_per_b, max_rows=2048):
    # keep >= 2 grid steps (v7x has 2 TensorCores) when possible, while folding
    # as many batch elements per step as keep the working set VMEM-safe on v7x.
    bt = b if b < 2 else max(1, b // 2)
    bt = max(1, min(bt, max_rows // max(rows_per_b, 1)))
    while b % bt:
        bt -= 1
    return bt


def two_stage_attention(x, params, n_heads, b_tile=None):
    b, n_data, seg_num, dm = x.shape
    f32, bf16 = jnp.float32, jnp.bfloat16

    wq_t, bq_t, wk_t, bk_t, wv_t, bv_t, wo_t, bo_t = params["time_attn"]
    wq_s, bq_s, wk_s, bk_s, wv_s, bv_s, wo_s, bo_s = params["dim_sender"]
    wq_r, bq_r, wk_r, bk_r, wv_r, bv_r, wo_r, bo_r = params["dim_receiver"]
    g1, be1, w11, b11, w12, b12, g2, be2 = params["block1"]
    g3, be3, w21, b21, w22, b22, g4, be4 = params["block2"]
    router = params["router"]                       # (seg, factor, dm)
    factor = router.shape[1]
    d_ff = w11.shape[1]
    rows_per_b = n_data * seg_num
    if b_tile is None:
        b_tile = _pick_b_tile(b, rows_per_b)
    assert b % b_tile == 0

    # ---- pack weights into a few large lane-dense operands (fewer DMAs) -----
    cols = {"wqkv": jnp.concatenate([wq_t, wk_t, wv_t], axis=1),
            "wo_t": wo_t, "w11": w11,
            "wsr": jnp.concatenate([wk_s, wv_s, wq_r], axis=1),
            "wo_s": wo_s,
            "wkv_r": jnp.concatenate([wk_r, wv_r], axis=1),
            "wo_r": wo_r, "w21": w21}
    vecs = {"bqkv": jnp.concatenate([bq_t, bk_t, bv_t], axis=1),
            "bo_t": bo_t, "g1": g1, "be1": be1, "b11": b11, "b12": b12,
            "g2": g2, "be2": be2,
            "bsr": jnp.concatenate([bk_s, bv_s, bq_r], axis=1),
            "bo_s": bo_s,
            "bkv_r": jnp.concatenate([bk_r, bv_r], axis=1),
            "bo_r": bo_r, "g3": g3, "be3": be3, "b21": b21, "b22": b22,
            "g4": g4, "be4": be4}
    wcol = jnp.concatenate([cols[n] for n, _ in _col_pairs(dm, d_ff)],
                           axis=1).astype(bf16)          # (dm, 11*dm + 2*d_ff)
    wdff = jnp.concatenate([w12, w22], axis=1).astype(bf16)   # (d_ff, 2*dm)
    vec = jnp.concatenate([vecs[n] for n, _ in _vec_pairs(dm, d_ff)],
                          axis=1).astype(f32)            # (1, 20*dm + 2*d_ff)

    # dim_sender query projection only sees the batch-independent router
    # parameter -> evaluated once outside the kernel (no per-batch tiling).
    q_router = (router.reshape(seg_num * factor, dm) @ wq_s + bq_s
                ).reshape(seg_num, factor, dm).astype(f32)

    x_flat = x.reshape(b, rows_per_b, dm).astype(f32)    # free, contiguous

    kern = functools.partial(_tsa_kernel, b_tile=b_tile, n_data=n_data,
                             seg_num=seg_num, n_heads=n_heads, factor=factor,
                             d_ff=d_ff)
    out = pl.pallas_call(
        kern,
        out_shape=jax.ShapeDtypeStruct((b, rows_per_b, dm), f32),
        grid=(b // b_tile,),
        in_specs=[pl.BlockSpec((b_tile, rows_per_b, dm), lambda i: (i, 0, 0)),
                  _full_spec(q_router), _full_spec(wcol), _full_spec(wdff),
                  _full_spec(vec)],
        out_specs=pl.BlockSpec((b_tile, rows_per_b, dm), lambda i: (i, 0, 0)),
        scratch_shapes=[pltpu.VMEM((b_tile * rows_per_b, 4 * dm), f32)],
        compiler_params=pltpu.CompilerParams(dimension_semantics=("parallel",)),
    )(x_flat, q_router, wcol, wdff, vec)

    # kernel emits (b, seg, D, dm) row order; the final seg<->D swap is a
    # few-KiB XLA transpose that fuses with downstream consumers.
    return out.reshape(b, seg_num, n_data, dm).transpose(0, 2, 1, 3)


# ----------------------------------------------------------------------------
# Parameter init (deterministic, synthetic)
# ----------------------------------------------------------------------------
def init_params(key, seg_num, factor, d_model, n_heads, d_ff):
    keys = iter(jax.random.split(key, 64))

    def lin(fan_in, fan_out):
        w = jax.random.normal(next(keys), (fan_in, fan_out), jnp.float32) * 0.05
        b = jax.random.normal(next(keys), (1, fan_out), jnp.float32) * 0.05
        return w, b

    def attn_params():
        wq, bq = lin(d_model, d_model)
        wk, bk = lin(d_model, d_model)
        wv, bv = lin(d_model, d_model)
        wo, bo = lin(d_model, d_model)
        return (wq, bq, wk, bk, wv, bv, wo, bo)

    def block_params():
        g1 = jnp.ones((1, d_model), jnp.float32)
        be1 = jnp.zeros((1, d_model), jnp.float32)
        w1, b1 = lin(d_model, d_ff)
        w2, b2 = lin(d_ff, d_model)
        g2 = jnp.ones((1, d_model), jnp.float32)
        be2 = jnp.zeros((1, d_model), jnp.float32)
        return (g1, be1, w1, b1, w2, b2, g2, be2)

    return {
        "time_attn": attn_params(),
        "dim_sender": attn_params(),
        "dim_receiver": attn_params(),
        "block1": block_params(),
        "block2": block_params(),
        "router": jax.random.normal(next(keys), (seg_num, factor, d_model),
                                    jnp.float32),
    }


# ----------------------------------------------------------------------------
# Pure-JAX reference (same math) for a sanity check
# ----------------------------------------------------------------------------
def _ref_attention(q_in, kv_in, p, n_heads):
    wq, bq, wk, bk, wv, bv, wo, bo = p
    B, Lq, dm = q_in.shape
    Lk = kv_in.shape[1]
    dk = dm // n_heads
    Q = (q_in @ wq + bq).reshape(B, Lq, n_heads, dk)
    K = (kv_in @ wk + bk).reshape(B, Lk, n_heads, dk)
    V = (kv_in @ wv + bv).reshape(B, Lk, n_heads, dk)
    s = jnp.einsum("blhe,bshe->bhls", Q, K) / math.sqrt(dk)
    a = jax.nn.softmax(s, axis=-1)
    ctx = jnp.einsum("bhls,bshd->blhd", a, V).reshape(B, Lq, dm)
    return ctx @ wo + bo


def _ref_post_block(x, attn_out, p):
    g1, be1, w1, b1, w2, b2, g2, be2 = p

    def ln(v, g, be):
        mu = jnp.mean(v, axis=-1, keepdims=True)
        var = jnp.mean(jnp.square(v - mu), axis=-1, keepdims=True)
        return (v - mu) / jnp.sqrt(var + 1e-5) * g + be

    y = ln(x + attn_out, g1, be1)
    z = jax.nn.gelu(y @ w1 + b1, approximate=True) @ w2 + b2
    return ln(z + z, g2, be2)


def _ref_two_stage(x, params, n_heads):
    b, d, seg, dm = x.shape
    time_in = x.reshape(b * d, seg, dm)
    time_enc = _ref_attention(time_in, time_in, params["time_attn"], n_heads)
    time_out = _ref_post_block(time_in, time_enc, params["block1"])
    dim_send = time_out.reshape(b, d, seg, dm).transpose(0, 2, 1, 3).reshape(b * seg, d, dm)
    batch_router = jnp.tile(params["router"], (b, 1, 1))
    dim_agg = _ref_attention(batch_router, dim_send, params["dim_sender"], n_heads)
    dim_receive = _ref_attention(dim_send, dim_agg, params["dim_receiver"], n_heads)
    dim_enc = _ref_post_block(dim_send, dim_receive, params["block2"])
    return dim_enc.reshape(b, seg, d, dm).transpose(0, 2, 1, 3)


if __name__ == "__main__":
    batch, data_dim, seg_num, d_model = 2, 4, 8, 32
    n_heads, factor = 4, 2
    d_ff = 4 * d_model

    key = jax.random.PRNGKey(0)
    kx, kp = jax.random.split(key)
    x = jax.random.normal(kx, (batch, data_dim, seg_num, d_model), jnp.float32)
    params = init_params(kp, seg_num, factor, d_model, n_heads, d_ff)

    fwd = jax.jit(functools.partial(two_stage_attention, n_heads=n_heads))
    out = jax.block_until_ready(fwd(x, params))

    assert out.shape == (batch, data_dim, seg_num, d_model)
    assert bool(jnp.all(jnp.isfinite(out)))
    ref = _ref_two_stage(x, params, n_heads)
    err = float(jnp.max(jnp.abs(out - ref)))
    # bf16 MXU operands inside the kernel vs. the pure-f32 reference -> 3e-2.
    assert bool(jnp.allclose(out, ref, rtol=3e-2, atol=3e-2)), (
        "max abs diff = %f" % err)
    print("KERNEL_OK")
</pallas_src>

<mosaic_0001>
module attributes {stable_mosaic.version = 11 : i64} {
  func.func @_tsa_kernel(%arg0: i32, %arg1: memref<1x32x32xf32, #tpu.memory_space<vmem>>, %arg2: memref<8x2x32xf32, #tpu.memory_space<vmem>>, %arg3: memref<32x608xbf16, #tpu.memory_space<vmem>>, %arg4: memref<128x64xbf16, #tpu.memory_space<vmem>>, %arg5: memref<1x928xf32, #tpu.memory_space<vmem>>, %arg6: memref<1x32x32xf32, #tpu.memory_space<vmem>>, %arg7: memref<32x128xf32, #tpu.memory_space<vmem>>) attributes {dimension_semantics = [#tpu.dimension_semantics<parallel>], iteration_bounds = array<i64: 2>, scalar_prefetch = 0 : i64, scratch_operands = 1 : i64, tpu.core_type = #tpu.core_type<tc>, window_params = [{transform_indices = @transform_0, window_bounds = array<i64: 1, 32, 32>}, {pipeline_mode = #tpu.pipeline_mode<synchronous>, transform_indices = @transform_1, window_bounds = array<i64: 8, 2, 32>}, {pipeline_mode = #tpu.pipeline_mode<synchronous>, transform_indices = @transform_2, window_bounds = array<i64: 32, 608>}, {pipeline_mode = #tpu.pipeline_mode<synchronous>, transform_indices = @transform_3, window_bounds = array<i64: 128, 64>}, {pipeline_mode = #tpu.pipeline_mode<synchronous>, transform_indices = @transform_4, window_bounds = array<i64: 1, 928>}, {transform_indices = @transform_5, window_bounds = array<i64: 1, 32, 32>}]} {
    %c0 = arith.constant 0 : index
    %c0_0 = arith.constant 0 : index
    %c0_1 = arith.constant 0 : index
    %0 = vector.load %arg1[%c0, %c0_0, %c0_1] : memref<1x32x32xf32, #tpu.memory_space<vmem>>, vector<1x32x32xf32>
    %1 = vector.shape_cast %0 : vector<1x32x32xf32> to vector<32x32xf32>
    %2 = arith.truncf %1 : vector<32x32xf32> to vector<32x32xbf16>
    %c0_2 = arith.constant 0 : index
    %c0_3 = arith.constant 0 : index
    %3 = vector.load %arg3[%c0_2, %c0_3] : memref<32x608xbf16, #tpu.memory_space<vmem>>, vector<32x96xbf16>
    %cst = arith.constant dense<0.000000e+00> : vector<32x96xf32>
    %4 = tpu.matmul %2, %3, %cst {dimension_numbers = #tpu.dot_dimension_numbers<[1], [0], [0], [1], [0, 0, 1, 1], [], []>} : vector<32x32xbf16>, vector<32x96xbf16>, vector<32x96xf32> -> vector<32x96xf32>
    %c0_4 = arith.constant 0 : index
    %c0_5 = arith.constant 0 : index
    %5 = vector.load %arg5[%c0_4, %c0_5] : memref<1x928xf32, #tpu.memory_space<vmem>>, vector<1x96xf32>
    %6 = vector.broadcast %5 : vector<1x96xf32> to vector<32x96xf32>
    %7 = arith.addf %4, %6 : vector<32x96xf32>
    %8 = vector.shape_cast %7 : vector<32x96xf32> to vector<4x8x96xf32>
    %9 = vector.extract_strided_slice %8 {offsets = [0, 0, 0], sizes = [4, 8, 8], strides = [1, 1, 1]} : vector<4x8x96xf32> to vector<4x8x8xf32>
    %10 = vector.extract_strided_slice %8 {offsets = [0, 0, 8], sizes = [4, 8, 8], strides = [1, 1, 1]} : vector<4x8x96xf32> to vector<4x8x8xf32>
    %11 = vector.extract_strided_slice %8 {offsets = [0, 0, 16], sizes = [4, 8, 8], strides = [1, 1, 1]} : vector<4x8x96xf32> to vector<4x8x8xf32>
    %12 = vector.extract_strided_slice %8 {offsets = [0, 0, 24], sizes = [4, 8, 8], strides = [1, 1, 1]} : vector<4x8x96xf32> to vector<4x8x8xf32>
    %13 = tpu.concatenate %9, %10, %11, %12 in 0 : vector<4x8x8xf32>, vector<4x8x8xf32>, vector<4x8x8xf32>, vector<4x8x8xf32> -> vector<16x8x8xf32>
    %14 = vector.extract_strided_slice %8 {offsets = [0, 0, 32], sizes = [4, 8, 8], strides = [1, 1, 1]} : vector<4x8x96xf32> to vector<4x8x8xf32>
    %15 = vector.extract_strided_slice %8 {offsets = [0, 0, 40], sizes = [4, 8, 8], strides = [1, 1, 1]} : vector<4x8x96xf32> to vector<4x8x8xf32>
    %16 = vector.extract_strided_slice %8 {offsets = [0, 0, 48], sizes = [4, 8, 8], strides = [1, 1, 1]} : vector<4x8x96xf32> to vector<4x8x8xf32>
    %17 = vector.extract_strided_slice %8 {offsets = [0, 0, 56], sizes = [4, 8, 8], strides = [1, 1, 1]} : vector<4x8x96xf32> to vector<4x8x8xf32>
    %18 = tpu.concatenate %14, %15, %16, %17 in 0 : vector<4x8x8xf32>, vector<4x8x8xf32>, vector<4x8x8xf32>, vector<4x8x8xf32> -> vector<16x8x8xf32>
    %19 = vector.extract_strided_slice %8 {offsets = [0, 0, 64], sizes = [4, 8, 8], strides = [1, 1, 1]} : vector<4x8x96xf32> to vector<4x8x8xf32>
    %20 = vector.extract_strided_slice %8 {offsets = [0, 0, 72], sizes = [4, 8, 8], strides = [1, 1, 1]} : vector<4x8x96xf32> to vector<4x8x8xf32>
    %21 = vector.extract_strided_slice %8 {offsets = [0, 0, 80], sizes = [4, 8, 8], strides = [1, 1, 1]} : vector<4x8x96xf32> to vector<4x8x8xf32>
    %22 = vector.extract_strided_slice %8 {offsets = [0, 0, 88], sizes = [4, 8, 8], strides = [1, 1, 1]} : vector<4x8x96xf32> to vector<4x8x8xf32>
    %23 = tpu.concatenate %19, %20, %21, %22 in 0 : vector<4x8x8xf32>, vector<4x8x8xf32>, vector<4x8x8xf32>, vector<4x8x8xf32> -> vector<16x8x8xf32>
    %24 = arith.truncf %13 : vector<16x8x8xf32> to vector<16x8x8xbf16>
    %25 = arith.truncf %18 : vector<16x8x8xf32> to vector<16x8x8xbf16>
    "tpu.trace_start"() <{level = 10 : i32, message = "bqe,bke->bqk"}> : () -> ()
    %cst_6 = arith.constant dense<0.000000e+00> : vector<16x8x8xf32>
    %26 = tpu.matmul %24, %25, %cst_6 {dimension_numbers = #tpu.dot_dimension_numbers<[2], [2], [1], [1], [0, 0, 0, 1, 1, 1], [0], [0]>} : vector<16x8x8xbf16>, vector<16x8x8xbf16>, vector<16x8x8xf32> -> vector<16x8x8xf32>
    "tpu.trace_stop"() : () -> ()
    %cst_7 = arith.constant 0.353553385 : f32
    %27 = vector.broadcast %cst_7 : f32 to vector<16x8x8xf32>
    %28 = arith.mulf %26, %27 : vector<16x8x8xf32>
    %cst_8 = arith.constant dense<0xFF800000> : vector<16x8xf32>
    %29 = vector.multi_reduction <maximumf>, %28, %cst_8 [2] : vector<16x8x8xf32> to vector<16x8xf32>
    %30 = vector.shape_cast %29 : vector<16x8xf32> to vector<16x8x1xf32>
    %31 = vector.broadcast %30 : vector<16x8x1xf32> to vector<16x8x8xf32>
    %32 = arith.subf %28, %31 : vector<16x8x8xf32>
    %33 = math.exp %32 : vector<16x8x8xf32>
    %cst_9 = arith.constant dense<0.000000e+00> : vector<16x8xf32>
    %34 = vector.multi_reduction <add>, %33, %cst_9 [2] : vector<16x8x8xf32> to vector<16x8xf32>
    %35 = vector.shape_cast %34 : vector<16x8xf32> to vector<16x8x1xf32>
    %36 = tpu.reciprocal %35 {approx = true} : vector<16x8x1xf32> -> vector<16x8x1xf32>
    %37 = vector.broadcast %36 : vector<16x8x1xf32> to vector<16x8x8xf32>
    %38 = arith.mulf %33, %37 : vector<16x8x8xf32>
    %39 = arith.truncf %38 : vector<16x8x8xf32> to vector<16x8x8xbf16>
    %40 = arith.truncf %23 : vector<16x8x8xf32> to vector<16x8x8xbf16>
    "tpu.trace_start"() <{level = 10 : i32, message = "bqk,bke->bqe"}> : () -> ()
    %cst_10 = arith.constant dense<0.000000e+00> : vector<16x8x8xf32>
    %41 = tpu.matmul %39, %40, %cst_10 {dimension_numbers = #tpu.dot_dimension_numbers<[2], [1], [1], [2], [0, 0, 0, 1, 1, 2], [0], [0]>} : vector<16x8x8xbf16>, vector<16x8x8xbf16>, vector<16x8x8xf32> -> vector<16x8x8xf32>
    "tpu.trace_stop"() : () -> ()
    %42 = vector.extract_strided_slice %41 {offsets = [0, 0, 0], sizes = [4, 8, 8], strides = [1, 1, 1]} : vector<16x8x8xf32> to vector<4x8x8xf32>
    %43 = vector.extract_strided_slice %41 {offsets = [4, 0, 0], sizes = [4, 8, 8], strides = [1, 1, 1]} : vector<16x8x8xf32> to vector<4x8x8xf32>
    %44 = vector.extract_strided_slice %41 {offsets = [8, 0, 0], sizes = [4, 8, 8], strides = [1, 1, 1]} : vector<16x8x8xf32> to vector<4x8x8xf32>
    %45 = vector.extract_strided_slice %41 {offsets = [12, 0, 0], sizes = [4, 8, 8], strides = [1, 1, 1]} : vector<16x8x8xf32> to vector<4x8x8xf32>
    %46 = tpu.concatenate %42, %43, %44, %45 in 2 : vector<4x8x8xf32>, vector<4x8x8xf32>, vector<4x8x8xf32>, vector<4x8x8xf32> -> vector<4x8x32xf32>
    %47 = vector.shape_cast %46 : vector<4x8x32xf32> to vector<32x32xf32>
    %48 = arith.truncf %47 : vector<32x32xf32> to vector<32x32xbf16>
    %c0_11 = arith.constant 0 : index
    %c96 = arith.constant 96 : index
    %49 = vector.load %arg3[%c0_11, %c96] : memref<32x608xbf16, #tpu.memory_space<vmem>>, vector<32x32xbf16>
    %cst_12 = arith.constant dense<0.000000e+00> : vector<32x32xf32>
    %50 = tpu.matmul %48, %49, %cst_12 {dimension_numbers = #tpu.dot_dimension_numbers<[1], [0], [0], [1], [0, 0, 1, 1], [], []>} : vector<32x32xbf16>, vector<32x32xbf16>, vector<32x32xf32> -> vector<32x32xf32>
    %c0_13 = arith.constant 0 : index
    %c96_14 = arith.constant 96 : index
    %51 = vector.load %arg5[%c0_13, %c96_14] : memref<1x928xf32, #tpu.memory_space<vmem>>, vector<1x32xf32>
    %52 = vector.broadcast %51 : vector<1x32xf32> to vector<32x32xf32>
    %53 = arith.addf %50, %52 : vector<32x32xf32>
    %54 = arith.addf %1, %53 : vector<32x32xf32>
    %c0_15 = arith.constant 0 : index
    %c128 = arith.constant 128 : index
    %55 = vector.load %arg5[%c0_15, %c128] : memref<1x928xf32, #tpu.memory_space<vmem>>, vector<1x32xf32>
    %c0_16 = arith.constant 0 : index
    %c160 = arith.constant 160 : index
    %56 = vector.load %arg5[%c0_16, %c160] : memref<1x928xf32, #tpu.memory_space<vmem>>, vector<1x32xf32>
    %cst_17 = arith.constant dense<0.000000e+00> : vector<32xf32>
    %57 = vector.multi_reduction <add>, %54, %cst_17 [1] : vector<32x32xf32> to vector<32xf32>
    %58 = vector.shape_cast %57 : vector<32xf32> to vector<32x1xf32>
    %cst_18 = arith.constant 3.200000e+01 : f32
    %59 = vector.broadcast %cst_18 : f32 to vector<32x1xf32>
    %60 = arith.divf %58, %59 : vector<32x1xf32>
    %61 = vector.broadcast %60 : vector<32x1xf32> to vector<32x32xf32>
    %62 = arith.subf %54, %61 : vector<32x32xf32>
    %63 = arith.mulf %62, %62 : vector<32x32xf32>
    %cst_19 = arith.constant dense<0.000000e+00> : vector<32xf32>
    %64 = vector.multi_reduction <add>, %63, %cst_19 [1] : vector<32x32xf32> to vector<32xf32>
    %65 = vector.shape_cast %64 : vector<32xf32> to vector<32x1xf32>
    %cst_20 = arith.constant 3.200000e+01 : f32
    %66 = vector.broadcast %cst_20 : f32 to vector<32x1xf32>
    %67 = arith.divf %65, %66 : vector<32x1xf32>
    %68 = vector.broadcast %60 : vector<32x1xf32> to vector<32x32xf32>
    %69 = arith.subf %54, %68 : vector<32x32xf32>
    %cst_21 = arith.constant 9.99999974E-6 : f32
    %70 = vector.broadcast %cst_21 : f32 to vector<32x1xf32>
    %71 = arith.addf %67, %70 : vector<32x1xf32>
    %72 = math.rsqrt %71 : vector<32x1xf32>
    %73 = vector.broadcast %72 : vector<32x1xf32> to vector<32x32xf32>
    %74 = arith.mulf %69, %73 : vector<32x32xf32>
    %75 = vector.broadcast %55 : vector<1x32xf32> to vector<32x32xf32>
    %76 = arith.mulf %74, %75 : vector<32x32xf32>
    %77 = vector.broadcast %56 : vector<1x32xf32> to vector<32x32xf32>
    %78 = arith.addf %76, %77 : vector<32x32xf32>
    %79 = arith.truncf %78 : vector<32x32xf32> to vector<32x32xbf16>
    %c0_22 = arith.constant 0 : index
    %c128_23 = arith.constant 128 : index
    %80 = vector.load %arg3[%c0_22, %c128_23] : memref<32x608xbf16, #tpu.memory_space<vmem>>, vector<32x128xbf16>
    %cst_24 = arith.constant dense<0.000000e+00> : vector<32x128xf32>
    %81 = tpu.matmul %79, %80, %cst_24 {dimension_numbers = #tpu.dot_dimension_numbers<[1], [0], [0], [1], [0, 0, 1, 1], [], []>} : vector<32x32xbf16>, vector<32x128xbf16>, vector<32x128xf32> -> vector<32x128xf32>
    %c0_25 = arith.constant 0 : index
    %c192 = arith.constant 192 : index
    %82 = vector.load %arg5[%c0_25, %c192] : memref<1x928xf32, #tpu.memory_space<vmem>>, vector<1x128xf32>
    %83 = vector.broadcast %82 : vector<1x128xf32> to vector<32x128xf32>
    %84 = arith.addf %81, %83 : vector<32x128xf32>
    %85 = arith.mulf %84, %84 : vector<32x128xf32>
    %86 = arith.mulf %84, %85 : vector<32x128xf32>
    %cst_26 = arith.constant 4.471500e-02 : f32
    %87 = vector.broadcast %cst_26 : f32 to vector<32x128xf32>
    %88 = arith.mulf %87, %86 : vector<32x128xf32>
    %89 = arith.addf %84, %88 : vector<32x128xf32>
    %cst_27 = arith.constant 0.797884583 : f32
    %90 = vector.broadcast %cst_27 : f32 to vector<32x128xf32>
    %91 = arith.mulf %90, %89 : vector<32x128xf32>
    %92 = math.tanh %91 : vector<32x128xf32>
    %cst_28 = arith.constant 1.000000e+00 : f32
    %93 = vector.broadcast %cst_28 : f32 to vector<32x128xf32>
    %94 = arith.addf %93, %92 : vector<32x128xf32>
    %cst_29 = arith.constant 5.000000e-01 : f32
    %95 = vector.broadcast %cst_29 : f32 to vector<32x128xf32>
    %96 = arith.mulf %95, %94 : vector<32x128xf32>
    %97 = arith.mulf %84, %96 : vector<32x128xf32>
    %98 = arith.truncf %97 : vector<32x128xf32> to vector<32x128xbf16>
    %c0_30 = arith.constant 0 : index
    %c0_31 = arith.constant 0 : index
    %99 = vector.load %arg4[%c0_30, %c0_31] : memref<128x64xbf16, #tpu.memory_space<vmem>>, vector<128x32xbf16>
    %cst_32 = arith.constant dense<0.000000e+00> : vector<32x32xf32>
    %100 = tpu.matmul %98, %99, %cst_32 {dimension_numbers = #tpu.dot_dimension_numbers<[1], [0], [0], [1], [0, 0, 1, 1], [], []>} : vector<32x128xbf16>, vector<128x32xbf16>, vector<32x32xf32> -> vector<32x32xf32>
    %c0_33 = arith.constant 0 : index
    %c320 = arith.constant 320 : index
    %101 = vector.load %arg5[%c0_33, %c320] : memref<1x928xf32, #tpu.memory_space<vmem>>, vector<1x32xf32>
    %102 = vector.broadcast %101 : vector<1x32xf32> to vector<32x32xf32>
    %103 = arith.addf %100, %102 : vector<32x32xf32>
    %104 = arith.addf %103, %103 : vector<32x32xf32>
    %c0_34 = arith.constant 0 : index
    %c352 = arith.constant 352 : index
    %105 = vector.load %arg5[%c0_34, %c352] : memref<1x928xf32, #tpu.memory_space<vmem>>, vector<1x32xf32>
    %c0_35 = arith.constant 0 : index
    %c384 = arith.constant 384 : index
    %106 = vector.load %arg5[%c0_35, %c384] : memref<1x928xf32, #tpu.memory_space<vmem>>, vector<1x32xf32>
    %cst_36 = arith.constant dense<0.000000e+00> : vector<32xf32>
    %107 = vector.multi_reduction <add>, %104, %cst_36 [1] : vector<32x32xf32> to vector<32xf32>
    %108 = vector.shape_cast %107 : vector<32xf32> to vector<32x1xf32>
    %cst_37 = arith.constant 3.200000e+01 : f32
    %109 = vector.broadcast %cst_37 : f32 to vector<32x1xf32>
    %110 = arith.divf %108, %109 : vector<32x1xf32>
    %111 = vector.broadcast %110 : vector<32x1xf32> to vector<32x32xf32>
    %112 = arith.subf %104, %111 : vector<32x32xf32>
    %113 = arith.mulf %112, %112 : vector<32x32xf32>
    %cst_38 = arith.constant dense<0.000000e+00> : vector<32xf32>
    %114 = vector.multi_reduction <add>, %113, %cst_38 [1] : vector<32x32xf32> to vector<32xf32>
    %115 = vector.shape_cast %114 : vector<32xf32> to vector<32x1xf32>
    %cst_39 = arith.constant 3.200000e+01 : f32
    %116 = vector.broadcast %cst_39 : f32 to vector<32x1xf32>
    %117 = arith.divf %115, %116 : vector<32x1xf32>
    %118 = vector.broadcast %110 : vector<32x1xf32> to vector<32x32xf32>
    %119 = arith.subf %104, %118 : vector<32x32xf32>
    %cst_40 = arith.constant 9.99999974E-6 : f32
    %120 = vector.broadcast %cst_40 : f32 to vector<32x1xf32>
    %121 = arith.addf %117, %120 : vector<32x1xf32>
    %122 = math.rsqrt %121 : vector<32x1xf32>
    %123 = vector.broadcast %122 : vector<32x1xf32> to vector<32x32xf32>
    %124 = arith.mulf %119, %123 : vector<32x32xf32>
    %125 = vector.broadcast %105 : vector<1x32xf32> to vector<32x32xf32>
    %126 = arith.mulf %124, %125 : vector<32x32xf32>
    %127 = vector.broadcast %106 : vector<1x32xf32> to vector<32x32xf32>
    %128 = arith.addf %126, %127 : vector<32x32xf32>
    %129 = arith.truncf %128 : vector<32x32xf32> to vector<32x32xbf16>
    %c0_41 = arith.constant 0 : index
    %c256 = arith.constant 256 : index
    %130 = vector.load %arg3[%c0_41, %c256] : memref<32x608xbf16, #tpu.memory_space<vmem>>, vector<32x96xbf16>
    %cst_42 = arith.constant dense<0.000000e+00> : vector<32x96xf32>
    %131 = tpu.matmul %129, %130, %cst_42 {dimension_numbers = #tpu.dot_dimension_numbers<[1], [0], [0], [1], [0, 0, 1, 1], [], []>} : vector<32x32xbf16>, vector<32x96xbf16>, vector<32x96xf32> -> vector<32x96xf32>
    %c0_43 = arith.constant 0 : index
    %c416 = arith.constant 416 : index
    %132 = vector.load %arg5[%c0_43, %c416] : memref<1x928xf32, #tpu.memory_space<vmem>>, vector<1x96xf32>
    %133 = vector.broadcast %132 : vector<1x96xf32> to vector<32x96xf32>
    %134 = arith.addf %131, %133 : vector<32x96xf32>
    %135 = tpu.concatenate %128, %134 in 1 : vector<32x32xf32>, vector<32x96xf32> -> vector<32x128xf32>
    %c0_44 = arith.constant 0 : index
    %c0_45 = arith.constant 0 : index
    %136 = vector.load %arg7[%c0_44, %c0_45] : memref<32x128xf32, #tpu.memory_space<vmem>>, vector<32x128xf32>
    tpu.vector_store %arg7[%c0_44, %c0_45], %135 {strides = array<i32>} : memref<32x128xf32, #tpu.memory_space<vmem>>, vector<32x128xf32>,
    %c0_46 = arith.constant 0 : index
    %c0_47 = arith.constant 0 : index
    %137 = tpu.strided_load %arg7[%c0_46, %c0_47] {strides = array<i32: 8, 1>} : memref<32x128xf32, #tpu.memory_space<vmem>>, vector<4x128xf32>
    %c1 = arith.constant 1 : index
    %c0_48 = arith.constant 0 : index
    %138 = tpu.strided_load %arg7[%c1, %c0_48] {strides = array<i32: 8, 1>} : memref<32x128xf32, #tpu.memory_space<vmem>>, vector<4x128xf32>
    %c2 = arith.constant 2 : index
    %c0_49 = arith.constant 0 : index
    %139 = tpu.strided_load %arg7[%c2, %c0_49] {strides = array<i32: 8, 1>} : memref<32x128xf32, #tpu.memory_space<vmem>>, vector<4x128xf32>
    %c3 = arith.constant 3 : index
    %c0_50 = arith.constant 0 : index
    %140 = tpu.strided_load %arg7[%c3, %c0_50] {strides = array<i32: 8, 1>} : memref<32x128xf32, #tpu.memory_space<vmem>>, vector<4x128xf32>
    %c4 = arith.constant 4 : index
    %c0_51 = arith.constant 0 : index
    %141 = tpu.strided_load %arg7[%c4, %c0_51] {strides = array<i32: 8, 1>} : memref<32x128xf32, #tpu.memory_space<vmem>>, vector<4x128xf32>
    %c5 = arith.constant 5 : index
    %c0_52 = arith.constant 0 : index
    %142 = tpu.strided_load %arg7[%c5, %c0_52] {strides = array<i32: 8, 1>} : memref<32x128xf32, #tpu.memory_space<vmem>>, vector<4x128xf32>
    %c6 = arith.constant 6 : index
    %c0_53 = arith.constant 0 : index
    %143 = tpu.strided_load %arg7[%c6, %c0_53] {strides = array<i32: 8, 1>} : memref<32x128xf32, #tpu.memory_space<vmem>>, vector<4x128xf32>
    %c7 = arith.constant 7 : index
    %c0_54 = arith.constant 0 : index
    %144 = tpu.strided_load %arg7[%c7, %c0_54] {strides = array<i32: 8, 1>} : memref<32x128xf32, #tpu.memory_space<vmem>>, vector<4x128xf32>
    %145 = vector.shape_cast %137 : vector<4x128xf32> to vector<1x4x128xf32>
    %146 = vector.shape_cast %138 : vector<4x128xf32> to vector<1x4x128xf32>
    %147 = vector.shape_cast %139 : vector<4x128xf32> to vector<1x4x128xf32>
    %148 = vector.shape_cast %140 : vector<4x128xf32> to vector<1x4x128xf32>
    %149 = vector.shape_cast %141 : vector<4x128xf32> to vector<1x4x128xf32>
    %150 = vector.shape_cast %142 : vector<4x128xf32> to vector<1x4x128xf32>
    %151 = vector.shape_cast %143 : vector<4x128xf32> to vector<1x4x128xf32>
    %152 = vector.shape_cast %144 : vector<4x128xf32> to vector<1x4x128xf32>
    %153 = tpu.concatenate %145, %146, %147, %148, %149, %150, %151, %152 in 0 : vector<1x4x128xf32>, vector<1x4x128xf32>, vector<1x4x128xf32>, vector<1x4x128xf32>, vector<1x4x128xf32>, vector<1x4x128xf32>, vector<1x4x128xf32>, vector<1x4x128xf32> -> vector<8x4x128xf32>
    %c0_55 = arith.constant 0 : index
    %c0_56 = arith.constant 0 : index
    %c0_57 = arith.constant 0 : index
    %154 = vector.load %arg2[%c0_55, %c0_56, %c0_57] : memref<8x2x32xf32, #tpu.memory_space<vmem>>, vector<8x2x32xf32>
    %155 = vector.shape_cast %154 : vector<8x2x32xf32> to vector<1x8x2x32xf32>
    %156 = vector.shape_cast %155 : vector<1x8x2x32xf32> to vector<8x2x32xf32>
    %157 = vector.extract_strided_slice %156 {offsets = [0, 0, 0], sizes = [8, 2, 8], strides = [1, 1, 1]} : vector<8x2x32xf32> to vector<8x2x8xf32>
    %158 = vector.extract_strided_slice %156 {offsets = [0, 0, 8], sizes = [8, 2, 8], strides = [1, 1, 1]} : vector<8x2x32xf32> to vector<8x2x8xf32>
    %159 = vector.extract_strided_slice %156 {offsets = [0, 0, 16], sizes = [8, 2, 8], strides = [1, 1, 1]} : vector<8x2x32xf32> to vector<8x2x8xf32>
    %160 = vector.extract_strided_slice %156 {offsets = [0, 0, 24], sizes = [8, 2, 8], strides = [1, 1, 1]} : vector<8x2x32xf32> to vector<8x2x8xf32>
    %161 = tpu.concatenate %157, %158, %159, %160 in 0 : vector<8x2x8xf32>, vector<8x2x8xf32>, vector<8x2x8xf32>, vector<8x2x8xf32> -> vector<32x2x8xf32>
    %162 = vector.extract_strided_slice %153 {offsets = [0, 0, 32], sizes = [8, 4, 8], strides = [1, 1, 1]} : vector<8x4x128xf32> to vector<8x4x8xf32>
    %163 = vector.extract_strided_slice %153 {offsets = [0, 0, 40], sizes = [8, 4, 8], strides = [1, 1, 1]} : vector<8x4x128xf32> to vector<8x4x8xf32>
    %164 = vector.extract_strided_slice %153 {offsets = [0, 0, 48], sizes = [8, 4, 8], strides = [1, 1, 1]} : vector<8x4x128xf32> to vector<8x4x8xf32>
    %165 = vector.extract_strided_slice %153 {offsets = [0, 0, 56], sizes = [8, 4, 8], strides = [1, 1, 1]} : vector<8x4x128xf32> to vector<8x4x8xf32>
    %166 = tpu.concatenate %162, %163, %164, %165 in 0 : vector<8x4x8xf32>, vector<8x4x8xf32>, vector<8x4x8xf32>, vector<8x4x8xf32> -> vector<32x4x8xf32>
    %167 = vector.extract_strided_slice %153 {offsets = [0, 0, 64], sizes = [8, 4, 8], strides = [1, 1, 1]} : vector<8x4x128xf32> to vector<8x4x8xf32>
    %168 = vector.extract_strided_slice %153 {offsets = [0, 0, 72], sizes = [8, 4, 8], strides = [1, 1, 1]} : vector<8x4x128xf32> to vector<8x4x8xf32>
    %169 = vector.extract_strided_slice %153 {offsets = [0, 0, 80], sizes = [8, 4, 8], strides = [1, 1, 1]} : vector<8x4x128xf32> to vector<8x4x8xf32>
    %170 = vector.extract_strided_slice %153 {offsets = [0, 0, 88], sizes = [8, 4, 8], strides = [1, 1, 1]} : vector<8x4x128xf32> to vector<8x4x8xf32>
    %171 = tpu.concatenate %167, %168, %169, %170 in 0 : vector<8x4x8xf32>, vector<8x4x8xf32>, vector<8x4x8xf32>, vector<8x4x8xf32> -> vector<32x4x8xf32>
    %172 = arith.truncf %161 : vector<32x2x8xf32> to vector<32x2x8xbf16>
    %173 = arith.truncf %166 : vector<32x4x8xf32> to vector<32x4x8xbf16>
    "tpu.trace_start"() <{level = 10 : i32, message = "bqe,bke->bqk"}> : () -> ()
    %cst_58 = arith.constant dense<0.000000e+00> : vector<32x2x4xf32>
    %174 = tpu.matmul %172, %173, %cst_58 {dimension_numbers = #tpu.dot_dimension_numbers<[2], [2], [1], [1], [0, 0, 0, 1, 1, 1], [0], [0]>} : vector<32x2x8xbf16>, vector<32x4x8xbf16>, vector<32x2x4xf32> -> vector<32x2x4xf32>
    "tpu.trace_stop"() : () -> ()
    %cst_59 = arith.constant 0.353553385 : f32
    %175 = vector.broadcast %cst_59 : f32 to vector<32x2x4xf32>
    %176 = arith.mulf %174, %175 : vector<32x2x4xf32>
    %cst_60 = arith.constant dense<0xFF800000> : vector<32x2xf32>
    %177 = vector.multi_reduction <maximumf>, %176, %cst_60 [2] : vector<32x2x4xf32> to vector<32x2xf32>
    %178 = vector.shape_cast %177 : vector<32x2xf32> to vector<32x2x1xf32>
    %179 = vector.broadcast %178 : vector<32x2x1xf32> to vector<32x2x4xf32>
    %180 = arith.subf %176, %179 : vector<32x2x4xf32>
    %181 = math.exp %180 : vector<32x2x4xf32>
    %cst_61 = arith.constant dense<0.000000e+00> : vector<32x2xf32>
    %182 = vector.multi_reduction <add>, %181, %cst_61 [2] : vector<32x2x4xf32> to vector<32x2xf32>
    %183 = vector.shape_cast %182 : vector<32x2xf32> to vector<32x2x1xf32>
    %184 = tpu.reciprocal %183 {approx = true} : vector<32x2x1xf32> -> vector<32x2x1xf32>
    %185 = vector.broadcast %184 : vector<32x2x1xf32> to vector<32x2x4xf32>
    %186 = arith.mulf %181, %185 : vector<32x2x4xf32>
    %187 = arith.truncf %186 : vector<32x2x4xf32> to vector<32x2x4xbf16>
    %188 = arith.truncf %171 : vector<32x4x8xf32> to vector<32x4x8xbf16>
    "tpu.trace_start"() <{level = 10 : i32, message = "bqk,bke->bqe"}> : () -> ()
    %cst_62 = arith.constant dense<0.000000e+00> : vector<32x2x8xf32>
    %189 = tpu.matmul %187, %188, %cst_62 {dimension_numbers = #tpu.dot_dimension_numbers<[2], [1], [1], [2], [0, 0, 0, 1, 1, 2], [0], [0]>} : vector<32x2x4xbf16>, vector<32x4x8xbf16>, vector<32x2x8xf32> -> vector<32x2x8xf32>
    "tpu.trace_stop"() : () -> ()
    %190 = vector.extract_strided_slice %189 {offsets = [0, 0, 0], sizes = [8, 2, 8], strides = [1, 1, 1]} : vector<32x2x8xf32> to vector<8x2x8xf32>
    %191 = vector.extract_strided_slice %189 {offsets = [8, 0, 0], sizes = [8, 2, 8], strides = [1, 1, 1]} : vector<32x2x8xf32> to vector<8x2x8xf32>
    %192 = vector.extract_strided_slice %189 {offsets = [16, 0, 0], sizes = [8, 2, 8], strides = [1, 1, 1]} : vector<32x2x8xf32> to vector<8x2x8xf32>
    %193 = vector.extract_strided_slice %189 {offsets = [24, 0, 0], sizes = [8, 2, 8], strides = [1, 1, 1]} : vector<32x2x8xf32> to vector<8x2x8xf32>
    %194 = tpu.concatenate %190, %191, %192, %193 in 2 : vector<8x2x8xf32>, vector<8x2x8xf32>, vector<8x2x8xf32>, vector<8x2x8xf32> -> vector<8x2x32xf32>
    %195 = vector.shape_cast %194 : vector<8x2x32xf32> to vector<16x32xf32>
    %196 = arith.truncf %195 : vector<16x32xf32> to vector<16x32xbf16>
    %c0_63 = arith.constant 0 : index
    %c352_64 = arith.constant 352 : index
    %197 = vector.load %arg3[%c0_63, %c352_64] : memref<32x608xbf16, #tpu.memory_space<vmem>>, vector<32x32xbf16>
    %cst_65 = arith.constant dense<0.000000e+00> : vector<16x32xf32>
    %198 = tpu.matmul %196, %197, %cst_65 {dimension_numbers = #tpu.dot_dimension_numbers<[1], [0], [0], [1], [0, 0, 1, 1], [], []>} : vector<16x32xbf16>, vector<32x32xbf16>, vector<16x32xf32> -> vector<16x32xf32>
    %c0_66 = arith.constant 0 : index
    %c512 = arith.constant 512 : index
    %199 = vector.load %arg5[%c0_66, %c512] : memref<1x928xf32, #tpu.memory_space<vmem>>, vector<1x32xf32>
    %200 = vector.broadcast %199 : vector<1x32xf32> to vector<16x32xf32>
    %201 = arith.addf %198, %200 : vector<16x32xf32>
    %202 = arith.truncf %201 : vector<16x32xf32> to vector<16x32xbf16>
    %c0_67 = arith.constant 0 : index
    %c384_68 = arith.constant 384 : index
    %203 = vector.load %arg3[%c0_67, %c384_68] : memref<32x608xbf16, #tpu.memory_space<vmem>>, vector<32x64xbf16>
    %cst_69 = arith.constant dense<0.000000e+00> : vector<16x64xf32>
    %204 = tpu.matmul %202, %203, %cst_69 {dimension_numbers = #tpu.dot_dimension_numbers<[1], [0], [0], [1], [0, 0, 1, 1], [], []>} : vector<16x32xbf16>, vector<32x64xbf16>, vector<16x64xf32> -> vector<16x64xf32>
    %c0_70 = arith.constant 0 : index
    %c544 = arith.constant 544 : index
    %205 = vector.load %arg5[%c0_70, %c544] : memref<1x928xf32, #tpu.memory_space<vmem>>, vector<1x64xf32>
    %206 = vector.broadcast %205 : vector<1x64xf32> to vector<16x64xf32>
    %207 = arith.addf %204, %206 : vector<16x64xf32>
    %208 = vector.shape_cast %207 : vector<16x64xf32> to vector<8x2x64xf32>
    %209 = vector.extract_strided_slice %153 {offsets = [0, 0, 96], sizes = [8, 4, 8], strides = [1, 1, 1]} : vector<8x4x128xf32> to vector<8x4x8xf32>
    %210 = vector.extract_strided_slice %153 {offsets = [0, 0, 104], sizes = [8, 4, 8], strides = [1, 1, 1]} : vector<8x4x128xf32> to vector<8x4x8xf32>
    %211 = vector.extract_strided_slice %153 {offsets = [0, 0, 112], sizes = [8, 4, 8], strides = [1, 1, 1]} : vector<8x4x128xf32> to vector<8x4x8xf32>
    %212 = vector.extract_strided_slice %153 {offsets = [0, 0, 120], sizes = [8, 4, 8], strides = [1, 1, 1]} : vector<8x4x128xf32> to vector<8x4x8xf32>
    %213 = tpu.concatenate %209, %210, %211, %212 in 0 : vector<8x4x8xf32>, vector<8x4x8xf32>, vector<8x4x8xf32>, vector<8x4x8xf32> -> vector<32x4x8xf32>
    %214 = vector.extract_strided_slice %208 {offsets = [0, 0, 0], sizes = [8, 2, 8], strides = [1, 1, 1]} : vector<8x2x64xf32> to vector<8x2x8xf32>
    %215 = vector.extract_strided_slice %208 {offsets = [0, 0, 8], sizes = [8, 2, 8], strides = [1, 1, 1]} : vector<8x2x64xf32> to vector<8x2x8xf32>
    %216 = vector.extract_strided_slice %208 {offsets = [0, 0, 16], sizes = [8, 2, 8], strides = [1, 1, 1]} : vector<8x2x64xf32> to vector<8x2x8xf32>
    %217 = vector.extract_strided_slice %208 {offsets = [0, 0, 24], sizes = [8, 2, 8], strides = [1, 1, 1]} : vector<8x2x64xf32> to vector<8x2x8xf32>
    %218 = tpu.concatenate %214, %215, %216, %217 in 0 : vector<8x2x8xf32>, vector<8x2x8xf32>, vector<8x2x8xf32>, vector<8x2x8xf32> -> vector<32x2x8xf32>
    %219 = vector.extract_strided_slice %208 {offsets = [0, 0, 32], sizes = [8, 2, 8], strides = [1, 1, 1]} : vector<8x2x64xf32> to vector<8x2x8xf32>
    %220 = vector.extract_strided_slice %208 {offsets = [0, 0, 40], sizes = [8, 2, 8], strides = [1, 1, 1]} : vector<8x2x64xf32> to vector<8x2x8xf32>
    %221 = vector.extract_strided_slice %208 {offsets = [0, 0, 48], sizes = [8, 2, 8], strides = [1, 1, 1]} : vector<8x2x64xf32> to vector<8x2x8xf32>
    %222 = vector.extract_strided_slice %208 {offsets = [0, 0, 56], sizes = [8, 2, 8], strides = [1, 1, 1]} : vector<8x2x64xf32> to vector<8x2x8xf32>
    %223 = tpu.concatenate %219, %220, %221, %222 in 0 : vector<8x2x8xf32>, vector<8x2x8xf32>, vector<8x2x8xf32>, vector<8x2x8xf32> -> vector<32x2x8xf32>
    %224 = arith.truncf %213 : vector<32x4x8xf32> to vector<32x4x8xbf16>
    %225 = arith.truncf %218 : vector<32x2x8xf32> to vector<32x2x8xbf16>
    "tpu.trace_start"() <{level = 10 : i32, message = "bqe,bke->bqk"}> : () -> ()
    %cst_71 = arith.constant dense<0.000000e+00> : vector<32x4x2xf32>
    %226 = tpu.matmul %224, %225, %cst_71 {dimension_numbers = #tpu.dot_dimension_numbers<[2], [2], [1], [1], [0, 0, 0, 1, 1, 1], [0], [0]>} : vector<32x4x8xbf16>, vector<32x2x8xbf16>, vector<32x4x2xf32> -> vector<32x4x2xf32>
    "tpu.trace_stop"() : () -> ()
    %cst_72 = arith.constant 0.353553385 : f32
    %227 = vector.broadcast %cst_72 : f32 to vector<32x4x2xf32>
    %228 = arith.mulf %226, %227 : vector<32x4x2xf32>
    %cst_73 = arith.constant dense<0xFF800000> : vector<32x4xf32>
    %229 = vector.multi_reduction <maximumf>, %228, %cst_73 [2] : vector<32x4x2xf32> to vector<32x4xf32>
    %230 = vector.shape_cast %229 : vector<32x4xf32> to vector<32x4x1xf32>
    %231 = vector.broadcast %230 : vector<32x4x1xf32> to vector<32x4x2xf32>
    %232 = arith.subf %228, %231 : vector<32x4x2xf32>
    %233 = math.exp %232 : vector<32x4x2xf32>
    %cst_74 = arith.constant dense<0.000000e+00> : vector<32x4xf32>
    %234 = vector.multi_reduction <add>, %233, %cst_74 [2] : vector<32x4x2xf32> to vector<32x4xf32>
    %235 = vector.shape_cast %234 : vector<32x4xf32> to vector<32x4x1xf32>
    %236 = tpu.reciprocal %235 {approx = true} : vector<32x4x1xf32> -> vector<32x4x1xf32>
    %237 = vector.broadcast %236 : vector<32x4x1xf32> to vector<32x4x2xf32>
    %238 = arith.mulf %233, %237 : vector<32x4x2xf32>
    %239 = arith.truncf %238 : vector<32x4x2xf32> to vector<32x4x2xbf16>
    %240 = arith.truncf %223 : vector<32x2x8xf32> to vector<32x2x8xbf16>
    "tpu.trace_start"() <{level = 10 : i32, message = "bqk,bke->bqe"}> : () -> ()
    %cst_75 = arith.constant dense<0.000000e+00> : vector<32x4x8xf32>
    %241 = tpu.matmul %239, %240, %cst_75 {dimension_numbers = #tpu.dot_dimension_numbers<[2], [1], [1], [2], [0, 0, 0, 1, 1, 2], [0], [0]>} : vector<32x4x2xbf16>, vector<32x2x8xbf16>, vector<32x4x8xf32> -> vector<32x4x8xf32>
    "tpu.trace_stop"() : () -> ()
    %242 = vector.extract_strided_slice %241 {offsets = [0, 0, 0], sizes = [8, 4, 8], strides = [1, 1, 1]} : vector<32x4x8xf32> to vector<8x4x8xf32>
    %243 = vector.extract_strided_slice %241 {offsets = [8, 0, 0], sizes = [8, 4, 8], strides = [1, 1, 1]} : vector<32x4x8xf32> to vector<8x4x8xf32>
    %244 = vector.extract_strided_slice %241 {offsets = [16, 0, 0], sizes = [8, 4, 8], strides = [1, 1, 1]} : vector<32x4x8xf32> to vector<8x4x8xf32>
    %245 = vector.extract_strided_slice %241 {offsets = [24, 0, 0], sizes = [8, 4, 8], strides = [1, 1, 1]} : vector<32x4x8xf32> to vector<8x4x8xf32>
    %246 = tpu.concatenate %242, %243, %244, %245 in 2 : vector<8x4x8xf32>, vector<8x4x8xf32>, vector<8x4x8xf32>, vector<8x4x8xf32> -> vector<8x4x32xf32>
    %247 = vector.shape_cast %246 : vector<8x4x32xf32> to vector<32x32xf32>
    %248 = arith.truncf %247 : vector<32x32xf32> to vector<32x32xbf16>
    %c0_76 = arith.constant 0 : index
    %c448 = arith.constant 448 : index
    %249 = vector.load %arg3[%c0_76, %c448] : memref<32x608xbf16, #tpu.memory_space<vmem>>, vector<32x32xbf16>
    %cst_77 = arith.constant dense<0.000000e+00> : vector<32x32xf32>
    %250 = tpu.matmul %248, %249, %cst_77 {dimension_numbers = #tpu.dot_dimension_numbers<[1], [0], [0], [1], [0, 0, 1, 1], [], []>} : vector<32x32xbf16>, vector<32x32xbf16>, vector<32x32xf32> -> vector<32x32xf32>
    %c0_78 = arith.constant 0 : index
    %c608 = arith.constant 608 : index
    %251 = vector.load %arg5[%c0_78, %c608] : memref<1x928xf32, #tpu.memory_space<vmem>>, vector<1x32xf32>
    %252 = vector.broadcast %251 : vector<1x32xf32> to vector<32x32xf32>
    %253 = arith.addf %250, %252 : vector<32x32xf32>
    %254 = vector.extract_strided_slice %153 {offsets = [0, 0, 0], sizes = [8, 4, 32], strides = [1, 1, 1]} : vector<8x4x128xf32> to vector<8x4x32xf32>
    %255 = vector.shape_cast %254 : vector<8x4x32xf32> to vector<32x32xf32>
    %256 = arith.addf %255, %253 : vector<32x32xf32>
    %c0_79 = arith.constant 0 : index
    %c640 = arith.constant 640 : index
    %257 = vector.load %arg5[%c0_79, %c640] : memref<1x928xf32, #tpu.memory_space<vmem>>, vector<1x32xf32>
    %c0_80 = arith.constant 0 : index
    %c672 = arith.constant 672 : index
    %258 = vector.load %arg5[%c0_80, %c672] : memref<1x928xf32, #tpu.memory_space<vmem>>, vector<1x32xf32>
    %cst_81 = arith.constant dense<0.000000e+00> : vector<32xf32>
    %259 = vector.multi_reduction <add>, %256, %cst_81 [1] : vector<32x32xf32> to vector<32xf32>
    %260 = vector.shape_cast %259 : vector<32xf32> to vector<32x1xf32>
    %cst_82 = arith.constant 3.200000e+01 : f32
    %261 = vector.broadcast %cst_82 : f32 to vector<32x1xf32>
    %262 = arith.divf %260, %261 : vector<32x1xf32>
    %263 = vector.broadcast %262 : vector<32x1xf32> to vector<32x32xf32>
    %264 = arith.subf %256, %263 : vector<32x32xf32>
    %265 = arith.mulf %264, %264 : vector<32x32xf32>
    %cst_83 = arith.constant dense<0.000000e+00> : vector<32xf32>
    %266 = vector.multi_reduction <add>, %265, %cst_83 [1] : vector<32x32xf32> to vector<32xf32>
    %267 = vector.shape_cast %266 : vector<32xf32> to vector<32x1xf32>
    %cst_84 = arith.constant 3.200000e+01 : f32
    %268 = vector.broadcast %cst_84 : f32 to vector<32x1xf32>
    %269 = arith.divf %267, %268 : vector<32x1xf32>
    %270 = vector.broadcast %262 : vector<32x1xf32> to vector<32x32xf32>
    %271 = arith.subf %256, %270 : vector<32x32xf32>
    %cst_85 = arith.constant 9.99999974E-6 : f32
    %272 = vector.broadcast %cst_85 : f32 to vector<32x1xf32>
    %273 = arith.addf %269, %272 : vector<32x1xf32>
    %274 = math.rsqrt %273 : vector<32x1xf32>
    %275 = vector.broadcast %274 : vector<32x1xf32> to vector<32x32xf32>
    %276 = arith.mulf %271, %275 : vector<32x32xf32>
    %277 = vector.broadcast %257 : vector<1x32xf32> to vector<32x32xf32>
    %278 = arith.mulf %276, %277 : vector<32x32xf32>
    %279 = vector.broadcast %258 : vector<1x32xf32> to vector<32x32xf32>
    %280 = arith.addf %278, %279 : vector<32x32xf32>
    %281 = arith.truncf %280 : vector<32x32xf32> to vector<32x32xbf16>
    %c0_86 = arith.constant 0 : index
    %c480 = arith.constant 480 : index
    %282 = vector.load %arg3[%c0_86, %c480] : memref<32x608xbf16, #tpu.memory_space<vmem>>, vector<32x128xbf16>
    %cst_87 = arith.constant dense<0.000000e+00> : vector<32x128xf32>
    %283 = tpu.matmul %281, %282, %cst_87 {dimension_numbers = #tpu.dot_dimension_numbers<[1], [0], [0], [1], [0, 0, 1, 1], [], []>} : vector<32x32xbf16>, vector<32x128xbf16>, vector<32x128xf32> -> vector<32x128xf32>
    %c0_88 = arith.constant 0 : index
    %c704 = arith.constant 704 : index
    %284 = vector.load %arg5[%c0_88, %c704] : memref<1x928xf32, #tpu.memory_space<vmem>>, vector<1x128xf32>
    %285 = vector.broadcast %284 : vector<1x128xf32> to vector<32x128xf32>
    %286 = arith.addf %283, %285 : vector<32x128xf32>
    %287 = arith.mulf %286, %286 : vector<32x128xf32>
    %288 = arith.mulf %286, %287 : vector<32x128xf32>
    %cst_89 = arith.constant 4.471500e-02 : f32
    %289 = vector.broadcast %cst_89 : f32 to vector<32x128xf32>
    %290 = arith.mulf %289, %288 : vector<32x128xf32>
    %291 = arith.addf %286, %290 : vector<32x128xf32>
    %cst_90 = arith.constant 0.797884583 : f32
    %292 = vector.broadcast %cst_90 : f32 to vector<32x128xf32>
    %293 = arith.mulf %292, %291 : vector<32x128xf32>
    %294 = math.tanh %293 : vector<32x128xf32>
    %cst_91 = arith.constant 1.000000e+00 : f32
    %295 = vector.broadcast %cst_91 : f32 to vector<32x128xf32>
    %296 = arith.addf %295, %294 : vector<32x128xf32>
    %cst_92 = arith.constant 5.000000e-01 : f32
    %297 = vector.broadcast %cst_92 : f32 to vector<32x128xf32>
    %298 = arith.mulf %297, %296 : vector<32x128xf32>
    %299 = arith.mulf %286, %298 : vector<32x128xf32>
    %300 = arith.truncf %299 : vector<32x128xf32> to vector<32x128xbf16>
    %c0_93 = arith.constant 0 : index
    %c32 = arith.constant 32 : index
    %301 = vector.load %arg4[%c0_93, %c32] : memref<128x64xbf16, #tpu.memory_space<vmem>>, vector<128x32xbf16>
    %cst_94 = arith.constant dense<0.000000e+00> : vector<32x32xf32>
    %302 = tpu.matmul %300, %301, %cst_94 {dimension_numbers = #tpu.dot_dimension_numbers<[1], [0], [0], [1], [0, 0, 1, 1], [], []>} : vector<32x128xbf16>, vector<128x32xbf16>, vector<32x32xf32> -> vector<32x32xf32>
    %c0_95 = arith.constant 0 : index
    %c832 = arith.constant 832 : index
    %303 = vector.load %arg5[%c0_95, %c832] : memref<1x928xf32, #tpu.memory_space<vmem>>, vector<1x32xf32>
    %304 = vector.broadcast %303 : vector<1x32xf32> to vector<32x32xf32>
    %305 = arith.addf %302, %304 : vector<32x32xf32>
    %306 = arith.addf %305, %305 : vector<32x32xf32>
    %c0_96 = arith.constant 0 : index
    %c864 = arith.constant 864 : index
    %307 = vector.load %arg5[%c0_96, %c864] : memref<1x928xf32, #tpu.memory_space<vmem>>, vector<1x32xf32>
    %c0_97 = arith.constant 0 : index
    %c896 = arith.constant 896 : index
    %308 = vector.load %arg5[%c0_97, %c896] : memref<1x928xf32, #tpu.memory_space<vmem>>, vector<1x32xf32>
    %cst_98 = arith.constant dense<0.000000e+00> : vector<32xf32>
    %309 = vector.multi_reduction <add>, %306, %cst_98 [1] : vector<32x32xf32> to vector<32xf32>
    %310 = vector.shape_cast %309 : vector<32xf32> to vector<32x1xf32>
    %cst_99 = arith.constant 3.200000e+01 : f32
    %311 = vector.broadcast %cst_99 : f32 to vector<32x1xf32>
    %312 = arith.divf %310, %311 : vector<32x1xf32>
    %313 = vector.broadcast %312 : vector<32x1xf32> to vector<32x32xf32>
    %314 = arith.subf %306, %313 : vector<32x32xf32>
    %315 = arith.mulf %314, %314 : vector<32x32xf32>
    %cst_100 = arith.constant dense<0.000000e+00> : vector<32xf32>
    %316 = vector.multi_reduction <add>, %315, %cst_100 [1] : vector<32x32xf32> to vector<32xf32>
    %317 = vector.shape_cast %316 : vector<32xf32> to vector<32x1xf32>
    %cst_101 = arith.constant 3.200000e+01 : f32
    %318 = vector.broadcast %cst_101 : f32 to vector<32x1xf32>
    %319 = arith.divf %317, %318 : vector<32x1xf32>
    %320 = vector.broadcast %312 : vector<32x1xf32> to vector<32x32xf32>
    %321 = arith.subf %306, %320 : vector<32x32xf32>
    %cst_102 = arith.constant 9.99999974E-6 : f32
    %322 = vector.broadcast %cst_102 : f32 to vector<32x1xf32>
    %323 = arith.addf %319, %322 : vector<32x1xf32>
    %324 = math.rsqrt %323 : vector<32x1xf32>
    %325 = vector.broadcast %324 : vector<32x1xf32> to vector<32x32xf32>
    %326 = arith.mulf %321, %325 : vector<32x32xf32>
    %327 = vector.broadcast %307 : vector<1x32xf32> to vector<32x32xf32>
    %328 = arith.mulf %326, %327 : vector<32x32xf32>
    %329 = vector.broadcast %308 : vector<1x32xf32> to vector<32x32xf32>
    %330 = arith.addf %328, %329 : vector<32x32xf32>
    %331 = vector.shape_cast %330 : vector<32x32xf32> to vector<1x32x32xf32>
    %c0_103 = arith.constant 0 : index
    %c0_104 = arith.constant 0 : index
    %c0_105 = arith.constant 0 : index
    %332 = vector.load %arg6[%c0_103, %c0_104, %c0_105] : memref<1x32x32xf32, #tpu.memory_space<vmem>>, vector<1x32x32xf32>
    tpu.vector_store %arg6[%c0_103, %c0_104, %c0_105], %331 {strides = array<i32>} : memref<1x32x32xf32, #tpu.memory_space<vmem>>, vector<1x32x32xf32>,
    return
  }
  func.func @transform_0(%arg0: i32) -> (i32, i32, i32) {
    %c0_i32 = arith.constant 0 : i32
    %c0_i32_0 = arith.constant 0 : i32
    %c0_i32_1 = arith.constant 0 : i32
    return %arg0, %c0_i32, %c0_i32_0 : i32, i32, i32
  }
  func.func @transform_1(%arg0: i32) -> (i32, i32, i32) {
    %c0_i32 = arith.constant 0 : i32
    %c0_i32_0 = arith.constant 0 : i32
    %c0_i32_1 = arith.constant 0 : i32
    %c0_i32_2 = arith.constant 0 : i32
    return %c0_i32, %c0_i32_0, %c0_i32_1 : i32, i32, i32
  }
  func.func @transform_2(%arg0: i32) -> (i32, i32) {
    %c0_i32 = arith.constant 0 : i32
    %c0_i32_0 = arith.constant 0 : i32
    %c0_i32_1 = arith.constant 0 : i32
    return %c0_i32, %c0_i32_0 : i32, i32
  }
  func.func @transform_3(%arg0: i32) -> (i32, i32) {
    %c0_i32 = arith.constant 0 : i32
    %c0_i32_0 = arith.constant 0 : i32
    %c0_i32_1 = arith.constant 0 : i32
    return %c0_i32, %c0_i32_0 : i32, i32
  }
  func.func @transform_4(%arg0: i32) -> (i32, i32) {
    %c0_i32 = arith.constant 0 : i32
    %c0_i32_0 = arith.constant 0 : i32
    %c0_i32_1 = arith.constant 0 : i32
    return %c0_i32, %c0_i32_0 : i32, i32
  }
  func.func @transform_5(%arg0: i32) -> (i32, i32, i32) {
    %c0_i32 = arith.constant 0 : i32
    %c0_i32_0 = arith.constant 0 : i32
    %c0_i32_1 = arith.constant 0 : i32
    return %arg0, %c0_i32, %c0_i32_0 : i32, i32, i32
  }
}

</mosaic_0001>

<llo_original>
// kernel: two_stage_attention.1
$region0: #{two_stage_attention.1}
  #allocation0 [shape = 'u32[]', space=smem, size = 0x4, offset = 0x4, fixed_abs, tag = 'smem constant byte address 0x4 - core index']
  #allocation1 [shape = 'u32[144,128]{1,0:T(1,128)}', space=vmem, size = 0x12000, scoped, tag = 'internal scratch']
  #allocation2 [shape = 'f32[32,128]{1,0:T(8,128)}', space=vmem, size = 0x4000, scoped, tag = 'scratch operand']
  %s0 = inlined_call_operand.vmem [shape: f32[2,32,32], index: 0, kind: input, shape index: {}]
  %s1 = inlined_call_operand.vmem [shape: f32[8,2,32], index: 1, kind: input, shape index: {}]
  %s2 = inlined_call_operand.vmem [shape: bf16[32,608], index: 2, kind: input, shape index: {}]
  %s3 = inlined_call_operand.vmem [shape: bf16[128,64], index: 3, kind: input, shape index: {}]
  %s4 = inlined_call_operand.vmem [shape: f32[1,928], index: 4, kind: input, shape index: {}]
  %s5 = inlined_call_operand.vmem [shape: f32[2,32,32], index: 5, kind: output, shape index: {}]
  %s6 = sld [smem:[#allocation0]]
  $region53: #{two_stage_attention.1} parent=0
    _
  %s8 = ssub.s32 1, %s6
  %s9 = scalar_select 0, %s8, %s6
  loop: start=0, step=1, limit=4
  $region2: #{two_stage_attention.1} parent=0 // loop_pre_header
    _
  $region3: #{two_stage_attention.1} parent=0 // loop_header
    %s11 = sphi 0, %s15
    %p12 = scmp.ge.s32.totalorder %s11, 4
    %s21 = sphi 0, %s23
    %s24 = sphi 0, %s21
    %s25 = sphi 0, %s24
    %s41 = sphi 0, %s25
    %s45 = sphi 0, %s45
    %s47 = sphi 0, %s45
    %s48 = sphi 0, %s47
    %s62 = sphi 0, %s48
    %s66 = sphi 0, %s66
    %s68 = sphi 0, %s66
    %s69 = sphi 0, %s68
    %s83 = sphi 0, %s69
    %s87 = sphi 0, %s87
    %s89 = sphi 0, %s87
    %s90 = sphi 0, %s89
    %s104 = sphi 0, %s90
    %s108 = sphi 0, %s108
    %s110 = sphi 0, %s108
    %s111 = sphi 0, %s110
    %s125 = sphi 0, %s111
    %s131 = sphi 0, %s133
    %s134 = sphi 0, %s131
    %s135 = sphi 0, %s134
    %s151 = sphi 0, %s135
  $region4: #{two_stage_attention.1} parent=0 // loop_header_branch
    %14 = sbr.rel (%p12) target = $region8
  $region5: #{two_stage_attention.1} parent=0 // loop_body
    %s16 = ssub.s32 %s11, 1
    %s17 = ssub.s32 %s11, 2
    %s18 = sadd.s32 %s11, 1
    %s19 = ssub.s32 %s11, %s18
    %p20 = scmp.eq.s32.totalorder %s19, 0
    %s22 = sadd.s32 %s21, 1
    %s23 = scalar_select %p20, %s21, %s22
    %p26 = pneg %p20
    %p27 = scmp.eq.s32.totalorder %s11, 1
    %p28 = por %p26, %p27
    %p29 = scmp.ne.s32.totalorder %s21, %s24
    %p30 = scmp.eq.s32.totalorder %s11, 0
    %p31 = por %p29, %p30
    %p32 = scmp.ne.s32.totalorder %s21, %s24
    %p33 = scmp.eq.s32.totalorder %s16, 1
    %p34 = por %p32, %p33
    %p35 = scmp.ne.s32.totalorder %s24, %s25
    %p36 = scmp.eq.s32.totalorder %s16, 0
    %p37 = por %p35, %p36
    %p38 = scmp.ne.s32.totalorder %s24, %s25
    %p39 = scmp.eq.s32.totalorder %s17, 1
    %p40 = por %p38, %p39
    %p42 = scmp.ne.s32.totalorder %s25, %s41
    %p43 = scmp.eq.s32.totalorder %s17, 0
    %p44 = por %p42, %p43
    %s46 = sadd.s32 %s45, 1
    %p49 = scmp.eq.s32.totalorder %s11, 1
    %p50 = scmp.ne.s32.totalorder %s45, %s47
    %p51 = scmp.eq.s32.totalorder %s11, 0
    %p52 = por %p50, %p51
    %p53 = scmp.ne.s32.totalorder %s45, %s47
    %p54 = scmp.eq.s32.totalorder %s16, 1
    %p55 = por %p53, %p54
    %p56 = scmp.ne.s32.totalorder %s47, %s48
    %p57 = scmp.eq.s32.totalorder %s16, 0
    %p58 = por %p56, %p57
    %p59 = scmp.ne.s32.totalorder %s47, %s48
    %p60 = scmp.eq.s32.totalorder %s17, 1
    %p61 = por %p59, %p60
    %p63 = scmp.ne.s32.totalorder %s48, %s62
    %p64 = scmp.eq.s32.totalorder %s17, 0
    %p65 = por %p63, %p64
    %s67 = sadd.s32 %s66, 1
    %p70 = scmp.eq.s32.totalorder %s11, 1
    %p71 = scmp.ne.s32.totalorder %s66, %s68
    %p72 = scmp.eq.s32.totalorder %s11, 0
    %p73 = por %p71, %p72
    %p74 = scmp.ne.s32.totalorder %s66, %s68
    %p75 = scmp.eq.s32.totalorder %s16, 1
    %p76 = por %p74, %p75
    %p77 = scmp.ne.s32.totalorder %s68, %s69
    %p78 = scmp.eq.s32.totalorder %s16, 0
    %p79 = por %p77, %p78
    %p80 = scmp.ne.s32.totalorder %s68, %s69
    %p81 = scmp.eq.s32.totalorder %s17, 1
    %p82 = por %p80, %p81
    %p84 = scmp.ne.s32.totalorder %s69, %s83
    %p85 = scmp.eq.s32.totalorder %s17, 0
    %p86 = por %p84, %p85
    %s88 = sadd.s32 %s87, 1
    %p91 = scmp.eq.s32.totalorder %s11, 1
    %p92 = scmp.ne.s32.totalorder %s87, %s89
    %p93 = scmp.eq.s32.totalorder %s11, 0
    %p94 = por %p92, %p93
    %p95 = scmp.ne.s32.totalorder %s87, %s89
    %p96 = scmp.eq.s32.totalorder %s16, 1
    %p97 = por %p95, %p96
    %p98 = scmp.ne.s32.totalorder %s89, %s90
    %p99 = scmp.eq.s32.totalorder %s16, 0
    %p100 = por %p98, %p99
    %p101 = scmp.ne.s32.totalorder %s89, %s90
    %p102 = scmp.eq.s32.totalorder %s17, 1
    %p103 = por %p101, %p102
    %p105 = scmp.ne.s32.totalorder %s90, %s104
    %p106 = scmp.eq.s32.totalorder %s17, 0
    %p107 = por %p105, %p106
    %s109 = sadd.s32 %s108, 1
    %p112 = scmp.eq.s32.totalorder %s11, 1
    %p113 = scmp.ne.s32.totalorder %s108, %s110
    %p114 = scmp.eq.s32.totalorder %s11, 0
    %p115 = por %p113, %p114
    %p116 = scmp.ne.s32.totalorder %s108, %s110
    %p117 = scmp.eq.s32.totalorder %s16, 1
    %p118 = por %p116, %p117
    %p119 = scmp.ne.s32.totalorder %s110, %s111
    %p120 = scmp.eq.s32.totalorder %s16, 0
    %p121 = por %p119, %p120
    %p122 = scmp.ne.s32.totalorder %s110, %s111
    %p123 = scmp.eq.s32.totalorder %s17, 1
    %p124 = por %p122, %p123
    %p126 = scmp.ne.s32.totalorder %s111, %s125
    %p127 = scmp.eq.s32.totalorder %s17, 0
    %p128 = por %p126, %p127
    %s129 = ssub.s32 %s11, %s18
    %p130 = scmp.eq.s32.totalorder %s129, 0
    %s132 = sadd.s32 %s131, 1
    %s133 = scalar_select %p130, %s131, %s132
    %p136 = pneg %p130
    %p137 = scmp.eq.s32.totalorder %s11, 1
    %p138 = por %p136, %p137
    %p139 = scmp.ne.s32.totalorder %s131, %s134
    %p140 = scmp.eq.s32.totalorder %s11, 0
    %p141 = por %p139, %p140
    %p142 = scmp.ne.s32.totalorder %s131, %s134
    %p143 = scmp.eq.s32.totalorder %s16, 1
    %p144 = por %p142, %p143
    %p145 = scmp.ne.s32.totalorder %s134, %s135
    %p146 = scmp.eq.s32.totalorder %s16, 0
    %p147 = por %p145, %p146
    %p148 = scmp.ne.s32.totalorder %s134, %s135
    %p149 = scmp.eq.s32.totalorder %s17, 1
    %p150 = por %p148, %p149
    %p152 = scmp.ne.s32.totalorder %s135, %s151
    %p153 = scmp.eq.s32.totalorder %s17, 0
    %p154 = por %p152, %p153
    %p155 = scmp.le.s32.totalorder 1, %s11
    %p156 = scmp.lt.s32.totalorder %s11, 3
    %p157 = pnand %p155, %p156
    %p158 = pneg %p157
    // Predicated region
    $region9: #{two_stage_attention.1} parent=5 // pred_check
      _
    $region10: #{two_stage_attention.1} parent=5 // pred_check_branch
      %160 = sbr.rel (%p157) target = $region12
    $region11: #{two_stage_attention.1} parent=5 // pred_region
      %s161 = ssub.s32 %s11, 1
      // Predicated region
      $region13: #{two_stage_attention.1} parent=11 // pred_check
        %p162 = pneg %p58
      $region14: #{two_stage_attention.1} parent=11 // pred_check_branch
        %164 = sbr.rel (%p162) target = $region16
      $region15: #{two_stage_attention.1} parent=11 // pred_region
        _
      $region16: #{two_stage_attention.1} parent=11 // pred_fallthru
        _
      // Predicated region
      $region17: #{two_stage_attention.1} parent=11 // pred_check
        %p165 = pneg %p79
      $region18: #{two_stage_attention.1} parent=11 // pred_check_branch
        %167 = sbr.rel (%p165) target = $region20
      $region19: #{two_stage_attention.1} parent=11 // pred_region
        _
      $region20: #{two_stage_attention.1} parent=11 // pred_fallthru
        _
      // Predicated region
      $region21: #{two_stage_attention.1} parent=11 // pred_check
        %p168 = pneg %p100
      $region22: #{two_stage_attention.1} parent=11 // pred_check_branch
        %170 = sbr.rel (%p168) target = $region24
      $region23: #{two_stage_attention.1} parent=11 // pred_region
        _
      $region24: #{two_stage_attention.1} parent=11 // pred_fallthru
        _
      // Predicated region
      $region25: #{two_stage_attention.1} parent=11 // pred_check
        %p171 = pneg %p121
      $region26: #{two_stage_attention.1} parent=11 // pred_check_branch
        %173 = sbr.rel (%p171) target = $region28
      $region27: #{two_stage_attention.1} parent=11 // pred_region
        _
      $region28: #{two_stage_attention.1} parent=11 // pred_fallthru
        _
    $region12: #{two_stage_attention.1} parent=5 // pred_fallthru
      _
    %p174 = scmp.lt.s32.totalorder %s11, 2
    // Predicated region
    $region29: #{two_stage_attention.1} parent=5 // pred_check
      %p175 = pneg %p174
    $region30: #{two_stage_attention.1} parent=5 // pred_check_branch
      %177 = sbr.rel (%p175) target = $region32
    $region31: #{two_stage_attention.1} parent=5 // pred_region
      // Predicated region
      $region33: #{two_stage_attention.1} parent=31 // pred_check
        %p178 = pneg %p31
      $region34: #{two_stage_attention.1} parent=31 // pred_check_branch
        %180 = sbr.rel (%p178) target = $region36
      $region35: #{two_stage_attention.1} parent=31 // pred_region
        %p181 = scmp.lt.s32.totalorder %s11, 1
        %s182 = scalar_select %p181, %s11, 1
        %s183 = smul.addr %s182, 4
        %s184 = smul.addr %s183, 8
        %s185 = scalar_lea.vmem %s0, %s184
      $region36: #{two_stage_attention.1} parent=31 // pred_fallthru
        _
    $region32: #{two_stage_attention.1} parent=5 // pred_fallthru
      _
    %p186 = scmp.le.s32.totalorder 1, %s11
    %p187 = scmp.lt.s32.totalorder %s11, 3
    %p188 = pnand %p186, %p187
    %p189 = pneg %p188
    // Predicated region
    $region37: #{two_stage_attention.1} parent=5 // pred_check
      _
    $region38: #{two_stage_attention.1} parent=5 // pred_check_branch
      %191 = sbr.rel (%p188) target = $region40
    $region39: #{two_stage_attention.1} parent=5 // pred_region
      %s192 = ssub.s32 %s11, 1
      %p193 = scmp.lt.s32.totalorder %s16, 1
      %s194 = scalar_select %p193, %s16, 1
      %s195 = smul.addr %s194, 4
      %s196 = smul.addr %s195, 8
      %s197 = scalar_lea.vmem %s0, %s196
      %p198 = pneg %p37
      %p199 = pneg %p34
      %p200 = pneg %p58
      %p201 = pneg %p55
      %p202 = pneg %p79
      %p203 = pneg %p76
      %p204 = pneg %p100
      %p205 = pneg %p97
      %p206 = pneg %p121
      %p207 = pneg %p118
      %p208 = pneg %p147
      %p209 = pneg %p144
      %p210 = scmp.lt.s32.totalorder %s16, 1
      %s211 = scalar_select %p210, %s16, 1
      %s212 = smul.addr %s211, 4
      %s213 = smul.addr %s212, 8
      %s214 = scalar_lea.vmem %s5, %s213
      %p215 = scmp.lt.s32.totalorder %s16, 1
      %s216 = scalar_select %p215, %s16, 1
      %s217 = smul.addr %s216, 4
      %s218 = smul.addr %s217, 8
      %s219 = scalar_lea.vmem %s0, %s218
      %p220 = scmp.lt.s32.totalorder %s16, 1
      %s221 = scalar_select %p220, %s16, 1
      %s222 = smul.addr %s221, 4
      %s223 = smul.addr %s222, 8
      %s224 = scalar_lea.vmem %s5, %s223
      %v226 = vld [vmem:[%s219] sm:$0xff]
      %v227 = vld [vmem:[%s219 + $0x8] sm:$0xff]
      %v228 = vld [vmem:[%s219 + $0x10] sm:$0xff]
      %v229 = vld [vmem:[%s219 + $0x18] sm:$0xff]
      %v230 = vpack.c.bf16 %v227, %v226
      %v231 = vpack.c.bf16 %v229, %v228
      %v232 = vld [vmem:[%s2] sm:$0xf]
      %v233 = vld [vmem:[%s2 + $0x14] sm:$0xf]
      %v234 = vld [vmem:[%s2 + $0x28] sm:$0xf]
      %v235 = vld [vmem:[%s2 + $0x3c] sm:$0xf]
      %v236 = vld [vmem:[%s4] sm:$0x1]
      %v238 = vlaneseq
      %v239 = vshrl.u32 %v238, 7
      %v240 = vsub.s32 0, %v239
      %v241 = vrot.slane %v236, %v240
      %v247 = vunpack.c.l.b16 %v232
      %v248 = vunpack.c.l.b16 %v233
      %v249 = vunpack.c.l.b16 %v234
      %v250 = vunpack.c.l.b16 %v235
      %v251 = vpack.c.b16 %v248, %v247
      %v252 = vpack.c.b16 %v250, %v249
      %vm255 = vcmask 261120
      %v257 = vsel %vm255, %v230, 0
      %v260 = vsel %vm255, %v231, 0
      %262 = vmatprep.subr.bf16.mxu0 0
      %263 = vmatpush1.bf16.msra.mxu0 %v251
      %264 = vmatprep.subr.bf16.mxu0 0
      %265 = vmatpush1.bf16.msra.mxu0 %v252
      %266 = vmatprep.subr.bf16.mxu0 0
      %267 = vmatpush1.bf16.msra.mxu0 0
      %268 = vmatprep.subr.bf16.mxu0 0
      %269 = vmatpush1.bf16.msra.mxu0 0
      %270 = vmatprep.subr.bf16.mxu0 0
      %271 = vmatpush1.bf16.msra.mxu0 0
      %272 = vmatprep.subr.bf16.mxu0 0
      %273 = vmatpush1.bf16.msra.mxu0 0
      %274 = vmatprep.subr.bf16.mxu0 0
      %275 = vmatpush1.bf16.msra.mxu0 0
      %276 = vmatprep.subr.bf16.mxu0 0
      %277 = vmatpush1.bf16.msra.mxu0 0
      %278 = vmatprep.subr.bf16.mxu0 0
      %279 = vmatpush1.bf16.msra.mxu0 0
      %280 = vmatprep.subr.bf16.mxu0 0
      %281 = vmatpush1.bf16.msra.mxu0 0
      %282 = vmatprep.subr.bf16.mxu0 0
      %283 = vmatpush1.bf16.msra.mxu0 0
      %284 = vmatprep.subr.bf16.mxu0 0
      %285 = vmatpush1.bf16.msra.mxu0 0
      %286 = vmatprep.subr.bf16.mxu0 0
      %287 = vmatpush1.bf16.msra.mxu0 0
      %288 = vmatprep.subr.bf16.mxu0 0
      %289 = vmatpush1.bf16.msra.mxu0 0
      %290 = vmatprep.subr.bf16.mxu0 0
      %291 = vmatpush1.bf16.msra.mxu0 0
      %292 = vmatprep.subr.bf16.mxu0 0
      %293 = vmatpush1.bf16.msra.mxu0 0
      %294 = vmatprep.mubr.bf16.mxu0 0
      %295 = vmatmul.mubr.bf16.gmra.mrb[0].mxu0 %v257
      %v296 = vpop.f32.mrb[0].mxu0
      %v297 = vadd.f32 %v241, %v296
      %v298 = vpop.f32.mrb[0].mxu0
      %v299 = vpop.f32.mrb[0].mxu0
      %v300 = vadd.f32 %v241, %v299
      %v301 = vpop.f32.mrb[0].mxu0
      %302 = vmatprep.mubr.bf16.mxu0 0
      %303 = vmatmul.mubr.bf16.gmra.mrb[0].mxu0 %v260
      %v304 = vpop.f32.mrb[0].mxu0
      %v305 = vadd.f32 %v241, %v304
      %v306 = vpop.f32.mrb[0].mxu0
      %v307 = vpop.f32.mrb[0].mxu0
      %v308 = vadd.f32 %v241, %v307
      %v309 = vpop.f32.mrb[0].mxu0
      %310 = vdwg.mxu0
      %315 = vrot.lane.b32.xlu0 %v297, 120
      %v316 = vpop.permute.xlu0 %315
      %317 = vrot.lane.b32.xlu0 %v300, 120
      %v318 = vpop.permute.xlu0 %317
      %319 = vrot.lane.b32.xlu0 %v305, 120
      %v320 = vpop.permute.xlu0 %319
      %321 = vrot.lane.b32.xlu0 %v308, 120
      %v322 = vpop.permute.xlu0 %321
      %327 = vrot.lane.b32.xlu0 %v297, 112
      %v328 = vpop.permute.xlu0 %327
      %329 = vrot.lane.b32.xlu0 %v300, 112
      %v330 = vpop.permute.xlu0 %329
      %331 = vrot.lane.b32.xlu0 %v305, 112
      %v332 = vpop.permute.xlu0 %331
      %333 = vrot.lane.b32.xlu0 %v308, 112
      %v334 = vpop.permute.xlu0 %333
      %339 = vrot.lane.b32.xlu0 %v297, 104
      %v340 = vpop.permute.xlu0 %339
      %341 = vrot.lane.b32.xlu0 %v300, 104
      %v342 = vpop.permute.xlu0 %341
      %343 = vrot.lane.b32.xlu0 %v305, 104
      %v344 = vpop.permute.xlu0 %343
      %345 = vrot.lane.b32.xlu0 %v308, 104
      %v346 = vpop.permute.xlu0 %345
      %v351 = vpack.c.bf16 %v297, %v297
      %v352 = vpack.c.bf16 %v300, %v300
      %v353 = vpack.c.bf16 %v305, %v305
      %v354 = vpack.c.bf16 %v308, %v308
      %v355 = vpack.c.bf16 %v316, %v316
      %v356 = vpack.c.bf16 %v318, %v318
      %v357 = vpack.c.bf16 %v320, %v320
      %v358 = vpack.c.bf16 %v322, %v322
      %v359 = vpack.c.bf16 %v328, %v328
      %v360 = vpack.c.bf16 %v330, %v330
      %v361 = vpack.c.bf16 %v332, %v332
      %v362 = vpack.c.bf16 %v334, %v334
      %v363 = vpack.c.bf16 %v340, %v340
      %v364 = vpack.c.bf16 %v342, %v342
      %v365 = vpack.c.bf16 %v344, %v344
      %v366 = vpack.c.bf16 %v346, %v346
      %368 = vrot.lane.b32.xlu0 %v351, 96
      %v369 = vpop.permute.xlu0 %368
      %vm370 = vcmask 64512
      %v372 = vsel %vm370, %v351, 0
      %v375 = vsel %vm370, %v369, 0
      %377 = vmatprep.subr.bf16.mxu0 0
      %378 = vmatpush1.bf16.xpose.msra.mxu0 %v375
      %379 = vmatprep.subr.bf16.mxu0 0
      %380 = vmatpush1.bf16.xpose.msra.mxu0 0
      %381 = vmatprep.subr.bf16.mxu0 0
      %382 = vmatpush1.bf16.xpose.msra.mxu0 0
      %383 = vmatprep.subr.bf16.mxu0 0
      %384 = vmatpush1.bf16.xpose.msra.mxu0 0
      %385 = vmatprep.subr.bf16.mxu0 0
      %386 = vmatpush1.bf16.xpose.msra.mxu0 0
      %387 = vmatprep.subr.bf16.mxu0 0
      %388 = vmatpush1.bf16.xpose.msra.mxu0 0
      %389 = vmatprep.subr.bf16.mxu0 0
      %390 = vmatpush1.bf16.xpose.msra.mxu0 0
      %391 = vmatprep.subr.bf16.mxu0 0
      %392 = vmatpush1.bf16.xpose.msra.mxu0 0
      %393 = vmatprep.subr.bf16.mxu0 0
      %394 = vmatpush1.bf16.xpose.msra.mxu0 0
      %395 = vmatprep.subr.bf16.mxu0 0
      %396 = vmatpush1.bf16.xpose.msra.mxu0 0
      %397 = vmatprep.subr.bf16.mxu0 0
      %398 = vmatpush1.bf16.xpose.msra.mxu0 0
      %399 = vmatprep.subr.bf16.mxu0 0
      %400 = vmatpush1.bf16.xpose.msra.mxu0 0
      %401 = vmatprep.subr.bf16.mxu0 0
      %402 = vmatpush1.bf16.xpose.msra.mxu0 0
      %403 = vmatprep.subr.bf16.mxu0 0
      %404 = vmatpush1.bf16.xpose.msra.mxu0 0
      %405 = vmatprep.subr.bf16.mxu0 0
      %406 = vmatpush1.bf16.xpose.msra.mxu0 0
      %407 = vmatprep.subr.bf16.mxu0 0
      %408 = vmatpush1.bf16.xpose.msra.mxu0 0
      %409 = vmatprep.mubr.bf16.mxu0 0
      %410 = vmatmul.mubr.bf16.gmra.mrb[0].mxu0 %v372
      %v411 = vpop.f32.mrb[0].mxu0
      %v412 = vadd.f32 0.0, %v411
      %v413 = vpop.f32.mrb[0].mxu0
      %v414 = vpop.f32.mrb[0].mxu0
      %v415 = vpop.f32.mrb[0].mxu0
      %416 = vdwg.mxu0
      %418 = vrot.lane.b32.xlu0 %v352, 96
      %v419 = vpop.permute.xlu0 %418
      %v421 = vsel %vm370, %v352, 0
      %v424 = vsel %vm370, %v419, 0
      %426 = vmatprep.subr.bf16.mxu0 0
      %427 = vmatpush1.bf16.xpose.msra.mxu0 %v424
      %428 = vmatprep.subr.bf16.mxu0 0
      %429 = vmatpush1.bf16.xpose.msra.mxu0 0
      %430 = vmatprep.subr.bf16.mxu0 0
      %431 = vmatpush1.bf16.xpose.msra.mxu0 0
      %432 = vmatprep.subr.bf16.mxu0 0
      %433 = vmatpush1.bf16.xpose.msra.mxu0 0
      %434 = vmatprep.subr.bf16.mxu0 0
      %435 = vmatpush1.bf16.xpose.msra.mxu0 0
      %436 = vmatprep.subr.bf16.mxu0 0
      %437 = vmatpush1.bf16.xpose.msra.mxu0 0
      %438 = vmatprep.subr.bf16.mxu0 0
      %439 = vmatpush1.bf16.xpose.msra.mxu0 0
      %440 = vmatprep.subr.bf16.mxu0 0
      %441 = vmatpush1.bf16.xpose.msra.mxu0 0
      %442 = vmatprep.subr.bf16.mxu0 0
      %443 = vmatpush1.bf16.xpose.msra.mxu0 0
      %444 = vmatprep.subr.bf16.mxu0 0
      %445 = vmatpush1.bf16.xpose.msra.mxu0 0
      %446 = vmatprep.subr.bf16.mxu0 0
      %447 = vmatpush1.bf16.xpose.msra.mxu0 0
      %448 = vmatprep.subr.bf16.mxu0 0
      %449 = vmatpush1.bf16.xpose.msra.mxu0 0
      %450 = vmatprep.subr.bf16.mxu0 0
      %451 = vmatpush1.bf16.xpose.msra.mxu0 0
      %452 = vmatprep.subr.bf16.mxu0 0
      %453 = vmatpush1.bf16.xpose.msra.mxu0 0
      %454 = vmatprep.subr.bf16.mxu0 0
      %455 = vmatpush1.bf16.xpose.msra.mxu0 0
      %456 = vmatprep.subr.bf16.mxu0 0
      %457 = vmatpush1.bf16.xpose.msra.mxu0 0
      %458 = vmatprep.mubr.bf16.mxu0 0
      %459 = vmatmul.mubr.bf16.gmra.mrb[0].mxu0 %v421
      %v460 = vpop.f32.mrb[0].mxu0
      %v461 = vadd.f32 0.0, %v460
      %v462 = vpop.f32.mrb[0].mxu0
      %v463 = vpop.f32.mrb[0].mxu0
      %v464 = vpop.f32.mrb[0].mxu0
      %465 = vdwg.mxu0
      %467 = vrot.lane.b32.xlu0 %v353, 96
      %v468 = vpop.permute.xlu0 %467
      %v470 = vsel %vm370, %v353, 0
      %v473 = vsel %vm370, %v468, 0
      %475 = vmatprep.subr.bf16.mxu0 0
      %476 = vmatpush1.bf16.xpose.msra.mxu0 %v473
      %477 = vmatprep.subr.bf16.mxu0 0
      %478 = vmatpush1.bf16.xpose.msra.mxu0 0
      %479 = vmatprep.subr.bf16.mxu0 0
      %480 = vmatpush1.bf16.xpose.msra.mxu0 0
      %481 = vmatprep.subr.bf16.mxu0 0
      %482 = vmatpush1.bf16.xpose.msra.mxu0 0
      %483 = vmatprep.subr.bf16.mxu0 0
      %484 = vmatpush1.bf16.xpose.msra.mxu0 0
      %485 = vmatprep.subr.bf16.mxu0 0
      %486 = vmatpush1.bf16.xpose.msra.mxu0 0
      %487 = vmatprep.subr.bf16.mxu0 0
      %488 = vmatpush1.bf16.xpose.msra.mxu0 0
      %489 = vmatprep.subr.bf16.mxu0 0
      %490 = vmatpush1.bf16.xpose.msra.mxu0 0
      %491 = vmatprep.subr.bf16.mxu0 0
      %492 = vmatpush1.bf16.xpose.msra.mxu0 0
      %493 = vmatprep.subr.bf16.mxu0 0
      %494 = vmatpush1.bf16.xpose.msra.mxu0 0
      %495 = vmatprep.subr.bf16.mxu0 0
      %496 = vmatpush1.bf16.xpose.msra.mxu0 0
      %497 = vmatprep.subr.bf16.mxu0 0
      %498 = vmatpush1.bf16.xpose.msra.mxu0 0
      %499 = vmatprep.subr.bf16.mxu0 0
      %500 = vmatpush1.bf16.xpose.msra.mxu0 0
      %501 = vmatprep.subr.bf16.mxu0 0
      %502 = vmatpush1.bf16.xpose.msra.mxu0 0
      %503 = vmatprep.subr.bf16.mxu0 0
      %504 = vmatpush1.bf16.xpose.msra.mxu0 0
      %505 = vmatprep.subr.bf16.mxu0 0
      %506 = vmatpush1.bf16.xpose.msra.mxu0 0
      %507 = vmatprep.mubr.bf16.mxu0 0
      %508 = vmatmul.mubr.bf16.gmra.mrb[0].mxu0 %v470
      %v509 = vpop.f32.mrb[0].mxu0
      %v510 = vadd.f32 0.0, %v509
      %v511 = vpop.f32.mrb[0].mxu0
      %v512 = vpop.f32.mrb[0].mxu0
      %v513 = vpop.f32.mrb[0].mxu0
      %514 = vdwg.mxu0
      %516 = vrot.lane.b32.xlu0 %v354, 96
      %v517 = vpop.permute.xlu0 %516
      %v519 = vsel %vm370, %v354, 0
      %v522 = vsel %vm370, %v517, 0
      %524 = vmatprep.subr.bf16.mxu0 0
      %525 = vmatpush1.bf16.xpose.msra.mxu0 %v522
      %526 = vmatprep.subr.bf16.mxu0 0
      %527 = vmatpush1.bf16.xpose.msra.mxu0 0
      %528 = vmatprep.subr.bf16.mxu0 0
      %529 = vmatpush1.bf16.xpose.msra.mxu0 0
      %530 = vmatprep.subr.bf16.mxu0 0
      %531 = vmatpush1.bf16.xpose.msra.mxu0 0
      %532 = vmatprep.subr.bf16.mxu0 0
      %533 = vmatpush1.bf16.xpose.msra.mxu0 0
      %534 = vmatprep.subr.bf16.mxu0 0
      %535 = vmatpush1.bf16.xpose.msra.mxu0 0
      %536 = vmatprep.subr.bf16.mxu0 0
      %537 = vmatpush1.bf16.xpose.msra.mxu0 0
      %538 = vmatprep.subr.bf16.mxu0 0
      %539 = vmatpush1.bf16.xpose.msra.mxu0 0
      %540 = vmatprep.subr.bf16.mxu0 0
      %541 = vmatpush1.bf16.xpose.msra.mxu0 0
      %542 = vmatprep.subr.bf16.mxu0 0
      %543 = vmatpush1.bf16.xpose.msra.mxu0 0
      %544 = vmatprep.subr.bf16.mxu0 0
      %545 = vmatpush1.bf16.xpose.msra.mxu0 0
      %546 = vmatprep.subr.bf16.mxu0 0
      %547 = vmatpush1.bf16.xpose.msra.mxu0 0
      %548 = vmatprep.subr.bf16.mxu0 0
      %549 = vmatpush1.bf16.xpose.msra.mxu0 0
      %550 = vmatprep.subr.bf16.mxu0 0
      %551 = vmatpush1.bf16.xpose.msra.mxu0 0
      %552 = vmatprep.subr.bf16.mxu0 0
      %553 = vmatpush1.bf16.xpose.msra.mxu0 0
      %554 = vmatprep.subr.bf16.mxu0 0
      %555 = vmatpush1.bf16.xpose.msra.mxu0 0
      %556 = vmatprep.mubr.bf16.mxu0 0
      %557 = vmatmul.mubr.bf16.gmra.mrb[0].mxu0 %v519
      %v558 = vpop.f32.mrb[0].mxu0
      %v559 = vadd.f32 0.0, %v558
      %v560 = vpop.f32.mrb[0].mxu0
      %v561 = vpop.f32.mrb[0].mxu0
      %v562 = vpop.f32.mrb[0].mxu0
      %563 = vdwg.mxu0
      %565 = vrot.lane.b32.xlu0 %v355, 96
      %v566 = vpop.permute.xlu0 %565
      %v568 = vsel %vm370, %v355, 0
      %v571 = vsel %vm370, %v566, 0
      %573 = vmatprep.subr.bf16.mxu0 0
      %574 = vmatpush1.bf16.xpose.msra.mxu0 %v571
      %575 = vmatprep.subr.bf16.mxu0 0
      %576 = vmatpush1.bf16.xpose.msra.mxu0 0
      %577 = vmatprep.subr.bf16.mxu0 0
      %578 = vmatpush1.bf16.xpose.msra.mxu0 0
      %579 = vmatprep.subr.bf16.mxu0 0
      %580 = vmatpush1.bf16.xpose.msra.mxu0 0
      %581 = vmatprep.subr.bf16.mxu0 0
      %582 = vmatpush1.bf16.xpose.msra.mxu0 0
      %583 = vmatprep.subr.bf16.mxu0 0
      %584 = vmatpush1.bf16.xpose.msra.mxu0 0
      %585 = vmatprep.subr.bf16.mxu0 0
      %586 = vmatpush1.bf16.xpose.msra.mxu0 0
      %587 = vmatprep.subr.bf16.mxu0 0
      %588 = vmatpush1.bf16.xpose.msra.mxu0 0
      %589 = vmatprep.subr.bf16.mxu0 0
      %590 = vmatpush1.bf16.xpose.msra.mxu0 0
      %591 = vmatprep.subr.bf16.mxu0 0
      %592 = vmatpush1.bf16.xpose.msra.mxu0 0
      %593 = vmatprep.subr.bf16.mxu0 0
      %594 = vmatpush1.bf16.xpose.msra.mxu0 0
      %595 = vmatprep.subr.bf16.mxu0 0
      %596 = vmatpush1.bf16.xpose.msra.mxu0 0
      %597 = vmatprep.subr.bf16.mxu0 0
      %598 = vmatpush1.bf16.xpose.msra.mxu0 0
      %599 = vmatprep.subr.bf16.mxu0 0
      %600 = vmatpush1.bf16.xpose.msra.mxu0 0
      %601 = vmatprep.subr.bf16.mxu0 0
      %602 = vmatpush1.bf16.xpose.msra.mxu0 0
      %603 = vmatprep.subr.bf16.mxu0 0
      %604 = vmatpush1.bf16.xpose.msra.mxu0 0
      %605 = vmatprep.mubr.bf16.mxu0 0
      %606 = vmatmul.mubr.bf16.gmra.mrb[0].mxu0 %v568
      %v607 = vpop.f32.mrb[0].mxu0
      %v608 = vadd.f32 0.0, %v607
      %v609 = vpop.f32.mrb[0].mxu0
      %v610 = vpop.f32.mrb[0].mxu0
      %v611 = vpop.f32.mrb[0].mxu0
      %612 = vdwg.mxu0
      %614 = vrot.lane.b32.xlu0 %v356, 96
      %v615 = vpop.permute.xlu0 %614
      %v617 = vsel %vm370, %v356, 0
      %v620 = vsel %vm370, %v615, 0
      %622 = vmatprep.subr.bf16.mxu0 0
      %623 = vmatpush1.bf16.xpose.msra.mxu0 %v620
      %624 = vmatprep.subr.bf16.mxu0 0
      %625 = vmatpush1.bf16.xpose.msra.mxu0 0
      %626 = vmatprep.subr.bf16.mxu0 0
      %627 = vmatpush1.bf16.xpose.msra.mxu0 0
      %628 = vmatprep.subr.bf16.mxu0 0
      %629 = vmatpush1.bf16.xpose.msra.mxu0 0
      %630 = vmatprep.subr.bf16.mxu0 0
      %631 = vmatpush1.bf16.xpose.msra.mxu0 0
      %632 = vmatprep.subr.bf16.mxu0 0
      %633 = vmatpush1.bf16.xpose.msra.mxu0 0
      %634 = vmatprep.subr.bf16.mxu0 0
      %635 = vmatpush1.bf16.xpose.msra.mxu0 0
      %636 = vmatprep.subr.bf16.mxu0 0
      %637 = vmatpush1.bf16.xpose.msra.mxu0 0
      %638 = vmatprep.subr.bf16.mxu0 0
      %639 = vmatpush1.bf16.xpose.msra.mxu0 0
      %640 = vmatprep.subr.bf16.mxu0 0
      %641 = vmatpush1.bf16.xpose.msra.mxu0 0
      %642 = vmatprep.subr.bf16.mxu0 0
      %643 = vmatpush1.bf16.xpose.msra.mxu0 0
      %644 = vmatprep.subr.bf16.mxu0 0
      %645 = vmatpush1.bf16.xpose.msra.mxu0 0
      %646 = vmatprep.subr.bf16.mxu0 0
      %647 = vmatpush1.bf16.xpose.msra.mxu0 0
      %648 = vmatprep.subr.bf16.mxu0 0
      %649 = vmatpush1.bf16.xpose.msra.mxu0 0
      %650 = vmatprep.subr.bf16.mxu0 0
      %651 = vmatpush1.bf16.xpose.msra.mxu0 0
      %652 = vmatprep.subr.bf16.mxu0 0
      %653 = vmatpush1.bf16.xpose.msra.mxu0 0
      %654 = vmatprep.mubr.bf16.mxu0 0
      %655 = vmatmul.mubr.bf16.gmra.mrb[0].mxu0 %v617
      %v656 = vpop.f32.mrb[0].mxu0
      %v657 = vadd.f32 0.0, %v656
      %v658 = vpop.f32.mrb[0].mxu0
      %v659 = vpop.f32.mrb[0].mxu0
      %v660 = vpop.f32.mrb[0].mxu0
      %661 = vdwg.mxu0
      %663 = vrot.lane.b32.xlu0 %v357, 96
      %v664 = vpop.permute.xlu0 %663
      %v666 = vsel %vm370, %v357, 0
      %v669 = vsel %vm370, %v664, 0
      %671 = vmatprep.subr.bf16.mxu0 0
      %672 = vmatpush1.bf16.xpose.msra.mxu0 %v669
      %673 = vmatprep.subr.bf16.mxu0 0
      %674 = vmatpush1.bf16.xpose.msra.mxu0 0
      %675 = vmatprep.subr.bf16.mxu0 0
      %676 = vmatpush1.bf16.xpose.msra.mxu0 0
      %677 = vmatprep.subr.bf16.mxu0 0
      %678 = vmatpush1.bf16.xpose.msra.mxu0 0
      %679 = vmatprep.subr.bf16.mxu0 0
      %680 = vmatpush1.bf16.xpose.msra.mxu0 0
      %681 = vmatprep.subr.bf16.mxu0 0
      %682 = vmatpush1.bf16.xpose.msra.mxu0 0
      %683 = vmatprep.subr.bf16.mxu0 0
      %684 = vmatpush1.bf16.xpose.msra.mxu0 0
      %685 = vmatprep.subr.bf16.mxu0 0
      %686 = vmatpush1.bf16.xpose.msra.mxu0 0
      %687 = vmatprep.subr.bf16.mxu0 0
      %688 = vmatpush1.bf16.xpose.msra.mxu0 0
      %689 = vmatprep.subr.bf16.mxu0 0
      %690 = vmatpush1.bf16.xpose.msra.mxu0 0
      %691 = vmatprep.subr.bf16.mxu0 0
      %692 = vmatpush1.bf16.xpose.msra.mxu0 0
      %693 = vmatprep.subr.bf16.mxu0 0
      %694 = vmatpush1.bf16.xpose.msra.mxu0 0
      %695 = vmatprep.subr.bf16.mxu0 0
      %696 = vmatpush1.bf16.xpose.msra.mxu0 0
      %697 = vmatprep.subr.bf16.mxu0 0
      %698 = vmatpush1.bf16.xpose.msra.mxu0 0
      %699 = vmatprep.subr.bf16.mxu0 0
      %700 = vmatpush1.bf16.xpose.msra.mxu0 0
      %701 = vmatprep.subr.bf16.mxu0 0
      %702 = vmatpush1.bf16.xpose.msra.mxu0 0
      %703 = vmatprep.mubr.bf16.mxu0 0
      %704 = vmatmul.mubr.bf16.gmra.mrb[0].mxu0 %v666
      %v705 = vpop.f32.mrb[0].mxu0
      %v706 = vadd.f32 0.0, %v705
      %v707 = vpop.f32.mrb[0].mxu0
      %v708 = vpop.f32.mrb[0].mxu0
      %v709 = vpop.f32.mrb[0].mxu0
      %710 = vdwg.mxu0
      %712 = vrot.lane.b32.xlu0 %v358, 96
      %v713 = vpop.permute.xlu0 %712
      %v715 = vsel %vm370, %v358, 0
      %v718 = vsel %vm370, %v713, 0
      %720 = vmatprep.subr.bf16.mxu0 0
      %721 = vmatpush1.bf16.xpose.msra.mxu0 %v718
      %722 = vmatprep.subr.bf16.mxu0 0
      %723 = vmatpush1.bf16.xpose.msra.mxu0 0
      %724 = vmatprep.subr.bf16.mxu0 0
      %725 = vmatpush1.bf16.xpose.msra.mxu0 0
      %726 = vmatprep.subr.bf16.mxu0 0
      %727 = vmatpush1.bf16.xpose.msra.mxu0 0
      %728 = vmatprep.subr.bf16.mxu0 0
      %729 = vmatpush1.bf16.xpose.msra.mxu0 0
      %730 = vmatprep.subr.bf16.mxu0 0
      %731 = vmatpush1.bf16.xpose.msra.mxu0 0
      %732 = vmatprep.subr.bf16.mxu0 0
      %733 = vmatpush1.bf16.xpose.msra.mxu0 0
      %734 = vmatprep.subr.bf16.mxu0 0
      %735 = vmatpush1.bf16.xpose.msra.mxu0 0
      %736 = vmatprep.subr.bf16.mxu0 0
      %737 = vmatpush1.bf16.xpose.msra.mxu0 0
      %738 = vmatprep.subr.bf16.mxu0 0
      %739 = vmatpush1.bf16.xpose.msra.mxu0 0
      %740 = vmatprep.subr.bf16.mxu0 0
      %741 = vmatpush1.bf16.xpose.msra.mxu0 0
      %742 = vmatprep.subr.bf16.mxu0 0
      %743 = vmatpush1.bf16.xpose.msra.mxu0 0
      %744 = vmatprep.subr.bf16.mxu0 0
      %745 = vmatpush1.bf16.xpose.msra.mxu0 0
      %746 = vmatprep.subr.bf16.mxu0 0
      %747 = vmatpush1.bf16.xpose.msra.mxu0 0
      %748 = vmatprep.subr.bf16.mxu0 0
      %749 = vmatpush1.bf16.xpose.msra.mxu0 0
      %750 = vmatprep.subr.bf16.mxu0 0
      %751 = vmatpush1.bf16.xpose.msra.mxu0 0
      %752 = vmatprep.mubr.bf16.mxu0 0
      %753 = vmatmul.mubr.bf16.gmra.mrb[0].mxu0 %v715
      %v754 = vpop.f32.mrb[0].mxu0
      %v755 = vadd.f32 0.0, %v754
      %v756 = vpop.f32.mrb[0].mxu0
      %v757 = vpop.f32.mrb[0].mxu0
      %v758 = vpop.f32.mrb[0].mxu0
      %759 = vdwg.mxu0
      %761 = vrot.lane.b32.xlu0 %v359, 96
      %v762 = vpop.permute.xlu0 %761
      %v764 = vsel %vm370, %v359, 0
      %v767 = vsel %vm370, %v762, 0
      %769 = vmatprep.subr.bf16.mxu0 0
      %770 = vmatpush1.bf16.xpose.msra.mxu0 %v767
      %771 = vmatprep.subr.bf16.mxu0 0
      %772 = vmatpush1.bf16.xpose.msra.mxu0 0
      %773 = vmatprep.subr.bf16.mxu0 0
      %774 = vmatpush1.bf16.xpose.msra.mxu0 0
      %775 = vmatprep.subr.bf16.mxu0 0
      %776 = vmatpush1.bf16.xpose.msra.mxu0 0
      %777 = vmatprep.subr.bf16.mxu0 0
      %778 = vmatpush1.bf16.xpose.msra.mxu0 0
      %779 = vmatprep.subr.bf16.mxu0 0
      %780 = vmatpush1.bf16.xpose.msra.mxu0 0
      %781 = vmatprep.subr.bf16.mxu0 0
      %782 = vmatpush1.bf16.xpose.msra.mxu0 0
      %783 = vmatprep.subr.bf16.mxu0 0
      %784 = vmatpush1.bf16.xpose.msra.mxu0 0
      %785 = vmatprep.subr.bf16.mxu0 0
      %786 = vmatpush1.bf16.xpose.msra.mxu0 0
      %787 = vmatprep.subr.bf16.mxu0 0
      %788 = vmatpush1.bf16.xpose.msra.mxu0 0
      %789 = vmatprep.subr.bf16.mxu0 0
      %790 = vmatpush1.bf16.xpose.msra.mxu0 0
      %791 = vmatprep.subr.bf16.mxu0 0
      %792 = vmatpush1.bf16.xpose.msra.mxu0 0
      %793 = vmatprep.subr.bf16.mxu0 0
      %794 = vmatpush1.bf16.xpose.msra.mxu0 0
      %795 = vmatprep.subr.bf16.mxu0 0
      %796 = vmatpush1.bf16.xpose.msra.mxu0 0
      %797 = vmatprep.subr.bf16.mxu0 0
      %798 = vmatpush1.bf16.xpose.msra.mxu0 0
      %799 = vmatprep.subr.bf16.mxu0 0
      %800 = vmatpush1.bf16.xpose.msra.mxu0 0
      %801 = vmatprep.mubr.bf16.mxu0 0
      %802 = vmatmul.mubr.bf16.gmra.mrb[0].mxu0 %v764
      %v803 = vpop.f32.mrb[0].mxu0
      %v804 = vadd.f32 0.0, %v803
      %v805 = vpop.f32.mrb[0].mxu0
      %v806 = vpop.f32.mrb[0].mxu0
      %v807 = vpop.f32.mrb[0].mxu0
      %808 = vdwg.mxu0
      %810 = vrot.lane.b32.xlu0 %v360, 96
      %v811 = vpop.permute.xlu0 %810
      %v813 = vsel %vm370, %v360, 0
      %v816 = vsel %vm370, %v811, 0
      %818 = vmatprep.subr.bf16.mxu0 0
      %819 = vmatpush1.bf16.xpose.msra.mxu0 %v816
      %820 = vmatprep.subr.bf16.mxu0 0
      %821 = vmatpush1.bf16.xpose.msra.mxu0 0
      %822 = vmatprep.subr.bf16.mxu0 0
      %823 = vmatpush1.bf16.xpose.msra.mxu0 0
      %824 = vmatprep.subr.bf16.mxu0 0
      %825 = vmatpush1.bf16.xpose.msra.mxu0 0
      %826 = vmatprep.subr.bf16.mxu0 0
      %827 = vmatpush1.bf16.xpose.msra.mxu0 0
      %828 = vmatprep.subr.bf16.mxu0 0
      %829 = vmatpush1.bf16.xpose.msra.mxu0 0
      %830 = vmatprep.subr.bf16.mxu0 0
      %831 = vmatpush1.bf16.xpose.msra.mxu0 0
      %832 = vmatprep.subr.bf16.mxu0 0
      %833 = vmatpush1.bf16.xpose.msra.mxu0 0
      %834 = vmatprep.subr.bf16.mxu0 0
      %835 = vmatpush1.bf16.xpose.msra.mxu0 0
      %836 = vmatprep.subr.bf16.mxu0 0
      %837 = vmatpush1.bf16.xpose.msra.mxu0 0
      %838 = vmatprep.subr.bf16.mxu0 0
      %839 = vmatpush1.bf16.xpose.msra.mxu0 0
      %840 = vmatprep.subr.bf16.mxu0 0
      %841 = vmatpush1.bf16.xpose.msra.mxu0 0
      %842 = vmatprep.subr.bf16.mxu0 0
      %843 = vmatpush1.bf16.xpose.msra.mxu0 0
      %844 = vmatprep.subr.bf16.mxu0 0
      %845 = vmatpush1.bf16.xpose.msra.mxu0 0
      %846 = vmatprep.subr.bf16.mxu0 0
      %847 = vmatpush1.bf16.xpose.msra.mxu0 0
      %848 = vmatprep.subr.bf16.mxu0 0
      %849 = vmatpush1.bf16.xpose.msra.mxu0 0
      %850 = vmatprep.mubr.bf16.mxu0 0
      %851 = vmatmul.mubr.bf16.gmra.mrb[0].mxu0 %v813
      %v852 = vpop.f32.mrb[0].mxu0
      %v853 = vadd.f32 0.0, %v852
      %v854 = vpop.f32.mrb[0].mxu0
      %v855 = vpop.f32.mrb[0].mxu0
      %v856 = vpop.f32.mrb[0].mxu0
      %857 = vdwg.mxu0
      %859 = vrot.lane.b32.xlu0 %v361, 96
      %v860 = vpop.permute.xlu0 %859
      %v862 = vsel %vm370, %v361, 0
      %v865 = vsel %vm370, %v860, 0
      %867 = vmatprep.subr.bf16.mxu0 0
      %868 = vmatpush1.bf16.xpose.msra.mxu0 %v865
      %869 = vmatprep.subr.bf16.mxu0 0
      %870 = vmatpush1.bf16.xpose.msra.mxu0 0
      %871 = vmatprep.subr.bf16.mxu0 0
      %872 = vmatpush1.bf16.xpose.msra.mxu0 0
      %873 = vmatprep.subr.bf16.mxu0 0
      %874 = vmatpush1.bf16.xpose.msra.mxu0 0
      %875 = vmatprep.subr.bf16.mxu0 0
      %876 = vmatpush1.bf16.xpose.msra.mxu0 0
      %877 = vmatprep.subr.bf16.mxu0 0
      %878 = vmatpush1.bf16.xpose.msra.mxu0 0
      %879 = vmatprep.subr.bf16.mxu0 0
      %880 = vmatpush1.bf16.xpose.msra.mxu0 0
      %881 = vmatprep.subr.bf16.mxu0 0
      %882 = vmatpush1.bf16.xpose.msra.mxu0 0
      %883 = vmatprep.subr.bf16.mxu0 0
      %884 = vmatpush1.bf16.xpose.msra.mxu0 0
      %885 = vmatprep.subr.bf16.mxu0 0
      %886 = vmatpush1.bf16.xpose.msra.mxu0 0
      %887 = vmatprep.subr.bf16.mxu0 0
      %888 = vmatpush1.bf16.xpose.msra.mxu0 0
      %889 = vmatprep.subr.bf16.mxu0 0
      %890 = vmatpush1.bf16.xpose.msra.mxu0 0
      %891 = vmatprep.subr.bf16.mxu0 0
      %892 = vmatpush1.bf16.xpose.msra.mxu0 0
      %893 = vmatprep.subr.bf16.mxu0 0
      %894 = vmatpush1.bf16.xpose.msra.mxu0 0
      %895 = vmatprep.subr.bf16.mxu0 0
      %896 = vmatpush1.bf16.xpose.msra.mxu0 0
      %897 = vmatprep.subr.bf16.mxu0 0
      %898 = vmatpush1.bf16.xpose.msra.mxu0 0
      %899 = vmatprep.mubr.bf16.mxu0 0
      %900 = vmatmul.mubr.bf16.gmra.mrb[0].mxu0 %v862
      %v901 = vpop.f32.mrb[0].mxu0
      %v902 = vadd.f32 0.0, %v901
      %v903 = vpop.f32.mrb[0].mxu0
      %v904 = vpop.f32.mrb[0].mxu0
      %v905 = vpop.f32.mrb[0].mxu0
      %906 = vdwg.mxu0
      %908 = vrot.lane.b32.xlu0 %v362, 96
      %v909 = vpop.permute.xlu0 %908
      %v911 = vsel %vm370, %v362, 0
      %v914 = vsel %vm370, %v909, 0
      %916 = vmatprep.subr.bf16.mxu0 0
      %917 = vmatpush1.bf16.xpose.msra.mxu0 %v914
      %918 = vmatprep.subr.bf16.mxu0 0
      %919 = vmatpush1.bf16.xpose.msra.mxu0 0
      %920 = vmatprep.subr.bf16.mxu0 0
      %921 = vmatpush1.bf16.xpose.msra.mxu0 0
      %922 = vmatprep.subr.bf16.mxu0 0
      %923 = vmatpush1.bf16.xpose.msra.mxu0 0
      %924 = vmatprep.subr.bf16.mxu0 0
      %925 = vmatpush1.bf16.xpose.msra.mxu0 0
      %926 = vmatprep.subr.bf16.mxu0 0
      %927 = vmatpush1.bf16.xpose.msra.mxu0 0
      %928 = vmatprep.subr.bf16.mxu0 0
      %929 = vmatpush1.bf16.xpose.msra.mxu0 0
      %930 = vmatprep.subr.bf16.mxu0 0
      %931 = vmatpush1.bf16.xpose.msra.mxu0 0
      %932 = vmatprep.subr.bf16.mxu0 0
      %933 = vmatpush1.bf16.xpose.msra.mxu0 0
      %934 = vmatprep.subr.bf16.mxu0 0
      %935 = vmatpush1.bf16.xpose.msra.mxu0 0
      %936 = vmatprep.subr.bf16.mxu0 0
      %937 = vmatpush1.bf16.xpose.msra.mxu0 0
      %938 = vmatprep.subr.bf16.mxu0 0
      %939 = vmatpush1.bf16.xpose.msra.mxu0 0
      %940 = vmatprep.subr.bf16.mxu0 0
      %941 = vmatpush1.bf16.xpose.msra.mxu0 0
      %942 = vmatprep.subr.bf16.mxu0 0
      %943 = vmatpush1.bf16.xpose.msra.mxu0 0
      %944 = vmatprep.subr.bf16.mxu0 0
      %945 = vmatpush1.bf16.xpose.msra.mxu0 0
      %946 = vmatprep.subr.bf16.mxu0 0
      %947 = vmatpush1.bf16.xpose.msra.mxu0 0
      %948 = vmatprep.mubr.bf16.mxu0 0
      %949 = vmatmul.mubr.bf16.gmra.mrb[0].mxu0 %v911
      %v950 = vpop.f32.mrb[0].mxu0
      %v951 = vadd.f32 0.0, %v950
      %v952 = vpop.f32.mrb[0].mxu0
      %v953 = vpop.f32.mrb[0].mxu0
      %v954 = vpop.f32.mrb[0].mxu0
      %955 = vdwg.mxu0
      %957 = vrot.lane.b32.xlu0 %v363, 96
      %v958 = vpop.permute.xlu0 %957
      %v960 = vsel %vm370, %v363, 0
      %v963 = vsel %vm370, %v958, 0
      %965 = vmatprep.subr.bf16.mxu0 0
      %966 = vmatpush1.bf16.xpose.msra.mxu0 %v963
      %967 = vmatprep.subr.bf16.mxu0 0
      %968 = vmatpush1.bf16.xpose.msra.mxu0 0
      %969 = vmatprep.subr.bf16.mxu0 0
      %970 = vmatpush1.bf16.xpose.msra.mxu0 0
      %971 = vmatprep.subr.bf16.mxu0 0
      %972 = vmatpush1.bf16.xpose.msra.mxu0 0
      %973 = vmatprep.subr.bf16.mxu0 0
      %974 = vmatpush1.bf16.xpose.msra.mxu0 0
      %975 = vmatprep.subr.bf16.mxu0 0
      %976 = vmatpush1.bf16.xpose.msra.mxu0 0
      %977 = vmatprep.subr.bf16.mxu0 0
      %978 = vmatpush1.bf16.xpose.msra.mxu0 0
      %979 = vmatprep.subr.bf16.mxu0 0
      %980 = vmatpush1.bf16.xpose.msra.mxu0 0
      %981 = vmatprep.subr.bf16.mxu0 0
      %982 = vmatpush1.bf16.xpose.msra.mxu0 0
      %983 = vmatprep.subr.bf16.mxu0 0
      %984 = vmatpush1.bf16.xpose.msra.mxu0 0
      %985 = vmatprep.subr.bf16.mxu0 0
      %986 = vmatpush1.bf16.xpose.msra.mxu0 0
      %987 = vmatprep.subr.bf16.mxu0 0
      %988 = vmatpush1.bf16.xpose.msra.mxu0 0
      %989 = vmatprep.subr.bf16.mxu0 0
      %990 = vmatpush1.bf16.xpose.msra.mxu0 0
      %991 = vmatprep.subr.bf16.mxu0 0
      %992 = vmatpush1.bf16.xpose.msra.mxu0 0
      %993 = vmatprep.subr.bf16.mxu0 0
      %994 = vmatpush1.bf16.xpose.msra.mxu0 0
      %995 = vmatprep.subr.bf16.mxu0 0
      %996 = vmatpush1.bf16.xpose.msra.mxu0 0
      %997 = vmatprep.mubr.bf16.mxu0 0
      %998 = vmatmul.mubr.bf16.gmra.mrb[0].mxu0 %v960
      %v999 = vpop.f32.mrb[0].mxu0
      %v1000 = vadd.f32 0.0, %v999
      %v1001 = vpop.f32.mrb[0].mxu0
      %v1002 = vpop.f32.mrb[0].mxu0
      %v1003 = vpop.f32.mrb[0].mxu0
      %1004 = vdwg.mxu0
      %1006 = vrot.lane.b32.xlu0 %v364, 96
      %v1007 = vpop.permute.xlu0 %1006
      %v1009 = vsel %vm370, %v364, 0
      %v1012 = vsel %vm370, %v1007, 0
      %1014 = vmatprep.subr.bf16.mxu0 0
      %1015 = vmatpush1.bf16.xpose.msra.mxu0 %v1012
      %1016 = vmatprep.subr.bf16.mxu0 0
      %1017 = vmatpush1.bf16.xpose.msra.mxu0 0
      %1018 = vmatprep.subr.bf16.mxu0 0
      %1019 = vmatpush1.bf16.xpose.msra.mxu0 0
      %1020 = vmatprep.subr.bf16.mxu0 0
      %1021 = vmatpush1.bf16.xpose.msra.mxu0 0
      %1022 = vmatprep.subr.bf16.mxu0 0
      %1023 = vmatpush1.bf16.xpose.msra.mxu0 0
      %1024 = vmatprep.subr.bf16.mxu0 0
      %1025 = vmatpush1.bf16.xpose.msra.mxu0 0
      %1026 = vmatprep.subr.bf16.mxu0 0
      %1027 = vmatpush1.bf16.xpose.msra.mxu0 0
      %1028 = vmatprep.subr.bf16.mxu0 0
      %1029 = vmatpush1.bf16.xpose.msra.mxu0 0
      %1030 = vmatprep.subr.bf16.mxu0 0
      %1031 = vmatpush1.bf16.xpose.msra.mxu0 0
      %1032 = vmatprep.subr.bf16.mxu0 0
      %1033 = vmatpush1.bf16.xpose.msra.mxu0 0
      %1034 = vmatprep.subr.bf16.mxu0 0
      %1035 = vmatpush1.bf16.xpose.msra.mxu0 0
      %1036 = vmatprep.subr.bf16.mxu0 0
      %1037 = vmatpush1.bf16.xpose.msra.mxu0 0
      %1038 = vmatprep.subr.bf16.mxu0 0
      %1039 = vmatpush1.bf16.xpose.msra.mxu0 0
      %1040 = vmatprep.subr.bf16.mxu0 0
      %1041 = vmatpush1.bf16.xpose.msra.mxu0 0
      %1042 = vmatprep.subr.bf16.mxu0 0
      %1043 = vmatpush1.bf16.xpose.msra.mxu0 0
      %1044 = vmatprep.subr.bf16.mxu0 0
      %1045 = vmatpush1.bf16.xpose.msra.mxu0 0
      %1046 = vmatprep.mubr.bf16.mxu0 0
      %1047 = vmatmul.mubr.bf16.gmra.mrb[0].mxu0 %v1009
      %v1048 = vpop.f32.mrb[0].mxu0
      %v1049 = vadd.f32 0.0, %v1048
      %v1050 = vpop.f32.mrb[0].mxu0
      %v1051 = vpop.f32.mrb[0].mxu0
      %v1052 = vpop.f32.mrb[0].mxu0
      %1053 = vdwg.mxu0
      %1055 = vrot.lane.b32.xlu0 %v365, 96
      %v1056 = vpop.permute.xlu0 %1055
      %v1058 = vsel %vm370, %v365, 0
      %v1061 = vsel %vm370, %v1056, 0
      %1063 = vmatprep.subr.bf16.mxu0 0
      %1064 = vmatpush1.bf16.xpose.msra.mxu0 %v1061
      %1065 = vmatprep.subr.bf16.mxu0 0
      %1066 = vmatpush1.bf16.xpose.msra.mxu0 0
      %1067 = vmatprep.subr.bf16.mxu0 0
      %1068 = vmatpush1.bf16.xpose.msra.mxu0 0
      %1069 = vmatprep.subr.bf16.mxu0 0
      %1070 = vmatpush1.bf16.xpose.msra.mxu0 0
      %1071 = vmatprep.subr.bf16.mxu0 0
      %1072 = vmatpush1.bf16.xpose.msra.mxu0 0
      %1073 = vmatprep.subr.bf16.mxu0 0
      %1074 = vmatpush1.bf16.xpose.msra.mxu0 0
      %1075 = vmatprep.subr.bf16.mxu0 0
      %1076 = vmatpush1.bf16.xpose.msra.mxu0 0
      %1077 = vmatprep.subr.bf16.mxu0 0
      %1078 = vmatpush1.bf16.xpose.msra.mxu0 0
      %1079 = vmatprep.subr.bf16.mxu0 0
      %1080 = vmatpush1.bf16.xpose.msra.mxu0 0
      %1081 = vmatprep.subr.bf16.mxu0 0
      %1082 = vmatpush1.bf16.xpose.msra.mxu0 0
      %1083 = vmatprep.subr.bf16.mxu0 0
      %1084 = vmatpush1.bf16.xpose.msra.mxu0 0
      %1085 = vmatprep.subr.bf16.mxu0 0
      %1086 = vmatpush1.bf16.xpose.msra.mxu0 0
      %1087 = vmatprep.subr.bf16.mxu0 0
      %1088 = vmatpush1.bf16.xpose.msra.mxu0 0
      %1089 = vmatprep.subr.bf16.mxu0 0
      %1090 = vmatpush1.bf16.xpose.msra.mxu0 0
      %1091 = vmatprep.subr.bf16.mxu0 0
      %1092 = vmatpush1.bf16.xpose.msra.mxu0 0
      %1093 = vmatprep.subr.bf16.mxu0 0
      %1094 = vmatpush1.bf16.xpose.msra.mxu0 0
      %1095 = vmatprep.mubr.bf16.mxu0 0
      %1096 = vmatmul.mubr.bf16.gmra.mrb[0].mxu0 %v1058
      %v1097 = vpop.f32.mrb[0].mxu0
      %v1098 = vadd.f32 0.0, %v1097
      %v1099 = vpop.f32.mrb[0].mxu0
      %v1100 = vpop.f32.mrb[0].mxu0
      %v1101 = vpop.f32.mrb[0].mxu0
      %1102 = vdwg.mxu0
      %1104 = vrot.lane.b32.xlu0 %v366, 96
      %v1105 = vpop.permute.xlu0 %1104
      %v1107 = vsel %vm370, %v366, 0
      %v1110 = vsel %vm370, %v1105, 0
      %1112 = vmatprep.subr.bf16.mxu0 0
      %1113 = vmatpush1.bf16.xpose.msra.mxu0 %v1110
      %1114 = vmatprep.subr.bf16.mxu0 0
      %1115 = vmatpush1.bf16.xpose.msra.mxu0 0
      %1116 = vmatprep.subr.bf16.mxu0 0
      %1117 = vmatpush1.bf16.xpose.msra.mxu0 0
      %1118 = vmatprep.subr.bf16.mxu0 0
      %1119 = vmatpush1.bf16.xpose.msra.mxu0 0
      %1120 = vmatprep.subr.bf16.mxu0 0
      %1121 = vmatpush1.bf16.xpose.msra.mxu0 0
      %1122 = vmatprep.subr.bf16.mxu0 0
      %1123 = vmatpush1.bf16.xpose.msra.mxu0 0
      %1124 = vmatprep.subr.bf16.mxu0 0
      %1125 = vmatpush1.bf16.xpose.msra.mxu0 0
      %1126 = vmatprep.subr.bf16.mxu0 0
      %1127 = vmatpush1.bf16.xpose.msra.mxu0 0
      %1128 = vmatprep.subr.bf16.mxu0 0
      %1129 = vmatpush1.bf16.xpose.msra.mxu0 0
      %1130 = vmatprep.subr.bf16.mxu0 0
      %1131 = vmatpush1.bf16.xpose.msra.mxu0 0
      %1132 = vmatprep.subr.bf16.mxu0 0
      %1133 = vmatpush1.bf16.xpose.msra.mxu0 0
      %1134 = vmatprep.subr.bf16.mxu0 0
      %1135 = vmatpush1.bf16.xpose.msra.mxu0 0
      %1136 = vmatprep.subr.bf16.mxu0 0
      %1137 = vmatpush1.bf16.xpose.msra.mxu0 0
      %1138 = vmatprep.subr.bf16.mxu0 0
      %1139 = vmatpush1.bf16.xpose.msra.mxu0 0
      %1140 = vmatprep.subr.bf16.mxu0 0
      %1141 = vmatpush1.bf16.xpose.msra.mxu0 0
      %1142 = vmatprep.subr.bf16.mxu0 0
      %1143 = vmatpush1.bf16.xpose.msra.mxu0 0
      %1144 = vmatprep.mubr.bf16.mxu0 0
      %1145 = vmatmul.mubr.bf16.gmra.mrb[0].mxu0 %v1107
      %v1146 = vpop.f32.mrb[0].mxu0
      %v1147 = vadd.f32 0.0, %v1146
      %v1148 = vpop.f32.mrb[0].mxu0
      %v1149 = vpop.f32.mrb[0].mxu0
      %v1150 = vpop.f32.mrb[0].mxu0
      %1151 = vdwg.mxu0
      %v1152 = vmul.f32 %v412, 0.35355338
      %v1153 = vmul.f32 %v461, 0.35355338
      %v1154 = vmul.f32 %v510, 0.35355338
      %v1155 = vmul.f32 %v559, 0.35355338
      %v1156 = vmul.f32 %v608, 0.35355338
      %v1157 = vmul.f32 %v657, 0.35355338
      %v1158 = vmul.f32 %v706, 0.35355338
      %v1159 = vmul.f32 %v755, 0.35355338
      %v1160 = vmul.f32 %v804, 0.35355338
      %v1161 = vmul.f32 %v853, 0.35355338
      %v1162 = vmul.f32 %v902, 0.35355338
      %v1163 = vmul.f32 %v951, 0.35355338
      %v1164 = vmul.f32 %v1000, 0.35355338
      %v1165 = vmul.f32 %v1049, 0.35355338
      %v1166 = vmul.f32 %v1098, 0.35355338
      %v1167 = vmul.f32 %v1147, 0.35355338
      %v1168 = vsel %vm370, %v1152, -inf
      %1169 = vmax.xlane.f32.xlu0 %v1168
      %v1170 = vpop.xlane.xlu0 %1169
      %v1171 = vsel %vm370, %v1153, -inf
      %1172 = vmax.xlane.f32.xlu0 %v1171
      %v1173 = vpop.xlane.xlu0 %1172
      %v1174 = vsel %vm370, %v1154, -inf
      %1175 = vmax.xlane.f32.xlu0 %v1174
      %v1176 = vpop.xlane.xlu0 %1175
      %v1177 = vsel %vm370, %v1155, -inf
      %1178 = vmax.xlane.f32.xlu0 %v1177
      %v1179 = vpop.xlane.xlu0 %1178
      %v1180 = vsel %vm370, %v1156, -inf
      %1181 = vmax.xlane.f32.xlu0 %v1180
      %v1182 = vpop.xlane.xlu0 %1181
      %v1183 = vsel %vm370, %v1157, -inf
      %1184 = vmax.xlane.f32.xlu0 %v1183
      %v1185 = vpop.xlane.xlu0 %1184
      %v1186 = vsel %vm370, %v1158, -inf
      %1187 = vmax.xlane.f32.xlu0 %v1186
      %v1188 = vpop.xlane.xlu0 %1187
      %v1189 = vsel %vm370, %v1159, -inf
      %1190 = vmax.xlane.f32.xlu0 %v1189
      %v1191 = vpop.xlane.xlu0 %1190
      %v1192 = vsel %vm370, %v1160, -inf
      %1193 = vmax.xlane.f32.xlu0 %v1192
      %v1194 = vpop.xlane.xlu0 %1193
      %v1195 = vsel %vm370, %v1161, -inf
      %1196 = vmax.xlane.f32.xlu0 %v1195
      %v1197 = vpop.xlane.xlu0 %1196
      %v1198 = vsel %vm370, %v1162, -inf
      %1199 = vmax.xlane.f32.xlu0 %v1198
      %v1200 = vpop.xlane.xlu0 %1199
      %v1201 = vsel %vm370, %v1163, -inf
      %1202 = vmax.xlane.f32.xlu0 %v1201
      %v1203 = vpop.xlane.xlu0 %1202
      %v1204 = vsel %vm370, %v1164, -inf
      %1205 = vmax.xlane.f32.xlu0 %v1204
      %v1206 = vpop.xlane.xlu0 %1205
      %v1207 = vsel %vm370, %v1165, -inf
      %1208 = vmax.xlane.f32.xlu0 %v1207
      %v1209 = vpop.xlane.xlu0 %1208
      %v1210 = vsel %vm370, %v1166, -inf
      %1211 = vmax.xlane.f32.xlu0 %v1210
      %v1212 = vpop.xlane.xlu0 %1211
      %v1213 = vsel %vm370, %v1167, -inf
      %1214 = vmax.xlane.f32.xlu0 %v1213
      %v1215 = vpop.xlane.xlu0 %1214
      %v1216 = vsub.f32 %v1152, %v1170
      %v1217 = vsub.f32 %v1153, %v1173
      %v1218 = vsub.f32 %v1154, %v1176
      %v1219 = vsub.f32 %v1155, %v1179
      %v1220 = vsub.f32 %v1156, %v1182
      %v1221 = vsub.f32 %v1157, %v1185
      %v1222 = vsub.f32 %v1158, %v1188
      %v1223 = vsub.f32 %v1159, %v1191
      %v1224 = vsub.f32 %v1160, %v1194
      %v1225 = vsub.f32 %v1161, %v1197
      %v1226 = vsub.f32 %v1162, %v1200
      %v1227 = vsub.f32 %v1163, %v1203
      %v1228 = vsub.f32 %v1164, %v1206
      %v1229 = vsub.f32 %v1165, %v1209
      %v1230 = vsub.f32 %v1166, %v1212
      %v1231 = vsub.f32 %v1167, %v1215
      %v1232 = vmul.f32 %v1216, 1.442695
      %v1233 = vpow.pop %v1232
      %v1234 = vmul.f32 %v1217, 1.442695
      %v1235 = vpow.pop %v1234
      %v1236 = vmul.f32 %v1218, 1.442695
      %v1237 = vpow.pop %v1236
      %v1238 = vmul.f32 %v1219, 1.442695
      %v1239 = vpow.pop %v1238
      %v1240 = vmul.f32 %v1220, 1.442695
      %v1241 = vpow.pop %v1240
      %v1242 = vmul.f32 %v1221, 1.442695
      %v1243 = vpow.pop %v1242
      %v1244 = vmul.f32 %v1222, 1.442695
      %v1245 = vpow.pop %v1244
      %v1246 = vmul.f32 %v1223, 1.442695
      %v1247 = vpow.pop %v1246
      %v1248 = vmul.f32 %v1224, 1.442695
      %v1249 = vpow.pop %v1248
      %v1250 = vmul.f32 %v1225, 1.442695
      %v1251 = vpow.pop %v1250
      %v1252 = vmul.f32 %v1226, 1.442695
      %v1253 = vpow.pop %v1252
      %v1254 = vmul.f32 %v1227, 1.442695
      %v1255 = vpow.pop %v1254
      %v1256 = vmul.f32 %v1228, 1.442695
      %v1257 = vpow.pop %v1256
      %v1258 = vmul.f32 %v1229, 1.442695
      %v1259 = vpow.pop %v1258
      %v1260 = vmul.f32 %v1230, 1.442695
      %v1261 = vpow.pop %v1260
      %v1262 = vmul.f32 %v1231, 1.442695
      %v1263 = vpow.pop %v1262
      %v1264 = vsel %vm370, %v1233, 0.0
      %1265 = vadd.xlane.f32.xlu0 %v1264
      %v1266 = vpop.xlane.xlu0 %1265
      %v1267 = vsel %vm370, %v1235, 0.0
      %1268 = vadd.xlane.f32.xlu0 %v1267
      %v1269 = vpop.xlane.xlu0 %1268
      %v1270 = vsel %vm370, %v1237, 0.0
      %1271 = vadd.xlane.f32.xlu0 %v1270
      %v1272 = vpop.xlane.xlu0 %1271
      %v1273 = vsel %vm370, %v1239, 0.0
      %1274 = vadd.xlane.f32.xlu0 %v1273
      %v1275 = vpop.xlane.xlu0 %1274
      %v1276 = vsel %vm370, %v1241, 0.0
      %1277 = vadd.xlane.f32.xlu0 %v1276
      %v1278 = vpop.xlane.xlu0 %1277
      %v1279 = vsel %vm370, %v1243, 0.0
      %1280 = vadd.xlane.f32.xlu0 %v1279
      %v1281 = vpop.xlane.xlu0 %1280
      %v1282 = vsel %vm370, %v1245, 0.0
      %1283 = vadd.xlane.f32.xlu0 %v1282
      %v1284 = vpop.xlane.xlu0 %1283
      %v1285 = vsel %vm370, %v1247, 0.0
      %1286 = vadd.xlane.f32.xlu0 %v1285
      %v1287 = vpop.xlane.xlu0 %1286
      %v1288 = vsel %vm370, %v1249, 0.0
      %1289 = vadd.xlane.f32.xlu0 %v1288
      %v1290 = vpop.xlane.xlu0 %1289
      %v1291 = vsel %vm370, %v1251, 0.0
      %1292 = vadd.xlane.f32.xlu0 %v1291
      %v1293 = vpop.xlane.xlu0 %1292
      %v1294 = vsel %vm370, %v1253, 0.0
      %1295 = vadd.xlane.f32.xlu0 %v1294
      %v1296 = vpop.xlane.xlu0 %1295
      %v1297 = vsel %vm370, %v1255, 0.0
      %1298 = vadd.xlane.f32.xlu0 %v1297
      %v1299 = vpop.xlane.xlu0 %1298
      %v1300 = vsel %vm370, %v1257, 0.0
      %1301 = vadd.xlane.f32.xlu0 %v1300
      %v1302 = vpop.xlane.xlu0 %1301
      %v1303 = vsel %vm370, %v1259, 0.0
      %1304 = vadd.xlane.f32.xlu0 %v1303
      %v1305 = vpop.xlane.xlu0 %1304
      %v1306 = vsel %vm370, %v1261, 0.0
      %1307 = vadd.xlane.f32.xlu0 %v1306
      %v1308 = vpop.xlane.xlu0 %1307
      %v1309 = vsel %vm370, %v1263, 0.0
      %1310 = vadd.xlane.f32.xlu0 %v1309
      %v1311 = vpop.xlane.xlu0 %1310
      %v1312 = vrcp.pop %v1266
      %v1313 = vrcp.pop %v1269
      %v1314 = vrcp.pop %v1272
      %v1315 = vrcp.pop %v1275
      %v1316 = vrcp.pop %v1278
      %v1317 = vrcp.pop %v1281
      %v1318 = vrcp.pop %v1284
      %v1319 = vrcp.pop %v1287
      %v1320 = vrcp.pop %v1290
      %v1321 = vrcp.pop %v1293
      %v1322 = vrcp.pop %v1296
      %v1323 = vrcp.pop %v1299
      %v1324 = vrcp.pop %v1302
      %v1325 = vrcp.pop %v1305
      %v1326 = vrcp.pop %v1308
      %v1327 = vrcp.pop %v1311
      %v1328 = vmul.f32 %v1233, %v1312
      %v1329 = vmul.f32 %v1235, %v1313
      %v1330 = vmul.f32 %v1237, %v1314
      %v1331 = vmul.f32 %v1239, %v1315
      %v1332 = vmul.f32 %v1241, %v1316
      %v1333 = vmul.f32 %v1243, %v1317
      %v1334 = vmul.f32 %v1245, %v1318
      %v1335 = vmul.f32 %v1247, %v1319
      %v1336 = vmul.f32 %v1249, %v1320
      %v1337 = vmul.f32 %v1251, %v1321
      %v1338 = vmul.f32 %v1253, %v1322
      %v1339 = vmul.f32 %v1255, %v1323
      %v1340 = vmul.f32 %v1257, %v1324
      %v1341 = vmul.f32 %v1259, %v1325
      %v1342 = vmul.f32 %v1261, %v1326
      %v1343 = vmul.f32 %v1263, %v1327
      %v1344 = vpack.c.bf16 %v1328, %v1328
      %v1345 = vpack.c.bf16 %v1329, %v1329
      %v1346 = vpack.c.bf16 %v1330, %v1330
      %v1347 = vpack.c.bf16 %v1331, %v1331
      %v1348 = vpack.c.bf16 %v1332, %v1332
      %v1349 = vpack.c.bf16 %v1333, %v1333
      %v1350 = vpack.c.bf16 %v1334, %v1334
      %v1351 = vpack.c.bf16 %v1335, %v1335
      %v1352 = vpack.c.bf16 %v1336, %v1336
      %v1353 = vpack.c.bf16 %v1337, %v1337
      %v1354 = vpack.c.bf16 %v1338, %v1338
      %v1355 = vpack.c.bf16 %v1339, %v1339
      %v1356 = vpack.c.bf16 %v1340, %v1340
      %v1357 = vpack.c.bf16 %v1341, %v1341
      %v1358 = vpack.c.bf16 %v1342, %v1342
      %v1359 = vpack.c.bf16 %v1343, %v1343
      %1360 = vrot.lane.b32.xlu0 %v351, 64
      %v1361 = vpop.permute.xlu0 %1360
      %v1363 = vsel %vm370, %v1344, 0
      %vm1365 = vcmask 1043456
      %v1367 = vsel %vm1365, %v1361, 0
      %1369 = vmatprep.subr.bf16.mxu0 0
      %1370 = vmatpush1.bf16.msra.mxu0 %v1367
      %1371 = vmatprep.subr.bf16.mxu0 0
      %1372 = vmatpush1.bf16.msra.mxu0 0
      %1373 = vmatprep.subr.bf16.mxu0 0
      %1374 = vmatpush1.bf16.msra.mxu0 0
      %1375 = vmatprep.subr.bf16.mxu0 0
      %1376 = vmatpush1.bf16.msra.mxu0 0
      %1377 = vmatprep.subr.bf16.mxu0 0
      %1378 = vmatpush1.bf16.msra.mxu0 0
      %1379 = vmatprep.subr.bf16.mxu0 0
      %1380 = vmatpush1.bf16.msra.mxu0 0
      %1381 = vmatprep.subr.bf16.mxu0 0
      %1382 = vmatpush1.bf16.msra.mxu0 0
      %1383 = vmatprep.subr.bf16.mxu0 0
      %1384 = vmatpush1.bf16.msra.mxu0 0
      %1385 = vmatprep.subr.bf16.mxu0 0
      %1386 = vmatpush1.bf16.msra.mxu0 0
      %1387 = vmatprep.subr.bf16.mxu0 0
      %1388 = vmatpush1.bf16.msra.mxu0 0
      %1389 = vmatprep.subr.bf16.mxu0 0
      %1390 = vmatpush1.bf16.msra.mxu0 0
      %1391 = vmatprep.subr.bf16.mxu0 0
      %1392 = vmatpush1.bf16.msra.mxu0 0
      %1393 = vmatprep.subr.bf16.mxu0 0
      %1394 = vmatpush1.bf16.msra.mxu0 0
      %1395 = vmatprep.subr.bf16.mxu0 0
      %1396 = vmatpush1.bf16.msra.mxu0 0
      %1397 = vmatprep.subr.bf16.mxu0 0
      %1398 = vmatpush1.bf16.msra.mxu0 0
      %1399 = vmatprep.subr.bf16.mxu0 0
      %1400 = vmatpush1.bf16.msra.mxu0 0
      %1401 = vmatprep.mubr.bf16.mxu0 0
      %1402 = vmatmul.mubr.bf16.gmra.mrb[0].mxu0 %v1363
      %v1403 = vpop.f32.mrb[0].mxu0
      %v1404 = vadd.f32 0.0, %v1403
      %v1405 = vpop.f32.mrb[0].mxu0
      %v1406 = vpop.f32.mrb[0].mxu0
      %v1407 = vpop.f32.mrb[0].mxu0
      %1408 = vdwg.mxu0
      %1409 = vrot.lane.b32.xlu0 %v352, 64
      %v1410 = vpop.permute.xlu0 %1409
      %v1412 = vsel %vm370, %v1345, 0
      %v1415 = vsel %vm1365, %v1410, 0
      %1417 = vmatprep.subr.bf16.mxu0 0
      %1418 = vmatpush1.bf16.msra.mxu0 %v1415
      %1419 = vmatprep.subr.bf16.mxu0 0
      %1420 = vmatpush1.bf16.msra.mxu0 0
      %1421 = vmatprep.subr.bf16.mxu0 0
      %1422 = vmatpush1.bf16.msra.mxu0 0
      %1423 = vmatprep.subr.bf16.mxu0 0
      %1424 = vmatpush1.bf16.msra.mxu0 0
      %1425 = vmatprep.subr.bf16.mxu0 0
      %1426 = vmatpush1.bf16.msra.mxu0 0
      %1427 = vmatprep.subr.bf16.mxu0 0
      %1428 = vmatpush1.bf16.msra.mxu0 0
      %1429 = vmatprep.subr.bf16.mxu0 0
      %1430 = vmatpush1.bf16.msra.mxu0 0
      %1431 = vmatprep.subr.bf16.mxu0 0
      %1432 = vmatpush1.bf16.msra.mxu0 0
      %1433 = vmatprep.subr.bf16.mxu0 0
      %1434 = vmatpush1.bf16.msra.mxu0 0
      %1435 = vmatprep.subr.bf16.mxu0 0
      %1436 = vmatpush1.bf16.msra.mxu0 0
      %1437 = vmatprep.subr.bf16.mxu0 0
      %1438 = vmatpush1.bf16.msra.mxu0 0
      %1439 = vmatprep.subr.bf16.mxu0 0
      %1440 = vmatpush1.bf16.msra.mxu0 0
      %1441 = vmatprep.subr.bf16.mxu0 0
      %1442 = vmatpush1.bf16.msra.mxu0 0
      %1443 = vmatprep.subr.bf16.mxu0 0
      %1444 = vmatpush1.bf16.msra.mxu0 0
      %1445 = vmatprep.subr.bf16.mxu0 0
      %1446 = vmatpush1.bf16.msra.mxu0 0
      %1447 = vmatprep.subr.bf16.mxu0 0
      %1448 = vmatpush1.bf16.msra.mxu0 0
      %1449 = vmatprep.mubr.bf16.mxu0 0
      %1450 = vmatmul.mubr.bf16.gmra.mrb[0].mxu0 %v1412
      %v1451 = vpop.f32.mrb[0].mxu0
      %v1452 = vadd.f32 0.0, %v1451
      %v1453 = vpop.f32.mrb[0].mxu0
      %v1454 = vpop.f32.mrb[0].mxu0
      %v1455 = vpop.f32.mrb[0].mxu0
      %1456 = vdwg.mxu0
      %1457 = vrot.lane.b32.xlu0 %v353, 64
      %v1458 = vpop.permute.xlu0 %1457
      %v1460 = vsel %vm370, %v1346, 0
      %v1463 = vsel %vm1365, %v1458, 0
      %1465 = vmatprep.subr.bf16.mxu0 0
      %1466 = vmatpush1.bf16.msra.mxu0 %v1463
      %1467 = vmatprep.subr.bf16.mxu0 0
      %1468 = vmatpush1.bf16.msra.mxu0 0
      %1469 = vmatprep.subr.bf16.mxu0 0
      %1470 = vmatpush1.bf16.msra.mxu0 0
      %1471 = vmatprep.subr.bf16.mxu0 0
      %1472 = vmatpush1.bf16.msra.mxu0 0
      %1473 = vmatprep.subr.bf16.mxu0 0
      %1474 = vmatpush1.bf16.msra.mxu0 0
      %1475 = vmatprep.subr.bf16.mxu0 0
      %1476 = vmatpush1.bf16.msra.mxu0 0
      %1477 = vmatprep.subr.bf16.mxu0 0
      %1478 = vmatpush1.bf16.msra.mxu0 0
      %1479 = vmatprep.subr.bf16.mxu0 0
      %1480 = vmatpush1.bf16.msra.mxu0 0
      %1481 = vmatprep.subr.bf16.mxu0 0
      %1482 = vmatpush1.bf16.msra.mxu0 0
      %1483 = vmatprep.subr.bf16.mxu0 0
      %1484 = vmatpush1.bf16.msra.mxu0 0
      %1485 = vmatprep.subr.bf16.mxu0 0
      %1486 = vmatpush1.bf16.msra.mxu0 0
      %1487 = vmatprep.subr.bf16.mxu0 0
      %1488 = vmatpush1.bf16.msra.mxu0 0
      %1489 = vmatprep.subr.bf16.mxu0 0
      %1490 = vmatpush1.bf16.msra.mxu0 0
      %1491 = vmatprep.subr.bf16.mxu0 0
      %1492 = vmatpush1.bf16.msra.mxu0 0
      %1493 = vmatprep.subr.bf16.mxu0 0
      %1494 = vmatpush1.bf16.msra.mxu0 0
      %1495 = vmatprep.subr.bf16.mxu0 0
      %1496 = vmatpush1.bf16.msra.mxu0 0
      %1497 = vmatprep.mubr.bf16.mxu0 0
      %1498 = vmatmul.mubr.bf16.gmra.mrb[0].mxu0 %v1460
      %v1499 = vpop.f32.mrb[0].mxu0
      %v1500 = vadd.f32 0.0, %v1499
      %v1501 = vpop.f32.mrb[0].mxu0
      %v1502 = vpop.f32.mrb[0].mxu0
      %v1503 = vpop.f32.mrb[0].mxu0
      %1504 = vdwg.mxu0
      %1505 = vrot.lane.b32.xlu0 %v354, 64
      %v1506 = vpop.permute.xlu0 %1505
      %v1508 = vsel %vm370, %v1347, 0
      %v1511 = vsel %vm1365, %v1506, 0
      %1513 = vmatprep.subr.bf16.mxu0 0
      %1514 = vmatpush1.bf16.msra.mxu0 %v1511
      %1515 = vmatprep.subr.bf16.mxu0 0
      %1516 = vmatpush1.bf16.msra.mxu0 0
      %1517 = vmatprep.subr.bf16.mxu0 0
      %1518 = vmatpush1.bf16.msra.mxu0 0
      %1519 = vmatprep.subr.bf16.mxu0 0
      %1520 = vmatpush1.bf16.msra.mxu0 0
      %1521 = vmatprep.subr.bf16.mxu0 0
      %1522 = vmatpush1.bf16.msra.mxu0 0
      %1523 = vmatprep.subr.bf16.mxu0 0
      %1524 = vmatpush1.bf16.msra.mxu0 0
      %1525 = vmatprep.subr.bf16.mxu0 0
      %1526 = vmatpush1.bf16.msra.mxu0 0
      %1527 = vmatprep.subr.bf16.mxu0 0
      %1528 = vmatpush1.bf16.msra.mxu0 0
      %1529 = vmatprep.subr.bf16.mxu0 0
      %1530 = vmatpush1.bf16.msra.mxu0 0
      %1531 = vmatprep.subr.bf16.mxu0 0
      %1532 = vmatpush1.bf16.msra.mxu0 0
      %1533 = vmatprep.subr.bf16.mxu0 0
      %1534 = vmatpush1.bf16.msra.mxu0 0
      %1535 = vmatprep.subr.bf16.mxu0 0
      %1536 = vmatpush1.bf16.msra.mxu0 0
      %1537 = vmatprep.subr.bf16.mxu0 0
      %1538 = vmatpush1.bf16.msra.mxu0 0
      %1539 = vmatprep.subr.bf16.mxu0 0
      %1540 = vmatpush1.bf16.msra.mxu0 0
      %1541 = vmatprep.subr.bf16.mxu0 0
      %1542 = vmatpush1.bf16.msra.mxu0 0
      %1543 = vmatprep.subr.bf16.mxu0 0
      %1544 = vmatpush1.bf16.msra.mxu0 0
      %1545 = vmatprep.mubr.bf16.mxu0 0
      %1546 = vmatmul.mubr.bf16.gmra.mrb[0].mxu0 %v1508
      %v1547 = vpop.f32.mrb[0].mxu0
      %v1548 = vadd.f32 0.0, %v1547
      %v1549 = vpop.f32.mrb[0].mxu0
      %v1550 = vpop.f32.mrb[0].mxu0
      %v1551 = vpop.f32.mrb[0].mxu0
      %1552 = vdwg.mxu0
      %1553 = vrot.lane.b32.xlu0 %v355, 64
      %v1554 = vpop.permute.xlu0 %1553
      %v1556 = vsel %vm370, %v1348, 0
      %v1559 = vsel %vm1365, %v1554, 0
      %1561 = vmatprep.subr.bf16.mxu0 0
      %1562 = vmatpush1.bf16.msra.mxu0 %v1559
      %1563 = vmatprep.subr.bf16.mxu0 0
      %1564 = vmatpush1.bf16.msra.mxu0 0
      %1565 = vmatprep.subr.bf16.mxu0 0
      %1566 = vmatpush1.bf16.msra.mxu0 0
      %1567 = vmatprep.subr.bf16.mxu0 0
      %1568 = vmatpush1.bf16.msra.mxu0 0
      %1569 = vmatprep.subr.bf16.mxu0 0
      %1570 = vmatpush1.bf16.msra.mxu0 0
      %1571 = vmatprep.subr.bf16.mxu0 0
      %1572 = vmatpush1.bf16.msra.mxu0 0
      %1573 = vmatprep.subr.bf16.mxu0 0
      %1574 = vmatpush1.bf16.msra.mxu0 0
      %1575 = vmatprep.subr.bf16.mxu0 0
      %1576 = vmatpush1.bf16.msra.mxu0 0
      %1577 = vmatprep.subr.bf16.mxu0 0
      %1578 = vmatpush1.bf16.msra.mxu0 0
      %1579 = vmatprep.subr.bf16.mxu0 0
      %1580 = vmatpush1.bf16.msra.mxu0 0
      %1581 = vmatprep.subr.bf16.mxu0 0
      %1582 = vmatpush1.bf16.msra.mxu0 0
      %1583 = vmatprep.subr.bf16.mxu0 0
      %1584 = vmatpush1.bf16.msra.mxu0 0
      %1585 = vmatprep.subr.bf16.mxu0 0
      %1586 = vmatpush1.bf16.msra.mxu0 0
      %1587 = vmatprep.subr.bf16.mxu0 0
      %1588 = vmatpush1.bf16.msra.mxu0 0
      %1589 = vmatprep.subr.bf16.mxu0 0
      %1590 = vmatpush1.bf16.msra.mxu0 0
      %1591 = vmatprep.subr.bf16.mxu0 0
      %1592 = vmatpush1.bf16.msra.mxu0 0
      %1593 = vmatprep.mubr.bf16.mxu0 0
      %1594 = vmatmul.mubr.bf16.gmra.mrb[0].mxu0 %v1556
      %v1595 = vpop.f32.mrb[0].mxu0
      %v1596 = vadd.f32 0.0, %v1595
      %v1597 = vpop.f32.mrb[0].mxu0
      %v1598 = vpop.f32.mrb[0].mxu0
      %v1599 = vpop.f32.mrb[0].mxu0
      %1600 = vdwg.mxu0
      %1601 = vrot.lane.b32.xlu0 %v356, 64
      %v1602 = vpop.permute.xlu0 %1601
      %v1604 = vsel %vm370, %v1349, 0
      %v1607 = vsel %vm1365, %v1602, 0
      %1609 = vmatprep.subr.bf16.mxu0 0
      %1610 = vmatpush1.bf16.msra.mxu0 %v1607
      %1611 = vmatprep.subr.bf16.mxu0 0
      %1612 = vmatpush1.bf16.msra.mxu0 0
      %1613 = vmatprep.subr.bf16.mxu0 0
      %1614 = vmatpush1.bf16.msra.mxu0 0
      %1615 = vmatprep.subr.bf16.mxu0 0
      %1616 = vmatpush1.bf16.msra.mxu0 0
      %1617 = vmatprep.subr.bf16.mxu0 0
      %1618 = vmatpush1.bf16.msra.mxu0 0
      %1619 = vmatprep.subr.bf16.mxu0 0
      %1620 = vmatpush1.bf16.msra.mxu0 0
      %1621 = vmatprep.subr.bf16.mxu0 0
      %1622 = vmatpush1.bf16.msra.mxu0 0
      %1623 = vmatprep.subr.bf16.mxu0 0
      %1624 = vmatpush1.bf16.msra.mxu0 0
      %1625 = vmatprep.subr.bf16.mxu0 0
      %1626 = vmatpush1.bf16.msra.mxu0 0
      %1627 = vmatprep.subr.bf16.mxu0 0
      %1628 = vmatpush1.bf16.msra.mxu0 0
      %1629 = vmatprep.subr.bf16.mxu0 0
      %1630 = vmatpush1.bf16.msra.mxu0 0
      %1631 = vmatprep.subr.bf16.mxu0 0
      %1632 = vmatpush1.bf16.msra.mxu0 0
      %1633 = vmatprep.subr.bf16.mxu0 0
      %1634 = vmatpush1.bf16.msra.mxu0 0
      %1635 = vmatprep.subr.bf16.mxu0 0
      %1636 = vmatpush1.bf16.msra.mxu0 0
      %1637 = vmatprep.subr.bf16.mxu0 0
      %1638 = vmatpush1.bf16.msra.mxu0 0
      %1639 = vmatprep.subr.bf16.mxu0 0
      %1640 = vmatpush1.bf16.msra.mxu0 0
      %1641 = vmatprep.mubr.bf16.mxu0 0
      %1642 = vmatmul.mubr.bf16.gmra.mrb[0].mxu0 %v1604
      %v1643 = vpop.f32.mrb[0].mxu0
      %v1644 = vadd.f32 0.0, %v1643
      %v1645 = vpop.f32.mrb[0].mxu0
      %v1646 = vpop.f32.mrb[0].mxu0
      %v1647 = vpop.f32.mrb[0].mxu0
      %1648 = vdwg.mxu0
      %1649 = vrot.lane.b32.xlu0 %v357, 64
      %v1650 = vpop.permute.xlu0 %1649
      %v1652 = vsel %vm370, %v1350, 0
      %v1655 = vsel %vm1365, %v1650, 0
      %1657 = vmatprep.subr.bf16.mxu0 0
      %1658 = vmatpush1.bf16.msra.mxu0 %v1655
      %1659 = vmatprep.subr.bf16.mxu0 0
      %1660 = vmatpush1.bf16.msra.mxu0 0
      %1661 = vmatprep.subr.bf16.mxu0 0
      %1662 = vmatpush1.bf16.msra.mxu0 0
      %1663 = vmatprep.subr.bf16.mxu0 0
      %1664 = vmatpush1.bf16.msra.mxu0 0
      %1665 = vmatprep.subr.bf16.mxu0 0
      %1666 = vmatpush1.bf16.msra.mxu0 0
      %1667 = vmatprep.subr.bf16.mxu0 0
      %1668 = vmatpush1.bf16.msra.mxu0 0
      %1669 = vmatprep.subr.bf16.mxu0 0
      %1670 = vmatpush1.bf16.msra.mxu0 0
      %1671 = vmatprep.subr.bf16.mxu0 0
      %1672 = vmatpush1.bf16.msra.mxu0 0
      %1673 = vmatprep.subr.bf16.mxu0 0
      %1674 = vmatpush1.bf16.msra.mxu0 0
      %1675 = vmatprep.subr.bf16.mxu0 0
      %1676 = vmatpush1.bf16.msra.mxu0 0
      %1677 = vmatprep.subr.bf16.mxu0 0
      %1678 = vmatpush1.bf16.msra.mxu0 0
      %1679 = vmatprep.subr.bf16.mxu0 0
      %1680 = vmatpush1.bf16.msra.mxu0 0
      %1681 = vmatprep.subr.bf16.mxu0 0
      %1682 = vmatpush1.bf16.msra.mxu0 0
      %1683 = vmatprep.subr.bf16.mxu0 0
      %1684 = vmatpush1.bf16.msra.mxu0 0
      %1685 = vmatprep.subr.bf16.mxu0 0
      %1686 = vmatpush1.bf16.msra.mxu0 0
      %1687 = vmatprep.subr.bf16.mxu0 0
      %1688 = vmatpush1.bf16.msra.mxu0 0
      %1689 = vmatprep.mubr.bf16.mxu0 0
      %1690 = vmatmul.mubr.bf16.gmra.mrb[0].mxu0 %v1652
      %v1691 = vpop.f32.mrb[0].mxu0
      %v1692 = vadd.f32 0.0, %v1691
      %v1693 = vpop.f32.mrb[0].mxu0
      %v1694 = vpop.f32.mrb[0].mxu0
      %v1695 = vpop.f32.mrb[0].mxu0
      %1696 = vdwg.mxu0
      %1697 = vrot.lane.b32.xlu0 %v358, 64
      %v1698 = vpop.permute.xlu0 %1697
      %v1700 = vsel %vm370, %v1351, 0
      %v1703 = vsel %vm1365, %v1698, 0
      %1705 = vmatprep.subr.bf16.mxu0 0
      %1706 = vmatpush1.bf16.msra.mxu0 %v1703
      %1707 = vmatprep.subr.bf16.mxu0 0
      %1708 = vmatpush1.bf16.msra.mxu0 0
      %1709 = vmatprep.subr.bf16.mxu0 0
      %1710 = vmatpush1.bf16.msra.mxu0 0
      %1711 = vmatprep.subr.bf16.mxu0 0
      %1712 = vmatpush1.bf16.msra.mxu0 0
      %1713 = vmatprep.subr.bf16.mxu0 0
      %1714 = vmatpush1.bf16.msra.mxu0 0
      %1715 = vmatprep.subr.bf16.mxu0 0
      %1716 = vmatpush1.bf16.msra.mxu0 0
      %1717 = vmatprep.subr.bf16.mxu0 0
      %1718 = vmatpush1.bf16.msra.mxu0 0
      %1719 = vmatprep.subr.bf16.mxu0 0
      %1720 = vmatpush1.bf16.msra.mxu0 0
      %1721 = vmatprep.subr.bf16.mxu0 0
      %1722 = vmatpush1.bf16.msra.mxu0 0
      %1723 = vmatprep.subr.bf16.mxu0 0
      %1724 = vmatpush1.bf16.msra.mxu0 0
      %1725 = vmatprep.subr.bf16.mxu0 0
      %1726 = vmatpush1.bf16.msra.mxu0 0
      %1727 = vmatprep.subr.bf16.mxu0 0
      %1728 = vmatpush1.bf16.msra.mxu0 0
      %1729 = vmatprep.subr.bf16.mxu0 0
      %1730 = vmatpush1.bf16.msra.mxu0 0
      %1731 = vmatprep.subr.bf16.mxu0 0
      %1732 = vmatpush1.bf16.msra.mxu0 0
      %1733 = vmatprep.subr.bf16.mxu0 0
      %1734 = vmatpush1.bf16.msra.mxu0 0
      %1735 = vmatprep.subr.bf16.mxu0 0
      %1736 = vmatpush1.bf16.msra.mxu0 0
      %1737 = vmatprep.mubr.bf16.mxu0 0
      %1738 = vmatmul.mubr.bf16.gmra.mrb[0].mxu0 %v1700
      %v1739 = vpop.f32.mrb[0].mxu0
      %v1740 = vadd.f32 0.0, %v1739
      %v1741 = vpop.f32.mrb[0].mxu0
      %v1742 = vpop.f32.mrb[0].mxu0
      %v1743 = vpop.f32.mrb[0].mxu0
      %1744 = vdwg.mxu0
      %1745 = vrot.lane.b32.xlu0 %v359, 64
      %v1746 = vpop.permute.xlu0 %1745
      %v1748 = vsel %vm370, %v1352, 0
      %v1751 = vsel %vm1365, %v1746, 0
      %1753 = vmatprep.subr.bf16.mxu0 0
      %1754 = vmatpush1.bf16.msra.mxu0 %v1751
      %1755 = vmatprep.subr.bf16.mxu0 0
      %1756 = vmatpush1.bf16.msra.mxu0 0
      %1757 = vmatprep.subr.bf16.mxu0 0
      %1758 = vmatpush1.bf16.msra.mxu0 0
      %1759 = vmatprep.subr.bf16.mxu0 0
      %1760 = vmatpush1.bf16.msra.mxu0 0
      %1761 = vmatprep.subr.bf16.mxu0 0
      %1762 = vmatpush1.bf16.msra.mxu0 0
      %1763 = vmatprep.subr.bf16.mxu0 0
      %1764 = vmatpush1.bf16.msra.mxu0 0
      %1765 = vmatprep.subr.bf16.mxu0 0
      %1766 = vmatpush1.bf16.msra.mxu0 0
      %1767 = vmatprep.subr.bf16.mxu0 0
      %1768 = vmatpush1.bf16.msra.mxu0 0
      %1769 = vmatprep.subr.bf16.mxu0 0
      %1770 = vmatpush1.bf16.msra.mxu0 0
      %1771 = vmatprep.subr.bf16.mxu0 0
      %1772 = vmatpush1.bf16.msra.mxu0 0
      %1773 = vmatprep.subr.bf16.mxu0 0
      %1774 = vmatpush1.bf16.msra.mxu0 0
      %1775 = vmatprep.subr.bf16.mxu0 0
      %1776 = vmatpush1.bf16.msra.mxu0 0
      %1777 = vmatprep.subr.bf16.mxu0 0
      %1778 = vmatpush1.bf16.msra.mxu0 0
      %1779 = vmatprep.subr.bf16.mxu0 0
      %1780 = vmatpush1.bf16.msra.mxu0 0
      %1781 = vmatprep.subr.bf16.mxu0 0
      %1782 = vmatpush1.bf16.msra.mxu0 0
      %1783 = vmatprep.subr.bf16.mxu0 0
      %1784 = vmatpush1.bf16.msra.mxu0 0
      %1785 = vmatprep.mubr.bf16.mxu0 0
      %1786 = vmatmul.mubr.bf16.gmra.mrb[0].mxu0 %v1748
      %v1787 = vpop.f32.mrb[0].mxu0
      %v1788 = vadd.f32 0.0, %v1787
      %v1789 = vpop.f32.mrb[0].mxu0
      %v1790 = vpop.f32.mrb[0].mxu0
      %v1791 = vpop.f32.mrb[0].mxu0
      %1792 = vdwg.mxu0
      %1793 = vrot.lane.b32.xlu0 %v360, 64
      %v1794 = vpop.permute.xlu0 %1793
      %v1796 = vsel %vm370, %v1353, 0
      %v1799 = vsel %vm1365, %v1794, 0
      %1801 = vmatprep.subr.bf16.mxu0 0
      %1802 = vmatpush1.bf16.msra.mxu0 %v1799
      %1803 = vmatprep.subr.bf16.mxu0 0
      %1804 = vmatpush1.bf16.msra.mxu0 0
      %1805 = vmatprep.subr.bf16.mxu0 0
      %1806 = vmatpush1.bf16.msra.mxu0 0
      %1807 = vmatprep.subr.bf16.mxu0 0
      %1808 = vmatpush1.bf16.msra.mxu0 0
      %1809 = vmatprep.subr.bf16.mxu0 0
      %1810 = vmatpush1.bf16.msra.mxu0 0
      %1811 = vmatprep.subr.bf16.mxu0 0
      %1812 = vmatpush1.bf16.msra.mxu0 0
      %1813 = vmatprep.subr.bf16.mxu0 0
      %1814 = vmatpush1.bf16.msra.mxu0 0
      %1815 = vmatprep.subr.bf16.mxu0 0
      %1816 = vmatpush1.bf16.msra.mxu0 0
      %1817 = vmatprep.subr.bf16.mxu0 0
      %1818 = vmatpush1.bf16.msra.mxu0 0
      %1819 = vmatprep.subr.bf16.mxu0 0
      %1820 = vmatpush1.bf16.msra.mxu0 0
      %1821 = vmatprep.subr.bf16.mxu0 0
      %1822 = vmatpush1.bf16.msra.mxu0 0
      %1823 = vmatprep.subr.bf16.mxu0 0
      %1824 = vmatpush1.bf16.msra.mxu0 0
      %1825 = vmatprep.subr.bf16.mxu0 0
      %1826 = vmatpush1.bf16.msra.mxu0 0
      %1827 = vmatprep.subr.bf16.mxu0 0
      %1828 = vmatpush1.bf16.msra.mxu0 0
      %1829 = vmatprep.subr.bf16.mxu0 0
      %1830 = vmatpush1.bf16.msra.mxu0 0
      %1831 = vmatprep.subr.bf16.mxu0 0
      %1832 = vmatpush1.bf16.msra.mxu0 0
      %1833 = vmatprep.mubr.bf16.mxu0 0
      %1834 = vmatmul.mubr.bf16.gmra.mrb[0].mxu0 %v1796
      %v1835 = vpop.f32.mrb[0].mxu0
      %v1836 = vadd.f32 0.0, %v1835
      %v1837 = vpop.f32.mrb[0].mxu0
      %v1838 = vpop.f32.mrb[0].mxu0
      %v1839 = vpop.f32.mrb[0].mxu0
      %1840 = vdwg.mxu0
      %1841 = vrot.lane.b32.xlu0 %v361, 64
      %v1842 = vpop.permute.xlu0 %1841
      %v1844 = vsel %vm370, %v1354, 0
      %v1847 = vsel %vm1365, %v1842, 0
      %1849 = vmatprep.subr.bf16.mxu0 0
      %1850 = vmatpush1.bf16.msra.mxu0 %v1847
      %1851 = vmatprep.subr.bf16.mxu0 0
      %1852 = vmatpush1.bf16.msra.mxu0 0
      %1853 = vmatprep.subr.bf16.mxu0 0
      %1854 = vmatpush1.bf16.msra.mxu0 0
      %1855 = vmatprep.subr.bf16.mxu0 0
      %1856 = vmatpush1.bf16.msra.mxu0 0
      %1857 = vmatprep.subr.bf16.mxu0 0
      %1858 = vmatpush1.bf16.msra.mxu0 0
      %1859 = vmatprep.subr.bf16.mxu0 0
      %1860 = vmatpush1.bf16.msra.mxu0 0
      %1861 = vmatprep.subr.bf16.mxu0 0
      %1862 = vmatpush1.bf16.msra.mxu0 0
      %1863 = vmatprep.subr.bf16.mxu0 0
      %1864 = vmatpush1.bf16.msra.mxu0 0
      %1865 = vmatprep.subr.bf16.mxu0 0
      %1866 = vmatpush1.bf16.msra.mxu0 0
      %1867 = vmatprep.subr.bf16.mxu0 0
      %1868 = vmatpush1.bf16.msra.mxu0 0
      %1869 = vmatprep.subr.bf16.mxu0 0
      %1870 = vmatpush1.bf16.msra.mxu0 0
      %1871 = vmatprep.subr.bf16.mxu0 0
      %1872 = vmatpush1.bf16.msra.mxu0 0
      %1873 = vmatprep.subr.bf16.mxu0 0
      %1874 = vmatpush1.bf16.msra.mxu0 0
      %1875 = vmatprep.subr.bf16.mxu0 0
      %1876 = vmatpush1.bf16.msra.mxu0 0
      %1877 = vmatprep.subr.bf16.mxu0 0
      %1878 = vmatpush1.bf16.msra.mxu0 0
      %1879 = vmatprep.subr.bf16.mxu0 0
      %1880 = vmatpush1.bf16.msra.mxu0 0
      %1881 = vmatprep.mubr.bf16.mxu0 0
      %1882 = vmatmul.mubr.bf16.gmra.mrb[0].mxu0 %v1844
      %v1883 = vpop.f32.mrb[0].mxu0
      %v1884 = vadd.f32 0.0, %v1883
      %v1885 = vpop.f32.mrb[0].mxu0
      %v1886 = vpop.f32.mrb[0].mxu0
      %v1887 = vpop.f32.mrb[0].mxu0
      %1888 = vdwg.mxu0
      %1889 = vrot.lane.b32.xlu0 %v362, 64
      %v1890 = vpop.permute.xlu0 %1889
      %v1892 = vsel %vm370, %v1355, 0
      %v1895 = vsel %vm1365, %v1890, 0
      %1897 = vmatprep.subr.bf16.mxu0 0
      %1898 = vmatpush1.bf16.msra.mxu0 %v1895
      %1899 = vmatprep.subr.bf16.mxu0 0
      %1900 = vmatpush1.bf16.msra.mxu0 0
      %1901 = vmatprep.subr.bf16.mxu0 0
      %1902 = vmatpush1.bf16.msra.mxu0 0
      %1903 = vmatprep.subr.bf16.mxu0 0
      %1904 = vmatpush1.bf16.msra.mxu0 0
      %1905 = vmatprep.subr.bf16.mxu0 0
      %1906 = vmatpush1.bf16.msra.mxu0 0
      %1907 = vmatprep.subr.bf16.mxu0 0
      %1908 = vmatpush1.bf16.msra.mxu0 0
      %1909 = vmatprep.subr.bf16.mxu0 0
      %1910 = vmatpush1.bf16.msra.mxu0 0
      %1911 = vmatprep.subr.bf16.mxu0 0
      %1912 = vmatpush1.bf16.msra.mxu0 0
      %1913 = vmatprep.subr.bf16.mxu0 0
      %1914 = vmatpush1.bf16.msra.mxu0 0
      %1915 = vmatprep.subr.bf16.mxu0 0
      %1916 = vmatpush1.bf16.msra.mxu0 0
      %1917 = vmatprep.subr.bf16.mxu0 0
      %1918 = vmatpush1.bf16.msra.mxu0 0
      %1919 = vmatprep.subr.bf16.mxu0 0
      %1920 = vmatpush1.bf16.msra.mxu0 0
      %1921 = vmatprep.subr.bf16.mxu0 0
      %1922 = vmatpush1.bf16.msra.mxu0 0
      %1923 = vmatprep.subr.bf16.mxu0 0
      %1924 = vmatpush1.bf16.msra.mxu0 0
      %1925 = vmatprep.subr.bf16.mxu0 0
      %1926 = vmatpush1.bf16.msra.mxu0 0
      %1927 = vmatprep.subr.bf16.mxu0 0
      %1928 = vmatpush1.bf16.msra.mxu0 0
      %1929 = vmatprep.mubr.bf16.mxu0 0
      %1930 = vmatmul.mubr.bf16.gmra.mrb[0].mxu0 %v1892
      %v1931 = vpop.f32.mrb[0].mxu0
      %v1932 = vadd.f32 0.0, %v1931
      %v1933 = vpop.f32.mrb[0].mxu0
      %v1934 = vpop.f32.mrb[0].mxu0
      %v1935 = vpop.f32.mrb[0].mxu0
      %1936 = vdwg.mxu0
      %1937 = vrot.lane.b32.xlu0 %v363, 64
      %v1938 = vpop.permute.xlu0 %1937
      %v1940 = vsel %vm370, %v1356, 0
      %v1943 = vsel %vm1365, %v1938, 0
      %1945 = vmatprep.subr.bf16.mxu0 0
      %1946 = vmatpush1.bf16.msra.mxu0 %v1943
      %1947 = vmatprep.subr.bf16.mxu0 0
      %1948 = vmatpush1.bf16.msra.mxu0 0
      %1949 = vmatprep.subr.bf16.mxu0 0
      %1950 = vmatpush1.bf16.msra.mxu0 0
      %1951 = vmatprep.subr.bf16.mxu0 0
      %1952 = vmatpush1.bf16.msra.mxu0 0
      %1953 = vmatprep.subr.bf16.mxu0 0
      %1954 = vmatpush1.bf16.msra.mxu0 0
      %1955 = vmatprep.subr.bf16.mxu0 0
      %1956 = vmatpush1.bf16.msra.mxu0 0
      %1957 = vmatprep.subr.bf16.mxu0 0
      %1958 = vmatpush1.bf16.msra.mxu0 0
      %1959 = vmatprep.subr.bf16.mxu0 0
      %1960 = vmatpush1.bf16.msra.mxu0 0
      %1961 = vmatprep.subr.bf16.mxu0 0
      %1962 = vmatpush1.bf16.msra.mxu0 0
      %1963 = vmatprep.subr.bf16.mxu0 0
      %1964 = vmatpush1.bf16.msra.mxu0 0
      %1965 = vmatprep.subr.bf16.mxu0 0
      %1966 = vmatpush1.bf16.msra.mxu0 0
      %1967 = vmatprep.subr.bf16.mxu0 0
      %1968 = vmatpush1.bf16.msra.mxu0 0
      %1969 = vmatprep.subr.bf16.mxu0 0
      %1970 = vmatpush1.bf16.msra.mxu0 0
      %1971 = vmatprep.subr.bf16.mxu0 0
      %1972 = vmatpush1.bf16.msra.mxu0 0
      %1973 = vmatprep.subr.bf16.mxu0 0
      %1974 = vmatpush1.bf16.msra.mxu0 0
      %1975 = vmatprep.subr.bf16.mxu0 0
      %1976 = vmatpush1.bf16.msra.mxu0 0
      %1977 = vmatprep.mubr.bf16.mxu0 0
      %1978 = vmatmul.mubr.bf16.gmra.mrb[0].mxu0 %v1940
      %v1979 = vpop.f32.mrb[0].mxu0
      %v1980 = vadd.f32 0.0, %v1979
      %v1981 = vpop.f32.mrb[0].mxu0
      %v1982 = vpop.f32.mrb[0].mxu0
      %v1983 = vpop.f32.mrb[0].mxu0
      %1984 = vdwg.mxu0
      %1985 = vrot.lane.b32.xlu0 %v364, 64
      %v1986 = vpop.permute.xlu0 %1985
      %v1988 = vsel %vm370, %v1357, 0
      %v1991 = vsel %vm1365, %v1986, 0
      %1993 = vmatprep.subr.bf16.mxu0 0
      %1994 = vmatpush1.bf16.msra.mxu0 %v1991
      %1995 = vmatprep.subr.bf16.mxu0 0
      %1996 = vmatpush1.bf16.msra.mxu0 0
      %1997 = vmatprep.subr.bf16.mxu0 0
      %1998 = vmatpush1.bf16.msra.mxu0 0
      %1999 = vmatprep.subr.bf16.mxu0 0
      %2000 = vmatpush1.bf16.msra.mxu0 0
      %2001 = vmatprep.subr.bf16.mxu0 0
      %2002 = vmatpush1.bf16.msra.mxu0 0
      %2003 = vmatprep.subr.bf16.mxu0 0
      %2004 = vmatpush1.bf16.msra.mxu0 0
      %2005 = vmatprep.subr.bf16.mxu0 0
      %2006 = vmatpush1.bf16.msra.mxu0 0
      %2007 = vmatprep.subr.bf16.mxu0 0
      %2008 = vmatpush1.bf16.msra.mxu0 0
      %2009 = vmatprep.subr.bf16.mxu0 0
      %2010 = vmatpush1.bf16.msra.mxu0 0
      %2011 = vmatprep.subr.bf16.mxu0 0
      %2012 = vmatpush1.bf16.msra.mxu0 0
      %2013 = vmatprep.subr.bf16.mxu0 0
      %2014 = vmatpush1.bf16.msra.mxu0 0
      %2015 = vmatprep.subr.bf16.mxu0 0
      %2016 = vmatpush1.bf16.msra.mxu0 0
      %2017 = vmatprep.subr.bf16.mxu0 0
      %2018 = vmatpush1.bf16.msra.mxu0 0
      %2019 = vmatprep.subr.bf16.mxu0 0
      %2020 = vmatpush1.bf16.msra.mxu0 0
      %2021 = vmatprep.subr.bf16.mxu0 0
      %2022 = vmatpush1.bf16.msra.mxu0 0
      %2023 = vmatprep.subr.bf16.mxu0 0
      %2024 = vmatpush1.bf16.msra.mxu0 0
      %2025 = vmatprep.mubr.bf16.mxu0 0
      %2026 = vmatmul.mubr.bf16.gmra.mrb[0].mxu0 %v1988
      %v2027 = vpop.f32.mrb[0].mxu0
      %v2028 = vadd.f32 0.0, %v2027
      %v2029 = vpop.f32.mrb[0].mxu0
      %v2030 = vpop.f32.mrb[0].mxu0
      %v2031 = vpop.f32.mrb[0].mxu0
      %2032 = vdwg.mxu0
      %2033 = vrot.lane.b32.xlu0 %v365, 64
      %v2034 = vpop.permute.xlu0 %2033
      %v2036 = vsel %vm370, %v1358, 0
      %v2039 = vsel %vm1365, %v2034, 0
      %2041 = vmatprep.subr.bf16.mxu0 0
      %2042 = vmatpush1.bf16.msra.mxu0 %v2039
      %2043 = vmatprep.subr.bf16.mxu0 0
      %2044 = vmatpush1.bf16.msra.mxu0 0
      %2045 = vmatprep.subr.bf16.mxu0 0
      %2046 = vmatpush1.bf16.msra.mxu0 0
      %2047 = vmatprep.subr.bf16.mxu0 0
      %2048 = vmatpush1.bf16.msra.mxu0 0
      %2049 = vmatprep.subr.bf16.mxu0 0
      %2050 = vmatpush1.bf16.msra.mxu0 0
      %2051 = vmatprep.subr.bf16.mxu0 0
      %2052 = vmatpush1.bf16.msra.mxu0 0
      %2053 = vmatprep.subr.bf16.mxu0 0
      %2054 = vmatpush1.bf16.msra.mxu0 0
      %2055 = vmatprep.subr.bf16.mxu0 0
      %2056 = vmatpush1.bf16.msra.mxu0 0
      %2057 = vmatprep.subr.bf16.mxu0 0
      %2058 = vmatpush1.bf16.msra.mxu0 0
      %2059 = vmatprep.subr.bf16.mxu0 0
      %2060 = vmatpush1.bf16.msra.mxu0 0
      %2061 = vmatprep.subr.bf16.mxu0 0
      %2062 = vmatpush1.bf16.msra.mxu0 0
      %2063 = vmatprep.subr.bf16.mxu0 0
      %2064 = vmatpush1.bf16.msra.mxu0 0
      %2065 = vmatprep.subr.bf16.mxu0 0
      %2066 = vmatpush1.bf16.msra.mxu0 0
      %2067 = vmatprep.subr.bf16.mxu0 0
      %2068 = vmatpush1.bf16.msra.mxu0 0
      %2069 = vmatprep.subr.bf16.mxu0 0
      %2070 = vmatpush1.bf16.msra.mxu0 0
      %2071 = vmatprep.subr.bf16.mxu0 0
      %2072 = vmatpush1.bf16.msra.mxu0 0
      %2073 = vmatprep.mubr.bf16.mxu0 0
      %2074 = vmatmul.mubr.bf16.gmra.mrb[0].mxu0 %v2036
      %v2075 = vpop.f32.mrb[0].mxu0
      %v2076 = vadd.f32 0.0, %v2075
      %v2077 = vpop.f32.mrb[0].mxu0
      %v2078 = vpop.f32.mrb[0].mxu0
      %v2079 = vpop.f32.mrb[0].mxu0
      %2080 = vdwg.mxu0
      %2081 = vrot.lane.b32.xlu0 %v366, 64
      %v2082 = vpop.permute.xlu0 %2081
      %v2084 = vsel %vm370, %v1359, 0
      %v2087 = vsel %vm1365, %v2082, 0
      %2089 = vmatprep.subr.bf16.mxu0 0
      %2090 = vmatpush1.bf16.msra.mxu0 %v2087
      %2091 = vmatprep.subr.bf16.mxu0 0
      %2092 = vmatpush1.bf16.msra.mxu0 0
      %2093 = vmatprep.subr.bf16.mxu0 0
      %2094 = vmatpush1.bf16.msra.mxu0 0
      %2095 = vmatprep.subr.bf16.mxu0 0
      %2096 = vmatpush1.bf16.msra.mxu0 0
      %2097 = vmatprep.subr.bf16.mxu0 0
      %2098 = vmatpush1.bf16.msra.mxu0 0
      %2099 = vmatprep.subr.bf16.mxu0 0
      %2100 = vmatpush1.bf16.msra.mxu0 0
      %2101 = vmatprep.subr.bf16.mxu0 0
      %2102 = vmatpush1.bf16.msra.mxu0 0
      %2103 = vmatprep.subr.bf16.mxu0 0
      %2104 = vmatpush1.bf16.msra.mxu0 0
      %2105 = vmatprep.subr.bf16.mxu0 0
      %2106 = vmatpush1.bf16.msra.mxu0 0
      %2107 = vmatprep.subr.bf16.mxu0 0
      %2108 = vmatpush1.bf16.msra.mxu0 0
      %2109 = vmatprep.subr.bf16.mxu0 0
      %2110 = vmatpush1.bf16.msra.mxu0 0
      %2111 = vmatprep.subr.bf16.mxu0 0
      %2112 = vmatpush1.bf16.msra.mxu0 0
      %2113 = vmatprep.subr.bf16.mxu0 0
      %2114 = vmatpush1.bf16.msra.mxu0 0
      %2115 = vmatprep.subr.bf16.mxu0 0
      %2116 = vmatpush1.bf16.msra.mxu0 0
      %2117 = vmatprep.subr.bf16.mxu0 0
      %2118 = vmatpush1.bf16.msra.mxu0 0
      %2119 = vmatprep.subr.bf16.mxu0 0
      %2120 = vmatpush1.bf16.msra.mxu0 0
      %2121 = vmatprep.mubr.bf16.mxu0 0
      %2122 = vmatmul.mubr.bf16.gmra.mrb[0].mxu0 %v2084
      %v2123 = vpop.f32.mrb[0].mxu0
      %v2124 = vadd.f32 0.0, %v2123
      %v2125 = vpop.f32.mrb[0].mxu0
      %v2126 = vpop.f32.mrb[0].mxu0
      %v2127 = vpop.f32.mrb[0].mxu0
      %2128 = vdwg.mxu0
      %2133 = vrot.lane.b32.xlu0 %v1596, 8
      %v2134 = vpop.permute.xlu0 %2133
      %2135 = vrot.lane.b32.xlu0 %v1644, 8
      %v2136 = vpop.permute.xlu0 %2135
      %2137 = vrot.lane.b32.xlu0 %v1692, 8
      %v2138 = vpop.permute.xlu0 %2137
      %2139 = vrot.lane.b32.xlu0 %v1740, 8
      %v2140 = vpop.permute.xlu0 %2139
      %2149 = vrot.lane.b32.xlu0 %v1788, 16
      %v2150 = vpop.permute.xlu0 %2149
      %2151 = vrot.lane.b32.xlu0 %v1836, 16
      %v2152 = vpop.permute.xlu0 %2151
      %2153 = vrot.lane.b32.xlu0 %v1884, 16
      %v2154 = vpop.permute.xlu0 %2153
      %2155 = vrot.lane.b32.xlu0 %v1932, 16
      %v2156 = vpop.permute.xlu0 %2155
      %2165 = vrot.lane.b32.xlu0 %v1980, 24
      %v2166 = vpop.permute.xlu0 %2165
      %2167 = vrot.lane.b32.xlu0 %v2028, 24
      %v2168 = vpop.permute.xlu0 %2167
      %2169 = vrot.lane.b32.xlu0 %v2076, 24
      %v2170 = vpop.permute.xlu0 %2169
      %2171 = vrot.lane.b32.xlu0 %v2124, 24
      %v2172 = vpop.permute.xlu0 %2171
      %v2177 = vsel %vm370, %v1404, %v2134
      %v2178 = vsel %vm370, %v1452, %v2136
      %v2179 = vsel %vm370, %v1500, %v2138
      %v2180 = vsel %vm370, %v1548, %v2140
      %vm2181 = vcmask 130048
      %v2182 = vsel %vm2181, %v2177, %v2150
      %v2183 = vsel %vm2181, %v2178, %v2152
      %v2184 = vsel %vm2181, %v2179, %v2154
      %v2185 = vsel %vm2181, %v2180, %v2156
      %vm2186 = vcmask 195584
      %v2187 = vsel %vm2186, %v2182, %v2166
      %v2188 = vsel %vm2186, %v2183, %v2168
      %v2189 = vsel %vm2186, %v2184, %v2170
      %v2190 = vsel %vm2186, %v2185, %v2172
      %v2191 = vpack.c.bf16 %v2188, %v2187
      %v2192 = vpack.c.bf16 %v2190, %v2189
      %v2193 = vld [vmem:[%s2] sm:$0xf]
      %v2194 = vld [vmem:[%s2 + $0x14] sm:$0xf]
      %v2195 = vld [vmem:[%s2 + $0x28] sm:$0xf]
      %v2196 = vld [vmem:[%s2 + $0x3c] sm:$0xf]
      %v2197 = vld [vmem:[%s4] sm:$0x1]
      %v2199 = vlaneseq
      %v2200 = vshrl.u32 %v2199, 7
      %v2201 = vsub.s32 0, %v2200
      %v2202 = vrot.slane %v2197, %v2201
      %v2207 = vunpack.c.l.b16 %v2193
      %v2208 = vunpack.c.l.b16 %v2194
      %v2209 = vunpack.c.l.b16 %v2195
      %v2210 = vunpack.c.l.b16 %v2196
      %v2211 = vpack.c.b16 %v2208, %v2207
      %v2212 = vpack.c.b16 %v2210, %v2209
      %2213 = vrot.lane.b32.xlu0 %v2211, 32
      %v2214 = vpop.permute.xlu0 %2213
      %2215 = vrot.lane.b32.xlu0 %v2212, 32
      %v2216 = vpop.permute.xlu0 %2215
      %2219 = vrot.lane.b32.xlu0 %v2202, 32
      %v2220 = vpop.permute.xlu0 %2219
      %v2223 = vsel %vm255, %v2191, 0
      %v2226 = vsel %vm255, %v2192, 0
      %2228 = vmatprep.subr.bf16.mxu0 0
      %2229 = vmatpush1.bf16.msra.mxu0 %v2214
      %2230 = vmatprep.subr.bf16.mxu0 0
      %2231 = vmatpush1.bf16.msra.mxu0 %v2216
      %2232 = vmatprep.subr.bf16.mxu0 0
      %2233 = vmatpush1.bf16.msra.mxu0 0
      %2234 = vmatprep.subr.bf16.mxu0 0
      %2235 = vmatpush1.bf16.msra.mxu0 0
      %2236 = vmatprep.subr.bf16.mxu0 0
      %2237 = vmatpush1.bf16.msra.mxu0 0
      %2238 = vmatprep.subr.bf16.mxu0 0
      %2239 = vmatpush1.bf16.msra.mxu0 0
      %2240 = vmatprep.subr.bf16.mxu0 0
      %2241 = vmatpush1.bf16.msra.mxu0 0
      %2242 = vmatprep.subr.bf16.mxu0 0
      %2243 = vmatpush1.bf16.msra.mxu0 0
      %2244 = vmatprep.subr.bf16.mxu0 0
      %2245 = vmatpush1.bf16.msra.mxu0 0
      %2246 = vmatprep.subr.bf16.mxu0 0
      %2247 = vmatpush1.bf16.msra.mxu0 0
      %2248 = vmatprep.subr.bf16.mxu0 0
      %2249 = vmatpush1.bf16.msra.mxu0 0
      %2250 = vmatprep.subr.bf16.mxu0 0
      %2251 = vmatpush1.bf16.msra.mxu0 0
      %2252 = vmatprep.subr.bf16.mxu0 0
      %2253 = vmatpush1.bf16.msra.mxu0 0
      %2254 = vmatprep.subr.bf16.mxu0 0
      %2255 = vmatpush1.bf16.msra.mxu0 0
      %2256 = vmatprep.subr.bf16.mxu0 0
      %2257 = vmatpush1.bf16.msra.mxu0 0
      %2258 = vmatprep.subr.bf16.mxu0 0
      %2259 = vmatpush1.bf16.msra.mxu0 0
      %2260 = vmatprep.mubr.bf16.mxu0 0
      %2261 = vmatmul.mubr.bf16.gmra.mrb[0].mxu0 %v2223
      %v2262 = vpop.f32.mrb[0].mxu0
      %v2263 = vadd.f32 %v2220, %v2262
      %v2264 = vpop.f32.mrb[0].mxu0
      %v2265 = vpop.f32.mrb[0].mxu0
      %v2266 = vadd.f32 %v2220, %v2265
      %v2267 = vpop.f32.mrb[0].mxu0
      %2268 = vmatprep.mubr.bf16.mxu0 0
      %2269 = vmatmul.mubr.bf16.gmra.mrb[0].mxu0 %v2226
      %v2270 = vpop.f32.mrb[0].mxu0
      %v2271 = vadd.f32 %v2220, %v2270
      %v2272 = vpop.f32.mrb[0].mxu0
      %v2273 = vpop.f32.mrb[0].mxu0
      %v2274 = vadd.f32 %v2220, %v2273
      %v2275 = vpop.f32.mrb[0].mxu0
      %2276 = vdwg.mxu0
      %v2277 = vadd.f32 %v226, %v2263
      %v2278 = vadd.f32 %v227, %v2266
      %v2279 = vadd.f32 %v228, %v2271
      %v2280 = vadd.f32 %v229, %v2274
      %v2281 = vld [vmem:[%s4 + $0x1] sm:$0x1]
      %v2282 = vsel %vm255, %v2277, 0.0
      %2283 = vadd.xlane.f32.xlu0 %v2282
      %v2284 = vpop.xlane.xlu0 %2283
      %v2285 = vsel %vm255, %v2278, 0.0
      %2286 = vadd.xlane.f32.xlu0 %v2285
      %v2287 = vpop.xlane.xlu0 %2286
      %v2288 = vsel %vm255, %v2279, 0.0
      %2289 = vadd.xlane.f32.xlu0 %v2288
      %v2290 = vpop.xlane.xlu0 %2289
      %v2291 = vsel %vm255, %v2280, 0.0
      %2292 = vadd.xlane.f32.xlu0 %v2291
      %v2293 = vpop.xlane.xlu0 %2292
      %v2294 = vrcp.pop 32.0
      %v2295 = vmul.f32 %v2284, %v2294
      %v2296 = vmul.f32 %v2287, %v2294
      %v2297 = vmul.f32 %v2290, %v2294
      %v2298 = vmul.f32 %v2293, %v2294
      %v2299 = vsub.f32 %v2277, %v2295
      %v2300 = vsub.f32 %v2278, %v2296
      %v2301 = vsub.f32 %v2279, %v2297
      %v2302 = vsub.f32 %v2280, %v2298
      %v2303 = vmul.f32 %v2299, %v2299
      %v2304 = vmul.f32 %v2300, %v2300
      %v2305 = vmul.f32 %v2301, %v2301
      %v2306 = vmul.f32 %v2302, %v2302
      %v2307 = vsel %vm255, %v2303, 0.0
      %2308 = vadd.xlane.f32.xlu0 %v2307
      %v2309 = vpop.xlane.xlu0 %2308
      %v2310 = vsel %vm255, %v2304, 0.0
      %2311 = vadd.xlane.f32.xlu0 %v2310
      %v2312 = vpop.xlane.xlu0 %2311
      %v2313 = vsel %vm255, %v2305, 0.0
      %2314 = vadd.xlane.f32.xlu0 %v2313
      %v2315 = vpop.xlane.xlu0 %2314
      %v2316 = vsel %vm255, %v2306, 0.0
      %2317 = vadd.xlane.f32.xlu0 %v2316
      %v2318 = vpop.xlane.xlu0 %2317
      %v2319 = vmul.f32 %v2309, %v2294
      %v2320 = vmul.f32 %v2312, %v2294
      %v2321 = vmul.f32 %v2315, %v2294
      %v2322 = vmul.f32 %v2318, %v2294
      %v2323 = vadd.f32 %v2319, 1e-05
      %v2324 = vadd.f32 %v2320, 1e-05
      %v2325 = vadd.f32 %v2321, 1e-05
      %v2326 = vadd.f32 %v2322, 1e-05
      %v2327 = vrsqrt.pop %v2323
      %v2328 = vrsqrt.pop %v2324
      %v2329 = vrsqrt.pop %v2325
      %v2330 = vrsqrt.pop %v2326
      %v2331 = vmul.f32 %v2299, %v2327
      %v2332 = vmul.f32 %v2300, %v2328
      %v2333 = vmul.f32 %v2301, %v2329
      %v2334 = vmul.f32 %v2302, %v2330
      %v2336 = vlaneseq
      %v2337 = vshrl.u32 %v2336, 7
      %v2338 = vsub.s32 0, %v2337
      %v2339 = vrot.slane %v2281, %v2338
      %v2341 = vmul.f32 %v2331, %v2339
      %v2342 = vmul.f32 %v2332, %v2339
      %v2343 = vmul.f32 %v2333, %v2339
      %v2344 = vmul.f32 %v2334, %v2339
      %2345 = vrot.lane.b32.xlu0 %v2339, 96
      %v2346 = vpop.permute.xlu0 %2345
      %v2348 = vadd.f32 %v2341, %v2346
      %v2349 = vadd.f32 %v2342, %v2346
      %v2350 = vadd.f32 %v2343, %v2346
      %v2351 = vadd.f32 %v2344, %v2346
      %v2352 = vpack.c.bf16 %v2349, %v2348
      %v2353 = vpack.c.bf16 %v2351, %v2350
      %v2354 = vld [vmem:[%s2 + $0x4] sm:$0xf]
      %v2355 = vld [vmem:[%s2 + $0x18] sm:$0xf]
      %v2356 = vld [vmem:[%s2 + $0x2c] sm:$0xf]
      %v2357 = vld [vmem:[%s2 + $0x40] sm:$0xf]
      %v2358 = vld [vmem:[%s4 + $0x1] sm:$0x3]
      %v2360 = vlaneseq
      %v2361 = vshrl.u32 %v2360, 7
      %v2362 = vsub.s32 0, %v2361
      %v2363 = vrot.slane %v2358, %v2362
      %v2364 = vlaneseq
      %v2365 = vshrl.u32 %v2364, 7
      %v2366 = vsub.s32 1, %v2365
      %v2367 = vrot.slane %v2358, %v2366
      %v2372 = vunpack.c.l.b16 %v2354
      %v2373 = vunpack.c.l.b16 %v2355
      %v2374 = vunpack.c.l.b16 %v2356
      %v2375 = vunpack.c.l.b16 %v2357
      %v2376 = vpack.c.b16 %v2373, %v2372
      %v2377 = vpack.c.b16 %v2375, %v2374
      %2380 = vrot.lane.b32.xlu0 %v2363, 64
      %v2381 = vpop.permute.xlu0 %2380
      %2382 = vrot.lane.b32.xlu0 %v2367, 64
      %v2383 = vpop.permute.xlu0 %2382
      %vm2384 = vcmask 523264
      %v2385 = vsel %vm2384, %v2381, %v2383
      %v2388 = vsel %vm255, %v2352, 0
      %v2391 = vsel %vm255, %v2353, 0
      %2393 = vmatprep.subr.bf16.mxu0 0
      %2394 = vmatpush1.bf16.msra.mxu0 %v2376
      %2395 = vmatprep.subr.bf16.mxu0 0
      %2396 = vmatpush1.bf16.msra.mxu0 %v2377
      %2397 = vmatprep.subr.bf16.mxu0 0
      %2398 = vmatpush1.bf16.msra.mxu0 0
      %2399 = vmatprep.subr.bf16.mxu0 0
      %2400 = vmatpush1.bf16.msra.mxu0 0
      %2401 = vmatprep.subr.bf16.mxu0 0
      %2402 = vmatpush1.bf16.msra.mxu0 0
      %2403 = vmatprep.subr.bf16.mxu0 0
      %2404 = vmatpush1.bf16.msra.mxu0 0
      %2405 = vmatprep.subr.bf16.mxu0 0
      %2406 = vmatpush1.bf16.msra.mxu0 0
      %2407 = vmatprep.subr.bf16.mxu0 0
      %2408 = vmatpush1.bf16.msra.mxu0 0
      %2409 = vmatprep.subr.bf16.mxu0 0
      %2410 = vmatpush1.bf16.msra.mxu0 0
      %2411 = vmatprep.subr.bf16.mxu0 0
      %2412 = vmatpush1.bf16.msra.mxu0 0
      %2413 = vmatprep.subr.bf16.mxu0 0
      %2414 = vmatpush1.bf16.msra.mxu0 0
      %2415 = vmatprep.subr.bf16.mxu0 0
      %2416 = vmatpush1.bf16.msra.mxu0 0
      %2417 = vmatprep.subr.bf16.mxu0 0
      %2418 = vmatpush1.bf16.msra.mxu0 0
      %2419 = vmatprep.subr.bf16.mxu0 0
      %2420 = vmatpush1.bf16.msra.mxu0 0
      %2421 = vmatprep.subr.bf16.mxu0 0
      %2422 = vmatpush1.bf16.msra.mxu0 0
      %2423 = vmatprep.subr.bf16.mxu0 0
      %2424 = vmatpush1.bf16.msra.mxu0 0
      %2425 = vmatprep.mubr.bf16.mxu0 0
      %2426 = vmatmul.mubr.bf16.gmra.mrb[0].mxu0 %v2388
      %v2427 = vpop.f32.mrb[0].mxu0
      %v2428 = vadd.f32 %v2385, %v2427
      %v2429 = vpop.f32.mrb[0].mxu0
      %v2430 = vpop.f32.mrb[0].mxu0
      %v2431 = vadd.f32 %v2385, %v2430
      %v2432 = vpop.f32.mrb[0].mxu0
      %2433 = vmatprep.mubr.bf16.mxu0 0
      %2434 = vmatmul.mubr.bf16.gmra.mrb[0].mxu0 %v2391
      %v2435 = vpop.f32.mrb[0].mxu0
      %v2436 = vadd.f32 %v2385, %v2435
      %v2437 = vpop.f32.mrb[0].mxu0
      %v2438 = vpop.f32.mrb[0].mxu0
      %v2439 = vadd.f32 %v2385, %v2438
      %v2440 = vpop.f32.mrb[0].mxu0
      %2441 = vdwg.mxu0
      %v2442 = vmul.f32 %v2428, %v2428
      %v2443 = vmul.f32 %v2431, %v2431
      %v2444 = vmul.f32 %v2436, %v2436
      %v2445 = vmul.f32 %v2439, %v2439
      %v2446 = vmul.f32 %v2428, %v2442
      %v2447 = vmul.f32 %v2431, %v2443
      %v2448 = vmul.f32 %v2436, %v2444
      %v2449 = vmul.f32 %v2439, %v2445
      %v2450 = vmul.f32 %v2446, 0.044715
      %v2451 = vmul.f32 %v2447, 0.044715
      %v2452 = vmul.f32 %v2448, 0.044715
      %v2453 = vmul.f32 %v2449, 0.044715
      %v2454 = vadd.f32 %v2428, %v2450
      %v2455 = vadd.f32 %v2431, %v2451
      %v2456 = vadd.f32 %v2436, %v2452
      %v2457 = vadd.f32 %v2439, %v2453
      %v2458 = vmul.f32 %v2454, 0.7978846
      %v2459 = vmul.f32 %v2455, 0.7978846
      %v2460 = vmul.f32 %v2456, 0.7978846
      %v2461 = vmul.f32 %v2457, 0.7978846
      %v2462 = vtanh.pop %v2458
      %v2463 = vtanh.pop %v2459
      %v2464 = vtanh.pop %v2460
      %v2465 = vtanh.pop %v2461
      %v2466 = vadd.f32 %v2462, 1.0
      %v2467 = vadd.f32 %v2463, 1.0
      %v2468 = vadd.f32 %v2464, 1.0
      %v2469 = vadd.f32 %v2465, 1.0
      %v2470 = vmul.f32 %v2466, 0.5
      %v2471 = vmul.f32 %v2467, 0.5
      %v2472 = vmul.f32 %v2468, 0.5
      %v2473 = vmul.f32 %v2469, 0.5
      %v2474 = vmul.f32 %v2428, %v2470
      %v2475 = vmul.f32 %v2431, %v2471
      %v2476 = vmul.f32 %v2436, %v2472
      %v2477 = vmul.f32 %v2439, %v2473
      %v2478 = vpack.c.bf16 %v2475, %v2474
      %v2479 = vpack.c.bf16 %v2477, %v2476
      %v2480 = vld [vmem:[%s3] sm:$0xf]
      %v2481 = vld [vmem:[%s3 + $0x4] sm:$0xf]
      %v2482 = vld [vmem:[%s3 + $0x8] sm:$0xf]
      %v2483 = vld [vmem:[%s3 + $0xc] sm:$0xf]
      %v2484 = vld [vmem:[%s3 + $0x10] sm:$0xf]
      %v2485 = vld [vmem:[%s3 + $0x14] sm:$0xf]
      %v2486 = vld [vmem:[%s3 + $0x18] sm:$0xf]
      %v2487 = vld [vmem:[%s3 + $0x1c] sm:$0xf]
      %v2488 = vld [vmem:[%s3 + $0x20] sm:$0xf]
      %v2489 = vld [vmem:[%s3 + $0x24] sm:$0xf]
      %v2490 = vld [vmem:[%s3 + $0x28] sm:$0xf]
      %v2491 = vld [vmem:[%s3 + $0x2c] sm:$0xf]
      %v2492 = vld [vmem:[%s3 + $0x30] sm:$0xf]
      %v2493 = vld [vmem:[%s3 + $0x34] sm:$0xf]
      %v2494 = vld [vmem:[%s3 + $0x38] sm:$0xf]
      %v2495 = vld [vmem:[%s3 + $0x3c] sm:$0xf]
      %v2496 = vld [vmem:[%s4 + $0x2] sm:$0x1]
      %v2498 = vlaneseq
      %v2499 = vshrl.u32 %v2498, 7
      %v2500 = vsub.s32 0, %v2499
      %v2501 = vrot.slane %v2496, %v2500
      %v2518 = vunpack.c.l.b16 %v2480
      %v2519 = vunpack.c.l.b16 %v2481
      %v2520 = vunpack.c.l.b16 %v2482
      %v2521 = vunpack.c.l.b16 %v2483
      %v2522 = vunpack.c.l.b16 %v2484
      %v2523 = vunpack.c.l.b16 %v2485
      %v2524 = vunpack.c.l.b16 %v2486
      %v2525 = vunpack.c.l.b16 %v2487
      %v2526 = vunpack.c.l.b16 %v2488
      %v2527 = vunpack.c.l.b16 %v2489
      %v2528 = vunpack.c.l.b16 %v2490
      %v2529 = vunpack.c.l.b16 %v2491
      %v2530 = vunpack.c.l.b16 %v2492
      %v2531 = vunpack.c.l.b16 %v2493
      %v2532 = vunpack.c.l.b16 %v2494
      %v2533 = vunpack.c.l.b16 %v2495
      %v2534 = vpack.c.b16 %v2519, %v2518
      %v2535 = vpack.c.b16 %v2521, %v2520
      %v2536 = vpack.c.b16 %v2523, %v2522
      %v2537 = vpack.c.b16 %v2525, %v2524
      %v2538 = vpack.c.b16 %v2527, %v2526
      %v2539 = vpack.c.b16 %v2529, %v2528
      %v2540 = vpack.c.b16 %v2531, %v2530
      %v2541 = vpack.c.b16 %v2533, %v2532
      %2550 = vrot.lane.b32.xlu0 %v2501, 64
      %v2551 = vpop.permute.xlu0 %2550
      %2553 = vmatprep.subr.bf16.mxu0 0
      %2554 = vmatpush1.bf16.msra.mxu0 %v2534
      %2555 = vmatprep.subr.bf16.mxu0 0
      %2556 = vmatpush1.bf16.msra.mxu0 %v2535
      %2557 = vmatprep.subr.bf16.mxu0 0
      %2558 = vmatpush1.bf16.msra.mxu0 %v2536
      %2559 = vmatprep.subr.bf16.mxu0 0
      %2560 = vmatpush1.bf16.msra.mxu0 %v2537
      %2561 = vmatprep.subr.bf16.mxu0 0
      %2562 = vmatpush1.bf16.msra.mxu0 %v2538
      %2563 = vmatprep.subr.bf16.mxu0 0
      %2564 = vmatpush1.bf16.msra.mxu0 %v2539
      %2565 = vmatprep.subr.bf16.mxu0 0
      %2566 = vmatpush1.bf16.msra.mxu0 %v2540
      %2567 = vmatprep.subr.bf16.mxu0 0
      %2568 = vmatpush1.bf16.msra.mxu0 %v2541
      %2569 = vmatprep.subr.bf16.mxu0 0
      %2570 = vmatpush1.bf16.msra.mxu0 0
      %2571 = vmatprep.subr.bf16.mxu0 0
      %2572 = vmatpush1.bf16.msra.mxu0 0
      %2573 = vmatprep.subr.bf16.mxu0 0
      %2574 = vmatpush1.bf16.msra.mxu0 0
      %2575 = vmatprep.subr.bf16.mxu0 0
      %2576 = vmatpush1.bf16.msra.mxu0 0
      %2577 = vmatprep.subr.bf16.mxu0 0
      %2578 = vmatpush1.bf16.msra.mxu0 0
      %2579 = vmatprep.subr.bf16.mxu0 0
      %2580 = vmatpush1.bf16.msra.mxu0 0
      %2581 = vmatprep.subr.bf16.mxu0 0
      %2582 = vmatpush1.bf16.msra.mxu0 0
      %2583 = vmatprep.subr.bf16.mxu0 0
      %2584 = vmatpush1.bf16.msra.mxu0 0
      %2585 = vmatprep.mubr.bf16.mxu0 0
      %2586 = vmatmul.mubr.bf16.gmra.mrb[0].mxu0 %v2478
      %v2587 = vpop.f32.mrb[0].mxu0
      %v2588 = vadd.f32 %v2551, %v2587
      %v2589 = vpop.f32.mrb[0].mxu0
      %v2590 = vpop.f32.mrb[0].mxu0
      %v2591 = vadd.f32 %v2551, %v2590
      %v2592 = vpop.f32.mrb[0].mxu0
      %2593 = vmatprep.mubr.bf16.mxu0 0
      %2594 = vmatmul.mubr.bf16.gmra.mrb[0].mxu0 %v2479
      %v2595 = vpop.f32.mrb[0].mxu0
      %v2596 = vadd.f32 %v2551, %v2595
      %v2597 = vpop.f32.mrb[0].mxu0
      %v2598 = vpop.f32.mrb[0].mxu0
      %v2599 = vadd.f32 %v2551, %v2598
      %v2600 = vpop.f32.mrb[0].mxu0
      %2601 = vdwg.mxu0
      %v2602 = vadd.f32 %v2588, %v2588
      %v2603 = vadd.f32 %v2591, %v2591
      %v2604 = vadd.f32 %v2596, %v2596
      %v2605 = vadd.f32 %v2599, %v2599
      %v2606 = vld [vmem:[%s4 + $0x3] sm:$0x1]
      %v2607 = vsel %vm255, %v2602, 0.0
      %2608 = vadd.xlane.f32.xlu0 %v2607
      %v2609 = vpop.xlane.xlu0 %2608
      %v2610 = vsel %vm255, %v2603, 0.0
      %2611 = vadd.xlane.f32.xlu0 %v2610
      %v2612 = vpop.xlane.xlu0 %2611
      %v2613 = vsel %vm255, %v2604, 0.0
      %2614 = vadd.xlane.f32.xlu0 %v2613
      %v2615 = vpop.xlane.xlu0 %2614
      %v2616 = vsel %vm255, %v2605, 0.0
      %2617 = vadd.xlane.f32.xlu0 %v2616
      %v2618 = vpop.xlane.xlu0 %2617
      %v2619 = vmul.f32 %v2609, %v2294
      %v2620 = vmul.f32 %v2612, %v2294
      %v2621 = vmul.f32 %v2615, %v2294
      %v2622 = vmul.f32 %v2618, %v2294
      %v2623 = vsub.f32 %v2602, %v2619
      %v2624 = vsub.f32 %v2603, %v2620
      %v2625 = vsub.f32 %v2604, %v2621
      %v2626 = vsub.f32 %v2605, %v2622
      %v2627 = vmul.f32 %v2623, %v2623
      %v2628 = vmul.f32 %v2624, %v2624
      %v2629 = vmul.f32 %v2625, %v2625
      %v2630 = vmul.f32 %v2626, %v2626
      %v2631 = vsel %vm255, %v2627, 0.0
      %2632 = vadd.xlane.f32.xlu0 %v2631
      %v2633 = vpop.xlane.xlu0 %2632
      %v2634 = vsel %vm255, %v2628, 0.0
      %2635 = vadd.xlane.f32.xlu0 %v2634
      %v2636 = vpop.xlane.xlu0 %2635
      %v2637 = vsel %vm255, %v2629, 0.0
      %2638 = vadd.xlane.f32.xlu0 %v2637
      %v2639 = vpop.xlane.xlu0 %2638
      %v2640 = vsel %vm255, %v2630, 0.0
      %2641 = vadd.xlane.f32.xlu0 %v2640
      %v2642 = vpop.xlane.xlu0 %2641
      %v2643 = vmul.f32 %v2633, %v2294
      %v2644 = vmul.f32 %v2636, %v2294
      %v2645 = vmul.f32 %v2639, %v2294
      %v2646 = vmul.f32 %v2642, %v2294
      %v2647 = vadd.f32 %v2643, 1e-05
      %v2648 = vadd.f32 %v2644, 1e-05
      %v2649 = vadd.f32 %v2645, 1e-05
      %v2650 = vadd.f32 %v2646, 1e-05
      %v2651 = vrsqrt.pop %v2647
      %v2652 = vrsqrt.pop %v2648
      %v2653 = vrsqrt.pop %v2649
      %v2654 = vrsqrt.pop %v2650
      %v2655 = vmul.f32 %v2623, %v2651
      %v2656 = vmul.f32 %v2624, %v2652
      %v2657 = vmul.f32 %v2625, %v2653
      %v2658 = vmul.f32 %v2626, %v2654
      %2659 = vrot.lane.b32.xlu0 %v2501, 32
      %v2660 = vpop.permute.xlu0 %2659
      %v2662 = vmul.f32 %v2655, %v2660
      %v2663 = vmul.f32 %v2656, %v2660
      %v2664 = vmul.f32 %v2657, %v2660
      %v2665 = vmul.f32 %v2658, %v2660
      %v2667 = vlaneseq
      %v2668 = vshrl.u32 %v2667, 7
      %v2669 = vsub.s32 0, %v2668
      %v2670 = vrot.slane %v2606, %v2669
      %v2672 = vadd.f32 %v2662, %v2670
      %v2673 = vadd.f32 %v2663, %v2670
      %v2674 = vadd.f32 %v2664, %v2670
      %v2675 = vadd.f32 %v2665, %v2670
      %v2676 = vpack.c.bf16 %v2673, %v2672
      %v2677 = vpack.c.bf16 %v2675, %v2674
      %v2678 = vld [vmem:[%s2 + $0x8] sm:$0xf]
      %v2679 = vld [vmem:[%s2 + $0x1c] sm:$0xf]
      %v2680 = vld [vmem:[%s2 + $0x30] sm:$0xf]
      %v2681 = vld [vmem:[%s2 + $0x44] sm:$0xf]
      %v2686 = vunpack.c.l.b16 %v2678
      %v2687 = vunpack.c.l.b16 %v2679
      %v2688 = vunpack.c.l.b16 %v2680
      %v2689 = vunpack.c.l.b16 %v2681
      %v2690 = vpack.c.b16 %v2687, %v2686
      %v2691 = vpack.c.b16 %v2689, %v2688
      %2694 = vrot.lane.b32.xlu0 %v2670, 96
      %v2695 = vpop.permute.xlu0 %2694
      %v2698 = vsel %vm255, %v2676, 0
      %v2701 = vsel %vm255, %v2677, 0
      %2703 = vmatprep.subr.bf16.mxu0 0
      %2704 = vmatpush1.bf16.msra.mxu0 %v2690
      %2705 = vmatprep.subr.bf16.mxu0 0
      %2706 = vmatpush1.bf16.msra.mxu0 %v2691
      %2707 = vmatprep.subr.bf16.mxu0 0
      %2708 = vmatpush1.bf16.msra.mxu0 0
      %2709 = vmatprep.subr.bf16.mxu0 0
      %2710 = vmatpush1.bf16.msra.mxu0 0
      %2711 = vmatprep.subr.bf16.mxu0 0
      %2712 = vmatpush1.bf16.msra.mxu0 0
      %2713 = vmatprep.subr.bf16.mxu0 0
      %2714 = vmatpush1.bf16.msra.mxu0 0
      %2715 = vmatprep.subr.bf16.mxu0 0
      %2716 = vmatpush1.bf16.msra.mxu0 0
      %2717 = vmatprep.subr.bf16.mxu0 0
      %2718 = vmatpush1.bf16.msra.mxu0 0
      %2719 = vmatprep.subr.bf16.mxu0 0
      %2720 = vmatpush1.bf16.msra.mxu0 0
      %2721 = vmatprep.subr.bf16.mxu0 0
      %2722 = vmatpush1.bf16.msra.mxu0 0
      %2723 = vmatprep.subr.bf16.mxu0 0
      %2724 = vmatpush1.bf16.msra.mxu0 0
      %2725 = vmatprep.subr.bf16.mxu0 0
      %2726 = vmatpush1.bf16.msra.mxu0 0
      %2727 = vmatprep.subr.bf16.mxu0 0
      %2728 = vmatpush1.bf16.msra.mxu0 0
      %2729 = vmatprep.subr.bf16.mxu0 0
      %2730 = vmatpush1.bf16.msra.mxu0 0
      %2731 = vmatprep.subr.bf16.mxu0 0
      %2732 = vmatpush1.bf16.msra.mxu0 0
      %2733 = vmatprep.subr.bf16.mxu0 0
      %2734 = vmatpush1.bf16.msra.mxu0 0
      %2735 = vmatprep.mubr.bf16.mxu0 0
      %2736 = vmatmul.mubr.bf16.gmra.mrb[0].mxu0 %v2698
      %v2737 = vpop.f32.mrb[0].mxu0
      %v2738 = vadd.f32 %v2695, %v2737
      %v2739 = vpop.f32.mrb[0].mxu0
      %v2740 = vpop.f32.mrb[0].mxu0
      %v2741 = vadd.f32 %v2695, %v2740
      %v2742 = vpop.f32.mrb[0].mxu0
      %2743 = vmatprep.mubr.bf16.mxu0 0
      %2744 = vmatmul.mubr.bf16.gmra.mrb[0].mxu0 %v2701
      %v2745 = vpop.f32.mrb[0].mxu0
      %v2746 = vadd.f32 %v2695, %v2745
      %v2747 = vpop.f32.mrb[0].mxu0
      %v2748 = vpop.f32.mrb[0].mxu0
      %v2749 = vadd.f32 %v2695, %v2748
      %v2750 = vpop.f32.mrb[0].mxu0
      %2751 = vdwg.mxu0
      %2756 = vrot.lane.b32.xlu0 %v2738, 32
      %v2757 = vpop.permute.xlu0 %2756
      %2758 = vrot.lane.b32.xlu0 %v2741, 32
      %v2759 = vpop.permute.xlu0 %2758
      %2760 = vrot.lane.b32.xlu0 %v2746, 32
      %v2761 = vpop.permute.xlu0 %2760
      %2762 = vrot.lane.b32.xlu0 %v2749, 32
      %v2763 = vpop.permute.xlu0 %2762
      %v2768 = vsel %vm255, %v2672, %v2757
      %v2769 = vsel %vm255, %v2673, %v2759
      %v2770 = vsel %vm255, %v2674, %v2761
      %v2771 = vsel %vm255, %v2675, %v2763
      %2772 = vst [vmem:[#allocation2] sm:$0xff] %v2768
      %2773 = vst [vmem:[#allocation2 + $0x8] sm:$0xff] %v2769
      %2774 = vst [vmem:[#allocation2 + $0x10] sm:$0xff] %v2770
      %2775 = vst [vmem:[#allocation2 + $0x18] sm:$0xff] %v2771
      %v2776 = vld [vmem:[#allocation2] ss:$8 sm:$0xf]
      %s2777 = scalar_lea.vmem [#allocation2], 1
      %v2778 = vld [vmem:[%s2777] ss:$8 sm:$0xf]
      %s2779 = scalar_lea.vmem [#allocation2], 2
      %v2780 = vld [vmem:[%s2779] ss:$8 sm:$0xf]
      %s2781 = scalar_lea.vmem [#allocation2], 3
      %v2782 = vld [vmem:[%s2781] ss:$8 sm:$0xf]
      %s2783 = scalar_lea.vmem [#allocation2], 4
      %v2784 = vld [vmem:[%s2783] ss:$8 sm:$0xf]
      %s2785 = scalar_lea.vmem [#allocation2], 5
      %v2786 = vld [vmem:[%s2785] ss:$8 sm:$0xf]
      %s2787 = scalar_lea.vmem [#allocation2], 6
      %v2788 = vld [vmem:[%s2787] ss:$8 sm:$0xf]
      %s2789 = scalar_lea.vmem [#allocation2], 7
      %v2790 = vld [vmem:[%s2789] ss:$8 sm:$0xf]
      %v2791 = vld [vmem:[%s1] sm:$0x3]
      %v2792 = vld [vmem:[%s1 + $0x2] sm:$0x3]
      %v2793 = vld [vmem:[%s1 + $0x4] sm:$0x3]
      %v2794 = vld [vmem:[%s1 + $0x6] sm:$0x3]
      %v2795 = vld [vmem:[%s1 + $0x8] sm:$0x3]
      %v2796 = vld [vmem:[%s1 + $0xa] sm:$0x3]
      %v2797 = vld [vmem:[%s1 + $0xc] sm:$0x3]
      %v2798 = vld [vmem:[%s1 + $0xe] sm:$0x3]
      %2807 = vrot.lane.b32.xlu0 %v2791, 120
      %v2808 = vpop.permute.xlu0 %2807
      %2809 = vrot.lane.b32.xlu0 %v2792, 120
      %v2810 = vpop.permute.xlu0 %2809
      %2811 = vrot.lane.b32.xlu0 %v2793, 120
      %v2812 = vpop.permute.xlu0 %2811
      %2813 = vrot.lane.b32.xlu0 %v2794, 120
      %v2814 = vpop.permute.xlu0 %2813
      %2815 = vrot.lane.b32.xlu0 %v2795, 120
      %v2816 = vpop.permute.xlu0 %2815
      %2817 = vrot.lane.b32.xlu0 %v2796, 120
      %v2818 = vpop.permute.xlu0 %2817
      %2819 = vrot.lane.b32.xlu0 %v2797, 120
      %v2820 = vpop.permute.xlu0 %2819
      %2821 = vrot.lane.b32.xlu0 %v2798, 120
      %v2822 = vpop.permute.xlu0 %2821
      %2831 = vrot.lane.b32.xlu0 %v2791, 112
      %v2832 = vpop.permute.xlu0 %2831
      %2833 = vrot.lane.b32.xlu0 %v2792, 112
      %v2834 = vpop.permute.xlu0 %2833
      %2835 = vrot.lane.b32.xlu0 %v2793, 112
      %v2836 = vpop.permute.xlu0 %2835
      %2837 = vrot.lane.b32.xlu0 %v2794, 112
      %v2838 = vpop.permute.xlu0 %2837
      %2839 = vrot.lane.b32.xlu0 %v2795, 112
      %v2840 = vpop.permute.xlu0 %2839
      %2841 = vrot.lane.b32.xlu0 %v2796, 112
      %v2842 = vpop.permute.xlu0 %2841
      %2843 = vrot.lane.b32.xlu0 %v2797, 112
      %v2844 = vpop.permute.xlu0 %2843
      %2845 = vrot.lane.b32.xlu0 %v2798, 112
      %v2846 = vpop.permute.xlu0 %2845
      %2855 = vrot.lane.b32.xlu0 %v2791, 104
      %v2856 = vpop.permute.xlu0 %2855
      %2857 = vrot.lane.b32.xlu0 %v2792, 104
      %v2858 = vpop.permute.xlu0 %2857
      %2859 = vrot.lane.b32.xlu0 %v2793, 104
      %v2860 = vpop.permute.xlu0 %2859
      %2861 = vrot.lane.b32.xlu0 %v2794, 104
      %v2862 = vpop.permute.xlu0 %2861
      %2863 = vrot.lane.b32.xlu0 %v2795, 104
      %v2864 = vpop.permute.xlu0 %2863
      %2865 = vrot.lane.b32.xlu0 %v2796, 104
      %v2866 = vpop.permute.xlu0 %2865
      %2867 = vrot.lane.b32.xlu0 %v2797, 104
      %v2868 = vpop.permute.xlu0 %2867
      %2869 = vrot.lane.b32.xlu0 %v2798, 104
      %v2870 = vpop.permute.xlu0 %2869
      %2887 = vrot.lane.b32.xlu0 %v2776, 120
      %v2888 = vpop.permute.xlu0 %2887
      %2889 = vrot.lane.b32.xlu0 %v2778, 120
      %v2890 = vpop.permute.xlu0 %2889
      %2891 = vrot.lane.b32.xlu0 %v2780, 120
      %v2892 = vpop.permute.xlu0 %2891
      %2893 = vrot.lane.b32.xlu0 %v2782, 120
      %v2894 = vpop.permute.xlu0 %2893
      %2895 = vrot.lane.b32.xlu0 %v2784, 120
      %v2896 = vpop.permute.xlu0 %2895
      %2897 = vrot.lane.b32.xlu0 %v2786, 120
      %v2898 = vpop.permute.xlu0 %2897
      %2899 = vrot.lane.b32.xlu0 %v2788, 120
      %v2900 = vpop.permute.xlu0 %2899
      %2901 = vrot.lane.b32.xlu0 %v2790, 120
      %v2902 = vpop.permute.xlu0 %2901
      %2911 = vrot.lane.b32.xlu0 %v2776, 112
      %v2912 = vpop.permute.xlu0 %2911
      %2913 = vrot.lane.b32.xlu0 %v2778, 112
      %v2914 = vpop.permute.xlu0 %2913
      %2915 = vrot.lane.b32.xlu0 %v2780, 112
      %v2916 = vpop.permute.xlu0 %2915
      %2917 = vrot.lane.b32.xlu0 %v2782, 112
      %v2918 = vpop.permute.xlu0 %2917
      %2919 = vrot.lane.b32.xlu0 %v2784, 112
      %v2920 = vpop.permute.xlu0 %2919
      %2921 = vrot.lane.b32.xlu0 %v2786, 112
      %v2922 = vpop.permute.xlu0 %2921
      %2923 = vrot.lane.b32.xlu0 %v2788, 112
      %v2924 = vpop.permute.xlu0 %2923
      %2925 = vrot.lane.b32.xlu0 %v2790, 112
      %v2926 = vpop.permute.xlu0 %2925
      %2935 = vrot.lane.b32.xlu0 %v2776, 104
      %v2936 = vpop.permute.xlu0 %2935
      %2937 = vrot.lane.b32.xlu0 %v2778, 104
      %v2938 = vpop.permute.xlu0 %2937
      %2939 = vrot.lane.b32.xlu0 %v2780, 104
      %v2940 = vpop.permute.xlu0 %2939
      %2941 = vrot.lane.b32.xlu0 %v2782, 104
      %v2942 = vpop.permute.xlu0 %2941
      %2943 = vrot.lane.b32.xlu0 %v2784, 104
      %v2944 = vpop.permute.xlu0 %2943
      %2945 = vrot.lane.b32.xlu0 %v2786, 104
      %v2946 = vpop.permute.xlu0 %2945
      %2947 = vrot.lane.b32.xlu0 %v2788, 104
      %v2948 = vpop.permute.xlu0 %2947
      %2949 = vrot.lane.b32.xlu0 %v2790, 104
      %v2950 = vpop.permute.xlu0 %2949
      %v2959 = vpack.c.bf16 %v2791, %v2791
      %v2960 = vpack.c.bf16 %v2792, %v2792
      %v2961 = vpack.c.bf16 %v2793, %v2793
      %v2962 = vpack.c.bf16 %v2794, %v2794
      %v2963 = vpack.c.bf16 %v2795, %v2795
      %v2964 = vpack.c.bf16 %v2796, %v2796
      %v2965 = vpack.c.bf16 %v2797, %v2797
      %v2966 = vpack.c.bf16 %v2798, %v2798
      %v2967 = vpack.c.bf16 %v2808, %v2808
      %v2968 = vpack.c.bf16 %v2810, %v2810
      %v2969 = vpack.c.bf16 %v2812, %v2812
      %v2970 = vpack.c.bf16 %v2814, %v2814
      %v2971 = vpack.c.bf16 %v2816, %v2816
      %v2972 = vpack.c.bf16 %v2818, %v2818
      %v2973 = vpack.c.bf16 %v2820, %v2820
      %v2974 = vpack.c.bf16 %v2822, %v2822
      %v2975 = vpack.c.bf16 %v2832, %v2832
      %v2976 = vpack.c.bf16 %v2834, %v2834
      %v2977 = vpack.c.bf16 %v2836, %v2836
      %v2978 = vpack.c.bf16 %v2838, %v2838
      %v2979 = vpack.c.bf16 %v2840, %v2840
      %v2980 = vpack.c.bf16 %v2842, %v2842
      %v2981 = vpack.c.bf16 %v2844, %v2844
      %v2982 = vpack.c.bf16 %v2846, %v2846
      %v2983 = vpack.c.bf16 %v2856, %v2856
      %v2984 = vpack.c.bf16 %v2858, %v2858
      %v2985 = vpack.c.bf16 %v2860, %v2860
      %v2986 = vpack.c.bf16 %v2862, %v2862
      %v2987 = vpack.c.bf16 %v2864, %v2864
      %v2988 = vpack.c.bf16 %v2866, %v2866
      %v2989 = vpack.c.bf16 %v2868, %v2868
      %v2990 = vpack.c.bf16 %v2870, %v2870
      %v2991 = vpack.c.bf16 %v2776, %v2776
      %v2992 = vpack.c.bf16 %v2778, %v2778
      %v2993 = vpack.c.bf16 %v2780, %v2780
      %v2994 = vpack.c.bf16 %v2782, %v2782
      %v2995 = vpack.c.bf16 %v2784, %v2784
      %v2996 = vpack.c.bf16 %v2786, %v2786
      %v2997 = vpack.c.bf16 %v2788, %v2788
      %v2998 = vpack.c.bf16 %v2790, %v2790
      %v2999 = vpack.c.bf16 %v2888, %v2888
      %v3000 = vpack.c.bf16 %v2890, %v2890
      %v3001 = vpack.c.bf16 %v2892, %v2892
      %v3002 = vpack.c.bf16 %v2894, %v2894
      %v3003 = vpack.c.bf16 %v2896, %v2896
      %v3004 = vpack.c.bf16 %v2898, %v2898
      %v3005 = vpack.c.bf16 %v2900, %v2900
      %v3006 = vpack.c.bf16 %v2902, %v2902
      %v3007 = vpack.c.bf16 %v2912, %v2912
      %v3008 = vpack.c.bf16 %v2914, %v2914
      %v3009 = vpack.c.bf16 %v2916, %v2916
      %v3010 = vpack.c.bf16 %v2918, %v2918
      %v3011 = vpack.c.bf16 %v2920, %v2920
      %v3012 = vpack.c.bf16 %v2922, %v2922
      %v3013 = vpack.c.bf16 %v2924, %v2924
      %v3014 = vpack.c.bf16 %v2926, %v2926
      %v3015 = vpack.c.bf16 %v2936, %v2936
      %v3016 = vpack.c.bf16 %v2938, %v2938
      %v3017 = vpack.c.bf16 %v2940, %v2940
      %v3018 = vpack.c.bf16 %v2942, %v2942
      %v3019 = vpack.c.bf16 %v2944, %v2944
      %v3020 = vpack.c.bf16 %v2946, %v2946
      %v3021 = vpack.c.bf16 %v2948, %v2948
      %v3022 = vpack.c.bf16 %v2950, %v2950
      %3024 = vrot.lane.b32.xlu0 %v2991, 96
      %v3025 = vpop.permute.xlu0 %3024
      %v3027 = vsel %vm370, %v2959, 0
      %v3030 = vsel %vm370, %v3025, 0
      %3032 = vmatprep.subr.bf16.mxu0 0
      %3033 = vmatpush1.bf16.xpose.msra.mxu0 %v3030
      %3034 = vmatprep.subr.bf16.mxu0 0
      %3035 = vmatpush1.bf16.xpose.msra.mxu0 0
      %3036 = vmatprep.subr.bf16.mxu0 0
      %3037 = vmatpush1.bf16.xpose.msra.mxu0 0
      %3038 = vmatprep.subr.bf16.mxu0 0
      %3039 = vmatpush1.bf16.xpose.msra.mxu0 0
      %3040 = vmatprep.subr.bf16.mxu0 0
      %3041 = vmatpush1.bf16.xpose.msra.mxu0 0
      %3042 = vmatprep.subr.bf16.mxu0 0
      %3043 = vmatpush1.bf16.xpose.msra.mxu0 0
      %3044 = vmatprep.subr.bf16.mxu0 0
      %3045 = vmatpush1.bf16.xpose.msra.mxu0 0
      %3046 = vmatprep.subr.bf16.mxu0 0
      %3047 = vmatpush1.bf16.xpose.msra.mxu0 0
      %3048 = vmatprep.subr.bf16.mxu0 0
      %3049 = vmatpush1.bf16.xpose.msra.mxu0 0
      %3050 = vmatprep.subr.bf16.mxu0 0
      %3051 = vmatpush1.bf16.xpose.msra.mxu0 0
      %3052 = vmatprep.subr.bf16.mxu0 0
      %3053 = vmatpush1.bf16.xpose.msra.mxu0 0
      %3054 = vmatprep.subr.bf16.mxu0 0
      %3055 = vmatpush1.bf16.xpose.msra.mxu0 0
      %3056 = vmatprep.subr.bf16.mxu0 0
      %3057 = vmatpush1.bf16.xpose.msra.mxu0 0
      %3058 = vmatprep.subr.bf16.mxu0 0
      %3059 = vmatpush1.bf16.xpose.msra.mxu0 0
      %3060 = vmatprep.subr.bf16.mxu0 0
      %3061 = vmatpush1.bf16.xpose.msra.mxu0 0
      %3062 = vmatprep.subr.bf16.mxu0 0
      %3063 = vmatpush1.bf16.xpose.msra.mxu0 0
      %3064 = vmatprep.mubr.bf16.mxu0 0
      %3065 = vmatmul.mubr.bf16.gmra.mrb[0].mxu0 %v3027
      %v3066 = vpop.f32.mrb[0].mxu0
      %v3067 = vadd.f32 0.0, %v3066
      %v3068 = vpop.f32.mrb[0].mxu0
      %v3069 = vpop.f32.mrb[0].mxu0
      %v3070 = vpop.f32.mrb[0].mxu0
      %3071 = vdwg.mxu0
      %3073 = vrot.lane.b32.xlu0 %v2992, 96
      %v3074 = vpop.permute.xlu0 %3073
      %v3076 = vsel %vm370, %v2960, 0
      %v3079 = vsel %vm370, %v3074, 0
      %3081 = vmatprep.subr.bf16.mxu0 0
      %3082 = vmatpush1.bf16.xpose.msra.mxu0 %v3079
      %3083 = vmatprep.subr.bf16.mxu0 0
      %3084 = vmatpush1.bf16.xpose.msra.mxu0 0
      %3085 = vmatprep.subr.bf16.mxu0 0
      %3086 = vmatpush1.bf16.xpose.msra.mxu0 0
      %3087 = vmatprep.subr.bf16.mxu0 0
      %3088 = vmatpush1.bf16.xpose.msra.mxu0 0
      %3089 = vmatprep.subr.bf16.mxu0 0
      %3090 = vmatpush1.bf16.xpose.msra.mxu0 0
      %3091 = vmatprep.subr.bf16.mxu0 0
      %3092 = vmatpush1.bf16.xpose.msra.mxu0 0
      %3093 = vmatprep.subr.bf16.mxu0 0
      %3094 = vmatpush1.bf16.xpose.msra.mxu0 0
      %3095 = vmatprep.subr.bf16.mxu0 0
      %3096 = vmatpush1.bf16.xpose.msra.mxu0 0
      %3097 = vmatprep.subr.bf16.mxu0 0
      %3098 = vmatpush1.bf16.xpose.msra.mxu0 0
      %3099 = vmatprep.subr.bf16.mxu0 0
      %3100 = vmatpush1.bf16.xpose.msra.mxu0 0
      %3101 = vmatprep.subr.bf16.mxu0 0
      %3102 = vmatpush1.bf16.xpose.msra.mxu0 0
      %3103 = vmatprep.subr.bf16.mxu0 0
      %3104 = vmatpush1.bf16.xpose.msra.mxu0 0
      %3105 = vmatprep.subr.bf16.mxu0 0
      %3106 = vmatpush1.bf16.xpose.msra.mxu0 0
      %3107 = vmatprep.subr.bf16.mxu0 0
      %3108 = vmatpush1.bf16.xpose.msra.mxu0 0
      %3109 = vmatprep.subr.bf16.mxu0 0
      %3110 = vmatpush1.bf16.xpose.msra.mxu0 0
      %3111 = vmatprep.subr.bf16.mxu0 0
      %3112 = vmatpush1.bf16.xpose.msra.mxu0 0
      %3113 = vmatprep.mubr.bf16.mxu0 0
      %3114 = vmatmul.mubr.bf16.gmra.mrb[0].mxu0 %v3076
      %v3115 = vpop.f32.mrb[0].mxu0
      %v3116 = vadd.f32 0.0, %v3115
      %v3117 = vpop.f32.mrb[0].mxu0
      %v3118 = vpop.f32.mrb[0].mxu0
      %v3119 = vpop.f32.mrb[0].mxu0
      %3120 = vdwg.mxu0
      %3122 = vrot.lane.b32.xlu0 %v2993, 96
      %v3123 = vpop.permute.xlu0 %3122
      %v3125 = vsel %vm370, %v2961, 0
      %v3128 = vsel %vm370, %v3123, 0
      %3130 = vmatprep.subr.bf16.mxu0 0
      %3131 = vmatpush1.bf16.xpose.msra.mxu0 %v3128
      %3132 = vmatprep.subr.bf16.mxu0 0
      %3133 = vmatpush1.bf16.xpose.msra.mxu0 0
      %3134 = vmatprep.subr.bf16.mxu0 0
      %3135 = vmatpush1.bf16.xpose.msra.mxu0 0
      %3136 = vmatprep.subr.bf16.mxu0 0
      %3137 = vmatpush1.bf16.xpose.msra.mxu0 0
      %3138 = vmatprep.subr.bf16.mxu0 0
      %3139 = vmatpush1.bf16.xpose.msra.mxu0 0
      %3140 = vmatprep.subr.bf16.mxu0 0
      %3141 = vmatpush1.bf16.xpose.msra.mxu0 0
      %3142 = vmatprep.subr.bf16.mxu0 0
      %3143 = vmatpush1.bf16.xpose.msra.mxu0 0
      %3144 = vmatprep.subr.bf16.mxu0 0
      %3145 = vmatpush1.bf16.xpose.msra.mxu0 0
      %3146 = vmatprep.subr.bf16.mxu0 0
      %3147 = vmatpush1.bf16.xpose.msra.mxu0 0
      %3148 = vmatprep.subr.bf16.mxu0 0
      %3149 = vmatpush1.bf16.xpose.msra.mxu0 0
      %3150 = vmatprep.subr.bf16.mxu0 0
      %3151 = vmatpush1.bf16.xpose.msra.mxu0 0
      %3152 = vmatprep.subr.bf16.mxu0 0
      %3153 = vmatpush1.bf16.xpose.msra.mxu0 0
      %3154 = vmatprep.subr.bf16.mxu0 0
      %3155 = vmatpush1.bf16.xpose.msra.mxu0 0
      %3156 = vmatprep.subr.bf16.mxu0 0
      %3157 = vmatpush1.bf16.xpose.msra.mxu0 0
      %3158 = vmatprep.subr.bf16.mxu0 0
      %3159 = vmatpush1.bf16.xpose.msra.mxu0 0
      %3160 = vmatprep.subr.bf16.mxu0 0
      %3161 = vmatpush1.bf16.xpose.msra.mxu0 0
      %3162 = vmatprep.mubr.bf16.mxu0 0
      %3163 = vmatmul.mubr.bf16.gmra.mrb[0].mxu0 %v3125
      %v3164 = vpop.f32.mrb[0].mxu0
      %v3165 = vadd.f32 0.0, %v3164
      %v3166 = vpop.f32.mrb[0].mxu0
      %v3167 = vpop.f32.mrb[0].mxu0
      %v3168 = vpop.f32.mrb[0].mxu0
      %3169 = vdwg.mxu0
      %3171 = vrot.lane.b32.xlu0 %v2994, 96
      %v3172 = vpop.permute.xlu0 %3171
      %v3174 = vsel %vm370, %v2962, 0
      %v3177 = vsel %vm370, %v3172, 0
      %3179 = vmatprep.subr.bf16.mxu0 0
      %3180 = vmatpush1.bf16.xpose.msra.mxu0 %v3177
      %3181 = vmatprep.subr.bf16.mxu0 0
      %3182 = vmatpush1.bf16.xpose.msra.mxu0 0
      %3183 = vmatprep.subr.bf16.mxu0 0
      %3184 = vmatpush1.bf16.xpose.msra.mxu0 0
      %3185 = vmatprep.subr.bf16.mxu0 0
      %3186 = vmatpush1.bf16.xpose.msra.mxu0 0
      %3187 = vmatprep.subr.bf16.mxu0 0
      %3188 = vmatpush1.bf16.xpose.msra.mxu0 0
      %3189 = vmatprep.subr.bf16.mxu0 0
      %3190 = vmatpush1.bf16.xpose.msra.mxu0 0
      %3191 = vmatprep.subr.bf16.mxu0 0
      %3192 = vmatpush1.bf16.xpose.msra.mxu0 0
      %3193 = vmatprep.subr.bf16.mxu0 0
      %3194 = vmatpush1.bf16.xpose.msra.mxu0 0
      %3195 = vmatprep.subr.bf16.mxu0 0
      %3196 = vmatpush1.bf16.xpose.msra.mxu0 0
      %3197 = vmatprep.subr.bf16.mxu0 0
      %3198 = vmatpush1.bf16.xpose.msra.mxu0 0
      %3199 = vmatprep.subr.bf16.mxu0 0
      %3200 = vmatpush1.bf16.xpose.msra.mxu0 0
      %3201 = vmatprep.subr.bf16.mxu0 0
      %3202 = vmatpush1.bf16.xpose.msra.mxu0 0
      %3203 = vmatprep.subr.bf16.mxu0 0
      %3204 = vmatpush1.bf16.xpose.msra.mxu0 0
      %3205 = vmatprep.subr.bf16.mxu0 0
      %3206 = vmatpush1.bf16.xpose.msra.mxu0 0
      %3207 = vmatprep.subr.bf16.mxu0 0
      %3208 = vmatpush1.bf16.xpose.msra.mxu0 0
      %3209 = vmatprep.subr.bf16.mxu0 0
      %3210 = vmatpush1.bf16.xpose.msra.mxu0 0
      %3211 = vmatprep.mubr.bf16.mxu0 0
      %3212 = vmatmul.mubr.bf16.gmra.mrb[0].mxu0 %v3174
      %v3213 = vpop.f32.mrb[0].mxu0
      %v3214 = vadd.f32 0.0, %v3213
      %v3215 = vpop.f32.mrb[0].mxu0
      %v3216 = vpop.f32.mrb[0].mxu0
      %v3217 = vpop.f32.mrb[0].mxu0
      %3218 = vdwg.mxu0
      %3220 = vrot.lane.b32.xlu0 %v2995, 96
      %v3221 = vpop.permute.xlu0 %3220
      %v3223 = vsel %vm370, %v2963, 0
      %v3226 = vsel %vm370, %v3221, 0
      %3228 = vmatprep.subr.bf16.mxu0 0
      %3229 = vmatpush1.bf16.xpose.msra.mxu0 %v3226
      %3230 = vmatprep.subr.bf16.mxu0 0
      %3231 = vmatpush1.bf16.xpose.msra.mxu0 0
      %3232 = vmatprep.subr.bf16.mxu0 0
      %3233 = vmatpush1.bf16.xpose.msra.mxu0 0
      %3234 = vmatprep.subr.bf16.mxu0 0
      %3235 = vmatpush1.bf16.xpose.msra.mxu0 0
      %3236 = vmatprep.subr.bf16.mxu0 0
      %3237 = vmatpush1.bf16.xpose.msra.mxu0 0
      %3238 = vmatprep.subr.bf16.mxu0 0
      %3239 = vmatpush1.bf16.xpose.msra.mxu0 0
      %3240 = vmatprep.subr.bf16.mxu0 0
      %3241 = vmatpush1.bf16.xpose.msra.mxu0 0
      %3242 = vmatprep.subr.bf16.mxu0 0
      %3243 = vmatpush1.bf16.xpose.msra.mxu0 0
      %3244 = vmatprep.subr.bf16.mxu0 0
      %3245 = vmatpush1.bf16.xpose.msra.mxu0 0
      %3246 = vmatprep.subr.bf16.mxu0 0
      %3247 = vmatpush1.bf16.xpose.msra.mxu0 0
      %3248 = vmatprep.subr.bf16.mxu0 0
      %3249 = vmatpush1.bf16.xpose.msra.mxu0 0
      %3250 = vmatprep.subr.bf16.mxu0 0
      %3251 = vmatpush1.bf16.xpose.msra.mxu0 0
      %3252 = vmatprep.subr.bf16.mxu0 0
      %3253 = vmatpush1.bf16.xpose.msra.mxu0 0
      %3254 = vmatprep.subr.bf16.mxu0 0
      %3255 = vmatpush1.bf16.xpose.msra.mxu0 0
      %3256 = vmatprep.subr.bf16.mxu0 0
      %3257 = vmatpush1.bf16.xpose.msra.mxu0 0
      %3258 = vmatprep.subr.bf16.mxu0 0
      %3259 = vmatpush1.bf16.xpose.msra.mxu0 0
      %3260 = vmatprep.mubr.bf16.mxu0 0
      %3261 = vmatmul.mubr.bf16.gmra.mrb[0].mxu0 %v3223
      %v3262 = vpop.f32.mrb[0].mxu0
      %v3263 = vadd.f32 0.0, %v3262
      %v3264 = vpop.f32.mrb[0].mxu0
      %v3265 = vpop.f32.mrb[0].mxu0
      %v3266 = vpop.f32.mrb[0].mxu0
      %3267 = vdwg.mxu0
      %3269 = vrot.lane.b32.xlu0 %v2996, 96
      %v3270 = vpop.permute.xlu0 %3269
      %v3272 = vsel %vm370, %v2964, 0
      %v3275 = vsel %vm370, %v3270, 0
      %3277 = vmatprep.subr.bf16.mxu0 0
      %3278 = vmatpush1.bf16.xpose.msra.mxu0 %v3275
      %3279 = vmatprep.subr.bf16.mxu0 0
      %3280 = vmatpush1.bf16.xpose.msra.mxu0 0
      %3281 = vmatprep.subr.bf16.mxu0 0
      %3282 = vmatpush1.bf16.xpose.msra.mxu0 0
      %3283 = vmatprep.subr.bf16.mxu0 0
      %3284 = vmatpush1.bf16.xpose.msra.mxu0 0
      %3285 = vmatprep.subr.bf16.mxu0 0
      %3286 = vmatpush1.bf16.xpose.msra.mxu0 0
      %3287 = vmatprep.subr.bf16.mxu0 0
      %3288 = vmatpush1.bf16.xpose.msra.mxu0 0
      %3289 = vmatprep.subr.bf16.mxu0 0
      %3290 = vmatpush1.bf16.xpose.msra.mxu0 0
      %3291 = vmatprep.subr.bf16.mxu0 0
      %3292 = vmatpush1.bf16.xpose.msra.mxu0 0
      %3293 = vmatprep.subr.bf16.mxu0 0
      %3294 = vmatpush1.bf16.xpose.msra.mxu0 0
      %3295 = vmatprep.subr.bf16.mxu0 0
      %3296 = vmatpush1.bf16.xpose.msra.mxu0 0
      %3297 = vmatprep.subr.bf16.mxu0 0
      %3298 = vmatpush1.bf16.xpose.msra.mxu0 0
      %3299 = vmatprep.subr.bf16.mxu0 0
      %3300 = vmatpush1.bf16.xpose.msra.mxu0 0
      %3301 = vmatprep.subr.bf16.mxu0 0
      %3302 = vmatpush1.bf16.xpose.msra.mxu0 0
      %3303 = vmatprep.subr.bf16.mxu0 0
      %3304 = vmatpush1.bf16.xpose.msra.mxu0 0
      %3305 = vmatprep.subr.bf16.mxu0 0
      %3306 = vmatpush1.bf16.xpose.msra.mxu0 0
      %3307 = vmatprep.subr.bf16.mxu0 0
      %3308 = vmatpush1.bf16.xpose.msra.mxu0 0
      %3309 = vmatprep.mubr.bf16.mxu0 0
      %3310 = vmatmul.mubr.bf16.gmra.mrb[0].mxu0 %v3272
      %v3311 = vpop.f32.mrb[0].mxu0
      %v3312 = vadd.f32 0.0, %v3311
      %v3313 = vpop.f32.mrb[0].mxu0
      %v3314 = vpop.f32.mrb[0].mxu0
      %v3315 = vpop.f32.mrb[0].mxu0
      %3316 = vdwg.mxu0
      %3318 = vrot.lane.b32.xlu0 %v2997, 96
      %v3319 = vpop.permute.xlu0 %3318
      %v3321 = vsel %vm370, %v2965, 0
      %v3324 = vsel %vm370, %v3319, 0
      %3326 = vmatprep.subr.bf16.mxu0 0
      %3327 = vmatpush1.bf16.xpose.msra.mxu0 %v3324
      %3328 = vmatprep.subr.bf16.mxu0 0
      %3329 = vmatpush1.bf16.xpose.msra.mxu0 0
      %3330 = vmatprep.subr.bf16.mxu0 0
      %3331 = vmatpush1.bf16.xpose.msra.mxu0 0
      %3332 = vmatprep.subr.bf16.mxu0 0
      %3333 = vmatpush1.bf16.xpose.msra.mxu0 0
      %3334 = vmatprep.subr.bf16.mxu0 0
      %3335 = vmatpush1.bf16.xpose.msra.mxu0 0
      %3336 = vmatprep.subr.bf16.mxu0 0
      %3337 = vmatpush1.bf16.xpose.msra.mxu0 0
      %3338 = vmatprep.subr.bf16.mxu0 0
      %3339 = vmatpush1.bf16.xpose.msra.mxu0 0
      %3340 = vmatprep.subr.bf16.mxu0 0
      %3341 = vmatpush1.bf16.xpose.msra.mxu0 0
      %3342 = vmatprep.subr.bf16.mxu0 0
      %3343 = vmatpush1.bf16.xpose.msra.mxu0 0
      %3344 = vmatprep.subr.bf16.mxu0 0
      %3345 = vmatpush1.bf16.xpose.msra.mxu0 0
      %3346 = vmatprep.subr.bf16.mxu0 0
      %3347 = vmatpush1.bf16.xpose.msra.mxu0 0
      %3348 = vmatprep.subr.bf16.mxu0 0
      %3349 = vmatpush1.bf16.xpose.msra.mxu0 0
      %3350 = vmatprep.subr.bf16.mxu0 0
      %3351 = vmatpush1.bf16.xpose.msra.mxu0 0
      %3352 = vmatprep.subr.bf16.mxu0 0
      %3353 = vmatpush1.bf16.xpose.msra.mxu0 0
      %3354 = vmatprep.subr.bf16.mxu0 0
      %3355 = vmatpush1.bf16.xpose.msra.mxu0 0
      %3356 = vmatprep.subr.bf16.mxu0 0
      %3357 = vmatpush1.bf16.xpose.msra.mxu0 0
      %3358 = vmatprep.mubr.bf16.mxu0 0
      %3359 = vmatmul.mubr.bf16.gmra.mrb[0].mxu0 %v3321
      %v3360 = vpop.f32.mrb[0].mxu0
      %v3361 = vadd.f32 0.0, %v3360
      %v3362 = vpop.f32.mrb[0].mxu0
      %v3363 = vpop.f32.mrb[0].mxu0
      %v3364 = vpop.f32.mrb[0].mxu0
      %3365 = vdwg.mxu0
      %3367 = vrot.lane.b32.xlu0 %v2998, 96
      %v3368 = vpop.permute.xlu0 %3367
      %v3370 = vsel %vm370, %v2966, 0
      %v3373 = vsel %vm370, %v3368, 0
      %3375 = vmatprep.subr.bf16.mxu0 0
      %3376 = vmatpush1.bf16.xpose.msra.mxu0 %v3373
      %3377 = vmatprep.subr.bf16.mxu0 0
      %3378 = vmatpush1.bf16.xpose.msra.mxu0 0
      %3379 = vmatprep.subr.bf16.mxu0 0
      %3380 = vmatpush1.bf16.xpose.msra.mxu0 0
      %3381 = vmatprep.subr.bf16.mxu0 0
      %3382 = vmatpush1.bf16.xpose.msra.mxu0 0
      %3383 = vmatprep.subr.bf16.mxu0 0
      %3384 = vmatpush1.bf16.xpose.msra.mxu0 0
      %3385 = vmatprep.subr.bf16.mxu0 0
      %3386 = vmatpush1.bf16.xpose.msra.mxu0 0
      %3387 = vmatprep.subr.bf16.mxu0 0
      %3388 = vmatpush1.bf16.xpose.msra.mxu0 0
      %3389 = vmatprep.subr.bf16.mxu0 0
      %3390 = vmatpush1.bf16.xpose.msra.mxu0 0
      %3391 = vmatprep.subr.bf16.mxu0 0
      %3392 = vmatpush1.bf16.xpose.msra.mxu0 0
      %3393 = vmatprep.subr.bf16.mxu0 0
      %3394 = vmatpush1.bf16.xpose.msra.mxu0 0
      %3395 = vmatprep.subr.bf16.mxu0 0
      %3396 = vmatpush1.bf16.xpose.msra.mxu0 0
      %3397 = vmatprep.subr.bf16.mxu0 0
      %3398 = vmatpush1.bf16.xpose.msra.mxu0 0
      %3399 = vmatprep.subr.bf16.mxu0 0
      %3400 = vmatpush1.bf16.xpose.msra.mxu0 0
      %3401 = vmatprep.subr.bf16.mxu0 0
      %3402 = vmatpush1.bf16.xpose.msra.mxu0 0
      %3403 = vmatprep.subr.bf16.mxu0 0
      %3404 = vmatpush1.bf16.xpose.msra.mxu0 0
      %3405 = vmatprep.subr.bf16.mxu0 0
      %3406 = vmatpush1.bf16.xpose.msra.mxu0 0
      %3407 = vmatprep.mubr.bf16.mxu0 0
      %3408 = vmatmul.mubr.bf16.gmra.mrb[0].mxu0 %v3370
      %v3409 = vpop.f32.mrb[0].mxu0
      %v3410 = vadd.f32 0.0, %v3409
      %v3411 = vpop.f32.mrb[0].mxu0
      %v3412 = vpop.f32.mrb[0].mxu0
      %v3413 = vpop.f32.mrb[0].mxu0
      %3414 = vdwg.mxu0
      %3416 = vrot.lane.b32.xlu0 %v2999, 96
      %v3417 = vpop.permute.xlu0 %3416
      %v3419 = vsel %vm370, %v2967, 0
      %v3422 = vsel %vm370, %v3417, 0
      %3424 = vmatprep.subr.bf16.mxu0 0
      %3425 = vmatpush1.bf16.xpose.msra.mxu0 %v3422
      %3426 = vmatprep.subr.bf16.mxu0 0
      %3427 = vmatpush1.bf16.xpose.msra.mxu0 0
      %3428 = vmatprep.subr.bf16.mxu0 0
      %3429 = vmatpush1.bf16.xpose.msra.mxu0 0
      %3430 = vmatprep.subr.bf16.mxu0 0
      %3431 = vmatpush1.bf16.xpose.msra.mxu0 0
      %3432 = vmatprep.subr.bf16.mxu0 0
      %3433 = vmatpush1.bf16.xpose.msra.mxu0 0
      %3434 = vmatprep.subr.bf16.mxu0 0
      %3435 = vmatpush1.bf16.xpose.msra.mxu0 0
      %3436 = vmatprep.subr.bf16.mxu0 0
      %3437 = vmatpush1.bf16.xpose.msra.mxu0 0
      %3438 = vmatprep.subr.bf16.mxu0 0
      %3439 = vmatpush1.bf16.xpose.msra.mxu0 0
      %3440 = vmatprep.subr.bf16.mxu0 0
      %3441 = vmatpush1.bf16.xpose.msra.mxu0 0
      %3442 = vmatprep.subr.bf16.mxu0 0
      %3443 = vmatpush1.bf16.xpose.msra.mxu0 0
      %3444 = vmatprep.subr.bf16.mxu0 0
      %3445 = vmatpush1.bf16.xpose.msra.mxu0 0
      %3446 = vmatprep.subr.bf16.mxu0 0
      %3447 = vmatpush1.bf16.xpose.msra.mxu0 0
      %3448 = vmatprep.subr.bf16.mxu0 0
      %3449 = vmatpush1.bf16.xpose.msra.mxu0 0
      %3450 = vmatprep.subr.bf16.mxu0 0
      %3451 = vmatpush1.bf16.xpose.msra.mxu0 0
      %3452 = vmatprep.subr.bf16.mxu0 0
      %3453 = vmatpush1.bf16.xpose.msra.mxu0 0
      %3454 = vmatprep.subr.bf16.mxu0 0
      %3455 = vmatpush1.bf16.xpose.msra.mxu0 0
      %3456 = vmatprep.mubr.bf16.mxu0 0
      %3457 = vmatmul.mubr.bf16.gmra.mrb[0].mxu0 %v3419
      %v3458 = vpop.f32.mrb[0].mxu0
      %v3459 = vadd.f32 0.0, %v3458
      %v3460 = vpop.f32.mrb[0].mxu0
      %v3461 = vpop.f32.mrb[0].mxu0
      %v3462 = vpop.f32.mrb[0].mxu0
      %3463 = vdwg.mxu0
      %3465 = vrot.lane.b32.xlu0 %v3000, 96
      %v3466 = vpop.permute.xlu0 %3465
      %v3468 = vsel %vm370, %v2968, 0
      %v3471 = vsel %vm370, %v3466, 0
      %3473 = vmatprep.subr.bf16.mxu0 0
      %3474 = vmatpush1.bf16.xpose.msra.mxu0 %v3471
      %3475 = vmatprep.subr.bf16.mxu0 0
      %3476 = vmatpush1.bf16.xpose.msra.mxu0 0
      %3477 = vmatprep.subr.bf16.mxu0 0
      %3478 = vmatpush1.bf16.xpose.msra.mxu0 0
      %3479 = vmatprep.subr.bf16.mxu0 0
      %3480 = vmatpush1.bf16.xpose.msra.mxu0 0
      %3481 = vmatprep.subr.bf16.mxu0 0
      %3482 = vmatpush1.bf16.xpose.msra.mxu0 0
      %3483 = vmatprep.subr.bf16.mxu0 0
      %3484 = vmatpush1.bf16.xpose.msra.mxu0 0
      %3485 = vmatprep.subr.bf16.mxu0 0
      %3486 = vmatpush1.bf16.xpose.msra.mxu0 0
      %3487 = vmatprep.subr.bf16.mxu0 0
      %3488 = vmatpush1.bf16.xpose.msra.mxu0 0
      %3489 = vmatprep.subr.bf16.mxu0 0
      %3490 = vmatpush1.bf16.xpose.msra.mxu0 0
      %3491 = vmatprep.subr.bf16.mxu0 0
      %3492 = vmatpush1.bf16.xpose.msra.mxu0 0
      %3493 = vmatprep.subr.bf16.mxu0 0
      %3494 = vmatpush1.bf16.xpose.msra.mxu0 0
      %3495 = vmatprep.subr.bf16.mxu0 0
      %3496 = vmatpush1.bf16.xpose.msra.mxu0 0
      %3497 = vmatprep.subr.bf16.mxu0 0
      %3498 = vmatpush1.bf16.xpose.msra.mxu0 0
      %3499 = vmatprep.subr.bf16.mxu0 0
      %3500 = vmatpush1.bf16.xpose.msra.mxu0 0
      %3501 = vmatprep.subr.bf16.mxu0 0
      %3502 = vmatpush1.bf16.xpose.msra.mxu0 0
      %3503 = vmatprep.subr.bf16.mxu0 0
      %3504 = vmatpush1.bf16.xpose.msra.mxu0 0
      %3505 = vmatprep.mubr.bf16.mxu0 0
      %3506 = vmatmul.mubr.bf16.gmra.mrb[0].mxu0 %v3468
      %v3507 = vpop.f32.mrb[0].mxu0
      %v3508 = vadd.f32 0.0, %v3507
      %v3509 = vpop.f32.mrb[0].mxu0
      %v3510 = vpop.f32.mrb[0].mxu0
      %v3511 = vpop.f32.mrb[0].mxu0
      %3512 = vdwg.mxu0
      %3514 = vrot.lane.b32.xlu0 %v3001, 96
      %v3515 = vpop.permute.xlu0 %3514
      %v3517 = vsel %vm370, %v2969, 0
      %v3520 = vsel %vm370, %v3515, 0
      %3522 = vmatprep.subr.bf16.mxu0 0
      %3523 = vmatpush1.bf16.xpose.msra.mxu0 %v3520
      %3524 = vmatprep.subr.bf16.mxu0 0
      %3525 = vmatpush1.bf16.xpose.msra.mxu0 0
      %3526 = vmatprep.subr.bf16.mxu0 0
      %3527 = vmatpush1.bf16.xpose.msra.mxu0 0
      %3528 = vmatprep.subr.bf16.mxu0 0
      %3529 = vmatpush1.bf16.xpose.msra.mxu0 0
      %3530 = vmatprep.subr.bf16.mxu0 0
      %3531 = vmatpush1.bf16.xpose.msra.mxu0 0
      %3532 = vmatprep.subr.bf16.mxu0 0
      %3533 = vmatpush1.bf16.xpose.msra.mxu0 0
      %3534 = vmatprep.subr.bf16.mxu0 0
      %3535 = vmatpush1.bf16.xpose.msra.mxu0 0
      %3536 = vmatprep.subr.bf16.mxu0 0
      %3537 = vmatpush1.bf16.xpose.msra.mxu0 0
      %3538 = vmatprep.subr.bf16.mxu0 0
      %3539 = vmatpush1.bf16.xpose.msra.mxu0 0
      %3540 = vmatprep.subr.bf16.mxu0 0
      %3541 = vmatpush1.bf16.xpose.msra.mxu0 0
      %3542 = vmatprep.subr.bf16.mxu0 0
      %3543 = vmatpush1.bf16.xpose.msra.mxu0 0
      %3544 = vmatprep.subr.bf16.mxu0 0
      %3545 = vmatpush1.bf16.xpose.msra.mxu0 0
      %3546 = vmatprep.subr.bf16.mxu0 0
      %3547 = vmatpush1.bf16.xpose.msra.mxu0 0
      %3548 = vmatprep.subr.bf16.mxu0 0
      %3549 = vmatpush1.bf16.xpose.msra.mxu0 0
      %3550 = vmatprep.subr.bf16.mxu0 0
      %3551 = vmatpush1.bf16.xpose.msra.mxu0 0
      %3552 = vmatprep.subr.bf16.mxu0 0
      %3553 = vmatpush1.bf16.xpose.msra.mxu0 0
      %3554 = vmatprep.mubr.bf16.mxu0 0
      %3555 = vmatmul.mubr.bf16.gmra.mrb[0].mxu0 %v3517
      %v3556 = vpop.f32.mrb[0].mxu0
      %v3557 = vadd.f32 0.0, %v3556
      %v3558 = vpop.f32.mrb[0].mxu0
      %v3559 = vpop.f32.mrb[0].mxu0
      %v3560 = vpop.f32.mrb[0].mxu0
      %3561 = vdwg.mxu0
      %3563 = vrot.lane.b32.xlu0 %v3002, 96
      %v3564 = vpop.permute.xlu0 %3563
      %v3566 = vsel %vm370, %v2970, 0
      %v3569 = vsel %vm370, %v3564, 0
      %3571 = vmatprep.subr.bf16.mxu0 0
      %3572 = vmatpush1.bf16.xpose.msra.mxu0 %v3569
      %3573 = vmatprep.subr.bf16.mxu0 0
      %3574 = vmatpush1.bf16.xpose.msra.mxu0 0
      %3575 = vmatprep.subr.bf16.mxu0 0
      %3576 = vmatpush1.bf16.xpose.msra.mxu0 0
      %3577 = vmatprep.subr.bf16.mxu0 0
      %3578 = vmatpush1.bf16.xpose.msra.mxu0 0
      %3579 = vmatprep.subr.bf16.mxu0 0
      %3580 = vmatpush1.bf16.xpose.msra.mxu0 0
      %3581 = vmatprep.subr.bf16.mxu0 0
      %3582 = vmatpush1.bf16.xpose.msra.mxu0 0
      %3583 = vmatprep.subr.bf16.mxu0 0
      %3584 = vmatpush1.bf16.xpose.msra.mxu0 0
      %3585 = vmatprep.subr.bf16.mxu0 0
      %3586 = vmatpush1.bf16.xpose.msra.mxu0 0
      %3587 = vmatprep.subr.bf16.mxu0 0
      %3588 = vmatpush1.bf16.xpose.msra.mxu0 0
      %3589 = vmatprep.subr.bf16.mxu0 0
      %3590 = vmatpush1.bf16.xpose.msra.mxu0 0
      %3591 = vmatprep.subr.bf16.mxu0 0
      %3592 = vmatpush1.bf16.xpose.msra.mxu0 0
      %3593 = vmatprep.subr.bf16.mxu0 0
      %3594 = vmatpush1.bf16.xpose.msra.mxu0 0
      %3595 = vmatprep.subr.bf16.mxu0 0
      %3596 = vmatpush1.bf16.xpose.msra.mxu0 0
      %3597 = vmatprep.subr.bf16.mxu0 0
      %3598 = vmatpush1.bf16.xpose.msra.mxu0 0
      %3599 = vmatprep.subr.bf16.mxu0 0
      %3600 = vmatpush1.bf16.xpose.msra.mxu0 0
      %3601 = vmatprep.subr.bf16.mxu0 0
      %3602 = vmatpush1.bf16.xpose.msra.mxu0 0
      %3603 = vmatprep.mubr.bf16.mxu0 0
      %3604 = vmatmul.mubr.bf16.gmra.mrb[0].mxu0 %v3566
      %v3605 = vpop.f32.mrb[0].mxu0
      %v3606 = vadd.f32 0.0, %v3605
      %v3607 = vpop.f32.mrb[0].mxu0
      %v3608 = vpop.f32.mrb[0].mxu0
      %v3609 = vpop.f32.mrb[0].mxu0
      %3610 = vdwg.mxu0
      %3612 = vrot.lane.b32.xlu0 %v3003, 96
      %v3613 = vpop.permute.xlu0 %3612
      %v3615 = vsel %vm370, %v2971, 0
      %v3618 = vsel %vm370, %v3613, 0
      %3620 = vmatprep.subr.bf16.mxu0 0
      %3621 = vmatpush1.bf16.xpose.msra.mxu0 %v3618
      %3622 = vmatprep.subr.bf16.mxu0 0
      %3623 = vmatpush1.bf16.xpose.msra.mxu0 0
      %3624 = vmatprep.subr.bf16.mxu0 0
      %3625 = vmatpush1.bf16.xpose.msra.mxu0 0
      %3626 = vmatprep.subr.bf16.mxu0 0
      %3627 = vmatpush1.bf16.xpose.msra.mxu0 0
      %3628 = vmatprep.subr.bf16.mxu0 0
      %3629 = vmatpush1.bf16.xpose.msra.mxu0 0
      %3630 = vmatprep.subr.bf16.mxu0 0
      %3631 = vmatpush1.bf16.xpose.msra.mxu0 0
      %3632 = vmatprep.subr.bf16.mxu0 0
      %3633 = vmatpush1.bf16.xpose.msra.mxu0 0
      %3634 = vmatprep.subr.bf16.mxu0 0
      %3635 = vmatpush1.bf16.xpose.msra.mxu0 0
      %3636 = vmatprep.subr.bf16.mxu0 0
      %3637 = vmatpush1.bf16.xpose.msra.mxu0 0
      %3638 = vmatprep.subr.bf16.mxu0 0
      %3639 = vmatpush1.bf16.xpose.msra.mxu0 0
      %3640 = vmatprep.subr.bf16.mxu0 0
      %3641 = vmatpush1.bf16.xpose.msra.mxu0 0
      %3642 = vmatprep.subr.bf16.mxu0 0
      %3643 = vmatpush1.bf16.xpose.msra.mxu0 0
      %3644 = vmatprep.subr.bf16.mxu0 0
      %3645 = vmatpush1.bf16.xpose.msra.mxu0 0
      %3646 = vmatprep.subr.bf16.mxu0 0
      %3647 = vmatpush1.bf16.xpose.msra.mxu0 0
      %3648 = vmatprep.subr.bf16.mxu0 0
      %3649 = vmatpush1.bf16.xpose.msra.mxu0 0
      %3650 = vmatprep.subr.bf16.mxu0 0
      %3651 = vmatpush1.bf16.xpose.msra.mxu0 0
      %3652 = vmatprep.mubr.bf16.mxu0 0
      %3653 = vmatmul.mubr.bf16.gmra.mrb[0].mxu0 %v3615
      %v3654 = vpop.f32.mrb[0].mxu0
      %v3655 = vadd.f32 0.0, %v3654
      %v3656 = vpop.f32.mrb[0].mxu0
      %v3657 = vpop.f32.mrb[0].mxu0
      %v3658 = vpop.f32.mrb[0].mxu0
      %3659 = vdwg.mxu0
      %3661 = vrot.lane.b32.xlu0 %v3004, 96
      %v3662 = vpop.permute.xlu0 %3661
      %v3664 = vsel %vm370, %v2972, 0
      %v3667 = vsel %vm370, %v3662, 0
      %3669 = vmatprep.subr.bf16.mxu0 0
      %3670 = vmatpush1.bf16.xpose.msra.mxu0 %v3667
      %3671 = vmatprep.subr.bf16.mxu0 0
      %3672 = vmatpush1.bf16.xpose.msra.mxu0 0
      %3673 = vmatprep.subr.bf16.mxu0 0
      %3674 = vmatpush1.bf16.xpose.msra.mxu0 0
      %3675 = vmatprep.subr.bf16.mxu0 0
      %3676 = vmatpush1.bf16.xpose.msra.mxu0 0
      %3677 = vmatprep.subr.bf16.mxu0 0
      %3678 = vmatpush1.bf16.xpose.msra.mxu0 0
      %3679 = vmatprep.subr.bf16.mxu0 0
      %3680 = vmatpush1.bf16.xpose.msra.mxu0 0
      %3681 = vmatprep.subr.bf16.mxu0 0
      %3682 = vmatpush1.bf16.xpose.msra.mxu0 0
      %3683 = vmatprep.subr.bf16.mxu0 0
      %3684 = vmatpush1.bf16.xpose.msra.mxu0 0
      %3685 = vmatprep.subr.bf16.mxu0 0
      %3686 = vmatpush1.bf16.xpose.msra.mxu0 0
      %3687 = vmatprep.subr.bf16.mxu0 0
      %3688 = vmatpush1.bf16.xpose.msra.mxu0 0
      %3689 = vmatprep.subr.bf16.mxu0 0
      %3690 = vmatpush1.bf16.xpose.msra.mxu0 0
      %3691 = vmatprep.subr.bf16.mxu0 0
      %3692 = vmatpush1.bf16.xpose.msra.mxu0 0
      %3693 = vmatprep.subr.bf16.mxu0 0
      %3694 = vmatpush1.bf16.xpose.msra.mxu0 0
      %3695 = vmatprep.subr.bf16.mxu0 0
      %3696 = vmatpush1.bf16.xpose.msra.mxu0 0
      %3697 = vmatprep.subr.bf16.mxu0 0
      %3698 = vmatpush1.bf16.xpose.msra.mxu0 0
      %3699 = vmatprep.subr.bf16.mxu0 0
      %3700 = vmatpush1.bf16.xpose.msra.mxu0 0
      %3701 = vmatprep.mubr.bf16.mxu0 0
      %3702 = vmatmul.mubr.bf16.gmra.mrb[0].mxu0 %v3664
      %v3703 = vpop.f32.mrb[0].mxu0
      %v3704 = vadd.f32 0.0, %v3703
      %v3705 = vpop.f32.mrb[0].mxu0
      %v3706 = vpop.f32.mrb[0].mxu0
      %v3707 = vpop.f32.mrb[0].mxu0
      %3708 = vdwg.mxu0
      %3710 = vrot.lane.b32.xlu0 %v3005, 96
      %v3711 = vpop.permute.xlu0 %3710
      %v3713 = vsel %vm370, %v2973, 0
      %v3716 = vsel %vm370, %v3711, 0
      %3718 = vmatprep.subr.bf16.mxu0 0
      %3719 = vmatpush1.bf16.xpose.msra.mxu0 %v3716
      %3720 = vmatprep.subr.bf16.mxu0 0
      %3721 = vmatpush1.bf16.xpose.msra.mxu0 0
      %3722 = vmatprep.subr.bf16.mxu0 0
      %3723 = vmatpush1.bf16.xpose.msra.mxu0 0
      %3724 = vmatprep.subr.bf16.mxu0 0
      %3725 = vmatpush1.bf16.xpose.msra.mxu0 0
      %3726 = vmatprep.subr.bf16.mxu0 0
      %3727 = vmatpush1.bf16.xpose.msra.mxu0 0
      %3728 = vmatprep.subr.bf16.mxu0 0
      %3729 = vmatpush1.bf16.xpose.msra.mxu0 0
      %3730 = vmatprep.subr.bf16.mxu0 0
      %3731 = vmatpush1.bf16.xpose.msra.mxu0 0
      %3732 = vmatprep.subr.bf16.mxu0 0
      %3733 = vmatpush1.bf16.xpose.msra.mxu0 0
      %3734 = vmatprep.subr.bf16.mxu0 0
      %3735 = vmatpush1.bf16.xpose.msra.mxu0 0
      %3736 = vmatprep.subr.bf16.mxu0 0
      %3737 = vmatpush1.bf16.xpose.msra.mxu0 0
      %3738 = vmatprep.subr.bf16.mxu0 0
      %3739 = vmatpush1.bf16.xpose.msra.mxu0 0
      %3740 = vmatprep.subr.bf16.mxu0 0
      %3741 = vmatpush1.bf16.xpose.msra.mxu0 0
      %3742 = vmatprep.subr.bf16.mxu0 0
      %3743 = vmatpush1.bf16.xpose.msra.mxu0 0
      %3744 = vmatprep.subr.bf16.mxu0 0
      %3745 = vmatpush1.bf16.xpose.msra.mxu0 0
      %3746 = vmatprep.subr.bf16.mxu0 0
      %3747 = vmatpush1.bf16.xpose.msra.mxu0 0
      %3748 = vmatprep.subr.bf16.mxu0 0
      %3749 = vmatpush1.bf16.xpose.msra.mxu0 0
      %3750 = vmatprep.mubr.bf16.mxu0 0
      %3751 = vmatmul.mubr.bf16.gmra.mrb[0].mxu0 %v3713
      %v3752 = vpop.f32.mrb[0].mxu0
      %v3753 = vadd.f32 0.0, %v3752
      %v3754 = vpop.f32.mrb[0].mxu0
      %v3755 = vpop.f32.mrb[0].mxu0
      %v3756 = vpop.f32.mrb[0].mxu0
      %3757 = vdwg.mxu0
      %3759 = vrot.lane.b32.xlu0 %v3006, 96
      %v3760 = vpop.permute.xlu0 %3759
      %v3762 = vsel %vm370, %v2974, 0
      %v3765 = vsel %vm370, %v3760, 0
      %3767 = vmatprep.subr.bf16.mxu0 0
      %3768 = vmatpush1.bf16.xpose.msra.mxu0 %v3765
      %3769 = vmatprep.subr.bf16.mxu0 0
      %3770 = vmatpush1.bf16.xpose.msra.mxu0 0
      %3771 = vmatprep.subr.bf16.mxu0 0
      %3772 = vmatpush1.bf16.xpose.msra.mxu0 0
      %3773 = vmatprep.subr.bf16.mxu0 0
      %3774 = vmatpush1.bf16.xpose.msra.mxu0 0
      %3775 = vmatprep.subr.bf16.mxu0 0
      %3776 = vmatpush1.bf16.xpose.msra.mxu0 0
      %3777 = vmatprep.subr.bf16.mxu0 0
      %3778 = vmatpush1.bf16.xpose.msra.mxu0 0
      %3779 = vmatprep.subr.bf16.mxu0 0
      %3780 = vmatpush1.bf16.xpose.msra.mxu0 0
      %3781 = vmatprep.subr.bf16.mxu0 0
      %3782 = vmatpush1.bf16.xpose.msra.mxu0 0
      %3783 = vmatprep.subr.bf16.mxu0 0
      %3784 = vmatpush1.bf16.xpose.msra.mxu0 0
      %3785 = vmatprep.subr.bf16.mxu0 0
      %3786 = vmatpush1.bf16.xpose.msra.mxu0 0
      %3787 = vmatprep.subr.bf16.mxu0 0
      %3788 = vmatpush1.bf16.xpose.msra.mxu0 0
      %3789 = vmatprep.subr.bf16.mxu0 0
      %3790 = vmatpush1.bf16.xpose.msra.mxu0 0
      %3791 = vmatprep.subr.bf16.mxu0 0
      %3792 = vmatpush1.bf16.xpose.msra.mxu0 0
      %3793 = vmatprep.subr.bf16.mxu0 0
      %3794 = vmatpush1.bf16.xpose.msra.mxu0 0
      %3795 = vmatprep.subr.bf16.mxu0 0
      %3796 = vmatpush1.bf16.xpose.msra.mxu0 0
      %3797 = vmatprep.subr.bf16.mxu0 0
      %3798 = vmatpush1.bf16.xpose.msra.mxu0 0
      %3799 = vmatprep.mubr.bf16.mxu0 0
      %3800 = vmatmul.mubr.bf16.gmra.mrb[0].mxu0 %v3762
      %v3801 = vpop.f32.mrb[0].mxu0
      %v3802 = vadd.f32 0.0, %v3801
      %v3803 = vpop.f32.mrb[0].mxu0
      %v3804 = vpop.f32.mrb[0].mxu0
      %v3805 = vpop.f32.mrb[0].mxu0
      %3806 = vdwg.mxu0
      %3808 = vrot.lane.b32.xlu0 %v3007, 96
      %v3809 = vpop.permute.xlu0 %3808
      %v3811 = vsel %vm370, %v2975, 0
      %v3814 = vsel %vm370, %v3809, 0
      %3816 = vmatprep.subr.bf16.mxu0 0
      %3817 = vmatpush1.bf16.xpose.msra.mxu0 %v3814
      %3818 = vmatprep.subr.bf16.mxu0 0
      %3819 = vmatpush1.bf16.xpose.msra.mxu0 0
      %3820 = vmatprep.subr.bf16.mxu0 0
      %3821 = vmatpush1.bf16.xpose.msra.mxu0 0
      %3822 = vmatprep.subr.bf16.mxu0 0
      %3823 = vmatpush1.bf16.xpose.msra.mxu0 0
      %3824 = vmatprep.subr.bf16.mxu0 0
      %3825 = vmatpush1.bf16.xpose.msra.mxu0 0
      %3826 = vmatprep.subr.bf16.mxu0 0
      %3827 = vmatpush1.bf16.xpose.msra.mxu0 0
      %3828 = vmatprep.subr.bf16.mxu0 0
      %3829 = vmatpush1.bf16.xpose.msra.mxu0 0
      %3830 = vmatprep.subr.bf16.mxu0 0
      %3831 = vmatpush1.bf16.xpose.msra.mxu0 0
      %3832 = vmatprep.subr.bf16.mxu0 0
      %3833 = vmatpush1.bf16.xpose.msra.mxu0 0
      %3834 = vmatprep.subr.bf16.mxu0 0
      %3835 = vmatpush1.bf16.xpose.msra.mxu0 0
      %3836 = vmatprep.subr.bf16.mxu0 0
      %3837 = vmatpush1.bf16.xpose.msra.mxu0 0
      %3838 = vmatprep.subr.bf16.mxu0 0
      %3839 = vmatpush1.bf16.xpose.msra.mxu0 0
      %3840 = vmatprep.subr.bf16.mxu0 0
      %3841 = vmatpush1.bf16.xpose.msra.mxu0 0
      %3842 = vmatprep.subr.bf16.mxu0 0
      %3843 = vmatpush1.bf16.xpose.msra.mxu0 0
      %3844 = vmatprep.subr.bf16.mxu0 0
      %3845 = vmatpush1.bf16.xpose.msra.mxu0 0
      %3846 = vmatprep.subr.bf16.mxu0 0
      %3847 = vmatpush1.bf16.xpose.msra.mxu0 0
      %3848 = vmatprep.mubr.bf16.mxu0 0
      %3849 = vmatmul.mubr.bf16.gmra.mrb[0].mxu0 %v3811
      %v3850 = vpop.f32.mrb[0].mxu0
      %v3851 = vadd.f32 0.0, %v3850
      %v3852 = vpop.f32.mrb[0].mxu0
      %v3853 = vpop.f32.mrb[0].mxu0
      %v3854 = vpop.f32.mrb[0].mxu0
      %3855 = vdwg.mxu0
      %3857 = vrot.lane.b32.xlu0 %v3008, 96
      %v3858 = vpop.permute.xlu0 %3857
      %v3860 = vsel %vm370, %v2976, 0
      %v3863 = vsel %vm370, %v3858, 0
      %3865 = vmatprep.subr.bf16.mxu0 0
      %3866 = vmatpush1.bf16.xpose.msra.mxu0 %v3863
      %3867 = vmatprep.subr.bf16.mxu0 0
      %3868 = vmatpush1.bf16.xpose.msra.mxu0 0
      %3869 = vmatprep.subr.bf16.mxu0 0
      %3870 = vmatpush1.bf16.xpose.msra.mxu0 0
      %3871 = vmatprep.subr.bf16.mxu0 0
      %3872 = vmatpush1.bf16.xpose.msra.mxu0 0
      %3873 = vmatprep.subr.bf16.mxu0 0
      %3874 = vmatpush1.bf16.xpose.msra.mxu0 0
      %3875 = vmatprep.subr.bf16.mxu0 0
      %3876 = vmatpush1.bf16.xpose.msra.mxu0 0
      %3877 = vmatprep.subr.bf16.mxu0 0
      %3878 = vmatpush1.bf16.xpose.msra.mxu0 0
      %3879 = vmatprep.subr.bf16.mxu0 0
      %3880 = vmatpush1.bf16.xpose.msra.mxu0 0
      %3881 = vmatprep.subr.bf16.mxu0 0
      %3882 = vmatpush1.bf16.xpose.msra.mxu0 0
      %3883 = vmatprep.subr.bf16.mxu0 0
      %3884 = vmatpush1.bf16.xpose.msra.mxu0 0
      %3885 = vmatprep.subr.bf16.mxu0 0
      %3886 = vmatpush1.bf16.xpose.msra.mxu0 0
      %3887 = vmatprep.subr.bf16.mxu0 0
      %3888 = vmatpush1.bf16.xpose.msra.mxu0 0
      %3889 = vmatprep.subr.bf16.mxu0 0
      %3890 = vmatpush1.bf16.xpose.msra.mxu0 0
      %3891 = vmatprep.subr.bf16.mxu0 0
      %3892 = vmatpush1.bf16.xpose.msra.mxu0 0
      %3893 = vmatprep.subr.bf16.mxu0 0
      %3894 = vmatpush1.bf16.xpose.msra.mxu0 0
      %3895 = vmatprep.subr.bf16.mxu0 0
      %3896 = vmatpush1.bf16.xpose.msra.mxu0 0
      %3897 = vmatprep.mubr.bf16.mxu0 0
      %3898 = vmatmul.mubr.bf16.gmra.mrb[0].mxu0 %v3860
      %v3899 = vpop.f32.mrb[0].mxu0
      %v3900 = vadd.f32 0.0, %v3899
      %v3901 = vpop.f32.mrb[0].mxu0
      %v3902 = vpop.f32.mrb[0].mxu0
      %v3903 = vpop.f32.mrb[0].mxu0
      %3904 = vdwg.mxu0
      %3906 = vrot.lane.b32.xlu0 %v3009, 96
      %v3907 = vpop.permute.xlu0 %3906
      %v3909 = vsel %vm370, %v2977, 0
      %v3912 = vsel %vm370, %v3907, 0
      %3914 = vmatprep.subr.bf16.mxu0 0
      %3915 = vmatpush1.bf16.xpose.msra.mxu0 %v3912
      %3916 = vmatprep.subr.bf16.mxu0 0
      %3917 = vmatpush1.bf16.xpose.msra.mxu0 0
      %3918 = vmatprep.subr.bf16.mxu0 0
      %3919 = vmatpush1.bf16.xpose.msra.mxu0 0
      %3920 = vmatprep.subr.bf16.mxu0 0
      %3921 = vmatpush1.bf16.xpose.msra.mxu0 0
      %3922 = vmatprep.subr.bf16.mxu0 0
      %3923 = vmatpush1.bf16.xpose.msra.mxu0 0
      %3924 = vmatprep.subr.bf16.mxu0 0
      %3925 = vmatpush1.bf16.xpose.msra.mxu0 0
      %3926 = vmatprep.subr.bf16.mxu0 0
      %3927 = vmatpush1.bf16.xpose.msra.mxu0 0
      %3928 = vmatprep.subr.bf16.mxu0 0
      %3929 = vmatpush1.bf16.xpose.msra.mxu0 0
      %3930 = vmatprep.subr.bf16.mxu0 0
      %3931 = vmatpush1.bf16.xpose.msra.mxu0 0
      %3932 = vmatprep.subr.bf16.mxu0 0
      %3933 = vmatpush1.bf16.xpose.msra.mxu0 0
      %3934 = vmatprep.subr.bf16.mxu0 0
      %3935 = vmatpush1.bf16.xpose.msra.mxu0 0
      %3936 = vmatprep.subr.bf16.mxu0 0
      %3937 = vmatpush1.bf16.xpose.msra.mxu0 0
      %3938 = vmatprep.subr.bf16.mxu0 0
      %3939 = vmatpush1.bf16.xpose.msra.mxu0 0
      %3940 = vmatprep.subr.bf16.mxu0 0
      %3941 = vmatpush1.bf16.xpose.msra.mxu0 0
      %3942 = vmatprep.subr.bf16.mxu0 0
      %3943 = vmatpush1.bf16.xpose.msra.mxu0 0
      %3944 = vmatprep.subr.bf16.mxu0 0
      %3945 = vmatpush1.bf16.xpose.msra.mxu0 0
      %3946 = vmatprep.mubr.bf16.mxu0 0
      %3947 = vmatmul.mubr.bf16.gmra.mrb[0].mxu0 %v3909
      %v3948 = vpop.f32.mrb[0].mxu0
      %v3949 = vadd.f32 0.0, %v3948
      %v3950 = vpop.f32.mrb[0].mxu0
      %v3951 = vpop.f32.mrb[0].mxu0
      %v3952 = vpop.f32.mrb[0].mxu0
      %3953 = vdwg.mxu0
      %3955 = vrot.lane.b32.xlu0 %v3010, 96
      %v3956 = vpop.permute.xlu0 %3955
      %v3958 = vsel %vm370, %v2978, 0
      %v3961 = vsel %vm370, %v3956, 0
      %3963 = vmatprep.subr.bf16.mxu0 0
      %3964 = vmatpush1.bf16.xpose.msra.mxu0 %v3961
      %3965 = vmatprep.subr.bf16.mxu0 0
      %3966 = vmatpush1.bf16.xpose.msra.mxu0 0
      %3967 = vmatprep.subr.bf16.mxu0 0
      %3968 = vmatpush1.bf16.xpose.msra.mxu0 0
      %3969 = vmatprep.subr.bf16.mxu0 0
      %3970 = vmatpush1.bf16.xpose.msra.mxu0 0
      %3971 = vmatprep.subr.bf16.mxu0 0
      %3972 = vmatpush1.bf16.xpose.msra.mxu0 0
      %3973 = vmatprep.subr.bf16.mxu0 0
      %3974 = vmatpush1.bf16.xpose.msra.mxu0 0
      %3975 = vmatprep.subr.bf16.mxu0 0
      %3976 = vmatpush1.bf16.xpose.msra.mxu0 0
      %3977 = vmatprep.subr.bf16.mxu0 0
      %3978 = vmatpush1.bf16.xpose.msra.mxu0 0
      %3979 = vmatprep.subr.bf16.mxu0 0
      %3980 = vmatpush1.bf16.xpose.msra.mxu0 0
      %3981 = vmatprep.subr.bf16.mxu0 0
      %3982 = vmatpush1.bf16.xpose.msra.mxu0 0
      %3983 = vmatprep.subr.bf16.mxu0 0
      %3984 = vmatpush1.bf16.xpose.msra.mxu0 0
      %3985 = vmatprep.subr.bf16.mxu0 0
      %3986 = vmatpush1.bf16.xpose.msra.mxu0 0
      %3987 = vmatprep.subr.bf16.mxu0 0
      %3988 = vmatpush1.bf16.xpose.msra.mxu0 0
      %3989 = vmatprep.subr.bf16.mxu0 0
      %3990 = vmatpush1.bf16.xpose.msra.mxu0 0
      %3991 = vmatprep.subr.bf16.mxu0 0
      %3992 = vmatpush1.bf16.xpose.msra.mxu0 0
      %3993 = vmatprep.subr.bf16.mxu0 0
      %3994 = vmatpush1.bf16.xpose.msra.mxu0 0
      %3995 = vmatprep.mubr.bf16.mxu0 0
      %3996 = vmatmul.mubr.bf16.gmra.mrb[0].mxu0 %v3958
      %v3997 = vpop.f32.mrb[0].mxu0
      %v3998 = vadd.f32 0.0, %v3997
      %v3999 = vpop.f32.mrb[0].mxu0
      %v4000 = vpop.f32.mrb[0].mxu0
      %v4001 = vpop.f32.mrb[0].mxu0
      %4002 = vdwg.mxu0
      %4004 = vrot.lane.b32.xlu0 %v3011, 96
      %v4005 = vpop.permute.xlu0 %4004
      %v4007 = vsel %vm370, %v2979, 0
      %v4010 = vsel %vm370, %v4005, 0
      %4012 = vmatprep.subr.bf16.mxu0 0
      %4013 = vmatpush1.bf16.xpose.msra.mxu0 %v4010
      %4014 = vmatprep.subr.bf16.mxu0 0
      %4015 = vmatpush1.bf16.xpose.msra.mxu0 0
      %4016 = vmatprep.subr.bf16.mxu0 0
      %4017 = vmatpush1.bf16.xpose.msra.mxu0 0
      %4018 = vmatprep.subr.bf16.mxu0 0
      %4019 = vmatpush1.bf16.xpose.msra.mxu0 0
      %4020 = vmatprep.subr.bf16.mxu0 0
      %4021 = vmatpush1.bf16.xpose.msra.mxu0 0
      %4022 = vmatprep.subr.bf16.mxu0 0
      %4023 = vmatpush1.bf16.xpose.msra.mxu0 0
      %4024 = vmatprep.subr.bf16.mxu0 0
      %4025 = vmatpush1.bf16.xpose.msra.mxu0 0
      %4026 = vmatprep.subr.bf16.mxu0 0
      %4027 = vmatpush1.bf16.xpose.msra.mxu0 0
      %4028 = vmatprep.subr.bf16.mxu0 0
      %4029 = vmatpush1.bf16.xpose.msra.mxu0 0
      %4030 = vmatprep.subr.bf16.mxu0 0
      %4031 = vmatpush1.bf16.xpose.msra.mxu0 0
      %4032 = vmatprep.subr.bf16.mxu0 0
      %4033 = vmatpush1.bf16.xpose.msra.mxu0 0
      %4034 = vmatprep.subr.bf16.mxu0 0
      %4035 = vmatpush1.bf16.xpose.msra.mxu0 0
      %4036 = vmatprep.subr.bf16.mxu0 0
      %4037 = vmatpush1.bf16.xpose.msra.mxu0 0
      %4038 = vmatprep.subr.bf16.mxu0 0
      %4039 = vmatpush1.bf16.xpose.msra.mxu0 0
      %4040 = vmatprep.subr.bf16.mxu0 0
      %4041 = vmatpush1.bf16.xpose.msra.mxu0 0
      %4042 = vmatprep.subr.bf16.mxu0 0
      %4043 = vmatpush1.bf16.xpose.msra.mxu0 0
      %4044 = vmatprep.mubr.bf16.mxu0 0
      %4045 = vmatmul.mubr.bf16.gmra.mrb[0].mxu0 %v4007
      %v4046 = vpop.f32.mrb[0].mxu0
      %v4047 = vadd.f32 0.0, %v4046
      %v4048 = vpop.f32.mrb[0].mxu0
      %v4049 = vpop.f32.mrb[0].mxu0
      %v4050 = vpop.f32.mrb[0].mxu0
      %4051 = vdwg.mxu0
      %4053 = vrot.lane.b32.xlu0 %v3012, 96
      %v4054 = vpop.permute.xlu0 %4053
      %v4056 = vsel %vm370, %v2980, 0
      %v4059 = vsel %vm370, %v4054, 0
      %4061 = vmatprep.subr.bf16.mxu0 0
      %4062 = vmatpush1.bf16.xpose.msra.mxu0 %v4059
      %4063 = vmatprep.subr.bf16.mxu0 0
      %4064 = vmatpush1.bf16.xpose.msra.mxu0 0
      %4065 = vmatprep.subr.bf16.mxu0 0
      %4066 = vmatpush1.bf16.xpose.msra.mxu0 0
      %4067 = vmatprep.subr.bf16.mxu0 0
      %4068 = vmatpush1.bf16.xpose.msra.mxu0 0
      %4069 = vmatprep.subr.bf16.mxu0 0
      %4070 = vmatpush1.bf16.xpose.msra.mxu0 0
      %4071 = vmatprep.subr.bf16.mxu0 0
      %4072 = vmatpush1.bf16.xpose.msra.mxu0 0
      %4073 = vmatprep.subr.bf16.mxu0 0
      %4074 = vmatpush1.bf16.xpose.msra.mxu0 0
      %4075 = vmatprep.subr.bf16.mxu0 0
      %4076 = vmatpush1.bf16.xpose.msra.mxu0 0
      %4077 = vmatprep.subr.bf16.mxu0 0
      %4078 = vmatpush1.bf16.xpose.msra.mxu0 0
      %4079 = vmatprep.subr.bf16.mxu0 0
      %4080 = vmatpush1.bf16.xpose.msra.mxu0 0
      %4081 = vmatprep.subr.bf16.mxu0 0
      %4082 = vmatpush1.bf16.xpose.msra.mxu0 0
      %4083 = vmatprep.subr.bf16.mxu0 0
      %4084 = vmatpush1.bf16.xpose.msra.mxu0 0
      %4085 = vmatprep.subr.bf16.mxu0 0
      %4086 = vmatpush1.bf16.xpose.msra.mxu0 0
      %4087 = vmatprep.subr.bf16.mxu0 0
      %4088 = vmatpush1.bf16.xpose.msra.mxu0 0
      %4089 = vmatprep.subr.bf16.mxu0 0
      %4090 = vmatpush1.bf16.xpose.msra.mxu0 0
      %4091 = vmatprep.subr.bf16.mxu0 0
      %4092 = vmatpush1.bf16.xpose.msra.mxu0 0
      %4093 = vmatprep.mubr.bf16.mxu0 0
      %4094 = vmatmul.mubr.bf16.gmra.mrb[0].mxu0 %v4056
      %v4095 = vpop.f32.mrb[0].mxu0
      %v4096 = vadd.f32 0.0, %v4095
      %v4097 = vpop.f32.mrb[0].mxu0
      %v4098 = vpop.f32.mrb[0].mxu0
      %v4099 = vpop.f32.mrb[0].mxu0
      %4100 = vdwg.mxu0
      %4102 = vrot.lane.b32.xlu0 %v3013, 96
      %v4103 = vpop.permute.xlu0 %4102
      %v4105 = vsel %vm370, %v2981, 0
      %v4108 = vsel %vm370, %v4103, 0
      %4110 = vmatprep.subr.bf16.mxu0 0
      %4111 = vmatpush1.bf16.xpose.msra.mxu0 %v4108
      %4112 = vmatprep.subr.bf16.mxu0 0
      %4113 = vmatpush1.bf16.xpose.msra.mxu0 0
      %4114 = vmatprep.subr.bf16.mxu0 0
      %4115 = vmatpush1.bf16.xpose.msra.mxu0 0
      %4116 = vmatprep.subr.bf16.mxu0 0
      %4117 = vmatpush1.bf16.xpose.msra.mxu0 0
      %4118 = vmatprep.subr.bf16.mxu0 0
      %4119 = vmatpush1.bf16.xpose.msra.mxu0 0
      %4120 = vmatprep.subr.bf16.mxu0 0
      %4121 = vmatpush1.bf16.xpose.msra.mxu0 0
      %4122 = vmatprep.subr.bf16.mxu0 0
      %4123 = vmatpush1.bf16.xpose.msra.mxu0 0
      %4124 = vmatprep.subr.bf16.mxu0 0
      %4125 = vmatpush1.bf16.xpose.msra.mxu0 0
      %4126 = vmatprep.subr.bf16.mxu0 0
      %4127 = vmatpush1.bf16.xpose.msra.mxu0 0
      %4128 = vmatprep.subr.bf16.mxu0 0
      %4129 = vmatpush1.bf16.xpose.msra.mxu0 0
      %4130 = vmatprep.subr.bf16.mxu0 0
      %4131 = vmatpush1.bf16.xpose.msra.mxu0 0
      %4132 = vmatprep.subr.bf16.mxu0 0
      %4133 = vmatpush1.bf16.xpose.msra.mxu0 0
      %4134 = vmatprep.subr.bf16.mxu0 0
      %4135 = vmatpush1.bf16.xpose.msra.mxu0 0
      %4136 = vmatprep.subr.bf16.mxu0 0
      %4137 = vmatpush1.bf16.xpose.msra.mxu0 0
      %4138 = vmatprep.subr.bf16.mxu0 0
      %4139 = vmatpush1.bf16.xpose.msra.mxu0 0
      %4140 = vmatprep.subr.bf16.mxu0 0
      %4141 = vmatpush1.bf16.xpose.msra.mxu0 0
      %4142 = vmatprep.mubr.bf16.mxu0 0
      %4143 = vmatmul.mubr.bf16.gmra.mrb[0].mxu0 %v4105
      %v4144 = vpop.f32.mrb[0].mxu0
      %v4145 = vadd.f32 0.0, %v4144
      %v4146 = vpop.f32.mrb[0].mxu0
      %v4147 = vpop.f32.mrb[0].mxu0
      %v4148 = vpop.f32.mrb[0].mxu0
      %4149 = vdwg.mxu0
      %4151 = vrot.lane.b32.xlu0 %v3014, 96
      %v4152 = vpop.permute.xlu0 %4151
      %v4154 = vsel %vm370, %v2982, 0
      %v4157 = vsel %vm370, %v4152, 0
      %4159 = vmatprep.subr.bf16.mxu0 0
      %4160 = vmatpush1.bf16.xpose.msra.mxu0 %v4157
      %4161 = vmatprep.subr.bf16.mxu0 0
      %4162 = vmatpush1.bf16.xpose.msra.mxu0 0
      %4163 = vmatprep.subr.bf16.mxu0 0
      %4164 = vmatpush1.bf16.xpose.msra.mxu0 0
      %4165 = vmatprep.subr.bf16.mxu0 0
      %4166 = vmatpush1.bf16.xpose.msra.mxu0 0
      %4167 = vmatprep.subr.bf16.mxu0 0
      %4168 = vmatpush1.bf16.xpose.msra.mxu0 0
      %4169 = vmatprep.subr.bf16.mxu0 0
      %4170 = vmatpush1.bf16.xpose.msra.mxu0 0
      %4171 = vmatprep.subr.bf16.mxu0 0
      %4172 = vmatpush1.bf16.xpose.msra.mxu0 0
      %4173 = vmatprep.subr.bf16.mxu0 0
      %4174 = vmatpush1.bf16.xpose.msra.mxu0 0
      %4175 = vmatprep.subr.bf16.mxu0 0
      %4176 = vmatpush1.bf16.xpose.msra.mxu0 0
      %4177 = vmatprep.subr.bf16.mxu0 0
      %4178 = vmatpush1.bf16.xpose.msra.mxu0 0
      %4179 = vmatprep.subr.bf16.mxu0 0
      %4180 = vmatpush1.bf16.xpose.msra.mxu0 0
      %4181 = vmatprep.subr.bf16.mxu0 0
      %4182 = vmatpush1.bf16.xpose.msra.mxu0 0
      %4183 = vmatprep.subr.bf16.mxu0 0
      %4184 = vmatpush1.bf16.xpose.msra.mxu0 0
      %4185 = vmatprep.subr.bf16.mxu0 0
      %4186 = vmatpush1.bf16.xpose.msra.mxu0 0
      %4187 = vmatprep.subr.bf16.mxu0 0
      %4188 = vmatpush1.bf16.xpose.msra.mxu0 0
      %4189 = vmatprep.subr.bf16.mxu0 0
      %4190 = vmatpush1.bf16.xpose.msra.mxu0 0
      %4191 = vmatprep.mubr.bf16.mxu0 0
      %4192 = vmatmul.mubr.bf16.gmra.mrb[0].mxu0 %v4154
      %v4193 = vpop.f32.mrb[0].mxu0
      %v4194 = vadd.f32 0.0, %v4193
      %v4195 = vpop.f32.mrb[0].mxu0
      %v4196 = vpop.f32.mrb[0].mxu0
      %v4197 = vpop.f32.mrb[0].mxu0
      %4198 = vdwg.mxu0
      %4200 = vrot.lane.b32.xlu0 %v3015, 96
      %v4201 = vpop.permute.xlu0 %4200
      %v4203 = vsel %vm370, %v2983, 0
      %v4206 = vsel %vm370, %v4201, 0
      %4208 = vmatprep.subr.bf16.mxu0 0
      %4209 = vmatpush1.bf16.xpose.msra.mxu0 %v4206
      %4210 = vmatprep.subr.bf16.mxu0 0
      %4211 = vmatpush1.bf16.xpose.msra.mxu0 0
      %4212 = vmatprep.subr.bf16.mxu0 0
      %4213 = vmatpush1.bf16.xpose.msra.mxu0 0
      %4214 = vmatprep.subr.bf16.mxu0 0
      %4215 = vmatpush1.bf16.xpose.msra.mxu0 0
      %4216 = vmatprep.subr.bf16.mxu0 0
      %4217 = vmatpush1.bf16.xpose.msra.mxu0 0
      %4218 = vmatprep.subr.bf16.mxu0 0
      %4219 = vmatpush1.bf16.xpose.msra.mxu0 0
      %4220 = vmatprep.subr.bf16.mxu0 0
      %4221 = vmatpush1.bf16.xpose.msra.mxu0 0
      %4222 = vmatprep.subr.bf16.mxu0 0
      %4223 = vmatpush1.bf16.xpose.msra.mxu0 0
      %4224 = vmatprep.subr.bf16.mxu0 0
      %4225 = vmatpush1.bf16.xpose.msra.mxu0 0
      %4226 = vmatprep.subr.bf16.mxu0 0
      %4227 = vmatpush1.bf16.xpose.msra.mxu0 0
      %4228 = vmatprep.subr.bf16.mxu0 0
      %4229 = vmatpush1.bf16.xpose.msra.mxu0 0
      %4230 = vmatprep.subr.bf16.mxu0 0
      %4231 = vmatpush1.bf16.xpose.msra.mxu0 0
      %4232 = vmatprep.subr.bf16.mxu0 0
      %4233 = vmatpush1.bf16.xpose.msra.mxu0 0
      %4234 = vmatprep.subr.bf16.mxu0 0
      %4235 = vmatpush1.bf16.xpose.msra.mxu0 0
      %4236 = vmatprep.subr.bf16.mxu0 0
      %4237 = vmatpush1.bf16.xpose.msra.mxu0 0
      %4238 = vmatprep.subr.bf16.mxu0 0
      %4239 = vmatpush1.bf16.xpose.msra.mxu0 0
      %4240 = vmatprep.mubr.bf16.mxu0 0
      %4241 = vmatmul.mubr.bf16.gmra.mrb[0].mxu0 %v4203
      %v4242 = vpop.f32.mrb[0].mxu0
      %v4243 = vadd.f32 0.0, %v4242
      %v4244 = vpop.f32.mrb[0].mxu0
      %v4245 = vpop.f32.mrb[0].mxu0
      %v4246 = vpop.f32.mrb[0].mxu0
      %4247 = vdwg.mxu0
      %4249 = vrot.lane.b32.xlu0 %v3016, 96
      %v4250 = vpop.permute.xlu0 %4249
      %v4252 = vsel %vm370, %v2984, 0
      %v4255 = vsel %vm370, %v4250, 0
      %4257 = vmatprep.subr.bf16.mxu0 0
      %4258 = vmatpush1.bf16.xpose.msra.mxu0 %v4255
      %4259 = vmatprep.subr.bf16.mxu0 0
      %4260 = vmatpush1.bf16.xpose.msra.mxu0 0
      %4261 = vmatprep.subr.bf16.mxu0 0
      %4262 = vmatpush1.bf16.xpose.msra.mxu0 0
      %4263 = vmatprep.subr.bf16.mxu0 0
      %4264 = vmatpush1.bf16.xpose.msra.mxu0 0
      %4265 = vmatprep.subr.bf16.mxu0 0
      %4266 = vmatpush1.bf16.xpose.msra.mxu0 0
      %4267 = vmatprep.subr.bf16.mxu0 0
      %4268 = vmatpush1.bf16.xpose.msra.mxu0 0
      %4269 = vmatprep.subr.bf16.mxu0 0
      %4270 = vmatpush1.bf16.xpose.msra.mxu0 0
      %4271 = vmatprep.subr.bf16.mxu0 0
      %4272 = vmatpush1.bf16.xpose.msra.mxu0 0
      %4273 = vmatprep.subr.bf16.mxu0 0
      %4274 = vmatpush1.bf16.xpose.msra.mxu0 0
      %4275 = vmatprep.subr.bf16.mxu0 0
      %4276 = vmatpush1.bf16.xpose.msra.mxu0 0
      %4277 = vmatprep.subr.bf16.mxu0 0
      %4278 = vmatpush1.bf16.xpose.msra.mxu0 0
      %4279 = vmatprep.subr.bf16.mxu0 0
      %4280 = vmatpush1.bf16.xpose.msra.mxu0 0
      %4281 = vmatprep.subr.bf16.mxu0 0
      %4282 = vmatpush1.bf16.xpose.msra.mxu0 0
      %4283 = vmatprep.subr.bf16.mxu0 0
      %4284 = vmatpush1.bf16.xpose.msra.mxu0 0
      %4285 = vmatprep.subr.bf16.mxu0 0
      %4286 = vmatpush1.bf16.xpose.msra.mxu0 0
      %4287 = vmatprep.subr.bf16.mxu0 0
      %4288 = vmatpush1.bf16.xpose.msra.mxu0 0
      %4289 = vmatprep.mubr.bf16.mxu0 0
      %4290 = vmatmul.mubr.bf16.gmra.mrb[0].mxu0 %v4252
      %v4291 = vpop.f32.mrb[0].mxu0
      %v4292 = vadd.f32 0.0, %v4291
      %v4293 = vpop.f32.mrb[0].mxu0
      %v4294 = vpop.f32.mrb[0].mxu0
      %v4295 = vpop.f32.mrb[0].mxu0
      %4296 = vdwg.mxu0
      %4298 = vrot.lane.b32.xlu0 %v3017, 96
      %v4299 = vpop.permute.xlu0 %4298
      %v4301 = vsel %vm370, %v2985, 0
      %v4304 = vsel %vm370, %v4299, 0
      %4306 = vmatprep.subr.bf16.mxu0 0
      %4307 = vmatpush1.bf16.xpose.msra.mxu0 %v4304
      %4308 = vmatprep.subr.bf16.mxu0 0
      %4309 = vmatpush1.bf16.xpose.msra.mxu0 0
      %4310 = vmatprep.subr.bf16.mxu0 0
      %4311 = vmatpush1.bf16.xpose.msra.mxu0 0
      %4312 = vmatprep.subr.bf16.mxu0 0
      %4313 = vmatpush1.bf16.xpose.msra.mxu0 0
      %4314 = vmatprep.subr.bf16.mxu0 0
      %4315 = vmatpush1.bf16.xpose.msra.mxu0 0
      %4316 = vmatprep.subr.bf16.mxu0 0
      %4317 = vmatpush1.bf16.xpose.msra.mxu0 0
      %4318 = vmatprep.subr.bf16.mxu0 0
      %4319 = vmatpush1.bf16.xpose.msra.mxu0 0
      %4320 = vmatprep.subr.bf16.mxu0 0
      %4321 = vmatpush1.bf16.xpose.msra.mxu0 0
      %4322 = vmatprep.subr.bf16.mxu0 0
      %4323 = vmatpush1.bf16.xpose.msra.mxu0 0
      %4324 = vmatprep.subr.bf16.mxu0 0
      %4325 = vmatpush1.bf16.xpose.msra.mxu0 0
      %4326 = vmatprep.subr.bf16.mxu0 0
      %4327 = vmatpush1.bf16.xpose.msra.mxu0 0
      %4328 = vmatprep.subr.bf16.mxu0 0
      %4329 = vmatpush1.bf16.xpose.msra.mxu0 0
      %4330 = vmatprep.subr.bf16.mxu0 0
      %4331 = vmatpush1.bf16.xpose.msra.mxu0 0
      %4332 = vmatprep.subr.bf16.mxu0 0
      %4333 = vmatpush1.bf16.xpose.msra.mxu0 0
      %4334 = vmatprep.subr.bf16.mxu0 0
      %4335 = vmatpush1.bf16.xpose.msra.mxu0 0
      %4336 = vmatprep.subr.bf16.mxu0 0
      %4337 = vmatpush1.bf16.xpose.msra.mxu0 0
      %4338 = vmatprep.mubr.bf16.mxu0 0
      %4339 = vmatmul.mubr.bf16.gmra.mrb[0].mxu0 %v4301
      %v4340 = vpop.f32.mrb[0].mxu0
      %v4341 = vadd.f32 0.0, %v4340
      %v4342 = vpop.f32.mrb[0].mxu0
      %v4343 = vpop.f32.mrb[0].mxu0
      %v4344 = vpop.f32.mrb[0].mxu0
      %4345 = vdwg.mxu0
      %4347 = vrot.lane.b32.xlu0 %v3018, 96
      %v4348 = vpop.permute.xlu0 %4347
      %v4350 = vsel %vm370, %v2986, 0
      %v4353 = vsel %vm370, %v4348, 0
      %4355 = vmatprep.subr.bf16.mxu0 0
      %4356 = vmatpush1.bf16.xpose.msra.mxu0 %v4353
      %4357 = vmatprep.subr.bf16.mxu0 0
      %4358 = vmatpush1.bf16.xpose.msra.mxu0 0
      %4359 = vmatprep.subr.bf16.mxu0 0
      %4360 = vmatpush1.bf16.xpose.msra.mxu0 0
      %4361 = vmatprep.subr.bf16.mxu0 0
      %4362 = vmatpush1.bf16.xpose.msra.mxu0 0
      %4363 = vmatprep.subr.bf16.mxu0 0
      %4364 = vmatpush1.bf16.xpose.msra.mxu0 0
      %4365 = vmatprep.subr.bf16.mxu0 0
      %4366 = vmatpush1.bf16.xpose.msra.mxu0 0
      %4367 = vmatprep.subr.bf16.mxu0 0
      %4368 = vmatpush1.bf16.xpose.msra.mxu0 0
      %4369 = vmatprep.subr.bf16.mxu0 0
      %4370 = vmatpush1.bf16.xpose.msra.mxu0 0
      %4371 = vmatprep.subr.bf16.mxu0 0
      %4372 = vmatpush1.bf16.xpose.msra.mxu0 0
      %4373 = vmatprep.subr.bf16.mxu0 0
      %4374 = vmatpush1.bf16.xpose.msra.mxu0 0
      %4375 = vmatprep.subr.bf16.mxu0 0
      %4376 = vmatpush1.bf16.xpose.msra.mxu0 0
      %4377 = vmatprep.subr.bf16.mxu0 0
      %4378 = vmatpush1.bf16.xpose.msra.mxu0 0
      %4379 = vmatprep.subr.bf16.mxu0 0
      %4380 = vmatpush1.bf16.xpose.msra.mxu0 0
      %4381 = vmatprep.subr.bf16.mxu0 0
      %4382 = vmatpush1.bf16.xpose.msra.mxu0 0
      %4383 = vmatprep.subr.bf16.mxu0 0
      %4384 = vmatpush1.bf16.xpose.msra.mxu0 0
      %4385 = vmatprep.subr.bf16.mxu0 0
      %4386 = vmatpush1.bf16.xpose.msra.mxu0 0
      %4387 = vmatprep.mubr.bf16.mxu0 0
      %4388 = vmatmul.mubr.bf16.gmra.mrb[0].mxu0 %v4350
      %v4389 = vpop.f32.mrb[0].mxu0
      %v4390 = vadd.f32 0.0, %v4389
      %v4391 = vpop.f32.mrb[0].mxu0
      %v4392 = vpop.f32.mrb[0].mxu0
      %v4393 = vpop.f32.mrb[0].mxu0
      %4394 = vdwg.mxu0
      %4396 = vrot.lane.b32.xlu0 %v3019, 96
      %v4397 = vpop.permute.xlu0 %4396
      %v4399 = vsel %vm370, %v2987, 0
      %v4402 = vsel %vm370, %v4397, 0
      %4404 = vmatprep.subr.bf16.mxu0 0
      %4405 = vmatpush1.bf16.xpose.msra.mxu0 %v4402
      %4406 = vmatprep.subr.bf16.mxu0 0
      %4407 = vmatpush1.bf16.xpose.msra.mxu0 0
      %4408 = vmatprep.subr.bf16.mxu0 0
      %4409 = vmatpush1.bf16.xpose.msra.mxu0 0
      %4410 = vmatprep.subr.bf16.mxu0 0
      %4411 = vmatpush1.bf16.xpose.msra.mxu0 0
      %4412 = vmatprep.subr.bf16.mxu0 0
      %4413 = vmatpush1.bf16.xpose.msra.mxu0 0
      %4414 = vmatprep.subr.bf16.mxu0 0
      %4415 = vmatpush1.bf16.xpose.msra.mxu0 0
      %4416 = vmatprep.subr.bf16.mxu0 0
      %4417 = vmatpush1.bf16.xpose.msra.mxu0 0
      %4418 = vmatprep.subr.bf16.mxu0 0
      %4419 = vmatpush1.bf16.xpose.msra.mxu0 0
      %4420 = vmatprep.subr.bf16.mxu0 0
      %4421 = vmatpush1.bf16.xpose.msra.mxu0 0
      %4422 = vmatprep.subr.bf16.mxu0 0
      %4423 = vmatpush1.bf16.xpose.msra.mxu0 0
      %4424 = vmatprep.subr.bf16.mxu0 0
      %4425 = vmatpush1.bf16.xpose.msra.mxu0 0
      %4426 = vmatprep.subr.bf16.mxu0 0
      %4427 = vmatpush1.bf16.xpose.msra.mxu0 0
      %4428 = vmatprep.subr.bf16.mxu0 0
      %4429 = vmatpush1.bf16.xpose.msra.mxu0 0
      %4430 = vmatprep.subr.bf16.mxu0 0
      %4431 = vmatpush1.bf16.xpose.msra.mxu0 0
      %4432 = vmatprep.subr.bf16.mxu0 0
      %4433 = vmatpush1.bf16.xpose.msra.mxu0 0
      %4434 = vmatprep.subr.bf16.mxu0 0
      %4435 = vmatpush1.bf16.xpose.msra.mxu0 0
      %4436 = vmatprep.mubr.bf16.mxu0 0
      %4437 = vmatmul.mubr.bf16.gmra.mrb[0].mxu0 %v4399
      %v4438 = vpop.f32.mrb[0].mxu0
      %v4439 = vadd.f32 0.0, %v4438
      %v4440 = vpop.f32.mrb[0].mxu0
      %v4441 = vpop.f32.mrb[0].mxu0
      %v4442 = vpop.f32.mrb[0].mxu0
      %4443 = vdwg.mxu0
      %4445 = vrot.lane.b32.xlu0 %v3020, 96
      %v4446 = vpop.permute.xlu0 %4445
      %v4448 = vsel %vm370, %v2988, 0
      %v4451 = vsel %vm370, %v4446, 0
      %4453 = vmatprep.subr.bf16.mxu0 0
      %4454 = vmatpush1.bf16.xpose.msra.mxu0 %v4451
      %4455 = vmatprep.subr.bf16.mxu0 0
      %4456 = vmatpush1.bf16.xpose.msra.mxu0 0
      %4457 = vmatprep.subr.bf16.mxu0 0
      %4458 = vmatpush1.bf16.xpose.msra.mxu0 0
      %4459 = vmatprep.subr.bf16.mxu0 0
      %4460 = vmatpush1.bf16.xpose.msra.mxu0 0
      %4461 = vmatprep.subr.bf16.mxu0 0
      %4462 = vmatpush1.bf16.xpose.msra.mxu0 0
      %4463 = vmatprep.subr.bf16.mxu0 0
      %4464 = vmatpush1.bf16.xpose.msra.mxu0 0
      %4465 = vmatprep.subr.bf16.mxu0 0
      %4466 = vmatpush1.bf16.xpose.msra.mxu0 0
      %4467 = vmatprep.subr.bf16.mxu0 0
      %4468 = vmatpush1.bf16.xpose.msra.mxu0 0
      %4469 = vmatprep.subr.bf16.mxu0 0
      %4470 = vmatpush1.bf16.xpose.msra.mxu0 0
      %4471 = vmatprep.subr.bf16.mxu0 0
      %4472 = vmatpush1.bf16.xpose.msra.mxu0 0
      %4473 = vmatprep.subr.bf16.mxu0 0
      %4474 = vmatpush1.bf16.xpose.msra.mxu0 0
      %4475 = vmatprep.subr.bf16.mxu0 0
      %4476 = vmatpush1.bf16.xpose.msra.mxu0 0
      %4477 = vmatprep.subr.bf16.mxu0 0
      %4478 = vmatpush1.bf16.xpose.msra.mxu0 0
      %4479 = vmatprep.subr.bf16.mxu0 0
      %4480 = vmatpush1.bf16.xpose.msra.mxu0 0
      %4481 = vmatprep.subr.bf16.mxu0 0
      %4482 = vmatpush1.bf16.xpose.msra.mxu0 0
      %4483 = vmatprep.subr.bf16.mxu0 0
      %4484 = vmatpush1.bf16.xpose.msra.mxu0 0
      %4485 = vmatprep.mubr.bf16.mxu0 0
      %4486 = vmatmul.mubr.bf16.gmra.mrb[0].mxu0 %v4448
      %v4487 = vpop.f32.mrb[0].mxu0
      %v4488 = vadd.f32 0.0, %v4487
      %v4489 = vpop.f32.mrb[0].mxu0
      %v4490 = vpop.f32.mrb[0].mxu0
      %v4491 = vpop.f32.mrb[0].mxu0
      %4492 = vdwg.mxu0
      %4494 = vrot.lane.b32.xlu0 %v3021, 96
      %v4495 = vpop.permute.xlu0 %4494
      %v4497 = vsel %vm370, %v2989, 0
      %v4500 = vsel %vm370, %v4495, 0
      %4502 = vmatprep.subr.bf16.mxu0 0
      %4503 = vmatpush1.bf16.xpose.msra.mxu0 %v4500
      %4504 = vmatprep.subr.bf16.mxu0 0
      %4505 = vmatpush1.bf16.xpose.msra.mxu0 0
      %4506 = vmatprep.subr.bf16.mxu0 0
      %4507 = vmatpush1.bf16.xpose.msra.mxu0 0
      %4508 = vmatprep.subr.bf16.mxu0 0
      %4509 = vmatpush1.bf16.xpose.msra.mxu0 0
      %4510 = vmatprep.subr.bf16.mxu0 0
      %4511 = vmatpush1.bf16.xpose.msra.mxu0 0
      %4512 = vmatprep.subr.bf16.mxu0 0
      %4513 = vmatpush1.bf16.xpose.msra.mxu0 0
      %4514 = vmatprep.subr.bf16.mxu0 0
      %4515 = vmatpush1.bf16.xpose.msra.mxu0 0
      %4516 = vmatprep.subr.bf16.mxu0 0
      %4517 = vmatpush1.bf16.xpose.msra.mxu0 0
      %4518 = vmatprep.subr.bf16.mxu0 0
      %4519 = vmatpush1.bf16.xpose.msra.mxu0 0
      %4520 = vmatprep.subr.bf16.mxu0 0
      %4521 = vmatpush1.bf16.xpose.msra.mxu0 0
      %4522 = vmatprep.subr.bf16.mxu0 0
      %4523 = vmatpush1.bf16.xpose.msra.mxu0 0
      %4524 = vmatprep.subr.bf16.mxu0 0
      %4525 = vmatpush1.bf16.xpose.msra.mxu0 0
      %4526 = vmatprep.subr.bf16.mxu0 0
      %4527 = vmatpush1.bf16.xpose.msra.mxu0 0
      %4528 = vmatprep.subr.bf16.mxu0 0
      %4529 = vmatpush1.bf16.xpose.msra.mxu0 0
      %4530 = vmatprep.subr.bf16.mxu0 0
      %4531 = vmatpush1.bf16.xpose.msra.mxu0 0
      %4532 = vmatprep.subr.bf16.mxu0 0
      %4533 = vmatpush1.bf16.xpose.msra.mxu0 0
      %4534 = vmatprep.mubr.bf16.mxu0 0
      %4535 = vmatmul.mubr.bf16.gmra.mrb[0].mxu0 %v4497
      %v4536 = vpop.f32.mrb[0].mxu0
      %v4537 = vadd.f32 0.0, %v4536
      %v4538 = vpop.f32.mrb[0].mxu0
      %v4539 = vpop.f32.mrb[0].mxu0
      %v4540 = vpop.f32.mrb[0].mxu0
      %4541 = vdwg.mxu0
      %4543 = vrot.lane.b32.xlu0 %v3022, 96
      %v4544 = vpop.permute.xlu0 %4543
      %v4546 = vsel %vm370, %v2990, 0
      %v4549 = vsel %vm370, %v4544, 0
      %4551 = vmatprep.subr.bf16.mxu0 0
      %4552 = vmatpush1.bf16.xpose.msra.mxu0 %v4549
      %4553 = vmatprep.subr.bf16.mxu0 0
      %4554 = vmatpush1.bf16.xpose.msra.mxu0 0
      %4555 = vmatprep.subr.bf16.mxu0 0
      %4556 = vmatpush1.bf16.xpose.msra.mxu0 0
      %4557 = vmatprep.subr.bf16.mxu0 0
      %4558 = vmatpush1.bf16.xpose.msra.mxu0 0
      %4559 = vmatprep.subr.bf16.mxu0 0
      %4560 = vmatpush1.bf16.xpose.msra.mxu0 0
      %4561 = vmatprep.subr.bf16.mxu0 0
      %4562 = vmatpush1.bf16.xpose.msra.mxu0 0
      %4563 = vmatprep.subr.bf16.mxu0 0
      %4564 = vmatpush1.bf16.xpose.msra.mxu0 0
      %4565 = vmatprep.subr.bf16.mxu0 0
      %4566 = vmatpush1.bf16.xpose.msra.mxu0 0
      %4567 = vmatprep.subr.bf16.mxu0 0
      %4568 = vmatpush1.bf16.xpose.msra.mxu0 0
      %4569 = vmatprep.subr.bf16.mxu0 0
      %4570 = vmatpush1.bf16.xpose.msra.mxu0 0
      %4571 = vmatprep.subr.bf16.mxu0 0
      %4572 = vmatpush1.bf16.xpose.msra.mxu0 0
      %4573 = vmatprep.subr.bf16.mxu0 0
      %4574 = vmatpush1.bf16.xpose.msra.mxu0 0
      %4575 = vmatprep.subr.bf16.mxu0 0
      %4576 = vmatpush1.bf16.xpose.msra.mxu0 0
      %4577 = vmatprep.subr.bf16.mxu0 0
      %4578 = vmatpush1.bf16.xpose.msra.mxu0 0
      %4579 = vmatprep.subr.bf16.mxu0 0
      %4580 = vmatpush1.bf16.xpose.msra.mxu0 0
      %4581 = vmatprep.subr.bf16.mxu0 0
      %4582 = vmatpush1.bf16.xpose.msra.mxu0 0
      %4583 = vmatprep.mubr.bf16.mxu0 0
      %4584 = vmatmul.mubr.bf16.gmra.mrb[0].mxu0 %v4546
      %v4585 = vpop.f32.mrb[0].mxu0
      %v4586 = vadd.f32 0.0, %v4585
      %v4587 = vpop.f32.mrb[0].mxu0
      %v4588 = vpop.f32.mrb[0].mxu0
      %v4589 = vpop.f32.mrb[0].mxu0
      %4590 = vdwg.mxu0
      %v4591 = vmul.f32 %v3067, 0.35355338
      %v4592 = vmul.f32 %v3116, 0.35355338
      %v4593 = vmul.f32 %v3165, 0.35355338
      %v4594 = vmul.f32 %v3214, 0.35355338
      %v4595 = vmul.f32 %v3263, 0.35355338
      %v4596 = vmul.f32 %v3312, 0.35355338
      %v4597 = vmul.f32 %v3361, 0.35355338
      %v4598 = vmul.f32 %v3410, 0.35355338
      %v4599 = vmul.f32 %v3459, 0.35355338
      %v4600 = vmul.f32 %v3508, 0.35355338
      %v4601 = vmul.f32 %v3557, 0.35355338
      %v4602 = vmul.f32 %v3606, 0.35355338
      %v4603 = vmul.f32 %v3655, 0.35355338
      %v4604 = vmul.f32 %v3704, 0.35355338
      %v4605 = vmul.f32 %v3753, 0.35355338
      %v4606 = vmul.f32 %v3802, 0.35355338
      %v4607 = vmul.f32 %v3851, 0.35355338
      %v4608 = vmul.f32 %v3900, 0.35355338
      %v4609 = vmul.f32 %v3949, 0.35355338
      %v4610 = vmul.f32 %v3998, 0.35355338
      %v4611 = vmul.f32 %v4047, 0.35355338
      %v4612 = vmul.f32 %v4096, 0.35355338
      %v4613 = vmul.f32 %v4145, 0.35355338
      %v4614 = vmul.f32 %v4194, 0.35355338
      %v4615 = vmul.f32 %v4243, 0.35355338
      %v4616 = vmul.f32 %v4292, 0.35355338
      %v4617 = vmul.f32 %v4341, 0.35355338
      %v4618 = vmul.f32 %v4390, 0.35355338
      %v4619 = vmul.f32 %v4439, 0.35355338
      %v4620 = vmul.f32 %v4488, 0.35355338
      %v4621 = vmul.f32 %v4537, 0.35355338
      %v4622 = vmul.f32 %v4586, 0.35355338
      %vm4623 = vcmask 25600
      %v4624 = vsel %vm4623, %v4591, -inf
      %4625 = vmax.xlane.f32.xlu0 %v4624
      %v4626 = vpop.xlane.xlu0 %4625
      %v4627 = vsel %vm4623, %v4592, -inf
      %4628 = vmax.xlane.f32.xlu0 %v4627
      %v4629 = vpop.xlane.xlu0 %4628
      %v4630 = vsel %vm4623, %v4593, -inf
      %4631 = vmax.xlane.f32.xlu0 %v4630
      %v4632 = vpop.xlane.xlu0 %4631
      %v4633 = vsel %vm4623, %v4594, -inf
      %4634 = vmax.xlane.f32.xlu0 %v4633
      %v4635 = vpop.xlane.xlu0 %4634
      %v4636 = vsel %vm4623, %v4595, -inf
      %4637 = vmax.xlane.f32.xlu0 %v4636
      %v4638 = vpop.xlane.xlu0 %4637
      %v4639 = vsel %vm4623, %v4596, -inf
      %4640 = vmax.xlane.f32.xlu0 %v4639
      %v4641 = vpop.xlane.xlu0 %4640
      %v4642 = vsel %vm4623, %v4597, -inf
      %4643 = vmax.xlane.f32.xlu0 %v4642
      %v4644 = vpop.xlane.xlu0 %4643
      %v4645 = vsel %vm4623, %v4598, -inf
      %4646 = vmax.xlane.f32.xlu0 %v4645
      %v4647 = vpop.xlane.xlu0 %4646
      %v4648 = vsel %vm4623, %v4599, -inf
      %4649 = vmax.xlane.f32.xlu0 %v4648
      %v4650 = vpop.xlane.xlu0 %4649
      %v4651 = vsel %vm4623, %v4600, -inf
      %4652 = vmax.xlane.f32.xlu0 %v4651
      %v4653 = vpop.xlane.xlu0 %4652
      %v4654 = vsel %vm4623, %v4601, -inf
      %4655 = vmax.xlane.f32.xlu0 %v4654
      %v4656 = vpop.xlane.xlu0 %4655
      %v4657 = vsel %vm4623, %v4602, -inf
      %4658 = vmax.xlane.f32.xlu0 %v4657
      %v4659 = vpop.xlane.xlu0 %4658
      %v4660 = vsel %vm4623, %v4603, -inf
      %4661 = vmax.xlane.f32.xlu0 %v4660
      %v4662 = vpop.xlane.xlu0 %4661
      %v4663 = vsel %vm4623, %v4604, -inf
      %4664 = vmax.xlane.f32.xlu0 %v4663
      %v4665 = vpop.xlane.xlu0 %4664
      %v4666 = vsel %vm4623, %v4605, -inf
      %4667 = vmax.xlane.f32.xlu0 %v4666
      %v4668 = vpop.xlane.xlu0 %4667
      %v4669 = vsel %vm4623, %v4606, -inf
      %4670 = vmax.xlane.f32.xlu0 %v4669
      %v4671 = vpop.xlane.xlu0 %4670
      %v4672 = vsel %vm4623, %v4607, -inf
      %4673 = vmax.xlane.f32.xlu0 %v4672
      %v4674 = vpop.xlane.xlu0 %4673
      %v4675 = vsel %vm4623, %v4608, -inf
      %4676 = vmax.xlane.f32.xlu0 %v4675
      %v4677 = vpop.xlane.xlu0 %4676
      %v4678 = vsel %vm4623, %v4609, -inf
      %4679 = vmax.xlane.f32.xlu0 %v4678
      %v4680 = vpop.xlane.xlu0 %4679
      %v4681 = vsel %vm4623, %v4610, -inf
      %4682 = vmax.xlane.f32.xlu0 %v4681
      %v4683 = vpop.xlane.xlu0 %4682
      %v4684 = vsel %vm4623, %v4611, -inf
      %4685 = vmax.xlane.f32.xlu0 %v4684
      %v4686 = vpop.xlane.xlu0 %4685
      %v4687 = vsel %vm4623, %v4612, -inf
      %4688 = vmax.xlane.f32.xlu0 %v4687
      %v4689 = vpop.xlane.xlu0 %4688
      %v4690 = vsel %vm4623, %v4613, -inf
      %4691 = vmax.xlane.f32.xlu0 %v4690
      %v4692 = vpop.xlane.xlu0 %4691
      %v4693 = vsel %vm4623, %v4614, -inf
      %4694 = vmax.xlane.f32.xlu0 %v4693
      %v4695 = vpop.xlane.xlu0 %4694
      %v4696 = vsel %vm4623, %v4615, -inf
      %4697 = vmax.xlane.f32.xlu0 %v4696
      %v4698 = vpop.xlane.xlu0 %4697
      %v4699 = vsel %vm4623, %v4616, -inf
      %4700 = vmax.xlane.f32.xlu0 %v4699
      %v4701 = vpop.xlane.xlu0 %4700
      %v4702 = vsel %vm4623, %v4617, -inf
      %4703 = vmax.xlane.f32.xlu0 %v4702
      %v4704 = vpop.xlane.xlu0 %4703
      %v4705 = vsel %vm4623, %v4618, -inf
      %4706 = vmax.xlane.f32.xlu0 %v4705
      %v4707 = vpop.xlane.xlu0 %4706
      %v4708 = vsel %vm4623, %v4619, -inf
      %4709 = vmax.xlane.f32.xlu0 %v4708
      %v4710 = vpop.xlane.xlu0 %4709
      %v4711 = vsel %vm4623, %v4620, -inf
      %4712 = vmax.xlane.f32.xlu0 %v4711
      %v4713 = vpop.xlane.xlu0 %4712
      %v4714 = vsel %vm4623, %v4621, -inf
      %4715 = vmax.xlane.f32.xlu0 %v4714
      %v4716 = vpop.xlane.xlu0 %4715
      %v4717 = vsel %vm4623, %v4622, -inf
      %4718 = vmax.xlane.f32.xlu0 %v4717
      %v4719 = vpop.xlane.xlu0 %4718
      %v4720 = vsub.f32 %v4591, %v4626
      %v4721 = vsub.f32 %v4592, %v4629
      %v4722 = vsub.f32 %v4593, %v4632
      %v4723 = vsub.f32 %v4594, %v4635
      %v4724 = vsub.f32 %v4595, %v4638
      %v4725 = vsub.f32 %v4596, %v4641
      %v4726 = vsub.f32 %v4597, %v4644
      %v4727 = vsub.f32 %v4598, %v4647
      %v4728 = vsub.f32 %v4599, %v4650
      %v4729 = vsub.f32 %v4600, %v4653
      %v4730 = vsub.f32 %v4601, %v4656
      %v4731 = vsub.f32 %v4602, %v4659
      %v4732 = vsub.f32 %v4603, %v4662
      %v4733 = vsub.f32 %v4604, %v4665
      %v4734 = vsub.f32 %v4605, %v4668
      %v4735 = vsub.f32 %v4606, %v4671
      %v4736 = vsub.f32 %v4607, %v4674
      %v4737 = vsub.f32 %v4608, %v4677
      %v4738 = vsub.f32 %v4609, %v4680
      %v4739 = vsub.f32 %v4610, %v4683
      %v4740 = vsub.f32 %v4611, %v4686
      %v4741 = vsub.f32 %v4612, %v4689
      %v4742 = vsub.f32 %v4613, %v4692
      %v4743 = vsub.f32 %v4614, %v4695
      %v4744 = vsub.f32 %v4615, %v4698
      %v4745 = vsub.f32 %v4616, %v4701
      %v4746 = vsub.f32 %v4617, %v4704
      %v4747 = vsub.f32 %v4618, %v4707
      %v4748 = vsub.f32 %v4619, %v4710
      %v4749 = vsub.f32 %v4620, %v4713
      %v4750 = vsub.f32 %v4621, %v4716
      %v4751 = vsub.f32 %v4622, %v4719
      %v4752 = vmul.f32 %v4720, 1.442695
      %v4753 = vpow.pop %v4752
      %v4754 = vmul.f32 %v4721, 1.442695
      %v4755 = vpow.pop %v4754
      %v4756 = vmul.f32 %v4722, 1.442695
      %v4757 = vpow.pop %v4756
      %v4758 = vmul.f32 %v4723, 1.442695
      %v4759 = vpow.pop %v4758
      %v4760 = vmul.f32 %v4724, 1.442695
      %v4761 = vpow.pop %v4760
      %v4762 = vmul.f32 %v4725, 1.442695
      %v4763 = vpow.pop %v4762
      %v4764 = vmul.f32 %v4726, 1.442695
      %v4765 = vpow.pop %v4764
      %v4766 = vmul.f32 %v4727, 1.442695
      %v4767 = vpow.pop %v4766
      %v4768 = vmul.f32 %v4728, 1.442695
      %v4769 = vpow.pop %v4768
      %v4770 = vmul.f32 %v4729, 1.442695
      %v4771 = vpow.pop %v4770
      %v4772 = vmul.f32 %v4730, 1.442695
      %v4773 = vpow.pop %v4772
      %v4774 = vmul.f32 %v4731, 1.442695
      %v4775 = vpow.pop %v4774
      %v4776 = vmul.f32 %v4732, 1.442695
      %v4777 = vpow.pop %v4776
      %v4778 = vmul.f32 %v4733, 1.442695
      %v4779 = vpow.pop %v4778
      %v4780 = vmul.f32 %v4734, 1.442695
      %v4781 = vpow.pop %v4780
      %v4782 = vmul.f32 %v4735, 1.442695
      %v4783 = vpow.pop %v4782
      %v4784 = vmul.f32 %v4736, 1.442695
      %v4785 = vpow.pop %v4784
      %v4786 = vmul.f32 %v4737, 1.442695
      %v4787 = vpow.pop %v4786
      %v4788 = vmul.f32 %v4738, 1.442695
      %v4789 = vpow.pop %v4788
      %v4790 = vmul.f32 %v4739, 1.442695
      %v4791 = vpow.pop %v4790
      %v4792 = vmul.f32 %v4740, 1.442695
      %v4793 = vpow.pop %v4792
      %v4794 = vmul.f32 %v4741, 1.442695
      %v4795 = vpow.pop %v4794
      %v4796 = vmul.f32 %v4742, 1.442695
      %v4797 = vpow.pop %v4796
      %v4798 = vmul.f32 %v4743, 1.442695
      %v4799 = vpow.pop %v4798
      %v4800 = vmul.f32 %v4744, 1.442695
      %v4801 = vpow.pop %v4800
      %v4802 = vmul.f32 %v4745, 1.442695
      %v4803 = vpow.pop %v4802
      %v4804 = vmul.f32 %v4746, 1.442695
      %v4805 = vpow.pop %v4804
      %v4806 = vmul.f32 %v4747, 1.442695
      %v4807 = vpow.pop %v4806
      %v4808 = vmul.f32 %v4748, 1.442695
      %v4809 = vpow.pop %v4808
      %v4810 = vmul.f32 %v4749, 1.442695
      %v4811 = vpow.pop %v4810
      %v4812 = vmul.f32 %v4750, 1.442695
      %v4813 = vpow.pop %v4812
      %v4814 = vmul.f32 %v4751, 1.442695
      %v4815 = vpow.pop %v4814
      %v4816 = vsel %vm4623, %v4753, 0.0
      %4817 = vadd.xlane.f32.xlu0 %v4816
      %v4818 = vpop.xlane.xlu0 %4817
      %v4819 = vsel %vm4623, %v4755, 0.0
      %4820 = vadd.xlane.f32.xlu0 %v4819
      %v4821 = vpop.xlane.xlu0 %4820
      %v4822 = vsel %vm4623, %v4757, 0.0
      %4823 = vadd.xlane.f32.xlu0 %v4822
      %v4824 = vpop.xlane.xlu0 %4823
      %v4825 = vsel %vm4623, %v4759, 0.0
      %4826 = vadd.xlane.f32.xlu0 %v4825
      %v4827 = vpop.xlane.xlu0 %4826
      %v4828 = vsel %vm4623, %v4761, 0.0
      %4829 = vadd.xlane.f32.xlu0 %v4828
      %v4830 = vpop.xlane.xlu0 %4829
      %v4831 = vsel %vm4623, %v4763, 0.0
      %4832 = vadd.xlane.f32.xlu0 %v4831
      %v4833 = vpop.xlane.xlu0 %4832
      %v4834 = vsel %vm4623, %v4765, 0.0
      %4835 = vadd.xlane.f32.xlu0 %v4834
      %v4836 = vpop.xlane.xlu0 %4835
      %v4837 = vsel %vm4623, %v4767, 0.0
      %4838 = vadd.xlane.f32.xlu0 %v4837
      %v4839 = vpop.xlane.xlu0 %4838
      %v4840 = vsel %vm4623, %v4769, 0.0
      %4841 = vadd.xlane.f32.xlu0 %v4840
      %v4842 = vpop.xlane.xlu0 %4841
      %v4843 = vsel %vm4623, %v4771, 0.0
      %4844 = vadd.xlane.f32.xlu0 %v4843
      %v4845 = vpop.xlane.xlu0 %4844
      %v4846 = vsel %vm4623, %v4773, 0.0
      %4847 = vadd.xlane.f32.xlu0 %v4846
      %v4848 = vpop.xlane.xlu0 %4847
      %v4849 = vsel %vm4623, %v4775, 0.0
      %4850 = vadd.xlane.f32.xlu0 %v4849
      %v4851 = vpop.xlane.xlu0 %4850
      %v4852 = vsel %vm4623, %v4777, 0.0
      %4853 = vadd.xlane.f32.xlu0 %v4852
      %v4854 = vpop.xlane.xlu0 %4853
      %v4855 = vsel %vm4623, %v4779, 0.0
      %4856 = vadd.xlane.f32.xlu0 %v4855
      %v4857 = vpop.xlane.xlu0 %4856
      %v4858 = vsel %vm4623, %v4781, 0.0
      %4859 = vadd.xlane.f32.xlu0 %v4858
      %v4860 = vpop.xlane.xlu0 %4859
      %v4861 = vsel %vm4623, %v4783, 0.0
      %4862 = vadd.xlane.f32.xlu0 %v4861
      %v4863 = vpop.xlane.xlu0 %4862
      %v4864 = vsel %vm4623, %v4785, 0.0
      %4865 = vadd.xlane.f32.xlu0 %v4864
      %v4866 = vpop.xlane.xlu0 %4865
      %v4867 = vsel %vm4623, %v4787, 0.0
      %4868 = vadd.xlane.f32.xlu0 %v4867
      %v4869 = vpop.xlane.xlu0 %4868
      %v4870 = vsel %vm4623, %v4789, 0.0
      %4871 = vadd.xlane.f32.xlu0 %v4870
      %v4872 = vpop.xlane.xlu0 %4871
      %v4873 = vsel %vm4623, %v4791, 0.0
      %4874 = vadd.xlane.f32.xlu0 %v4873
      %v4875 = vpop.xlane.xlu0 %4874
      %v4876 = vsel %vm4623, %v4793, 0.0
      %4877 = vadd.xlane.f32.xlu0 %v4876
      %v4878 = vpop.xlane.xlu0 %4877
      %v4879 = vsel %vm4623, %v4795, 0.0
      %4880 = vadd.xlane.f32.xlu0 %v4879
      %v4881 = vpop.xlane.xlu0 %4880
      %v4882 = vsel %vm4623, %v4797, 0.0
      %4883 = vadd.xlane.f32.xlu0 %v4882
      %v4884 = vpop.xlane.xlu0 %4883
      %v4885 = vsel %vm4623, %v4799, 0.0
      %4886 = vadd.xlane.f32.xlu0 %v4885
      %v4887 = vpop.xlane.xlu0 %4886
      %v4888 = vsel %vm4623, %v4801, 0.0
      %4889 = vadd.xlane.f32.xlu0 %v4888
      %v4890 = vpop.xlane.xlu0 %4889
      %v4891 = vsel %vm4623, %v4803, 0.0
      %4892 = vadd.xlane.f32.xlu0 %v4891
      %v4893 = vpop.xlane.xlu0 %4892
      %v4894 = vsel %vm4623, %v4805, 0.0
      %4895 = vadd.xlane.f32.xlu0 %v4894
      %v4896 = vpop.xlane.xlu0 %4895
      %v4897 = vsel %vm4623, %v4807, 0.0
      %4898 = vadd.xlane.f32.xlu0 %v4897
      %v4899 = vpop.xlane.xlu0 %4898
      %v4900 = vsel %vm4623, %v4809, 0.0
      %4901 = vadd.xlane.f32.xlu0 %v4900
      %v4902 = vpop.xlane.xlu0 %4901
      %v4903 = vsel %vm4623, %v4811, 0.0
      %4904 = vadd.xlane.f32.xlu0 %v4903
      %v4905 = vpop.xlane.xlu0 %4904
      %v4906 = vsel %vm4623, %v4813, 0.0
      %4907 = vadd.xlane.f32.xlu0 %v4906
      %v4908 = vpop.xlane.xlu0 %4907
      %v4909 = vsel %vm4623, %v4815, 0.0
      %4910 = vadd.xlane.f32.xlu0 %v4909
      %v4911 = vpop.xlane.xlu0 %4910
      %v4912 = vrcp.pop %v4818
      %v4913 = vrcp.pop %v4821
      %v4914 = vrcp.pop %v4824
      %v4915 = vrcp.pop %v4827
      %v4916 = vrcp.pop %v4830
      %v4917 = vrcp.pop %v4833
      %v4918 = vrcp.pop %v4836
      %v4919 = vrcp.pop %v4839
      %v4920 = vrcp.pop %v4842
      %v4921 = vrcp.pop %v4845
      %v4922 = vrcp.pop %v4848
      %v4923 = vrcp.pop %v4851
      %v4924 = vrcp.pop %v4854
      %v4925 = vrcp.pop %v4857
      %v4926 = vrcp.pop %v4860
      %v4927 = vrcp.pop %v4863
      %v4928 = vrcp.pop %v4866
      %v4929 = vrcp.pop %v4869
      %v4930 = vrcp.pop %v4872
      %v4931 = vrcp.pop %v4875
      %v4932 = vrcp.pop %v4878
      %v4933 = vrcp.pop %v4881
      %v4934 = vrcp.pop %v4884
      %v4935 = vrcp.pop %v4887
      %v4936 = vrcp.pop %v4890
      %v4937 = vrcp.pop %v4893
      %v4938 = vrcp.pop %v4896
      %v4939 = vrcp.pop %v4899
      %v4940 = vrcp.pop %v4902
      %v4941 = vrcp.pop %v4905
      %v4942 = vrcp.pop %v4908
      %v4943 = vrcp.pop %v4911
      %v4944 = vmul.f32 %v4753, %v4912
      %v4945 = vmul.f32 %v4755, %v4913
      %v4946 = vmul.f32 %v4757, %v4914
      %v4947 = vmul.f32 %v4759, %v4915
      %v4948 = vmul.f32 %v4761, %v4916
      %v4949 = vmul.f32 %v4763, %v4917
      %v4950 = vmul.f32 %v4765, %v4918
      %v4951 = vmul.f32 %v4767, %v4919
      %v4952 = vmul.f32 %v4769, %v4920
      %v4953 = vmul.f32 %v4771, %v4921
      %v4954 = vmul.f32 %v4773, %v4922
      %v4955 = vmul.f32 %v4775, %v4923
      %v4956 = vmul.f32 %v4777, %v4924
      %v4957 = vmul.f32 %v4779, %v4925
      %v4958 = vmul.f32 %v4781, %v4926
      %v4959 = vmul.f32 %v4783, %v4927
      %v4960 = vmul.f32 %v4785, %v4928
      %v4961 = vmul.f32 %v4787, %v4929
      %v4962 = vmul.f32 %v4789, %v4930
      %v4963 = vmul.f32 %v4791, %v4931
      %v4964 = vmul.f32 %v4793, %v4932
      %v4965 = vmul.f32 %v4795, %v4933
      %v4966 = vmul.f32 %v4797, %v4934
      %v4967 = vmul.f32 %v4799, %v4935
      %v4968 = vmul.f32 %v4801, %v4936
      %v4969 = vmul.f32 %v4803, %v4937
      %v4970 = vmul.f32 %v4805, %v4938
      %v4971 = vmul.f32 %v4807, %v4939
      %v4972 = vmul.f32 %v4809, %v4940
      %v4973 = vmul.f32 %v4811, %v4941
      %v4974 = vmul.f32 %v4813, %v4942
      %v4975 = vmul.f32 %v4815, %v4943
      %v4976 = vpack.c.bf16 %v4944, %v4944
      %v4977 = vpack.c.bf16 %v4945, %v4945
      %v4978 = vpack.c.bf16 %v4946, %v4946
      %v4979 = vpack.c.bf16 %v4947, %v4947
      %v4980 = vpack.c.bf16 %v4948, %v4948
      %v4981 = vpack.c.bf16 %v4949, %v4949
      %v4982 = vpack.c.bf16 %v4950, %v4950
      %v4983 = vpack.c.bf16 %v4951, %v4951
      %v4984 = vpack.c.bf16 %v4952, %v4952
      %v4985 = vpack.c.bf16 %v4953, %v4953
      %v4986 = vpack.c.bf16 %v4954, %v4954
      %v4987 = vpack.c.bf16 %v4955, %v4955
      %v4988 = vpack.c.bf16 %v4956, %v4956
      %v4989 = vpack.c.bf16 %v4957, %v4957
      %v4990 = vpack.c.bf16 %v4958, %v4958
      %v4991 = vpack.c.bf16 %v4959, %v4959
      %v4992 = vpack.c.bf16 %v4960, %v4960
      %v4993 = vpack.c.bf16 %v4961, %v4961
      %v4994 = vpack.c.bf16 %v4962, %v4962
      %v4995 = vpack.c.bf16 %v4963, %v4963
      %v4996 = vpack.c.bf16 %v4964, %v4964
      %v4997 = vpack.c.bf16 %v4965, %v4965
      %v4998 = vpack.c.bf16 %v4966, %v4966
      %v4999 = vpack.c.bf16 %v4967, %v4967
      %v5000 = vpack.c.bf16 %v4968, %v4968
      %v5001 = vpack.c.bf16 %v4969, %v4969
      %v5002 = vpack.c.bf16 %v4970, %v4970
      %v5003 = vpack.c.bf16 %v4971, %v4971
      %v5004 = vpack.c.bf16 %v4972, %v4972
      %v5005 = vpack.c.bf16 %v4973, %v4973
      %v5006 = vpack.c.bf16 %v4974, %v4974
      %v5007 = vpack.c.bf16 %v4975, %v4975
      %5008 = vrot.lane.b32.xlu0 %v2991, 64
      %v5009 = vpop.permute.xlu0 %5008
      %vm5010 = vcmask 31744
      %v5012 = vsel %vm5010, %v4976, 0
      %vm5014 = vcmask 1041408
      %v5016 = vsel %vm5014, %v5009, 0
      %5018 = vmatprep.subr.bf16.mxu0 0
      %5019 = vmatpush1.bf16.msra.mxu0 %v5016
      %5020 = vmatprep.subr.bf16.mxu0 0
      %5021 = vmatpush1.bf16.msra.mxu0 0
      %5022 = vmatprep.subr.bf16.mxu0 0
      %5023 = vmatpush1.bf16.msra.mxu0 0
      %5024 = vmatprep.subr.bf16.mxu0 0
      %5025 = vmatpush1.bf16.msra.mxu0 0
      %5026 = vmatprep.subr.bf16.mxu0 0
      %5027 = vmatpush1.bf16.msra.mxu0 0
      %5028 = vmatprep.subr.bf16.mxu0 0
      %5029 = vmatpush1.bf16.msra.mxu0 0
      %5030 = vmatprep.subr.bf16.mxu0 0
      %5031 = vmatpush1.bf16.msra.mxu0 0
      %5032 = vmatprep.subr.bf16.mxu0 0
      %5033 = vmatpush1.bf16.msra.mxu0 0
      %5034 = vmatprep.subr.bf16.mxu0 0
      %5035 = vmatpush1.bf16.msra.mxu0 0
      %5036 = vmatprep.subr.bf16.mxu0 0
      %5037 = vmatpush1.bf16.msra.mxu0 0
      %5038 = vmatprep.subr.bf16.mxu0 0
      %5039 = vmatpush1.bf16.msra.mxu0 0
      %5040 = vmatprep.subr.bf16.mxu0 0
      %5041 = vmatpush1.bf16.msra.mxu0 0
      %5042 = vmatprep.subr.bf16.mxu0 0
      %5043 = vmatpush1.bf16.msra.mxu0 0
      %5044 = vmatprep.subr.bf16.mxu0 0
      %5045 = vmatpush1.bf16.msra.mxu0 0
      %5046 = vmatprep.subr.bf16.mxu0 0
      %5047 = vmatpush1.bf16.msra.mxu0 0
      %5048 = vmatprep.subr.bf16.mxu0 0
      %5049 = vmatpush1.bf16.msra.mxu0 0
      %5050 = vmatprep.mubr.bf16.mxu0 0
      %5051 = vmatmul.mubr.bf16.gmra.mrb[0].mxu0 %v5012
      %v5052 = vpop.f32.mrb[0].mxu0
      %v5053 = vadd.f32 0.0, %v5052
      %v5054 = vpop.f32.mrb[0].mxu0
      %v5055 = vpop.f32.mrb[0].mxu0
      %v5056 = vpop.f32.mrb[0].mxu0
      %5057 = vdwg.mxu0
      %5058 = vrot.lane.b32.xlu0 %v2992, 64
      %v5059 = vpop.permute.xlu0 %5058
      %v5061 = vsel %vm5010, %v4977, 0
      %v5064 = vsel %vm5014, %v5059, 0
      %5066 = vmatprep.subr.bf16.mxu0 0
      %5067 = vmatpush1.bf16.msra.mxu0 %v5064
      %5068 = vmatprep.subr.bf16.mxu0 0
      %5069 = vmatpush1.bf16.msra.mxu0 0
      %5070 = vmatprep.subr.bf16.mxu0 0
      %5071 = vmatpush1.bf16.msra.mxu0 0
      %5072 = vmatprep.subr.bf16.mxu0 0
      %5073 = vmatpush1.bf16.msra.mxu0 0
      %5074 = vmatprep.subr.bf16.mxu0 0
      %5075 = vmatpush1.bf16.msra.mxu0 0
      %5076 = vmatprep.subr.bf16.mxu0 0
      %5077 = vmatpush1.bf16.msra.mxu0 0
      %5078 = vmatprep.subr.bf16.mxu0 0
      %5079 = vmatpush1.bf16.msra.mxu0 0
      %5080 = vmatprep.subr.bf16.mxu0 0
      %5081 = vmatpush1.bf16.msra.mxu0 0
      %5082 = vmatprep.subr.bf16.mxu0 0
      %5083 = vmatpush1.bf16.msra.mxu0 0
      %5084 = vmatprep.subr.bf16.mxu0 0
      %5085 = vmatpush1.bf16.msra.mxu0 0
      %5086 = vmatprep.subr.bf16.mxu0 0
      %5087 = vmatpush1.bf16.msra.mxu0 0
      %5088 = vmatprep.subr.bf16.mxu0 0
      %5089 = vmatpush1.bf16.msra.mxu0 0
      %5090 = vmatprep.subr.bf16.mxu0 0
      %5091 = vmatpush1.bf16.msra.mxu0 0
      %5092 = vmatprep.subr.bf16.mxu0 0
      %5093 = vmatpush1.bf16.msra.mxu0 0
      %5094 = vmatprep.subr.bf16.mxu0 0
      %5095 = vmatpush1.bf16.msra.mxu0 0
      %5096 = vmatprep.subr.bf16.mxu0 0
      %5097 = vmatpush1.bf16.msra.mxu0 0
      %5098 = vmatprep.mubr.bf16.mxu0 0
      %5099 = vmatmul.mubr.bf16.gmra.mrb[0].mxu0 %v5061
      %v5100 = vpop.f32.mrb[0].mxu0
      %v5101 = vadd.f32 0.0, %v5100
      %v5102 = vpop.f32.mrb[0].mxu0
      %v5103 = vpop.f32.mrb[0].mxu0
      %v5104 = vpop.f32.mrb[0].mxu0
      %5105 = vdwg.mxu0
      %5106 = vrot.lane.b32.xlu0 %v2993, 64
      %v5107 = vpop.permute.xlu0 %5106
      %v5109 = vsel %vm5010, %v4978, 0
      %v5112 = vsel %vm5014, %v5107, 0
      %5114 = vmatprep.subr.bf16.mxu0 0
      %5115 = vmatpush1.bf16.msra.mxu0 %v5112
      %5116 = vmatprep.subr.bf16.mxu0 0
      %5117 = vmatpush1.bf16.msra.mxu0 0
      %5118 = vmatprep.subr.bf16.mxu0 0
      %5119 = vmatpush1.bf16.msra.mxu0 0
      %5120 = vmatprep.subr.bf16.mxu0 0
      %5121 = vmatpush1.bf16.msra.mxu0 0
      %5122 = vmatprep.subr.bf16.mxu0 0
      %5123 = vmatpush1.bf16.msra.mxu0 0
      %5124 = vmatprep.subr.bf16.mxu0 0
      %5125 = vmatpush1.bf16.msra.mxu0 0
      %5126 = vmatprep.subr.bf16.mxu0 0
      %5127 = vmatpush1.bf16.msra.mxu0 0
      %5128 = vmatprep.subr.bf16.mxu0 0
      %5129 = vmatpush1.bf16.msra.mxu0 0
      %5130 = vmatprep.subr.bf16.mxu0 0
      %5131 = vmatpush1.bf16.msra.mxu0 0
      %5132 = vmatprep.subr.bf16.mxu0 0
      %5133 = vmatpush1.bf16.msra.mxu0 0
      %5134 = vmatprep.subr.bf16.mxu0 0
      %5135 = vmatpush1.bf16.msra.mxu0 0
      %5136 = vmatprep.subr.bf16.mxu0 0
      %5137 = vmatpush1.bf16.msra.mxu0 0
      %5138 = vmatprep.subr.bf16.mxu0 0
      %5139 = vmatpush1.bf16.msra.mxu0 0
      %5140 = vmatprep.subr.bf16.mxu0 0
      %5141 = vmatpush1.bf16.msra.mxu0 0
      %5142 = vmatprep.subr.bf16.mxu0 0
      %5143 = vmatpush1.bf16.msra.mxu0 0
      %5144 = vmatprep.subr.bf16.mxu0 0
      %5145 = vmatpush1.bf16.msra.mxu0 0
      %5146 = vmatprep.mubr.bf16.mxu0 0
      %5147 = vmatmul.mubr.bf16.gmra.mrb[0].mxu0 %v5109
      %v5148 = vpop.f32.mrb[0].mxu0
      %v5149 = vadd.f32 0.0, %v5148
      %v5150 = vpop.f32.mrb[0].mxu0
      %v5151 = vpop.f32.mrb[0].mxu0
      %v5152 = vpop.f32.mrb[0].mxu0
      %5153 = vdwg.mxu0
      %5154 = vrot.lane.b32.xlu0 %v2994, 64
      %v5155 = vpop.permute.xlu0 %5154
      %v5157 = vsel %vm5010, %v4979, 0
      %v5160 = vsel %vm5014, %v5155, 0
      %5162 = vmatprep.subr.bf16.mxu0 0
      %5163 = vmatpush1.bf16.msra.mxu0 %v5160
      %5164 = vmatprep.subr.bf16.mxu0 0
      %5165 = vmatpush1.bf16.msra.mxu0 0
      %5166 = vmatprep.subr.bf16.mxu0 0
      %5167 = vmatpush1.bf16.msra.mxu0 0
      %5168 = vmatprep.subr.bf16.mxu0 0
      %5169 = vmatpush1.bf16.msra.mxu0 0
      %5170 = vmatprep.subr.bf16.mxu0 0
      %5171 = vmatpush1.bf16.msra.mxu0 0
      %5172 = vmatprep.subr.bf16.mxu0 0
      %5173 = vmatpush1.bf16.msra.mxu0 0
      %5174 = vmatprep.subr.bf16.mxu0 0
      %5175 = vmatpush1.bf16.msra.mxu0 0
      %5176 = vmatprep.subr.bf16.mxu0 0
      %5177 = vmatpush1.bf16.msra.mxu0 0
      %5178 = vmatprep.subr.bf16.mxu0 0
      %5179 = vmatpush1.bf16.msra.mxu0 0
      %5180 = vmatprep.subr.bf16.mxu0 0
      %5181 = vmatpush1.bf16.msra.mxu0 0
      %5182 = vmatprep.subr.bf16.mxu0 0
      %5183 = vmatpush1.bf16.msra.mxu0 0
      %5184 = vmatprep.subr.bf16.mxu0 0
      %5185 = vmatpush1.bf16.msra.mxu0 0
      %5186 = vmatprep.subr.bf16.mxu0 0
      %5187 = vmatpush1.bf16.msra.mxu0 0
      %5188 = vmatprep.subr.bf16.mxu0 0
      %5189 = vmatpush1.bf16.msra.mxu0 0
      %5190 = vmatprep.subr.bf16.mxu0 0
      %5191 = vmatpush1.bf16.msra.mxu0 0
      %5192 = vmatprep.subr.bf16.mxu0 0
      %5193 = vmatpush1.bf16.msra.mxu0 0
      %5194 = vmatprep.mubr.bf16.mxu0 0
      %5195 = vmatmul.mubr.bf16.gmra.mrb[0].mxu0 %v5157
      %v5196 = vpop.f32.mrb[0].mxu0
      %v5197 = vadd.f32 0.0, %v5196
      %v5198 = vpop.f32.mrb[0].mxu0
      %v5199 = vpop.f32.mrb[0].mxu0
      %v5200 = vpop.f32.mrb[0].mxu0
      %5201 = vdwg.mxu0
      %5202 = vrot.lane.b32.xlu0 %v2995, 64
      %v5203 = vpop.permute.xlu0 %5202
      %v5205 = vsel %vm5010, %v4980, 0
      %v5208 = vsel %vm5014, %v5203, 0
      %5210 = vmatprep.subr.bf16.mxu0 0
      %5211 = vmatpush1.bf16.msra.mxu0 %v5208
      %5212 = vmatprep.subr.bf16.mxu0 0
      %5213 = vmatpush1.bf16.msra.mxu0 0
      %5214 = vmatprep.subr.bf16.mxu0 0
      %5215 = vmatpush1.bf16.msra.mxu0 0
      %5216 = vmatprep.subr.bf16.mxu0 0
      %5217 = vmatpush1.bf16.msra.mxu0 0
      %5218 = vmatprep.subr.bf16.mxu0 0
      %5219 = vmatpush1.bf16.msra.mxu0 0
      %5220 = vmatprep.subr.bf16.mxu0 0
      %5221 = vmatpush1.bf16.msra.mxu0 0
      %5222 = vmatprep.subr.bf16.mxu0 0
      %5223 = vmatpush1.bf16.msra.mxu0 0
      %5224 = vmatprep.subr.bf16.mxu0 0
      %5225 = vmatpush1.bf16.msra.mxu0 0
      %5226 = vmatprep.subr.bf16.mxu0 0
      %5227 = vmatpush1.bf16.msra.mxu0 0
      %5228 = vmatprep.subr.bf16.mxu0 0
      %5229 = vmatpush1.bf16.msra.mxu0 0
      %5230 = vmatprep.subr.bf16.mxu0 0
      %5231 = vmatpush1.bf16.msra.mxu0 0
      %5232 = vmatprep.subr.bf16.mxu0 0
      %5233 = vmatpush1.bf16.msra.mxu0 0
      %5234 = vmatprep.subr.bf16.mxu0 0
      %5235 = vmatpush1.bf16.msra.mxu0 0
      %5236 = vmatprep.subr.bf16.mxu0 0
      %5237 = vmatpush1.bf16.msra.mxu0 0
      %5238 = vmatprep.subr.bf16.mxu0 0
      %5239 = vmatpush1.bf16.msra.mxu0 0
      %5240 = vmatprep.subr.bf16.mxu0 0
      %5241 = vmatpush1.bf16.msra.mxu0 0
      %5242 = vmatprep.mubr.bf16.mxu0 0
      %5243 = vmatmul.mubr.bf16.gmra.mrb[0].mxu0 %v5205
      %v5244 = vpop.f32.mrb[0].mxu0
      %v5245 = vadd.f32 0.0, %v5244
      %v5246 = vpop.f32.mrb[0].mxu0
      %v5247 = vpop.f32.mrb[0].mxu0
      %v5248 = vpop.f32.mrb[0].mxu0
      %5249 = vdwg.mxu0
      %5250 = vrot.lane.b32.xlu0 %v2996, 64
      %v5251 = vpop.permute.xlu0 %5250
      %v5253 = vsel %vm5010, %v4981, 0
      %v5256 = vsel %vm5014, %v5251, 0
      %5258 = vmatprep.subr.bf16.mxu0 0
      %5259 = vmatpush1.bf16.msra.mxu0 %v5256
      %5260 = vmatprep.subr.bf16.mxu0 0
      %5261 = vmatpush1.bf16.msra.mxu0 0
      %5262 = vmatprep.subr.bf16.mxu0 0
      %5263 = vmatpush1.bf16.msra.mxu0 0
      %5264 = vmatprep.subr.bf16.mxu0 0
      %5265 = vmatpush1.bf16.msra.mxu0 0
      %5266 = vmatprep.subr.bf16.mxu0 0
      %5267 = vmatpush1.bf16.msra.mxu0 0
      %5268 = vmatprep.subr.bf16.mxu0 0
      %5269 = vmatpush1.bf16.msra.mxu0 0
      %5270 = vmatprep.subr.bf16.mxu0 0
      %5271 = vmatpush1.bf16.msra.mxu0 0
      %5272 = vmatprep.subr.bf16.mxu0 0
      %5273 = vmatpush1.bf16.msra.mxu0 0
      %5274 = vmatprep.subr.bf16.mxu0 0
      %5275 = vmatpush1.bf16.msra.mxu0 0
      %5276 = vmatprep.subr.bf16.mxu0 0
      %5277 = vmatpush1.bf16.msra.mxu0 0
      %5278 = vmatprep.subr.bf16.mxu0 0
      %5279 = vmatpush1.bf16.msra.mxu0 0
      %5280 = vmatprep.subr.bf16.mxu0 0
      %5281 = vmatpush1.bf16.msra.mxu0 0
      %5282 = vmatprep.subr.bf16.mxu0 0
      %5283 = vmatpush1.bf16.msra.mxu0 0
      %5284 = vmatprep.subr.bf16.mxu0 0
      %5285 = vmatpush1.bf16.msra.mxu0 0
      %5286 = vmatprep.subr.bf16.mxu0 0
      %5287 = vmatpush1.bf16.msra.mxu0 0
      %5288 = vmatprep.subr.bf16.mxu0 0
      %5289 = vmatpush1.bf16.msra.mxu0 0
      %5290 = vmatprep.mubr.bf16.mxu0 0
      %5291 = vmatmul.mubr.bf16.gmra.mrb[0].mxu0 %v5253
      %v5292 = vpop.f32.mrb[0].mxu0
      %v5293 = vadd.f32 0.0, %v5292
      %v5294 = vpop.f32.mrb[0].mxu0
      %v5295 = vpop.f32.mrb[0].mxu0
      %v5296 = vpop.f32.mrb[0].mxu0
      %5297 = vdwg.mxu0
      %5298 = vrot.lane.b32.xlu0 %v2997, 64
      %v5299 = vpop.permute.xlu0 %5298
      %v5301 = vsel %vm5010, %v4982, 0
      %v5304 = vsel %vm5014, %v5299, 0
      %5306 = vmatprep.subr.bf16.mxu0 0
      %5307 = vmatpush1.bf16.msra.mxu0 %v5304
      %5308 = vmatprep.subr.bf16.mxu0 0
      %5309 = vmatpush1.bf16.msra.mxu0 0
      %5310 = vmatprep.subr.bf16.mxu0 0
      %5311 = vmatpush1.bf16.msra.mxu0 0
      %5312 = vmatprep.subr.bf16.mxu0 0
      %5313 = vmatpush1.bf16.msra.mxu0 0
      %5314 = vmatprep.subr.bf16.mxu0 0
      %5315 = vmatpush1.bf16.msra.mxu0 0
      %5316 = vmatprep.subr.bf16.mxu0 0
      %5317 = vmatpush1.bf16.msra.mxu0 0
      %5318 = vmatprep.subr.bf16.mxu0 0
      %5319 = vmatpush1.bf16.msra.mxu0 0
      %5320 = vmatprep.subr.bf16.mxu0 0
      %5321 = vmatpush1.bf16.msra.mxu0 0
      %5322 = vmatprep.subr.bf16.mxu0 0
      %5323 = vmatpush1.bf16.msra.mxu0 0
      %5324 = vmatprep.subr.bf16.mxu0 0
      %5325 = vmatpush1.bf16.msra.mxu0 0
      %5326 = vmatprep.subr.bf16.mxu0 0
      %5327 = vmatpush1.bf16.msra.mxu0 0
      %5328 = vmatprep.subr.bf16.mxu0 0
      %5329 = vmatpush1.bf16.msra.mxu0 0
      %5330 = vmatprep.subr.bf16.mxu0 0
      %5331 = vmatpush1.bf16.msra.mxu0 0
      %5332 = vmatprep.subr.bf16.mxu0 0
      %5333 = vmatpush1.bf16.msra.mxu0 0
      %5334 = vmatprep.subr.bf16.mxu0 0
      %5335 = vmatpush1.bf16.msra.mxu0 0
      %5336 = vmatprep.subr.bf16.mxu0 0
      %5337 = vmatpush1.bf16.msra.mxu0 0
      %5338 = vmatprep.mubr.bf16.mxu0 0
      %5339 = vmatmul.mubr.bf16.gmra.mrb[0].mxu0 %v5301
      %v5340 = vpop.f32.mrb[0].mxu0
      %v5341 = vadd.f32 0.0, %v5340
      %v5342 = vpop.f32.mrb[0].mxu0
      %v5343 = vpop.f32.mrb[0].mxu0
      %v5344 = vpop.f32.mrb[0].mxu0
      %5345 = vdwg.mxu0
      %5346 = vrot.lane.b32.xlu0 %v2998, 64
      %v5347 = vpop.permute.xlu0 %5346
      %v5349 = vsel %vm5010, %v4983, 0
      %v5352 = vsel %vm5014, %v5347, 0
      %5354 = vmatprep.subr.bf16.mxu0 0
      %5355 = vmatpush1.bf16.msra.mxu0 %v5352
      %5356 = vmatprep.subr.bf16.mxu0 0
      %5357 = vmatpush1.bf16.msra.mxu0 0
      %5358 = vmatprep.subr.bf16.mxu0 0
      %5359 = vmatpush1.bf16.msra.mxu0 0
      %5360 = vmatprep.subr.bf16.mxu0 0
      %5361 = vmatpush1.bf16.msra.mxu0 0
      %5362 = vmatprep.subr.bf16.mxu0 0
      %5363 = vmatpush1.bf16.msra.mxu0 0
      %5364 = vmatprep.subr.bf16.mxu0 0
      %5365 = vmatpush1.bf16.msra.mxu0 0
      %5366 = vmatprep.subr.bf16.mxu0 0
      %5367 = vmatpush1.bf16.msra.mxu0 0
      %5368 = vmatprep.subr.bf16.mxu0 0
      %5369 = vmatpush1.bf16.msra.mxu0 0
      %5370 = vmatprep.subr.bf16.mxu0 0
      %5371 = vmatpush1.bf16.msra.mxu0 0
      %5372 = vmatprep.subr.bf16.mxu0 0
      %5373 = vmatpush1.bf16.msra.mxu0 0
      %5374 = vmatprep.subr.bf16.mxu0 0
      %5375 = vmatpush1.bf16.msra.mxu0 0
      %5376 = vmatprep.subr.bf16.mxu0 0
      %5377 = vmatpush1.bf16.msra.mxu0 0
      %5378 = vmatprep.subr.bf16.mxu0 0
      %5379 = vmatpush1.bf16.msra.mxu0 0
      %5380 = vmatprep.subr.bf16.mxu0 0
      %5381 = vmatpush1.bf16.msra.mxu0 0
      %5382 = vmatprep.subr.bf16.mxu0 0
      %5383 = vmatpush1.bf16.msra.mxu0 0
      %5384 = vmatprep.subr.bf16.mxu0 0
      %5385 = vmatpush1.bf16.msra.mxu0 0
      %5386 = vmatprep.mubr.bf16.mxu0 0
      %5387 = vmatmul.mubr.bf16.gmra.mrb[0].mxu0 %v5349
      %v5388 = vpop.f32.mrb[0].mxu0
      %v5389 = vadd.f32 0.0, %v5388
      %v5390 = vpop.f32.mrb[0].mxu0
      %v5391 = vpop.f32.mrb[0].mxu0
      %v5392 = vpop.f32.mrb[0].mxu0
      %5393 = vdwg.mxu0
      %5394 = vrot.lane.b32.xlu0 %v2999, 64
      %v5395 = vpop.permute.xlu0 %5394
      %v5397 = vsel %vm5010, %v4984, 0
      %v5400 = vsel %vm5014, %v5395, 0
      %5402 = vmatprep.subr.bf16.mxu0 0
      %5403 = vmatpush1.bf16.msra.mxu0 %v5400
      %5404 = vmatprep.subr.bf16.mxu0 0
      %5405 = vmatpush1.bf16.msra.mxu0 0
      %5406 = vmatprep.subr.bf16.mxu0 0
      %5407 = vmatpush1.bf16.msra.mxu0 0
      %5408 = vmatprep.subr.bf16.mxu0 0
      %5409 = vmatpush1.bf16.msra.mxu0 0
      %5410 = vmatprep.subr.bf16.mxu0 0
      %5411 = vmatpush1.bf16.msra.mxu0 0
      %5412 = vmatprep.subr.bf16.mxu0 0
      %5413 = vmatpush1.bf16.msra.mxu0 0
      %5414 = vmatprep.subr.bf16.mxu0 0
      %5415 = vmatpush1.bf16.msra.mxu0 0
      %5416 = vmatprep.subr.bf16.mxu0 0
      %5417 = vmatpush1.bf16.msra.mxu0 0
      %5418 = vmatprep.subr.bf16.mxu0 0
      %5419 = vmatpush1.bf16.msra.mxu0 0
      %5420 = vmatprep.subr.bf16.mxu0 0
      %5421 = vmatpush1.bf16.msra.mxu0 0
      %5422 = vmatprep.subr.bf16.mxu0 0
      %5423 = vmatpush1.bf16.msra.mxu0 0
      %5424 = vmatprep.subr.bf16.mxu0 0
      %5425 = vmatpush1.bf16.msra.mxu0 0
      %5426 = vmatprep.subr.bf16.mxu0 0
      %5427 = vmatpush1.bf16.msra.mxu0 0
      %5428 = vmatprep.subr.bf16.mxu0 0
      %5429 = vmatpush1.bf16.msra.mxu0 0
      %5430 = vmatprep.subr.bf16.mxu0 0
      %5431 = vmatpush1.bf16.msra.mxu0 0
      %5432 = vmatprep.subr.bf16.mxu0 0
      %5433 = vmatpush1.bf16.msra.mxu0 0
      %5434 = vmatprep.mubr.bf16.mxu0 0
      %5435 = vmatmul.mubr.bf16.gmra.mrb[0].mxu0 %v5397
      %v5436 = vpop.f32.mrb[0].mxu0
      %v5437 = vadd.f32 0.0, %v5436
      %v5438 = vpop.f32.mrb[0].mxu0
      %v5439 = vpop.f32.mrb[0].mxu0
      %v5440 = vpop.f32.mrb[0].mxu0
      %5441 = vdwg.mxu0
      %5442 = vrot.lane.b32.xlu0 %v3000, 64
      %v5443 = vpop.permute.xlu0 %5442
      %v5445 = vsel %vm5010, %v4985, 0
      %v5448 = vsel %vm5014, %v5443, 0
      %5450 = vmatprep.subr.bf16.mxu0 0
      %5451 = vmatpush1.bf16.msra.mxu0 %v5448
      %5452 = vmatprep.subr.bf16.mxu0 0
      %5453 = vmatpush1.bf16.msra.mxu0 0
      %5454 = vmatprep.subr.bf16.mxu0 0
      %5455 = vmatpush1.bf16.msra.mxu0 0
      %5456 = vmatprep.subr.bf16.mxu0 0
      %5457 = vmatpush1.bf16.msra.mxu0 0
      %5458 = vmatprep.subr.bf16.mxu0 0
      %5459 = vmatpush1.bf16.msra.mxu0 0
      %5460 = vmatprep.subr.bf16.mxu0 0
      %5461 = vmatpush1.bf16.msra.mxu0 0
      %5462 = vmatprep.subr.bf16.mxu0 0
      %5463 = vmatpush1.bf16.msra.mxu0 0
      %5464 = vmatprep.subr.bf16.mxu0 0
      %5465 = vmatpush1.bf16.msra.mxu0 0
      %5466 = vmatprep.subr.bf16.mxu0 0
      %5467 = vmatpush1.bf16.msra.mxu0 0
      %5468 = vmatprep.subr.bf16.mxu0 0
      %5469 = vmatpush1.bf16.msra.mxu0 0
      %5470 = vmatprep.subr.bf16.mxu0 0
      %5471 = vmatpush1.bf16.msra.mxu0 0
      %5472 = vmatprep.subr.bf16.mxu0 0
      %5473 = vmatpush1.bf16.msra.mxu0 0
      %5474 = vmatprep.subr.bf16.mxu0 0
      %5475 = vmatpush1.bf16.msra.mxu0 0
      %5476 = vmatprep.subr.bf16.mxu0 0
      %5477 = vmatpush1.bf16.msra.mxu0 0
      %5478 = vmatprep.subr.bf16.mxu0 0
      %5479 = vmatpush1.bf16.msra.mxu0 0
      %5480 = vmatprep.subr.bf16.mxu0 0
      %5481 = vmatpush1.bf16.msra.mxu0 0
      %5482 = vmatprep.mubr.bf16.mxu0 0
      %5483 = vmatmul.mubr.bf16.gmra.mrb[0].mxu0 %v5445
      %v5484 = vpop.f32.mrb[0].mxu0
      %v5485 = vadd.f32 0.0, %v5484
      %v5486 = vpop.f32.mrb[0].mxu0
      %v5487 = vpop.f32.mrb[0].mxu0
      %v5488 = vpop.f32.mrb[0].mxu0
      %5489 = vdwg.mxu0
      %5490 = vrot.lane.b32.xlu0 %v3001, 64
      %v5491 = vpop.permute.xlu0 %5490
      %v5493 = vsel %vm5010, %v4986, 0
      %v5496 = vsel %vm5014, %v5491, 0
      %5498 = vmatprep.subr.bf16.mxu0 0
      %5499 = vmatpush1.bf16.msra.mxu0 %v5496
      %5500 = vmatprep.subr.bf16.mxu0 0
      %5501 = vmatpush1.bf16.msra.mxu0 0
      %5502 = vmatprep.subr.bf16.mxu0 0
      %5503 = vmatpush1.bf16.msra.mxu0 0
      %5504 = vmatprep.subr.bf16.mxu0 0
      %5505 = vmatpush1.bf16.msra.mxu0 0
      %5506 = vmatprep.subr.bf16.mxu0 0
      %5507 = vmatpush1.bf16.msra.mxu0 0
      %5508 = vmatprep.subr.bf16.mxu0 0
      %5509 = vmatpush1.bf16.msra.mxu0 0
      %5510 = vmatprep.subr.bf16.mxu0 0
      %5511 = vmatpush1.bf16.msra.mxu0 0
      %5512 = vmatprep.subr.bf16.mxu0 0
      %5513 = vmatpush1.bf16.msra.mxu0 0
      %5514 = vmatprep.subr.bf16.mxu0 0
      %5515 = vmatpush1.bf16.msra.mxu0 0
      %5516 = vmatprep.subr.bf16.mxu0 0
      %5517 = vmatpush1.bf16.msra.mxu0 0
      %5518 = vmatprep.subr.bf16.mxu0 0
      %5519 = vmatpush1.bf16.msra.mxu0 0
      %5520 = vmatprep.subr.bf16.mxu0 0
      %5521 = vmatpush1.bf16.msra.mxu0 0
      %5522 = vmatprep.subr.bf16.mxu0 0
      %5523 = vmatpush1.bf16.msra.mxu0 0
      %5524 = vmatprep.subr.bf16.mxu0 0
      %5525 = vmatpush1.bf16.msra.mxu0 0
      %5526 = vmatprep.subr.bf16.mxu0 0
      %5527 = vmatpush1.bf16.msra.mxu0 0
      %5528 = vmatprep.subr.bf16.mxu0 0
      %5529 = vmatpush1.bf16.msra.mxu0 0
      %5530 = vmatprep.mubr.bf16.mxu0 0
      %5531 = vmatmul.mubr.bf16.gmra.mrb[0].mxu0 %v5493
      %v5532 = vpop.f32.mrb[0].mxu0
      %v5533 = vadd.f32 0.0, %v5532
      %v5534 = vpop.f32.mrb[0].mxu0
      %v5535 = vpop.f32.mrb[0].mxu0
      %v5536 = vpop.f32.mrb[0].mxu0
      %5537 = vdwg.mxu0
      %5538 = vrot.lane.b32.xlu0 %v3002, 64
      %v5539 = vpop.permute.xlu0 %5538
      %v5541 = vsel %vm5010, %v4987, 0
      %v5544 = vsel %vm5014, %v5539, 0
      %5546 = vmatprep.subr.bf16.mxu0 0
      %5547 = vmatpush1.bf16.msra.mxu0 %v5544
      %5548 = vmatprep.subr.bf16.mxu0 0
      %5549 = vmatpush1.bf16.msra.mxu0 0
      %5550 = vmatprep.subr.bf16.mxu0 0
      %5551 = vmatpush1.bf16.msra.mxu0 0
      %5552 = vmatprep.subr.bf16.mxu0 0
      %5553 = vmatpush1.bf16.msra.mxu0 0
      %5554 = vmatprep.subr.bf16.mxu0 0
      %5555 = vmatpush1.bf16.msra.mxu0 0
      %5556 = vmatprep.subr.bf16.mxu0 0
      %5557 = vmatpush1.bf16.msra.mxu0 0
      %5558 = vmatprep.subr.bf16.mxu0 0
      %5559 = vmatpush1.bf16.msra.mxu0 0
      %5560 = vmatprep.subr.bf16.mxu0 0
      %5561 = vmatpush1.bf16.msra.mxu0 0
      %5562 = vmatprep.subr.bf16.mxu0 0
      %5563 = vmatpush1.bf16.msra.mxu0 0
      %5564 = vmatprep.subr.bf16.mxu0 0
      %5565 = vmatpush1.bf16.msra.mxu0 0
      %5566 = vmatprep.subr.bf16.mxu0 0
      %5567 = vmatpush1.bf16.msra.mxu0 0
      %5568 = vmatprep.subr.bf16.mxu0 0
      %5569 = vmatpush1.bf16.msra.mxu0 0
      %5570 = vmatprep.subr.bf16.mxu0 0
      %5571 = vmatpush1.bf16.msra.mxu0 0
      %5572 = vmatprep.subr.bf16.mxu0 0
      %5573 = vmatpush1.bf16.msra.mxu0 0
      %5574 = vmatprep.subr.bf16.mxu0 0
      %5575 = vmatpush1.bf16.msra.mxu0 0
      %5576 = vmatprep.subr.bf16.mxu0 0
      %5577 = vmatpush1.bf16.msra.mxu0 0
      %5578 = vmatprep.mubr.bf16.mxu0 0
      %5579 = vmatmul.mubr.bf16.gmra.mrb[0].mxu0 %v5541
      %v5580 = vpop.f32.mrb[0].mxu0
      %v5581 = vadd.f32 0.0, %v5580
      %v5582 = vpop.f32.mrb[0].mxu0
      %v5583 = vpop.f32.mrb[0].mxu0
      %v5584 = vpop.f32.mrb[0].mxu0
      %5585 = vdwg.mxu0
      %5586 = vrot.lane.b32.xlu0 %v3003, 64
      %v5587 = vpop.permute.xlu0 %5586
      %v5589 = vsel %vm5010, %v4988, 0
      %v5592 = vsel %vm5014, %v5587, 0
      %5594 = vmatprep.subr.bf16.mxu0 0
      %5595 = vmatpush1.bf16.msra.mxu0 %v5592
      %5596 = vmatprep.subr.bf16.mxu0 0
      %5597 = vmatpush1.bf16.msra.mxu0 0
      %5598 = vmatprep.subr.bf16.mxu0 0
      %5599 = vmatpush1.bf16.msra.mxu0 0
      %5600 = vmatprep.subr.bf16.mxu0 0
      %5601 = vmatpush1.bf16.msra.mxu0 0
      %5602 = vmatprep.subr.bf16.mxu0 0
      %5603 = vmatpush1.bf16.msra.mxu0 0
      %5604 = vmatprep.subr.bf16.mxu0 0
      %5605 = vmatpush1.bf16.msra.mxu0 0
      %5606 = vmatprep.subr.bf16.mxu0 0
      %5607 = vmatpush1.bf16.msra.mxu0 0
      %5608 = vmatprep.subr.bf16.mxu0 0
      %5609 = vmatpush1.bf16.msra.mxu0 0
      %5610 = vmatprep.subr.bf16.mxu0 0
      %5611 = vmatpush1.bf16.msra.mxu0 0
      %5612 = vmatprep.subr.bf16.mxu0 0
      %5613 = vmatpush1.bf16.msra.mxu0 0
      %5614 = vmatprep.subr.bf16.mxu0 0
      %5615 = vmatpush1.bf16.msra.mxu0 0
      %5616 = vmatprep.subr.bf16.mxu0 0
      %5617 = vmatpush1.bf16.msra.mxu0 0
      %5618 = vmatprep.subr.bf16.mxu0 0
      %5619 = vmatpush1.bf16.msra.mxu0 0
      %5620 = vmatprep.subr.bf16.mxu0 0
      %5621 = vmatpush1.bf16.msra.mxu0 0
      %5622 = vmatprep.subr.bf16.mxu0 0
      %5623 = vmatpush1.bf16.msra.mxu0 0
      %5624 = vmatprep.subr.bf16.mxu0 0
      %5625 = vmatpush1.bf16.msra.mxu0 0
      %5626 = vmatprep.mubr.bf16.mxu0 0
      %5627 = vmatmul.mubr.bf16.gmra.mrb[0].mxu0 %v5589
      %v5628 = vpop.f32.mrb[0].mxu0
      %v5629 = vadd.f32 0.0, %v5628
      %v5630 = vpop.f32.mrb[0].mxu0
      %v5631 = vpop.f32.mrb[0].mxu0
      %v5632 = vpop.f32.mrb[0].mxu0
      %5633 = vdwg.mxu0
      %5634 = vrot.lane.b32.xlu0 %v3004, 64
      %v5635 = vpop.permute.xlu0 %5634
      %v5637 = vsel %vm5010, %v4989, 0
      %v5640 = vsel %vm5014, %v5635, 0
      %5642 = vmatprep.subr.bf16.mxu0 0
      %5643 = vmatpush1.bf16.msra.mxu0 %v5640
      %5644 = vmatprep.subr.bf16.mxu0 0
      %5645 = vmatpush1.bf16.msra.mxu0 0
      %5646 = vmatprep.subr.bf16.mxu0 0
      %5647 = vmatpush1.bf16.msra.mxu0 0
      %5648 = vmatprep.subr.bf16.mxu0 0
      %5649 = vmatpush1.bf16.msra.mxu0 0
      %5650 = vmatprep.subr.bf16.mxu0 0
      %5651 = vmatpush1.bf16.msra.mxu0 0
      %5652 = vmatprep.subr.bf16.mxu0 0
      %5653 = vmatpush1.bf16.msra.mxu0 0
      %5654 = vmatprep.subr.bf16.mxu0 0
      %5655 = vmatpush1.bf16.msra.mxu0 0
      %5656 = vmatprep.subr.bf16.mxu0 0
      %5657 = vmatpush1.bf16.msra.mxu0 0
      %5658 = vmatprep.subr.bf16.mxu0 0
      %5659 = vmatpush1.bf16.msra.mxu0 0
      %5660 = vmatprep.subr.bf16.mxu0 0
      %5661 = vmatpush1.bf16.msra.mxu0 0
      %5662 = vmatprep.subr.bf16.mxu0 0
      %5663 = vmatpush1.bf16.msra.mxu0 0
      %5664 = vmatprep.subr.bf16.mxu0 0
      %5665 = vmatpush1.bf16.msra.mxu0 0
      %5666 = vmatprep.subr.bf16.mxu0 0
      %5667 = vmatpush1.bf16.msra.mxu0 0
      %5668 = vmatprep.subr.bf16.mxu0 0
      %5669 = vmatpush1.bf16.msra.mxu0 0
      %5670 = vmatprep.subr.bf16.mxu0 0
      %5671 = vmatpush1.bf16.msra.mxu0 0
      %5672 = vmatprep.subr.bf16.mxu0 0
      %5673 = vmatpush1.bf16.msra.mxu0 0
      %5674 = vmatprep.mubr.bf16.mxu0 0
      %5675 = vmatmul.mubr.bf16.gmra.mrb[0].mxu0 %v5637
      %v5676 = vpop.f32.mrb[0].mxu0
      %v5677 = vadd.f32 0.0, %v5676
      %v5678 = vpop.f32.mrb[0].mxu0
      %v5679 = vpop.f32.mrb[0].mxu0
      %v5680 = vpop.f32.mrb[0].mxu0
      %5681 = vdwg.mxu0
      %5682 = vrot.lane.b32.xlu0 %v3005, 64
      %v5683 = vpop.permute.xlu0 %5682
      %v5685 = vsel %vm5010, %v4990, 0
      %v5688 = vsel %vm5014, %v5683, 0
      %5690 = vmatprep.subr.bf16.mxu0 0
      %5691 = vmatpush1.bf16.msra.mxu0 %v5688
      %5692 = vmatprep.subr.bf16.mxu0 0
      %5693 = vmatpush1.bf16.msra.mxu0 0
      %5694 = vmatprep.subr.bf16.mxu0 0
      %5695 = vmatpush1.bf16.msra.mxu0 0
      %5696 = vmatprep.subr.bf16.mxu0 0
      %5697 = vmatpush1.bf16.msra.mxu0 0
      %5698 = vmatprep.subr.bf16.mxu0 0
      %5699 = vmatpush1.bf16.msra.mxu0 0
      %5700 = vmatprep.subr.bf16.mxu0 0
      %5701 = vmatpush1.bf16.msra.mxu0 0
      %5702 = vmatprep.subr.bf16.mxu0 0
      %5703 = vmatpush1.bf16.msra.mxu0 0
      %5704 = vmatprep.subr.bf16.mxu0 0
      %5705 = vmatpush1.bf16.msra.mxu0 0
      %5706 = vmatprep.subr.bf16.mxu0 0
      %5707 = vmatpush1.bf16.msra.mxu0 0
      %5708 = vmatprep.subr.bf16.mxu0 0
      %5709 = vmatpush1.bf16.msra.mxu0 0
      %5710 = vmatprep.subr.bf16.mxu0 0
      %5711 = vmatpush1.bf16.msra.mxu0 0
      %5712 = vmatprep.subr.bf16.mxu0 0
      %5713 = vmatpush1.bf16.msra.mxu0 0
      %5714 = vmatprep.subr.bf16.mxu0 0
      %5715 = vmatpush1.bf16.msra.mxu0 0
      %5716 = vmatprep.subr.bf16.mxu0 0
      %5717 = vmatpush1.bf16.msra.mxu0 0
      %5718 = vmatprep.subr.bf16.mxu0 0
      %5719 = vmatpush1.bf16.msra.mxu0 0
      %5720 = vmatprep.subr.bf16.mxu0 0
      %5721 = vmatpush1.bf16.msra.mxu0 0
      %5722 = vmatprep.mubr.bf16.mxu0 0
      %5723 = vmatmul.mubr.bf16.gmra.mrb[0].mxu0 %v5685
      %v5724 = vpop.f32.mrb[0].mxu0
      %v5725 = vadd.f32 0.0, %v5724
      %v5726 = vpop.f32.mrb[0].mxu0
      %v5727 = vpop.f32.mrb[0].mxu0
      %v5728 = vpop.f32.mrb[0].mxu0
      %5729 = vdwg.mxu0
      %5730 = vrot.lane.b32.xlu0 %v3006, 64
      %v5731 = vpop.permute.xlu0 %5730
      %v5733 = vsel %vm5010, %v4991, 0
      %v5736 = vsel %vm5014, %v5731, 0
      %5738 = vmatprep.subr.bf16.mxu0 0
      %5739 = vmatpush1.bf16.msra.mxu0 %v5736
      %5740 = vmatprep.subr.bf16.mxu0 0
      %5741 = vmatpush1.bf16.msra.mxu0 0
      %5742 = vmatprep.subr.bf16.mxu0 0
      %5743 = vmatpush1.bf16.msra.mxu0 0
      %5744 = vmatprep.subr.bf16.mxu0 0
      %5745 = vmatpush1.bf16.msra.mxu0 0
      %5746 = vmatprep.subr.bf16.mxu0 0
      %5747 = vmatpush1.bf16.msra.mxu0 0
      %5748 = vmatprep.subr.bf16.mxu0 0
      %5749 = vmatpush1.bf16.msra.mxu0 0
      %5750 = vmatprep.subr.bf16.mxu0 0
      %5751 = vmatpush1.bf16.msra.mxu0 0
      %5752 = vmatprep.subr.bf16.mxu0 0
      %5753 = vmatpush1.bf16.msra.mxu0 0
      %5754 = vmatprep.subr.bf16.mxu0 0
      %5755 = vmatpush1.bf16.msra.mxu0 0
      %5756 = vmatprep.subr.bf16.mxu0 0
      %5757 = vmatpush1.bf16.msra.mxu0 0
      %5758 = vmatprep.subr.bf16.mxu0 0
      %5759 = vmatpush1.bf16.msra.mxu0 0
      %5760 = vmatprep.subr.bf16.mxu0 0
      %5761 = vmatpush1.bf16.msra.mxu0 0
      %5762 = vmatprep.subr.bf16.mxu0 0
      %5763 = vmatpush1.bf16.msra.mxu0 0
      %5764 = vmatprep.subr.bf16.mxu0 0
      %5765 = vmatpush1.bf16.msra.mxu0 0
      %5766 = vmatprep.subr.bf16.mxu0 0
      %5767 = vmatpush1.bf16.msra.mxu0 0
      %5768 = vmatprep.subr.bf16.mxu0 0
      %5769 = vmatpush1.bf16.msra.mxu0 0
      %5770 = vmatprep.mubr.bf16.mxu0 0
      %5771 = vmatmul.mubr.bf16.gmra.mrb[0].mxu0 %v5733
      %v5772 = vpop.f32.mrb[0].mxu0
      %v5773 = vadd.f32 0.0, %v5772
      %v5774 = vpop.f32.mrb[0].mxu0
      %v5775 = vpop.f32.mrb[0].mxu0
      %v5776 = vpop.f32.mrb[0].mxu0
      %5777 = vdwg.mxu0
      %5778 = vrot.lane.b32.xlu0 %v3007, 64
      %v5779 = vpop.permute.xlu0 %5778
      %v5781 = vsel %vm5010, %v4992, 0
      %v5784 = vsel %vm5014, %v5779, 0
      %5786 = vmatprep.subr.bf16.mxu0 0
      %5787 = vmatpush1.bf16.msra.mxu0 %v5784
      %5788 = vmatprep.subr.bf16.mxu0 0
      %5789 = vmatpush1.bf16.msra.mxu0 0
      %5790 = vmatprep.subr.bf16.mxu0 0
      %5791 = vmatpush1.bf16.msra.mxu0 0
      %5792 = vmatprep.subr.bf16.mxu0 0
      %5793 = vmatpush1.bf16.msra.mxu0 0
      %5794 = vmatprep.subr.bf16.mxu0 0
      %5795 = vmatpush1.bf16.msra.mxu0 0
      %5796 = vmatprep.subr.bf16.mxu0 0
      %5797 = vmatpush1.bf16.msra.mxu0 0
      %5798 = vmatprep.subr.bf16.mxu0 0
      %5799 = vmatpush1.bf16.msra.mxu0 0
      %5800 = vmatprep.subr.bf16.mxu0 0
      %5801 = vmatpush1.bf16.msra.mxu0 0
      %5802 = vmatprep.subr.bf16.mxu0 0
      %5803 = vmatpush1.bf16.msra.mxu0 0
      %5804 = vmatprep.subr.bf16.mxu0 0
      %5805 = vmatpush1.bf16.msra.mxu0 0
      %5806 = vmatprep.subr.bf16.mxu0 0
      %5807 = vmatpush1.bf16.msra.mxu0 0
      %5808 = vmatprep.subr.bf16.mxu0 0
      %5809 = vmatpush1.bf16.msra.mxu0 0
      %5810 = vmatprep.subr.bf16.mxu0 0
      %5811 = vmatpush1.bf16.msra.mxu0 0
      %5812 = vmatprep.subr.bf16.mxu0 0
      %5813 = vmatpush1.bf16.msra.mxu0 0
      %5814 = vmatprep.subr.bf16.mxu0 0
      %5815 = vmatpush1.bf16.msra.mxu0 0
      %5816 = vmatprep.subr.bf16.mxu0 0
      %5817 = vmatpush1.bf16.msra.mxu0 0
      %5818 = vmatprep.mubr.bf16.mxu0 0
      %5819 = vmatmul.mubr.bf16.gmra.mrb[0].mxu0 %v5781
      %v5820 = vpop.f32.mrb[0].mxu0
      %v5821 = vadd.f32 0.0, %v5820
      %v5822 = vpop.f32.mrb[0].mxu0
      %v5823 = vpop.f32.mrb[0].mxu0
      %v5824 = vpop.f32.mrb[0].mxu0
      %5825 = vdwg.mxu0
      %5826 = vrot.lane.b32.xlu0 %v3008, 64
      %v5827 = vpop.permute.xlu0 %5826
      %v5829 = vsel %vm5010, %v4993, 0
      %v5832 = vsel %vm5014, %v5827, 0
      %5834 = vmatprep.subr.bf16.mxu0 0
      %5835 = vmatpush1.bf16.msra.mxu0 %v5832
      %5836 = vmatprep.subr.bf16.mxu0 0
      %5837 = vmatpush1.bf16.msra.mxu0 0
      %5838 = vmatprep.subr.bf16.mxu0 0
      %5839 = vmatpush1.bf16.msra.mxu0 0
      %5840 = vmatprep.subr.bf16.mxu0 0
      %5841 = vmatpush1.bf16.msra.mxu0 0
      %5842 = vmatprep.subr.bf16.mxu0 0
      %5843 = vmatpush1.bf16.msra.mxu0 0
      %5844 = vmatprep.subr.bf16.mxu0 0
      %5845 = vmatpush1.bf16.msra.mxu0 0
      %5846 = vmatprep.subr.bf16.mxu0 0
      %5847 = vmatpush1.bf16.msra.mxu0 0
      %5848 = vmatprep.subr.bf16.mxu0 0
      %5849 = vmatpush1.bf16.msra.mxu0 0
      %5850 = vmatprep.subr.bf16.mxu0 0
      %5851 = vmatpush1.bf16.msra.mxu0 0
      %5852 = vmatprep.subr.bf16.mxu0 0
      %5853 = vmatpush1.bf16.msra.mxu0 0
      %5854 = vmatprep.subr.bf16.mxu0 0
      %5855 = vmatpush1.bf16.msra.mxu0 0
      %5856 = vmatprep.subr.bf16.mxu0 0
      %5857 = vmatpush1.bf16.msra.mxu0 0
      %5858 = vmatprep.subr.bf16.mxu0 0
      %5859 = vmatpush1.bf16.msra.mxu0 0
      %5860 = vmatprep.subr.bf16.mxu0 0
      %5861 = vmatpush1.bf16.msra.mxu0 0
      %5862 = vmatprep.subr.bf16.mxu0 0
      %5863 = vmatpush1.bf16.msra.mxu0 0
      %5864 = vmatprep.subr.bf16.mxu0 0
      %5865 = vmatpush1.bf16.msra.mxu0 0
      %5866 = vmatprep.mubr.bf16.mxu0 0
      %5867 = vmatmul.mubr.bf16.gmra.mrb[0].mxu0 %v5829
      %v5868 = vpop.f32.mrb[0].mxu0
      %v5869 = vadd.f32 0.0, %v5868
      %v5870 = vpop.f32.mrb[0].mxu0
      %v5871 = vpop.f32.mrb[0].mxu0
      %v5872 = vpop.f32.mrb[0].mxu0
      %5873 = vdwg.mxu0
      %5874 = vrot.lane.b32.xlu0 %v3009, 64
      %v5875 = vpop.permute.xlu0 %5874
      %v5877 = vsel %vm5010, %v4994, 0
      %v5880 = vsel %vm5014, %v5875, 0
      %5882 = vmatprep.subr.bf16.mxu0 0
      %5883 = vmatpush1.bf16.msra.mxu0 %v5880
      %5884 = vmatprep.subr.bf16.mxu0 0
      %5885 = vmatpush1.bf16.msra.mxu0 0
      %5886 = vmatprep.subr.bf16.mxu0 0
      %5887 = vmatpush1.bf16.msra.mxu0 0
      %5888 = vmatprep.subr.bf16.mxu0 0
      %5889 = vmatpush1.bf16.msra.mxu0 0
      %5890 = vmatprep.subr.bf16.mxu0 0
      %5891 = vmatpush1.bf16.msra.mxu0 0
      %5892 = vmatprep.subr.bf16.mxu0 0
      %5893 = vmatpush1.bf16.msra.mxu0 0
      %5894 = vmatprep.subr.bf16.mxu0 0
      %5895 = vmatpush1.bf16.msra.mxu0 0
      %5896 = vmatprep.subr.bf16.mxu0 0
      %5897 = vmatpush1.bf16.msra.mxu0 0
      %5898 = vmatprep.subr.bf16.mxu0 0
      %5899 = vmatpush1.bf16.msra.mxu0 0
      %5900 = vmatprep.subr.bf16.mxu0 0
      %5901 = vmatpush1.bf16.msra.mxu0 0
      %5902 = vmatprep.subr.bf16.mxu0 0
      %5903 = vmatpush1.bf16.msra.mxu0 0
      %5904 = vmatprep.subr.bf16.mxu0 0
      %5905 = vmatpush1.bf16.msra.mxu0 0
      %5906 = vmatprep.subr.bf16.mxu0 0
      %5907 = vmatpush1.bf16.msra.mxu0 0
      %5908 = vmatprep.subr.bf16.mxu0 0
      %5909 = vmatpush1.bf16.msra.mxu0 0
      %5910 = vmatprep.subr.bf16.mxu0 0
      %5911 = vmatpush1.bf16.msra.mxu0 0
      %5912 = vmatprep.subr.bf16.mxu0 0
      %5913 = vmatpush1.bf16.msra.mxu0 0
      %5914 = vmatprep.mubr.bf16.mxu0 0
      %5915 = vmatmul.mubr.bf16.gmra.mrb[0].mxu0 %v5877
      %v5916 = vpop.f32.mrb[0].mxu0
      %v5917 = vadd.f32 0.0, %v5916
      %v5918 = vpop.f32.mrb[0].mxu0
      %v5919 = vpop.f32.mrb[0].mxu0
      %v5920 = vpop.f32.mrb[0].mxu0
      %5921 = vdwg.mxu0
      %5922 = vrot.lane.b32.xlu0 %v3010, 64
      %v5923 = vpop.permute.xlu0 %5922
      %v5925 = vsel %vm5010, %v4995, 0
      %v5928 = vsel %vm5014, %v5923, 0
      %5930 = vmatprep.subr.bf16.mxu0 0
      %5931 = vmatpush1.bf16.msra.mxu0 %v5928
      %5932 = vmatprep.subr.bf16.mxu0 0
      %5933 = vmatpush1.bf16.msra.mxu0 0
      %5934 = vmatprep.subr.bf16.mxu0 0
      %5935 = vmatpush1.bf16.msra.mxu0 0
      %5936 = vmatprep.subr.bf16.mxu0 0
      %5937 = vmatpush1.bf16.msra.mxu0 0
      %5938 = vmatprep.subr.bf16.mxu0 0
      %5939 = vmatpush1.bf16.msra.mxu0 0
      %5940 = vmatprep.subr.bf16.mxu0 0
      %5941 = vmatpush1.bf16.msra.mxu0 0
      %5942 = vmatprep.subr.bf16.mxu0 0
      %5943 = vmatpush1.bf16.msra.mxu0 0
      %5944 = vmatprep.subr.bf16.mxu0 0
      %5945 = vmatpush1.bf16.msra.mxu0 0
      %5946 = vmatprep.subr.bf16.mxu0 0
      %5947 = vmatpush1.bf16.msra.mxu0 0
      %5948 = vmatprep.subr.bf16.mxu0 0
      %5949 = vmatpush1.bf16.msra.mxu0 0
      %5950 = vmatprep.subr.bf16.mxu0 0
      %5951 = vmatpush1.bf16.msra.mxu0 0
      %5952 = vmatprep.subr.bf16.mxu0 0
      %5953 = vmatpush1.bf16.msra.mxu0 0
      %5954 = vmatprep.subr.bf16.mxu0 0
      %5955 = vmatpush1.bf16.msra.mxu0 0
      %5956 = vmatprep.subr.bf16.mxu0 0
      %5957 = vmatpush1.bf16.msra.mxu0 0
      %5958 = vmatprep.subr.bf16.mxu0 0
      %5959 = vmatpush1.bf16.msra.mxu0 0
      %5960 = vmatprep.subr.bf16.mxu0 0
      %5961 = vmatpush1.bf16.msra.mxu0 0
      %5962 = vmatprep.mubr.bf16.mxu0 0
      %5963 = vmatmul.mubr.bf16.gmra.mrb[0].mxu0 %v5925
      %v5964 = vpop.f32.mrb[0].mxu0
      %v5965 = vadd.f32 0.0, %v5964
      %v5966 = vpop.f32.mrb[0].mxu0
      %v5967 = vpop.f32.mrb[0].mxu0
      %v5968 = vpop.f32.mrb[0].mxu0
      %5969 = vdwg.mxu0
      %5970 = vrot.lane.b32.xlu0 %v3011, 64
      %v5971 = vpop.permute.xlu0 %5970
      %v5973 = vsel %vm5010, %v4996, 0
      %v5976 = vsel %vm5014, %v5971, 0
      %5978 = vmatprep.subr.bf16.mxu0 0
      %5979 = vmatpush1.bf16.msra.mxu0 %v5976
      %5980 = vmatprep.subr.bf16.mxu0 0
      %5981 = vmatpush1.bf16.msra.mxu0 0
      %5982 = vmatprep.subr.bf16.mxu0 0
      %5983 = vmatpush1.bf16.msra.mxu0 0
      %5984 = vmatprep.subr.bf16.mxu0 0
      %5985 = vmatpush1.bf16.msra.mxu0 0
      %5986 = vmatprep.subr.bf16.mxu0 0
      %5987 = vmatpush1.bf16.msra.mxu0 0
      %5988 = vmatprep.subr.bf16.mxu0 0
      %5989 = vmatpush1.bf16.msra.mxu0 0
      %5990 = vmatprep.subr.bf16.mxu0 0
      %5991 = vmatpush1.bf16.msra.mxu0 0
      %5992 = vmatprep.subr.bf16.mxu0 0
      %5993 = vmatpush1.bf16.msra.mxu0 0
      %5994 = vmatprep.subr.bf16.mxu0 0
      %5995 = vmatpush1.bf16.msra.mxu0 0
      %5996 = vmatprep.subr.bf16.mxu0 0
      %5997 = vmatpush1.bf16.msra.mxu0 0
      %5998 = vmatprep.subr.bf16.mxu0 0
      %5999 = vmatpush1.bf16.msra.mxu0 0
      %6000 = vmatprep.subr.bf16.mxu0 0
      %6001 = vmatpush1.bf16.msra.mxu0 0
      %6002 = vmatprep.subr.bf16.mxu0 0
      %6003 = vmatpush1.bf16.msra.mxu0 0
      %6004 = vmatprep.subr.bf16.mxu0 0
      %6005 = vmatpush1.bf16.msra.mxu0 0
      %6006 = vmatprep.subr.bf16.mxu0 0
      %6007 = vmatpush1.bf16.msra.mxu0 0
      %6008 = vmatprep.subr.bf16.mxu0 0
      %6009 = vmatpush1.bf16.msra.mxu0 0
      %6010 = vmatprep.mubr.bf16.mxu0 0
      %6011 = vmatmul.mubr.bf16.gmra.mrb[0].mxu0 %v5973
      %v6012 = vpop.f32.mrb[0].mxu0
      %v6013 = vadd.f32 0.0, %v6012
      %v6014 = vpop.f32.mrb[0].mxu0
      %v6015 = vpop.f32.mrb[0].mxu0
      %v6016 = vpop.f32.mrb[0].mxu0
      %6017 = vdwg.mxu0
      %6018 = vrot.lane.b32.xlu0 %v3012, 64
      %v6019 = vpop.permute.xlu0 %6018
      %v6021 = vsel %vm5010, %v4997, 0
      %v6024 = vsel %vm5014, %v6019, 0
      %6026 = vmatprep.subr.bf16.mxu0 0
      %6027 = vmatpush1.bf16.msra.mxu0 %v6024
      %6028 = vmatprep.subr.bf16.mxu0 0
      %6029 = vmatpush1.bf16.msra.mxu0 0
      %6030 = vmatprep.subr.bf16.mxu0 0
      %6031 = vmatpush1.bf16.msra.mxu0 0
      %6032 = vmatprep.subr.bf16.mxu0 0
      %6033 = vmatpush1.bf16.msra.mxu0 0
      %6034 = vmatprep.subr.bf16.mxu0 0
      %6035 = vmatpush1.bf16.msra.mxu0 0
      %6036 = vmatprep.subr.bf16.mxu0 0
      %6037 = vmatpush1.bf16.msra.mxu0 0
      %6038 = vmatprep.subr.bf16.mxu0 0
      %6039 = vmatpush1.bf16.msra.mxu0 0
      %6040 = vmatprep.subr.bf16.mxu0 0
      %6041 = vmatpush1.bf16.msra.mxu0 0
      %6042 = vmatprep.subr.bf16.mxu0 0
      %6043 = vmatpush1.bf16.msra.mxu0 0
      %6044 = vmatprep.subr.bf16.mxu0 0
      %6045 = vmatpush1.bf16.msra.mxu0 0
      %6046 = vmatprep.subr.bf16.mxu0 0
      %6047 = vmatpush1.bf16.msra.mxu0 0
      %6048 = vmatprep.subr.bf16.mxu0 0
      %6049 = vmatpush1.bf16.msra.mxu0 0
      %6050 = vmatprep.subr.bf16.mxu0 0
      %6051 = vmatpush1.bf16.msra.mxu0 0
      %6052 = vmatprep.subr.bf16.mxu0 0
      %6053 = vmatpush1.bf16.msra.mxu0 0
      %6054 = vmatprep.subr.bf16.mxu0 0
      %6055 = vmatpush1.bf16.msra.mxu0 0
      %6056 = vmatprep.subr.bf16.mxu0 0
      %6057 = vmatpush1.bf16.msra.mxu0 0
      %6058 = vmatprep.mubr.bf16.mxu0 0
      %6059 = vmatmul.mubr.bf16.gmra.mrb[0].mxu0 %v6021
      %v6060 = vpop.f32.mrb[0].mxu0
      %v6061 = vadd.f32 0.0, %v6060
      %v6062 = vpop.f32.mrb[0].mxu0
      %v6063 = vpop.f32.mrb[0].mxu0
      %v6064 = vpop.f32.mrb[0].mxu0
      %6065 = vdwg.mxu0
      %6066 = vrot.lane.b32.xlu0 %v3013, 64
      %v6067 = vpop.permute.xlu0 %6066
      %v6069 = vsel %vm5010, %v4998, 0
      %v6072 = vsel %vm5014, %v6067, 0
      %6074 = vmatprep.subr.bf16.mxu0 0
      %6075 = vmatpush1.bf16.msra.mxu0 %v6072
      %6076 = vmatprep.subr.bf16.mxu0 0
      %6077 = vmatpush1.bf16.msra.mxu0 0
      %6078 = vmatprep.subr.bf16.mxu0 0
      %6079 = vmatpush1.bf16.msra.mxu0 0
      %6080 = vmatprep.subr.bf16.mxu0 0
      %6081 = vmatpush1.bf16.msra.mxu0 0
      %6082 = vmatprep.subr.bf16.mxu0 0
      %6083 = vmatpush1.bf16.msra.mxu0 0
      %6084 = vmatprep.subr.bf16.mxu0 0
      %6085 = vmatpush1.bf16.msra.mxu0 0
      %6086 = vmatprep.subr.bf16.mxu0 0
      %6087 = vmatpush1.bf16.msra.mxu0 0
      %6088 = vmatprep.subr.bf16.mxu0 0
      %6089 = vmatpush1.bf16.msra.mxu0 0
      %6090 = vmatprep.subr.bf16.mxu0 0
      %6091 = vmatpush1.bf16.msra.mxu0 0
      %6092 = vmatprep.subr.bf16.mxu0 0
      %6093 = vmatpush1.bf16.msra.mxu0 0
      %6094 = vmatprep.subr.bf16.mxu0 0
      %6095 = vmatpush1.bf16.msra.mxu0 0
      %6096 = vmatprep.subr.bf16.mxu0 0
      %6097 = vmatpush1.bf16.msra.mxu0 0
      %6098 = vmatprep.subr.bf16.mxu0 0
      %6099 = vmatpush1.bf16.msra.mxu0 0
      %6100 = vmatprep.subr.bf16.mxu0 0
      %6101 = vmatpush1.bf16.msra.mxu0 0
      %6102 = vmatprep.subr.bf16.mxu0 0
      %6103 = vmatpush1.bf16.msra.mxu0 0
      %6104 = vmatprep.subr.bf16.mxu0 0
      %6105 = vmatpush1.bf16.msra.mxu0 0
      %6106 = vmatprep.mubr.bf16.mxu0 0
      %6107 = vmatmul.mubr.bf16.gmra.mrb[0].mxu0 %v6069
      %v6108 = vpop.f32.mrb[0].mxu0
      %v6109 = vadd.f32 0.0, %v6108
      %v6110 = vpop.f32.mrb[0].mxu0
      %v6111 = vpop.f32.mrb[0].mxu0
      %v6112 = vpop.f32.mrb[0].mxu0
      %6113 = vdwg.mxu0
      %6114 = vrot.lane.b32.xlu0 %v3014, 64
      %v6115 = vpop.permute.xlu0 %6114
      %v6117 = vsel %vm5010, %v4999, 0
      %v6120 = vsel %vm5014, %v6115, 0
      %6122 = vmatprep.subr.bf16.mxu0 0
      %6123 = vmatpush1.bf16.msra.mxu0 %v6120
      %6124 = vmatprep.subr.bf16.mxu0 0
      %6125 = vmatpush1.bf16.msra.mxu0 0
      %6126 = vmatprep.subr.bf16.mxu0 0
      %6127 = vmatpush1.bf16.msra.mxu0 0
      %6128 = vmatprep.subr.bf16.mxu0 0
      %6129 = vmatpush1.bf16.msra.mxu0 0
      %6130 = vmatprep.subr.bf16.mxu0 0
      %6131 = vmatpush1.bf16.msra.mxu0 0
      %6132 = vmatprep.subr.bf16.mxu0 0
      %6133 = vmatpush1.bf16.msra.mxu0 0
      %6134 = vmatprep.subr.bf16.mxu0 0
      %6135 = vmatpush1.bf16.msra.mxu0 0
      %6136 = vmatprep.subr.bf16.mxu0 0
      %6137 = vmatpush1.bf16.msra.mxu0 0
      %6138 = vmatprep.subr.bf16.mxu0 0
      %6139 = vmatpush1.bf16.msra.mxu0 0
      %6140 = vmatprep.subr.bf16.mxu0 0
      %6141 = vmatpush1.bf16.msra.mxu0 0
      %6142 = vmatprep.subr.bf16.mxu0 0
      %6143 = vmatpush1.bf16.msra.mxu0 0
      %6144 = vmatprep.subr.bf16.mxu0 0
      %6145 = vmatpush1.bf16.msra.mxu0 0
      %6146 = vmatprep.subr.bf16.mxu0 0
      %6147 = vmatpush1.bf16.msra.mxu0 0
      %6148 = vmatprep.subr.bf16.mxu0 0
      %6149 = vmatpush1.bf16.msra.mxu0 0
      %6150 = vmatprep.subr.bf16.mxu0 0
      %6151 = vmatpush1.bf16.msra.mxu0 0
      %6152 = vmatprep.subr.bf16.mxu0 0
      %6153 = vmatpush1.bf16.msra.mxu0 0
      %6154 = vmatprep.mubr.bf16.mxu0 0
      %6155 = vmatmul.mubr.bf16.gmra.mrb[0].mxu0 %v6117
      %v6156 = vpop.f32.mrb[0].mxu0
      %v6157 = vadd.f32 0.0, %v6156
      %v6158 = vpop.f32.mrb[0].mxu0
      %v6159 = vpop.f32.mrb[0].mxu0
      %v6160 = vpop.f32.mrb[0].mxu0
      %6161 = vdwg.mxu0
      %6162 = vrot.lane.b32.xlu0 %v3015, 64
      %v6163 = vpop.permute.xlu0 %6162
      %v6165 = vsel %vm5010, %v5000, 0
      %v6168 = vsel %vm5014, %v6163, 0
      %6170 = vmatprep.subr.bf16.mxu0 0
      %6171 = vmatpush1.bf16.msra.mxu0 %v6168
      %6172 = vmatprep.subr.bf16.mxu0 0
      %6173 = vmatpush1.bf16.msra.mxu0 0
      %6174 = vmatprep.subr.bf16.mxu0 0
      %6175 = vmatpush1.bf16.msra.mxu0 0
      %6176 = vmatprep.subr.bf16.mxu0 0
      %6177 = vmatpush1.bf16.msra.mxu0 0
      %6178 = vmatprep.subr.bf16.mxu0 0
      %6179 = vmatpush1.bf16.msra.mxu0 0
      %6180 = vmatprep.subr.bf16.mxu0 0
      %6181 = vmatpush1.bf16.msra.mxu0 0
      %6182 = vmatprep.subr.bf16.mxu0 0
      %6183 = vmatpush1.bf16.msra.mxu0 0
      %6184 = vmatprep.subr.bf16.mxu0 0
      %6185 = vmatpush1.bf16.msra.mxu0 0
      %6186 = vmatprep.subr.bf16.mxu0 0
      %6187 = vmatpush1.bf16.msra.mxu0 0
      %6188 = vmatprep.subr.bf16.mxu0 0
      %6189 = vmatpush1.bf16.msra.mxu0 0
      %6190 = vmatprep.subr.bf16.mxu0 0
      %6191 = vmatpush1.bf16.msra.mxu0 0
      %6192 = vmatprep.subr.bf16.mxu0 0
      %6193 = vmatpush1.bf16.msra.mxu0 0
      %6194 = vmatprep.subr.bf16.mxu0 0
      %6195 = vmatpush1.bf16.msra.mxu0 0
      %6196 = vmatprep.subr.bf16.mxu0 0
      %6197 = vmatpush1.bf16.msra.mxu0 0
      %6198 = vmatprep.subr.bf16.mxu0 0
      %6199 = vmatpush1.bf16.msra.mxu0 0
      %6200 = vmatprep.subr.bf16.mxu0 0
      %6201 = vmatpush1.bf16.msra.mxu0 0
      %6202 = vmatprep.mubr.bf16.mxu0 0
      %6203 = vmatmul.mubr.bf16.gmra.mrb[0].mxu0 %v6165
      %v6204 = vpop.f32.mrb[0].mxu0
      %v6205 = vadd.f32 0.0, %v6204
      %v6206 = vpop.f32.mrb[0].mxu0
      %v6207 = vpop.f32.mrb[0].mxu0
      %v6208 = vpop.f32.mrb[0].mxu0
      %6209 = vdwg.mxu0
      %6210 = vrot.lane.b32.xlu0 %v3016, 64
      %v6211 = vpop.permute.xlu0 %6210
      %v6213 = vsel %vm5010, %v5001, 0
      %v6216 = vsel %vm5014, %v6211, 0
      %6218 = vmatprep.subr.bf16.mxu0 0
      %6219 = vmatpush1.bf16.msra.mxu0 %v6216
      %6220 = vmatprep.subr.bf16.mxu0 0
      %6221 = vmatpush1.bf16.msra.mxu0 0
      %6222 = vmatprep.subr.bf16.mxu0 0
      %6223 = vmatpush1.bf16.msra.mxu0 0
      %6224 = vmatprep.subr.bf16.mxu0 0
      %6225 = vmatpush1.bf16.msra.mxu0 0
      %6226 = vmatprep.subr.bf16.mxu0 0
      %6227 = vmatpush1.bf16.msra.mxu0 0
      %6228 = vmatprep.subr.bf16.mxu0 0
      %6229 = vmatpush1.bf16.msra.mxu0 0
      %6230 = vmatprep.subr.bf16.mxu0 0
      %6231 = vmatpush1.bf16.msra.mxu0 0
      %6232 = vmatprep.subr.bf16.mxu0 0
      %6233 = vmatpush1.bf16.msra.mxu0 0
      %6234 = vmatprep.subr.bf16.mxu0 0
      %6235 = vmatpush1.bf16.msra.mxu0 0
      %6236 = vmatprep.subr.bf16.mxu0 0
      %6237 = vmatpush1.bf16.msra.mxu0 0
      %6238 = vmatprep.subr.bf16.mxu0 0
      %6239 = vmatpush1.bf16.msra.mxu0 0
      %6240 = vmatprep.subr.bf16.mxu0 0
      %6241 = vmatpush1.bf16.msra.mxu0 0
      %6242 = vmatprep.subr.bf16.mxu0 0
      %6243 = vmatpush1.bf16.msra.mxu0 0
      %6244 = vmatprep.subr.bf16.mxu0 0
      %6245 = vmatpush1.bf16.msra.mxu0 0
      %6246 = vmatprep.subr.bf16.mxu0 0
      %6247 = vmatpush1.bf16.msra.mxu0 0
      %6248 = vmatprep.subr.bf16.mxu0 0
      %6249 = vmatpush1.bf16.msra.mxu0 0
      %6250 = vmatprep.mubr.bf16.mxu0 0
      %6251 = vmatmul.mubr.bf16.gmra.mrb[0].mxu0 %v6213
      %v6252 = vpop.f32.mrb[0].mxu0
      %v6253 = vadd.f32 0.0, %v6252
      %v6254 = vpop.f32.mrb[0].mxu0
      %v6255 = vpop.f32.mrb[0].mxu0
      %v6256 = vpop.f32.mrb[0].mxu0
      %6257 = vdwg.mxu0
      %6258 = vrot.lane.b32.xlu0 %v3017, 64
      %v6259 = vpop.permute.xlu0 %6258
      %v6261 = vsel %vm5010, %v5002, 0
      %v6264 = vsel %vm5014, %v6259, 0
      %6266 = vmatprep.subr.bf16.mxu0 0
      %6267 = vmatpush1.bf16.msra.mxu0 %v6264
      %6268 = vmatprep.subr.bf16.mxu0 0
      %6269 = vmatpush1.bf16.msra.mxu0 0
      %6270 = vmatprep.subr.bf16.mxu0 0
      %6271 = vmatpush1.bf16.msra.mxu0 0
      %6272 = vmatprep.subr.bf16.mxu0 0
      %6273 = vmatpush1.bf16.msra.mxu0 0
      %6274 = vmatprep.subr.bf16.mxu0 0
      %6275 = vmatpush1.bf16.msra.mxu0 0
      %6276 = vmatprep.subr.bf16.mxu0 0
      %6277 = vmatpush1.bf16.msra.mxu0 0
      %6278 = vmatprep.subr.bf16.mxu0 0
      %6279 = vmatpush1.bf16.msra.mxu0 0
      %6280 = vmatprep.subr.bf16.mxu0 0
      %6281 = vmatpush1.bf16.msra.mxu0 0
      %6282 = vmatprep.subr.bf16.mxu0 0
      %6283 = vmatpush1.bf16.msra.mxu0 0
      %6284 = vmatprep.subr.bf16.mxu0 0
      %6285 = vmatpush1.bf16.msra.mxu0 0
      %6286 = vmatprep.subr.bf16.mxu0 0
      %6287 = vmatpush1.bf16.msra.mxu0 0
      %6288 = vmatprep.subr.bf16.mxu0 0
      %6289 = vmatpush1.bf16.msra.mxu0 0
      %6290 = vmatprep.subr.bf16.mxu0 0
      %6291 = vmatpush1.bf16.msra.mxu0 0
      %6292 = vmatprep.subr.bf16.mxu0 0
      %6293 = vmatpush1.bf16.msra.mxu0 0
      %6294 = vmatprep.subr.bf16.mxu0 0
      %6295 = vmatpush1.bf16.msra.mxu0 0
      %6296 = vmatprep.subr.bf16.mxu0 0
      %6297 = vmatpush1.bf16.msra.mxu0 0
      %6298 = vmatprep.mubr.bf16.mxu0 0
      %6299 = vmatmul.mubr.bf16.gmra.mrb[0].mxu0 %v6261
      %v6300 = vpop.f32.mrb[0].mxu0
      %v6301 = vadd.f32 0.0, %v6300
      %v6302 = vpop.f32.mrb[0].mxu0
      %v6303 = vpop.f32.mrb[0].mxu0
      %v6304 = vpop.f32.mrb[0].mxu0
      %6305 = vdwg.mxu0
      %6306 = vrot.lane.b32.xlu0 %v3018, 64
      %v6307 = vpop.permute.xlu0 %6306
      %v6309 = vsel %vm5010, %v5003, 0
      %v6312 = vsel %vm5014, %v6307, 0
      %6314 = vmatprep.subr.bf16.mxu0 0
      %6315 = vmatpush1.bf16.msra.mxu0 %v6312
      %6316 = vmatprep.subr.bf16.mxu0 0
      %6317 = vmatpush1.bf16.msra.mxu0 0
      %6318 = vmatprep.subr.bf16.mxu0 0
      %6319 = vmatpush1.bf16.msra.mxu0 0
      %6320 = vmatprep.subr.bf16.mxu0 0
      %6321 = vmatpush1.bf16.msra.mxu0 0
      %6322 = vmatprep.subr.bf16.mxu0 0
      %6323 = vmatpush1.bf16.msra.mxu0 0
      %6324 = vmatprep.subr.bf16.mxu0 0
      %6325 = vmatpush1.bf16.msra.mxu0 0
      %6326 = vmatprep.subr.bf16.mxu0 0
      %6327 = vmatpush1.bf16.msra.mxu0 0
      %6328 = vmatprep.subr.bf16.mxu0 0
      %6329 = vmatpush1.bf16.msra.mxu0 0
      %6330 = vmatprep.subr.bf16.mxu0 0
      %6331 = vmatpush1.bf16.msra.mxu0 0
      %6332 = vmatprep.subr.bf16.mxu0 0
      %6333 = vmatpush1.bf16.msra.mxu0 0
      %6334 = vmatprep.subr.bf16.mxu0 0
      %6335 = vmatpush1.bf16.msra.mxu0 0
      %6336 = vmatprep.subr.bf16.mxu0 0
      %6337 = vmatpush1.bf16.msra.mxu0 0
      %6338 = vmatprep.subr.bf16.mxu0 0
      %6339 = vmatpush1.bf16.msra.mxu0 0
      %6340 = vmatprep.subr.bf16.mxu0 0
      %6341 = vmatpush1.bf16.msra.mxu0 0
      %6342 = vmatprep.subr.bf16.mxu0 0
      %6343 = vmatpush1.bf16.msra.mxu0 0
      %6344 = vmatprep.subr.bf16.mxu0 0
      %6345 = vmatpush1.bf16.msra.mxu0 0
      %6346 = vmatprep.mubr.bf16.mxu0 0
      %6347 = vmatmul.mubr.bf16.gmra.mrb[0].mxu0 %v6309
      %v6348 = vpop.f32.mrb[0].mxu0
      %v6349 = vadd.f32 0.0, %v6348
      %v6350 = vpop.f32.mrb[0].mxu0
      %v6351 = vpop.f32.mrb[0].mxu0
      %v6352 = vpop.f32.mrb[0].mxu0
      %6353 = vdwg.mxu0
      %6354 = vrot.lane.b32.xlu0 %v3019, 64
      %v6355 = vpop.permute.xlu0 %6354
      %v6357 = vsel %vm5010, %v5004, 0
      %v6360 = vsel %vm5014, %v6355, 0
      %6362 = vmatprep.subr.bf16.mxu0 0
      %6363 = vmatpush1.bf16.msra.mxu0 %v6360
      %6364 = vmatprep.subr.bf16.mxu0 0
      %6365 = vmatpush1.bf16.msra.mxu0 0
      %6366 = vmatprep.subr.bf16.mxu0 0
      %6367 = vmatpush1.bf16.msra.mxu0 0
      %6368 = vmatprep.subr.bf16.mxu0 0
      %6369 = vmatpush1.bf16.msra.mxu0 0
      %6370 = vmatprep.subr.bf16.mxu0 0
      %6371 = vmatpush1.bf16.msra.mxu0 0
      %6372 = vmatprep.subr.bf16.mxu0 0
      %6373 = vmatpush1.bf16.msra.mxu0 0
      %6374 = vmatprep.subr.bf16.mxu0 0
      %6375 = vmatpush1.bf16.msra.mxu0 0
      %6376 = vmatprep.subr.bf16.mxu0 0
      %6377 = vmatpush1.bf16.msra.mxu0 0
      %6378 = vmatprep.subr.bf16.mxu0 0
      %6379 = vmatpush1.bf16.msra.mxu0 0
      %6380 = vmatprep.subr.bf16.mxu0 0
      %6381 = vmatpush1.bf16.msra.mxu0 0
      %6382 = vmatprep.subr.bf16.mxu0 0
      %6383 = vmatpush1.bf16.msra.mxu0 0
      %6384 = vmatprep.subr.bf16.mxu0 0
      %6385 = vmatpush1.bf16.msra.mxu0 0
      %6386 = vmatprep.subr.bf16.mxu0 0
      %6387 = vmatpush1.bf16.msra.mxu0 0
      %6388 = vmatprep.subr.bf16.mxu0 0
      %6389 = vmatpush1.bf16.msra.mxu0 0
      %6390 = vmatprep.subr.bf16.mxu0 0
      %6391 = vmatpush1.bf16.msra.mxu0 0
      %6392 = vmatprep.subr.bf16.mxu0 0
      %6393 = vmatpush1.bf16.msra.mxu0 0
      %6394 = vmatprep.mubr.bf16.mxu0 0
      %6395 = vmatmul.mubr.bf16.gmra.mrb[0].mxu0 %v6357
      %v6396 = vpop.f32.mrb[0].mxu0
      %v6397 = vadd.f32 0.0, %v6396
      %v6398 = vpop.f32.mrb[0].mxu0
      %v6399 = vpop.f32.mrb[0].mxu0
      %v6400 = vpop.f32.mrb[0].mxu0
      %6401 = vdwg.mxu0
      %6402 = vrot.lane.b32.xlu0 %v3020, 64
      %v6403 = vpop.permute.xlu0 %6402
      %v6405 = vsel %vm5010, %v5005, 0
      %v6408 = vsel %vm5014, %v6403, 0
      %6410 = vmatprep.subr.bf16.mxu0 0
      %6411 = vmatpush1.bf16.msra.mxu0 %v6408
      %6412 = vmatprep.subr.bf16.mxu0 0
      %6413 = vmatpush1.bf16.msra.mxu0 0
      %6414 = vmatprep.subr.bf16.mxu0 0
      %6415 = vmatpush1.bf16.msra.mxu0 0
      %6416 = vmatprep.subr.bf16.mxu0 0
      %6417 = vmatpush1.bf16.msra.mxu0 0
      %6418 = vmatprep.subr.bf16.mxu0 0
      %6419 = vmatpush1.bf16.msra.mxu0 0
      %6420 = vmatprep.subr.bf16.mxu0 0
      %6421 = vmatpush1.bf16.msra.mxu0 0
      %6422 = vmatprep.subr.bf16.mxu0 0
      %6423 = vmatpush1.bf16.msra.mxu0 0
      %6424 = vmatprep.subr.bf16.mxu0 0
      %6425 = vmatpush1.bf16.msra.mxu0 0
      %6426 = vmatprep.subr.bf16.mxu0 0
      %6427 = vmatpush1.bf16.msra.mxu0 0
      %6428 = vmatprep.subr.bf16.mxu0 0
      %6429 = vmatpush1.bf16.msra.mxu0 0
      %6430 = vmatprep.subr.bf16.mxu0 0
      %6431 = vmatpush1.bf16.msra.mxu0 0
      %6432 = vmatprep.subr.bf16.mxu0 0
      %6433 = vmatpush1.bf16.msra.mxu0 0
      %6434 = vmatprep.subr.bf16.mxu0 0
      %6435 = vmatpush1.bf16.msra.mxu0 0
      %6436 = vmatprep.subr.bf16.mxu0 0
      %6437 = vmatpush1.bf16.msra.mxu0 0
      %6438 = vmatprep.subr.bf16.mxu0 0
      %6439 = vmatpush1.bf16.msra.mxu0 0
      %6440 = vmatprep.subr.bf16.mxu0 0
      %6441 = vmatpush1.bf16.msra.mxu0 0
      %6442 = vmatprep.mubr.bf16.mxu0 0
      %6443 = vmatmul.mubr.bf16.gmra.mrb[0].mxu0 %v6405
      %v6444 = vpop.f32.mrb[0].mxu0
      %v6445 = vadd.f32 0.0, %v6444
      %v6446 = vpop.f32.mrb[0].mxu0
      %v6447 = vpop.f32.mrb[0].mxu0
      %v6448 = vpop.f32.mrb[0].mxu0
      %6449 = vdwg.mxu0
      %6450 = vrot.lane.b32.xlu0 %v3021, 64
      %v6451 = vpop.permute.xlu0 %6450
      %v6453 = vsel %vm5010, %v5006, 0
      %v6456 = vsel %vm5014, %v6451, 0
      %6458 = vmatprep.subr.bf16.mxu0 0
      %6459 = vmatpush1.bf16.msra.mxu0 %v6456
      %6460 = vmatprep.subr.bf16.mxu0 0
      %6461 = vmatpush1.bf16.msra.mxu0 0
      %6462 = vmatprep.subr.bf16.mxu0 0
      %6463 = vmatpush1.bf16.msra.mxu0 0
      %6464 = vmatprep.subr.bf16.mxu0 0
      %6465 = vmatpush1.bf16.msra.mxu0 0
      %6466 = vmatprep.subr.bf16.mxu0 0
      %6467 = vmatpush1.bf16.msra.mxu0 0
      %6468 = vmatprep.subr.bf16.mxu0 0
      %6469 = vmatpush1.bf16.msra.mxu0 0
      %6470 = vmatprep.subr.bf16.mxu0 0
      %6471 = vmatpush1.bf16.msra.mxu0 0
      %6472 = vmatprep.subr.bf16.mxu0 0
      %6473 = vmatpush1.bf16.msra.mxu0 0
      %6474 = vmatprep.subr.bf16.mxu0 0
      %6475 = vmatpush1.bf16.msra.mxu0 0
      %6476 = vmatprep.subr.bf16.mxu0 0
      %6477 = vmatpush1.bf16.msra.mxu0 0
      %6478 = vmatprep.subr.bf16.mxu0 0
      %6479 = vmatpush1.bf16.msra.mxu0 0
      %6480 = vmatprep.subr.bf16.mxu0 0
      %6481 = vmatpush1.bf16.msra.mxu0 0
      %6482 = vmatprep.subr.bf16.mxu0 0
      %6483 = vmatpush1.bf16.msra.mxu0 0
      %6484 = vmatprep.subr.bf16.mxu0 0
      %6485 = vmatpush1.bf16.msra.mxu0 0
      %6486 = vmatprep.subr.bf16.mxu0 0
      %6487 = vmatpush1.bf16.msra.mxu0 0
      %6488 = vmatprep.subr.bf16.mxu0 0
      %6489 = vmatpush1.bf16.msra.mxu0 0
      %6490 = vmatprep.mubr.bf16.mxu0 0
      %6491 = vmatmul.mubr.bf16.gmra.mrb[0].mxu0 %v6453
      %v6492 = vpop.f32.mrb[0].mxu0
      %v6493 = vadd.f32 0.0, %v6492
      %v6494 = vpop.f32.mrb[0].mxu0
      %v6495 = vpop.f32.mrb[0].mxu0
      %v6496 = vpop.f32.mrb[0].mxu0
      %6497 = vdwg.mxu0
      %6498 = vrot.lane.b32.xlu0 %v3022, 64
      %v6499 = vpop.permute.xlu0 %6498
      %v6501 = vsel %vm5010, %v5007, 0
      %v6504 = vsel %vm5014, %v6499, 0
      %6506 = vmatprep.subr.bf16.mxu0 0
      %6507 = vmatpush1.bf16.msra.mxu0 %v6504
      %6508 = vmatprep.subr.bf16.mxu0 0
      %6509 = vmatpush1.bf16.msra.mxu0 0
      %6510 = vmatprep.subr.bf16.mxu0 0
      %6511 = vmatpush1.bf16.msra.mxu0 0
      %6512 = vmatprep.subr.bf16.mxu0 0
      %6513 = vmatpush1.bf16.msra.mxu0 0
      %6514 = vmatprep.subr.bf16.mxu0 0
      %6515 = vmatpush1.bf16.msra.mxu0 0
      %6516 = vmatprep.subr.bf16.mxu0 0
      %6517 = vmatpush1.bf16.msra.mxu0 0
      %6518 = vmatprep.subr.bf16.mxu0 0
      %6519 = vmatpush1.bf16.msra.mxu0 0
      %6520 = vmatprep.subr.bf16.mxu0 0
      %6521 = vmatpush1.bf16.msra.mxu0 0
      %6522 = vmatprep.subr.bf16.mxu0 0
      %6523 = vmatpush1.bf16.msra.mxu0 0
      %6524 = vmatprep.subr.bf16.mxu0 0
      %6525 = vmatpush1.bf16.msra.mxu0 0
      %6526 = vmatprep.subr.bf16.mxu0 0
      %6527 = vmatpush1.bf16.msra.mxu0 0
      %6528 = vmatprep.subr.bf16.mxu0 0
      %6529 = vmatpush1.bf16.msra.mxu0 0
      %6530 = vmatprep.subr.bf16.mxu0 0
      %6531 = vmatpush1.bf16.msra.mxu0 0
      %6532 = vmatprep.subr.bf16.mxu0 0
      %6533 = vmatpush1.bf16.msra.mxu0 0
      %6534 = vmatprep.subr.bf16.mxu0 0
      %6535 = vmatpush1.bf16.msra.mxu0 0
      %6536 = vmatprep.subr.bf16.mxu0 0
      %6537 = vmatpush1.bf16.msra.mxu0 0
      %6538 = vmatprep.mubr.bf16.mxu0 0
      %6539 = vmatmul.mubr.bf16.gmra.mrb[0].mxu0 %v6501
      %v6540 = vpop.f32.mrb[0].mxu0
      %v6541 = vadd.f32 0.0, %v6540
      %v6542 = vpop.f32.mrb[0].mxu0
      %v6543 = vpop.f32.mrb[0].mxu0
      %v6544 = vpop.f32.mrb[0].mxu0
      %6545 = vdwg.mxu0
      %6554 = vrot.lane.b32.xlu0 %v5437, 8
      %v6555 = vpop.permute.xlu0 %6554
      %6556 = vrot.lane.b32.xlu0 %v5485, 8
      %v6557 = vpop.permute.xlu0 %6556
      %6558 = vrot.lane.b32.xlu0 %v5533, 8
      %v6559 = vpop.permute.xlu0 %6558
      %6560 = vrot.lane.b32.xlu0 %v5581, 8
      %v6561 = vpop.permute.xlu0 %6560
      %6562 = vrot.lane.b32.xlu0 %v5629, 8
      %v6563 = vpop.permute.xlu0 %6562
      %6564 = vrot.lane.b32.xlu0 %v5677, 8
      %v6565 = vpop.permute.xlu0 %6564
      %6566 = vrot.lane.b32.xlu0 %v5725, 8
      %v6567 = vpop.permute.xlu0 %6566
      %6568 = vrot.lane.b32.xlu0 %v5773, 8
      %v6569 = vpop.permute.xlu0 %6568
      %6586 = vrot.lane.b32.xlu0 %v5821, 16
      %v6587 = vpop.permute.xlu0 %6586
      %6588 = vrot.lane.b32.xlu0 %v5869, 16
      %v6589 = vpop.permute.xlu0 %6588
      %6590 = vrot.lane.b32.xlu0 %v5917, 16
      %v6591 = vpop.permute.xlu0 %6590
      %6592 = vrot.lane.b32.xlu0 %v5965, 16
      %v6593 = vpop.permute.xlu0 %6592
      %6594 = vrot.lane.b32.xlu0 %v6013, 16
      %v6595 = vpop.permute.xlu0 %6594
      %6596 = vrot.lane.b32.xlu0 %v6061, 16
      %v6597 = vpop.permute.xlu0 %6596
      %6598 = vrot.lane.b32.xlu0 %v6109, 16
      %v6599 = vpop.permute.xlu0 %6598
      %6600 = vrot.lane.b32.xlu0 %v6157, 16
      %v6601 = vpop.permute.xlu0 %6600
      %6618 = vrot.lane.b32.xlu0 %v6205, 24
      %v6619 = vpop.permute.xlu0 %6618
      %6620 = vrot.lane.b32.xlu0 %v6253, 24
      %v6621 = vpop.permute.xlu0 %6620
      %6622 = vrot.lane.b32.xlu0 %v6301, 24
      %v6623 = vpop.permute.xlu0 %6622
      %6624 = vrot.lane.b32.xlu0 %v6349, 24
      %v6625 = vpop.permute.xlu0 %6624
      %6626 = vrot.lane.b32.xlu0 %v6397, 24
      %v6627 = vpop.permute.xlu0 %6626
      %6628 = vrot.lane.b32.xlu0 %v6445, 24
      %v6629 = vpop.permute.xlu0 %6628
      %6630 = vrot.lane.b32.xlu0 %v6493, 24
      %v6631 = vpop.permute.xlu0 %6630
      %6632 = vrot.lane.b32.xlu0 %v6541, 24
      %v6633 = vpop.permute.xlu0 %6632
      %v6642 = vsel %vm370, %v5053, %v6555
      %v6643 = vsel %vm370, %v5101, %v6557
      %v6644 = vsel %vm370, %v5149, %v6559
      %v6645 = vsel %vm370, %v5197, %v6561
      %v6646 = vsel %vm370, %v5245, %v6563
      %v6647 = vsel %vm370, %v5293, %v6565
      %v6648 = vsel %vm370, %v5341, %v6567
      %v6649 = vsel %vm370, %v5389, %v6569
      %v6650 = vsel %vm2181, %v6642, %v6587
      %v6651 = vsel %vm2181, %v6643, %v6589
      %v6652 = vsel %vm2181, %v6644, %v6591
      %v6653 = vsel %vm2181, %v6645, %v6593
      %v6654 = vsel %vm2181, %v6646, %v6595
      %v6655 = vsel %vm2181, %v6647, %v6597
      %v6656 = vsel %vm2181, %v6648, %v6599
      %v6657 = vsel %vm2181, %v6649, %v6601
      %v6658 = vsel %vm2186, %v6650, %v6619
      %v6659 = vsel %vm2186, %v6651, %v6621
      %v6660 = vsel %vm2186, %v6652, %v6623
      %v6661 = vsel %vm2186, %v6653, %v6625
      %v6662 = vsel %vm2186, %v6654, %v6627
      %v6663 = vsel %vm2186, %v6655, %v6629
      %v6664 = vsel %vm2186, %v6656, %v6631
      %v6665 = vsel %vm2186, %v6657, %v6633
      %v6674 = vcombine.low %v6658, %v6659
      %v6675 = vcombine.low %v6660, %v6661
      %v6677 = vunpack.c.l.s4 1983009808
      %v6678 = vunpack.c.0.s8 %v6677
      %v6679 = vlaneseq
      %v6680 = vshrl.u32 %v6679, 7
      %v6681 = vsub.s32 %v6678, %v6680
      %v6682 = vrot.slane %v6674, %v6681
      %v6684 = vunpack.c.l.s4 1983009808
      %v6685 = vunpack.c.0.s8 %v6684
      %v6686 = vlaneseq
      %v6687 = vshrl.u32 %v6686, 7
      %v6688 = vsub.s32 %v6685, %v6687
      %v6689 = vrot.slane %v6675, %v6688
      %v6690 = vcombine.low %v6682, %v6689
      %v6691 = vcombine.low %v6662, %v6663
      %v6692 = vcombine.low %v6664, %v6665
      %v6694 = vunpack.c.l.s4 1983009808
      %v6695 = vunpack.c.0.s8 %v6694
      %v6696 = vlaneseq
      %v6697 = vshrl.u32 %v6696, 7
      %v6698 = vsub.s32 %v6695, %v6697
      %v6699 = vrot.slane %v6691, %v6698
      %v6701 = vunpack.c.l.s4 1983009808
      %v6702 = vunpack.c.0.s8 %v6701
      %v6703 = vlaneseq
      %v6704 = vshrl.u32 %v6703, 7
      %v6705 = vsub.s32 %v6702, %v6704
      %v6706 = vrot.slane %v6692, %v6705
      %v6707 = vcombine.low %v6699, %v6706
      %v6710 = vpack.c.bf16 %v6707, %v6690
      %v6711 = vld [vmem:[%s2 + $0x8] sm:$0xf]
      %v6712 = vld [vmem:[%s2 + $0x1c] sm:$0xf]
      %v6713 = vld [vmem:[%s2 + $0x30] sm:$0xf]
      %v6714 = vld [vmem:[%s2 + $0x44] sm:$0xf]
      %v6715 = vld [vmem:[%s4 + $0x4] sm:$0x1]
      %v6717 = vlaneseq
      %v6718 = vshrl.u32 %v6717, 7
      %v6719 = vsub.s32 0, %v6718
      %v6720 = vrot.slane %v6715, %v6719
      %v6726 = vunpack.c.l.b16 %v6711
      %v6727 = vunpack.c.l.b16 %v6712
      %v6728 = vunpack.c.l.b16 %v6713
      %v6729 = vunpack.c.l.b16 %v6714
      %v6730 = vpack.c.b16 %v6727, %v6726
      %v6731 = vpack.c.b16 %v6729, %v6728
      %6732 = vrot.lane.b32.xlu0 %v6730, 32
      %v6733 = vpop.permute.xlu0 %6732
      %6734 = vrot.lane.b32.xlu0 %v6731, 32
      %v6735 = vpop.permute.xlu0 %6734
      %v6739 = vsel %vm255, %v6710, 0
      %6741 = vmatprep.subr.bf16.mxu0 0
      %6742 = vmatpush1.bf16.msra.mxu0 %v6733
      %6743 = vmatprep.subr.bf16.mxu0 0
      %6744 = vmatpush1.bf16.msra.mxu0 %v6735
      %6745 = vmatprep.subr.bf16.mxu0 0
      %6746 = vmatpush1.bf16.msra.mxu0 0
      %6747 = vmatprep.subr.bf16.mxu0 0
      %6748 = vmatpush1.bf16.msra.mxu0 0
      %6749 = vmatprep.subr.bf16.mxu0 0
      %6750 = vmatpush1.bf16.msra.mxu0 0
      %6751 = vmatprep.subr.bf16.mxu0 0
      %6752 = vmatpush1.bf16.msra.mxu0 0
      %6753 = vmatprep.subr.bf16.mxu0 0
      %6754 = vmatpush1.bf16.msra.mxu0 0
      %6755 = vmatprep.subr.bf16.mxu0 0
      %6756 = vmatpush1.bf16.msra.mxu0 0
      %6757 = vmatprep.subr.bf16.mxu0 0
      %6758 = vmatpush1.bf16.msra.mxu0 0
      %6759 = vmatprep.subr.bf16.mxu0 0
      %6760 = vmatpush1.bf16.msra.mxu0 0
      %6761 = vmatprep.subr.bf16.mxu0 0
      %6762 = vmatpush1.bf16.msra.mxu0 0
      %6763 = vmatprep.subr.bf16.mxu0 0
      %6764 = vmatpush1.bf16.msra.mxu0 0
      %6765 = vmatprep.subr.bf16.mxu0 0
      %6766 = vmatpush1.bf16.msra.mxu0 0
      %6767 = vmatprep.subr.bf16.mxu0 0
      %6768 = vmatpush1.bf16.msra.mxu0 0
      %6769 = vmatprep.subr.bf16.mxu0 0
      %6770 = vmatpush1.bf16.msra.mxu0 0
      %6771 = vmatprep.subr.bf16.mxu0 0
      %6772 = vmatpush1.bf16.msra.mxu0 0
      %6773 = vmatprep.mubr.bf16.mxu0 0
      %6774 = vmatmul.mubr.bf16.gmra.mrb[0].mxu0 %v6739
      %v6775 = vpop.f32.mrb[0].mxu0
      %v6776 = vadd.f32 %v6720, %v6775
      %v6777 = vpop.f32.mrb[0].mxu0
      %v6778 = vpop.f32.mrb[0].mxu0
      %v6779 = vadd.f32 %v6720, %v6778
      %v6780 = vpop.f32.mrb[0].mxu0
      %6781 = vdwg.mxu0
      %v6782 = vpack.c.bf16 %v6779, %v6776
      %v6783 = vld [vmem:[%s2 + $0xc] sm:$0xf]
      %v6784 = vld [vmem:[%s2 + $0x20] sm:$0xf]
      %v6785 = vld [vmem:[%s2 + $0x34] sm:$0xf]
      %v6786 = vld [vmem:[%s2 + $0x48] sm:$0xf]
      %v6791 = vunpack.c.l.b16 %v6783
      %v6792 = vunpack.c.l.b16 %v6784
      %v6793 = vunpack.c.l.b16 %v6785
      %v6794 = vunpack.c.l.b16 %v6786
      %v6795 = vpack.c.b16 %v6792, %v6791
      %v6796 = vpack.c.b16 %v6794, %v6793
      %6799 = vrot.lane.b32.xlu0 %v6720, 96
      %v6800 = vpop.permute.xlu0 %6799
      %v6803 = vsel %vm255, %v6782, 0
      %6805 = vmatprep.subr.bf16.mxu0 0
      %6806 = vmatpush1.bf16.msra.mxu0 %v6795
      %6807 = vmatprep.subr.bf16.mxu0 0
      %6808 = vmatpush1.bf16.msra.mxu0 %v6796
      %6809 = vmatprep.subr.bf16.mxu0 0
      %6810 = vmatpush1.bf16.msra.mxu0 0
      %6811 = vmatprep.subr.bf16.mxu0 0
      %6812 = vmatpush1.bf16.msra.mxu0 0
      %6813 = vmatprep.subr.bf16.mxu0 0
      %6814 = vmatpush1.bf16.msra.mxu0 0
      %6815 = vmatprep.subr.bf16.mxu0 0
      %6816 = vmatpush1.bf16.msra.mxu0 0
      %6817 = vmatprep.subr.bf16.mxu0 0
      %6818 = vmatpush1.bf16.msra.mxu0 0
      %6819 = vmatprep.subr.bf16.mxu0 0
      %6820 = vmatpush1.bf16.msra.mxu0 0
      %6821 = vmatprep.subr.bf16.mxu0 0
      %6822 = vmatpush1.bf16.msra.mxu0 0
      %6823 = vmatprep.subr.bf16.mxu0 0
      %6824 = vmatpush1.bf16.msra.mxu0 0
      %6825 = vmatprep.subr.bf16.mxu0 0
      %6826 = vmatpush1.bf16.msra.mxu0 0
      %6827 = vmatprep.subr.bf16.mxu0 0
      %6828 = vmatpush1.bf16.msra.mxu0 0
      %6829 = vmatprep.subr.bf16.mxu0 0
      %6830 = vmatpush1.bf16.msra.mxu0 0
      %6831 = vmatprep.subr.bf16.mxu0 0
      %6832 = vmatpush1.bf16.msra.mxu0 0
      %6833 = vmatprep.subr.bf16.mxu0 0
      %6834 = vmatpush1.bf16.msra.mxu0 0
      %6835 = vmatprep.subr.bf16.mxu0 0
      %6836 = vmatpush1.bf16.msra.mxu0 0
      %6837 = vmatprep.mubr.bf16.mxu0 0
      %6838 = vmatmul.mubr.bf16.gmra.mrb[0].mxu0 %v6803
      %v6839 = vpop.f32.mrb[0].mxu0
      %v6840 = vadd.f32 %v6800, %v6839
      %v6841 = vpop.f32.mrb[0].mxu0
      %v6842 = vpop.f32.mrb[0].mxu0
      %v6843 = vadd.f32 %v6800, %v6842
      %v6844 = vpop.f32.mrb[0].mxu0
      %6845 = vdwg.mxu0
      %v6848 = vcombine.high %v6840, %v6840
      %v6850 = vunpack.c.l.s4 1983009808
      %v6851 = vunpack.c.0.s8 %v6850
      %v6852 = vlaneseq
      %v6853 = vshrl.u32 %v6852, 7
      %v6854 = vsub.s32 %v6851, %v6853
      %v6855 = vrot.slane %v6840, %v6854
      %v6857 = vunpack.c.l.s4 1983009808
      %v6858 = vunpack.c.0.s8 %v6857
      %v6859 = vlaneseq
      %v6860 = vshrl.u32 %v6859, 7
      %v6861 = vsub.s32 %v6858, %v6860
      %v6862 = vrot.slane %v6848, %v6861
      %v6863 = vcombine.high %v6855, %v6855
      %v6864 = vcombine.high %v6862, %v6862
      %v6865 = vcombine.high %v6843, %v6843
      %v6867 = vunpack.c.l.s4 1983009808
      %v6868 = vunpack.c.0.s8 %v6867
      %v6869 = vlaneseq
      %v6870 = vshrl.u32 %v6869, 7
      %v6871 = vsub.s32 %v6868, %v6870
      %v6872 = vrot.slane %v6843, %v6871
      %v6874 = vunpack.c.l.s4 1983009808
      %v6875 = vunpack.c.0.s8 %v6874
      %v6876 = vlaneseq
      %v6877 = vshrl.u32 %v6876, 7
      %v6878 = vsub.s32 %v6875, %v6877
      %v6879 = vrot.slane %v6865, %v6878
      %v6880 = vcombine.high %v6872, %v6872
      %v6881 = vcombine.high %v6879, %v6879
      %6890 = vrot.lane.b32.xlu0 %v6855, 120
      %v6891 = vpop.permute.xlu0 %6890
      %6892 = vrot.lane.b32.xlu0 %v6863, 120
      %v6893 = vpop.permute.xlu0 %6892
      %6894 = vrot.lane.b32.xlu0 %v6862, 120
      %v6895 = vpop.permute.xlu0 %6894
      %6896 = vrot.lane.b32.xlu0 %v6864, 120
      %v6897 = vpop.permute.xlu0 %6896
      %6898 = vrot.lane.b32.xlu0 %v6872, 120
      %v6899 = vpop.permute.xlu0 %6898
      %6900 = vrot.lane.b32.xlu0 %v6880, 120
      %v6901 = vpop.permute.xlu0 %6900
      %6902 = vrot.lane.b32.xlu0 %v6879, 120
      %v6903 = vpop.permute.xlu0 %6902
      %6904 = vrot.lane.b32.xlu0 %v6881, 120
      %v6905 = vpop.permute.xlu0 %6904
      %6914 = vrot.lane.b32.xlu0 %v6855, 112
      %v6915 = vpop.permute.xlu0 %6914
      %6916 = vrot.lane.b32.xlu0 %v6863, 112
      %v6917 = vpop.permute.xlu0 %6916
      %6918 = vrot.lane.b32.xlu0 %v6862, 112
      %v6919 = vpop.permute.xlu0 %6918
      %6920 = vrot.lane.b32.xlu0 %v6864, 112
      %v6921 = vpop.permute.xlu0 %6920
      %6922 = vrot.lane.b32.xlu0 %v6872, 112
      %v6923 = vpop.permute.xlu0 %6922
      %6924 = vrot.lane.b32.xlu0 %v6880, 112
      %v6925 = vpop.permute.xlu0 %6924
      %6926 = vrot.lane.b32.xlu0 %v6879, 112
      %v6927 = vpop.permute.xlu0 %6926
      %6928 = vrot.lane.b32.xlu0 %v6881, 112
      %v6929 = vpop.permute.xlu0 %6928
      %6938 = vrot.lane.b32.xlu0 %v6855, 104
      %v6939 = vpop.permute.xlu0 %6938
      %6940 = vrot.lane.b32.xlu0 %v6863, 104
      %v6941 = vpop.permute.xlu0 %6940
      %6942 = vrot.lane.b32.xlu0 %v6862, 104
      %v6943 = vpop.permute.xlu0 %6942
      %6944 = vrot.lane.b32.xlu0 %v6864, 104
      %v6945 = vpop.permute.xlu0 %6944
      %6946 = vrot.lane.b32.xlu0 %v6872, 104
      %v6947 = vpop.permute.xlu0 %6946
      %6948 = vrot.lane.b32.xlu0 %v6880, 104
      %v6949 = vpop.permute.xlu0 %6948
      %6950 = vrot.lane.b32.xlu0 %v6879, 104
      %v6951 = vpop.permute.xlu0 %6950
      %6952 = vrot.lane.b32.xlu0 %v6881, 104
      %v6953 = vpop.permute.xlu0 %6952
      %v6962 = vpack.c.bf16 %v6855, %v6855
      %v6963 = vpack.c.bf16 %v6863, %v6863
      %v6964 = vpack.c.bf16 %v6862, %v6862
      %v6965 = vpack.c.bf16 %v6864, %v6864
      %v6966 = vpack.c.bf16 %v6872, %v6872
      %v6967 = vpack.c.bf16 %v6880, %v6880
      %v6968 = vpack.c.bf16 %v6879, %v6879
      %v6969 = vpack.c.bf16 %v6881, %v6881
      %v6970 = vpack.c.bf16 %v6891, %v6891
      %v6971 = vpack.c.bf16 %v6893, %v6893
      %v6972 = vpack.c.bf16 %v6895, %v6895
      %v6973 = vpack.c.bf16 %v6897, %v6897
      %v6974 = vpack.c.bf16 %v6899, %v6899
      %v6975 = vpack.c.bf16 %v6901, %v6901
      %v6976 = vpack.c.bf16 %v6903, %v6903
      %v6977 = vpack.c.bf16 %v6905, %v6905
      %v6978 = vpack.c.bf16 %v6915, %v6915
      %v6979 = vpack.c.bf16 %v6917, %v6917
      %v6980 = vpack.c.bf16 %v6919, %v6919
      %v6981 = vpack.c.bf16 %v6921, %v6921
      %v6982 = vpack.c.bf16 %v6923, %v6923
      %v6983 = vpack.c.bf16 %v6925, %v6925
      %v6984 = vpack.c.bf16 %v6927, %v6927
      %v6985 = vpack.c.bf16 %v6929, %v6929
      %v6986 = vpack.c.bf16 %v6939, %v6939
      %v6987 = vpack.c.bf16 %v6941, %v6941
      %v6988 = vpack.c.bf16 %v6943, %v6943
      %v6989 = vpack.c.bf16 %v6945, %v6945
      %v6990 = vpack.c.bf16 %v6947, %v6947
      %v6991 = vpack.c.bf16 %v6949, %v6949
      %v6992 = vpack.c.bf16 %v6951, %v6951
      %v6993 = vpack.c.bf16 %v6953, %v6953
      %6994 = vrot.lane.b32.xlu0 %v2991, 32
      %v6995 = vpop.permute.xlu0 %6994
      %v6997 = vsel %vm370, %v6995, 0
      %v7000 = vsel %vm370, %v6962, 0
      %7002 = vmatprep.subr.bf16.mxu0 0
      %7003 = vmatpush1.bf16.xpose.msra.mxu0 %v7000
      %7004 = vmatprep.subr.bf16.mxu0 0
      %7005 = vmatpush1.bf16.xpose.msra.mxu0 0
      %7006 = vmatprep.subr.bf16.mxu0 0
      %7007 = vmatpush1.bf16.xpose.msra.mxu0 0
      %7008 = vmatprep.subr.bf16.mxu0 0
      %7009 = vmatpush1.bf16.xpose.msra.mxu0 0
      %7010 = vmatprep.subr.bf16.mxu0 0
      %7011 = vmatpush1.bf16.xpose.msra.mxu0 0
      %7012 = vmatprep.subr.bf16.mxu0 0
      %7013 = vmatpush1.bf16.xpose.msra.mxu0 0
      %7014 = vmatprep.subr.bf16.mxu0 0
      %7015 = vmatpush1.bf16.xpose.msra.mxu0 0
      %7016 = vmatprep.subr.bf16.mxu0 0
      %7017 = vmatpush1.bf16.xpose.msra.mxu0 0
      %7018 = vmatprep.subr.bf16.mxu0 0
      %7019 = vmatpush1.bf16.xpose.msra.mxu0 0
      %7020 = vmatprep.subr.bf16.mxu0 0
      %7021 = vmatpush1.bf16.xpose.msra.mxu0 0
      %7022 = vmatprep.subr.bf16.mxu0 0
      %7023 = vmatpush1.bf16.xpose.msra.mxu0 0
      %7024 = vmatprep.subr.bf16.mxu0 0
      %7025 = vmatpush1.bf16.xpose.msra.mxu0 0
      %7026 = vmatprep.subr.bf16.mxu0 0
      %7027 = vmatpush1.bf16.xpose.msra.mxu0 0
      %7028 = vmatprep.subr.bf16.mxu0 0
      %7029 = vmatpush1.bf16.xpose.msra.mxu0 0
      %7030 = vmatprep.subr.bf16.mxu0 0
      %7031 = vmatpush1.bf16.xpose.msra.mxu0 0
      %7032 = vmatprep.subr.bf16.mxu0 0
      %7033 = vmatpush1.bf16.xpose.msra.mxu0 0
      %7034 = vmatprep.mubr.bf16.mxu0 0
      %7035 = vmatmul.mubr.bf16.gmra.mrb[0].mxu0 %v6997
      %v7036 = vpop.f32.mrb[0].mxu0
      %v7037 = vadd.f32 0.0, %v7036
      %v7038 = vpop.f32.mrb[0].mxu0
      %v7039 = vpop.f32.mrb[0].mxu0
      %v7040 = vpop.f32.mrb[0].mxu0
      %7041 = vdwg.mxu0
      %7042 = vrot.lane.b32.xlu0 %v2992, 32
      %v7043 = vpop.permute.xlu0 %7042
      %v7045 = vsel %vm370, %v7043, 0
      %v7048 = vsel %vm370, %v6963, 0
      %7050 = vmatprep.subr.bf16.mxu0 0
      %7051 = vmatpush1.bf16.xpose.msra.mxu0 %v7048
      %7052 = vmatprep.subr.bf16.mxu0 0
      %7053 = vmatpush1.bf16.xpose.msra.mxu0 0
      %7054 = vmatprep.subr.bf16.mxu0 0
      %7055 = vmatpush1.bf16.xpose.msra.mxu0 0
      %7056 = vmatprep.subr.bf16.mxu0 0
      %7057 = vmatpush1.bf16.xpose.msra.mxu0 0
      %7058 = vmatprep.subr.bf16.mxu0 0
      %7059 = vmatpush1.bf16.xpose.msra.mxu0 0
      %7060 = vmatprep.subr.bf16.mxu0 0
      %7061 = vmatpush1.bf16.xpose.msra.mxu0 0
      %7062 = vmatprep.subr.bf16.mxu0 0
      %7063 = vmatpush1.bf16.xpose.msra.mxu0 0
      %7064 = vmatprep.subr.bf16.mxu0 0
      %7065 = vmatpush1.bf16.xpose.msra.mxu0 0
      %7066 = vmatprep.subr.bf16.mxu0 0
      %7067 = vmatpush1.bf16.xpose.msra.mxu0 0
      %7068 = vmatprep.subr.bf16.mxu0 0
      %7069 = vmatpush1.bf16.xpose.msra.mxu0 0
      %7070 = vmatprep.subr.bf16.mxu0 0
      %7071 = vmatpush1.bf16.xpose.msra.mxu0 0
      %7072 = vmatprep.subr.bf16.mxu0 0
      %7073 = vmatpush1.bf16.xpose.msra.mxu0 0
      %7074 = vmatprep.subr.bf16.mxu0 0
      %7075 = vmatpush1.bf16.xpose.msra.mxu0 0
      %7076 = vmatprep.subr.bf16.mxu0 0
      %7077 = vmatpush1.bf16.xpose.msra.mxu0 0
      %7078 = vmatprep.subr.bf16.mxu0 0
      %7079 = vmatpush1.bf16.xpose.msra.mxu0 0
      %7080 = vmatprep.subr.bf16.mxu0 0
      %7081 = vmatpush1.bf16.xpose.msra.mxu0 0
      %7082 = vmatprep.mubr.bf16.mxu0 0
      %7083 = vmatmul.mubr.bf16.gmra.mrb[0].mxu0 %v7045
      %v7084 = vpop.f32.mrb[0].mxu0
      %v7085 = vadd.f32 0.0, %v7084
      %v7086 = vpop.f32.mrb[0].mxu0
      %v7087 = vpop.f32.mrb[0].mxu0
      %v7088 = vpop.f32.mrb[0].mxu0
      %7089 = vdwg.mxu0
      %7090 = vrot.lane.b32.xlu0 %v2993, 32
      %v7091 = vpop.permute.xlu0 %7090
      %v7093 = vsel %vm370, %v7091, 0
      %v7096 = vsel %vm370, %v6964, 0
      %7098 = vmatprep.subr.bf16.mxu0 0
      %7099 = vmatpush1.bf16.xpose.msra.mxu0 %v7096
      %7100 = vmatprep.subr.bf16.mxu0 0
      %7101 = vmatpush1.bf16.xpose.msra.mxu0 0
      %7102 = vmatprep.subr.bf16.mxu0 0
      %7103 = vmatpush1.bf16.xpose.msra.mxu0 0
      %7104 = vmatprep.subr.bf16.mxu0 0
      %7105 = vmatpush1.bf16.xpose.msra.mxu0 0
      %7106 = vmatprep.subr.bf16.mxu0 0
      %7107 = vmatpush1.bf16.xpose.msra.mxu0 0
      %7108 = vmatprep.subr.bf16.mxu0 0
      %7109 = vmatpush1.bf16.xpose.msra.mxu0 0
      %7110 = vmatprep.subr.bf16.mxu0 0
      %7111 = vmatpush1.bf16.xpose.msra.mxu0 0
      %7112 = vmatprep.subr.bf16.mxu0 0
      %7113 = vmatpush1.bf16.xpose.msra.mxu0 0
      %7114 = vmatprep.subr.bf16.mxu0 0
      %7115 = vmatpush1.bf16.xpose.msra.mxu0 0
      %7116 = vmatprep.subr.bf16.mxu0 0
      %7117 = vmatpush1.bf16.xpose.msra.mxu0 0
      %7118 = vmatprep.subr.bf16.mxu0 0
      %7119 = vmatpush1.bf16.xpose.msra.mxu0 0
      %7120 = vmatprep.subr.bf16.mxu0 0
      %7121 = vmatpush1.bf16.xpose.msra.mxu0 0
      %7122 = vmatprep.subr.bf16.mxu0 0
      %7123 = vmatpush1.bf16.xpose.msra.mxu0 0
      %7124 = vmatprep.subr.bf16.mxu0 0
      %7125 = vmatpush1.bf16.xpose.msra.mxu0 0
      %7126 = vmatprep.subr.bf16.mxu0 0
      %7127 = vmatpush1.bf16.xpose.msra.mxu0 0
      %7128 = vmatprep.subr.bf16.mxu0 0
      %7129 = vmatpush1.bf16.xpose.msra.mxu0 0
      %7130 = vmatprep.mubr.bf16.mxu0 0
      %7131 = vmatmul.mubr.bf16.gmra.mrb[0].mxu0 %v7093
      %v7132 = vpop.f32.mrb[0].mxu0
      %v7133 = vadd.f32 0.0, %v7132
      %v7134 = vpop.f32.mrb[0].mxu0
      %v7135 = vpop.f32.mrb[0].mxu0
      %v7136 = vpop.f32.mrb[0].mxu0
      %7137 = vdwg.mxu0
      %7138 = vrot.lane.b32.xlu0 %v2994, 32
      %v7139 = vpop.permute.xlu0 %7138
      %v7141 = vsel %vm370, %v7139, 0
      %v7144 = vsel %vm370, %v6965, 0
      %7146 = vmatprep.subr.bf16.mxu0 0
      %7147 = vmatpush1.bf16.xpose.msra.mxu0 %v7144
      %7148 = vmatprep.subr.bf16.mxu0 0
      %7149 = vmatpush1.bf16.xpose.msra.mxu0 0
      %7150 = vmatprep.subr.bf16.mxu0 0
      %7151 = vmatpush1.bf16.xpose.msra.mxu0 0
      %7152 = vmatprep.subr.bf16.mxu0 0
      %7153 = vmatpush1.bf16.xpose.msra.mxu0 0
      %7154 = vmatprep.subr.bf16.mxu0 0
      %7155 = vmatpush1.bf16.xpose.msra.mxu0 0
      %7156 = vmatprep.subr.bf16.mxu0 0
      %7157 = vmatpush1.bf16.xpose.msra.mxu0 0
      %7158 = vmatprep.subr.bf16.mxu0 0
      %7159 = vmatpush1.bf16.xpose.msra.mxu0 0
      %7160 = vmatprep.subr.bf16.mxu0 0
      %7161 = vmatpush1.bf16.xpose.msra.mxu0 0
      %7162 = vmatprep.subr.bf16.mxu0 0
      %7163 = vmatpush1.bf16.xpose.msra.mxu0 0
      %7164 = vmatprep.subr.bf16.mxu0 0
      %7165 = vmatpush1.bf16.xpose.msra.mxu0 0
      %7166 = vmatprep.subr.bf16.mxu0 0
      %7167 = vmatpush1.bf16.xpose.msra.mxu0 0
      %7168 = vmatprep.subr.bf16.mxu0 0
      %7169 = vmatpush1.bf16.xpose.msra.mxu0 0
      %7170 = vmatprep.subr.bf16.mxu0 0
      %7171 = vmatpush1.bf16.xpose.msra.mxu0 0
      %7172 = vmatprep.subr.bf16.mxu0 0
      %7173 = vmatpush1.bf16.xpose.msra.mxu0 0
      %7174 = vmatprep.subr.bf16.mxu0 0
      %7175 = vmatpush1.bf16.xpose.msra.mxu0 0
      %7176 = vmatprep.subr.bf16.mxu0 0
      %7177 = vmatpush1.bf16.xpose.msra.mxu0 0
      %7178 = vmatprep.mubr.bf16.mxu0 0
      %7179 = vmatmul.mubr.bf16.gmra.mrb[0].mxu0 %v7141
      %v7180 = vpop.f32.mrb[0].mxu0
      %v7181 = vadd.f32 0.0, %v7180
      %v7182 = vpop.f32.mrb[0].mxu0
      %v7183 = vpop.f32.mrb[0].mxu0
      %v7184 = vpop.f32.mrb[0].mxu0
      %7185 = vdwg.mxu0
      %7186 = vrot.lane.b32.xlu0 %v2995, 32
      %v7187 = vpop.permute.xlu0 %7186
      %v7189 = vsel %vm370, %v7187, 0
      %v7192 = vsel %vm370, %v6966, 0
      %7194 = vmatprep.subr.bf16.mxu0 0
      %7195 = vmatpush1.bf16.xpose.msra.mxu0 %v7192
      %7196 = vmatprep.subr.bf16.mxu0 0
      %7197 = vmatpush1.bf16.xpose.msra.mxu0 0
      %7198 = vmatprep.subr.bf16.mxu0 0
      %7199 = vmatpush1.bf16.xpose.msra.mxu0 0
      %7200 = vmatprep.subr.bf16.mxu0 0
      %7201 = vmatpush1.bf16.xpose.msra.mxu0 0
      %7202 = vmatprep.subr.bf16.mxu0 0
      %7203 = vmatpush1.bf16.xpose.msra.mxu0 0
      %7204 = vmatprep.subr.bf16.mxu0 0
      %7205 = vmatpush1.bf16.xpose.msra.mxu0 0
      %7206 = vmatprep.subr.bf16.mxu0 0
      %7207 = vmatpush1.bf16.xpose.msra.mxu0 0
      %7208 = vmatprep.subr.bf16.mxu0 0
      %7209 = vmatpush1.bf16.xpose.msra.mxu0 0
      %7210 = vmatprep.subr.bf16.mxu0 0
      %7211 = vmatpush1.bf16.xpose.msra.mxu0 0
      %7212 = vmatprep.subr.bf16.mxu0 0
      %7213 = vmatpush1.bf16.xpose.msra.mxu0 0
      %7214 = vmatprep.subr.bf16.mxu0 0
      %7215 = vmatpush1.bf16.xpose.msra.mxu0 0
      %7216 = vmatprep.subr.bf16.mxu0 0
      %7217 = vmatpush1.bf16.xpose.msra.mxu0 0
      %7218 = vmatprep.subr.bf16.mxu0 0
      %7219 = vmatpush1.bf16.xpose.msra.mxu0 0
      %7220 = vmatprep.subr.bf16.mxu0 0
      %7221 = vmatpush1.bf16.xpose.msra.mxu0 0
      %7222 = vmatprep.subr.bf16.mxu0 0
      %7223 = vmatpush1.bf16.xpose.msra.mxu0 0
      %7224 = vmatprep.subr.bf16.mxu0 0
      %7225 = vmatpush1.bf16.xpose.msra.mxu0 0
      %7226 = vmatprep.mubr.bf16.mxu0 0
      %7227 = vmatmul.mubr.bf16.gmra.mrb[0].mxu0 %v7189
      %v7228 = vpop.f32.mrb[0].mxu0
      %v7229 = vadd.f32 0.0, %v7228
      %v7230 = vpop.f32.mrb[0].mxu0
      %v7231 = vpop.f32.mrb[0].mxu0
      %v7232 = vpop.f32.mrb[0].mxu0
      %7233 = vdwg.mxu0
      %7234 = vrot.lane.b32.xlu0 %v2996, 32
      %v7235 = vpop.permute.xlu0 %7234
      %v7237 = vsel %vm370, %v7235, 0
      %v7240 = vsel %vm370, %v6967, 0
      %7242 = vmatprep.subr.bf16.mxu0 0
      %7243 = vmatpush1.bf16.xpose.msra.mxu0 %v7240
      %7244 = vmatprep.subr.bf16.mxu0 0
      %7245 = vmatpush1.bf16.xpose.msra.mxu0 0
      %7246 = vmatprep.subr.bf16.mxu0 0
      %7247 = vmatpush1.bf16.xpose.msra.mxu0 0
      %7248 = vmatprep.subr.bf16.mxu0 0
      %7249 = vmatpush1.bf16.xpose.msra.mxu0 0
      %7250 = vmatprep.subr.bf16.mxu0 0
      %7251 = vmatpush1.bf16.xpose.msra.mxu0 0
      %7252 = vmatprep.subr.bf16.mxu0 0
      %7253 = vmatpush1.bf16.xpose.msra.mxu0 0
      %7254 = vmatprep.subr.bf16.mxu0 0
      %7255 = vmatpush1.bf16.xpose.msra.mxu0 0
      %7256 = vmatprep.subr.bf16.mxu0 0
      %7257 = vmatpush1.bf16.xpose.msra.mxu0 0
      %7258 = vmatprep.subr.bf16.mxu0 0
      %7259 = vmatpush1.bf16.xpose.msra.mxu0 0
      %7260 = vmatprep.subr.bf16.mxu0 0
      %7261 = vmatpush1.bf16.xpose.msra.mxu0 0
      %7262 = vmatprep.subr.bf16.mxu0 0
      %7263 = vmatpush1.bf16.xpose.msra.mxu0 0
      %7264 = vmatprep.subr.bf16.mxu0 0
      %7265 = vmatpush1.bf16.xpose.msra.mxu0 0
      %7266 = vmatprep.subr.bf16.mxu0 0
      %7267 = vmatpush1.bf16.xpose.msra.mxu0 0
      %7268 = vmatprep.subr.bf16.mxu0 0
      %7269 = vmatpush1.bf16.xpose.msra.mxu0 0
      %7270 = vmatprep.subr.bf16.mxu0 0
      %7271 = vmatpush1.bf16.xpose.msra.mxu0 0
      %7272 = vmatprep.subr.bf16.mxu0 0
      %7273 = vmatpush1.bf16.xpose.msra.mxu0 0
      %7274 = vmatprep.mubr.bf16.mxu0 0
      %7275 = vmatmul.mubr.bf16.gmra.mrb[0].mxu0 %v7237
      %v7276 = vpop.f32.mrb[0].mxu0
      %v7277 = vadd.f32 0.0, %v7276
      %v7278 = vpop.f32.mrb[0].mxu0
      %v7279 = vpop.f32.mrb[0].mxu0
      %v7280 = vpop.f32.mrb[0].mxu0
      %7281 = vdwg.mxu0
      %7282 = vrot.lane.b32.xlu0 %v2997, 32
      %v7283 = vpop.permute.xlu0 %7282
      %v7285 = vsel %vm370, %v7283, 0
      %v7288 = vsel %vm370, %v6968, 0
      %7290 = vmatprep.subr.bf16.mxu0 0
      %7291 = vmatpush1.bf16.xpose.msra.mxu0 %v7288
      %7292 = vmatprep.subr.bf16.mxu0 0
      %7293 = vmatpush1.bf16.xpose.msra.mxu0 0
      %7294 = vmatprep.subr.bf16.mxu0 0
      %7295 = vmatpush1.bf16.xpose.msra.mxu0 0
      %7296 = vmatprep.subr.bf16.mxu0 0
      %7297 = vmatpush1.bf16.xpose.msra.mxu0 0
      %7298 = vmatprep.subr.bf16.mxu0 0
      %7299 = vmatpush1.bf16.xpose.msra.mxu0 0
      %7300 = vmatprep.subr.bf16.mxu0 0
      %7301 = vmatpush1.bf16.xpose.msra.mxu0 0
      %7302 = vmatprep.subr.bf16.mxu0 0
      %7303 = vmatpush1.bf16.xpose.msra.mxu0 0
      %7304 = vmatprep.subr.bf16.mxu0 0
      %7305 = vmatpush1.bf16.xpose.msra.mxu0 0
      %7306 = vmatprep.subr.bf16.mxu0 0
      %7307 = vmatpush1.bf16.xpose.msra.mxu0 0
      %7308 = vmatprep.subr.bf16.mxu0 0
      %7309 = vmatpush1.bf16.xpose.msra.mxu0 0
      %7310 = vmatprep.subr.bf16.mxu0 0
      %7311 = vmatpush1.bf16.xpose.msra.mxu0 0
      %7312 = vmatprep.subr.bf16.mxu0 0
      %7313 = vmatpush1.bf16.xpose.msra.mxu0 0
      %7314 = vmatprep.subr.bf16.mxu0 0
      %7315 = vmatpush1.bf16.xpose.msra.mxu0 0
      %7316 = vmatprep.subr.bf16.mxu0 0
      %7317 = vmatpush1.bf16.xpose.msra.mxu0 0
      %7318 = vmatprep.subr.bf16.mxu0 0
      %7319 = vmatpush1.bf16.xpose.msra.mxu0 0
      %7320 = vmatprep.subr.bf16.mxu0 0
      %7321 = vmatpush1.bf16.xpose.msra.mxu0 0
      %7322 = vmatprep.mubr.bf16.mxu0 0
      %7323 = vmatmul.mubr.bf16.gmra.mrb[0].mxu0 %v7285
      %v7324 = vpop.f32.mrb[0].mxu0
      %v7325 = vadd.f32 0.0, %v7324
      %v7326 = vpop.f32.mrb[0].mxu0
      %v7327 = vpop.f32.mrb[0].mxu0
      %v7328 = vpop.f32.mrb[0].mxu0
      %7329 = vdwg.mxu0
      %7330 = vrot.lane.b32.xlu0 %v2998, 32
      %v7331 = vpop.permute.xlu0 %7330
      %v7333 = vsel %vm370, %v7331, 0
      %v7336 = vsel %vm370, %v6969, 0
      %7338 = vmatprep.subr.bf16.mxu0 0
      %7339 = vmatpush1.bf16.xpose.msra.mxu0 %v7336
      %7340 = vmatprep.subr.bf16.mxu0 0
      %7341 = vmatpush1.bf16.xpose.msra.mxu0 0
      %7342 = vmatprep.subr.bf16.mxu0 0
      %7343 = vmatpush1.bf16.xpose.msra.mxu0 0
      %7344 = vmatprep.subr.bf16.mxu0 0
      %7345 = vmatpush1.bf16.xpose.msra.mxu0 0
      %7346 = vmatprep.subr.bf16.mxu0 0
      %7347 = vmatpush1.bf16.xpose.msra.mxu0 0
      %7348 = vmatprep.subr.bf16.mxu0 0
      %7349 = vmatpush1.bf16.xpose.msra.mxu0 0
      %7350 = vmatprep.subr.bf16.mxu0 0
      %7351 = vmatpush1.bf16.xpose.msra.mxu0 0
      %7352 = vmatprep.subr.bf16.mxu0 0
      %7353 = vmatpush1.bf16.xpose.msra.mxu0 0
      %7354 = vmatprep.subr.bf16.mxu0 0
      %7355 = vmatpush1.bf16.xpose.msra.mxu0 0
      %7356 = vmatprep.subr.bf16.mxu0 0
      %7357 = vmatpush1.bf16.xpose.msra.mxu0 0
      %7358 = vmatprep.subr.bf16.mxu0 0
      %7359 = vmatpush1.bf16.xpose.msra.mxu0 0
      %7360 = vmatprep.subr.bf16.mxu0 0
      %7361 = vmatpush1.bf16.xpose.msra.mxu0 0
      %7362 = vmatprep.subr.bf16.mxu0 0
      %7363 = vmatpush1.bf16.xpose.msra.mxu0 0
      %7364 = vmatprep.subr.bf16.mxu0 0
      %7365 = vmatpush1.bf16.xpose.msra.mxu0 0
      %7366 = vmatprep.subr.bf16.mxu0 0
      %7367 = vmatpush1.bf16.xpose.msra.mxu0 0
      %7368 = vmatprep.subr.bf16.mxu0 0
      %7369 = vmatpush1.bf16.xpose.msra.mxu0 0
      %7370 = vmatprep.mubr.bf16.mxu0 0
      %7371 = vmatmul.mubr.bf16.gmra.mrb[0].mxu0 %v7333
      %v7372 = vpop.f32.mrb[0].mxu0
      %v7373 = vadd.f32 0.0, %v7372
      %v7374 = vpop.f32.mrb[0].mxu0
      %v7375 = vpop.f32.mrb[0].mxu0
      %v7376 = vpop.f32.mrb[0].mxu0
      %7377 = vdwg.mxu0
      %7378 = vrot.lane.b32.xlu0 %v2999, 32
      %v7379 = vpop.permute.xlu0 %7378
      %v7381 = vsel %vm370, %v7379, 0
      %v7384 = vsel %vm370, %v6970, 0
      %7386 = vmatprep.subr.bf16.mxu0 0
      %7387 = vmatpush1.bf16.xpose.msra.mxu0 %v7384
      %7388 = vmatprep.subr.bf16.mxu0 0
      %7389 = vmatpush1.bf16.xpose.msra.mxu0 0
      %7390 = vmatprep.subr.bf16.mxu0 0
      %7391 = vmatpush1.bf16.xpose.msra.mxu0 0
      %7392 = vmatprep.subr.bf16.mxu0 0
      %7393 = vmatpush1.bf16.xpose.msra.mxu0 0
      %7394 = vmatprep.subr.bf16.mxu0 0
      %7395 = vmatpush1.bf16.xpose.msra.mxu0 0
      %7396 = vmatprep.subr.bf16.mxu0 0
      %7397 = vmatpush1.bf16.xpose.msra.mxu0 0
      %7398 = vmatprep.subr.bf16.mxu0 0
      %7399 = vmatpush1.bf16.xpose.msra.mxu0 0
      %7400 = vmatprep.subr.bf16.mxu0 0
      %7401 = vmatpush1.bf16.xpose.msra.mxu0 0
      %7402 = vmatprep.subr.bf16.mxu0 0
      %7403 = vmatpush1.bf16.xpose.msra.mxu0 0
      %7404 = vmatprep.subr.bf16.mxu0 0
      %7405 = vmatpush1.bf16.xpose.msra.mxu0 0
      %7406 = vmatprep.subr.bf16.mxu0 0
      %7407 = vmatpush1.bf16.xpose.msra.mxu0 0
      %7408 = vmatprep.subr.bf16.mxu0 0
      %7409 = vmatpush1.bf16.xpose.msra.mxu0 0
      %7410 = vmatprep.subr.bf16.mxu0 0
      %7411 = vmatpush1.bf16.xpose.msra.mxu0 0
      %7412 = vmatprep.subr.bf16.mxu0 0
      %7413 = vmatpush1.bf16.xpose.msra.mxu0 0
      %7414 = vmatprep.subr.bf16.mxu0 0
      %7415 = vmatpush1.bf16.xpose.msra.mxu0 0
      %7416 = vmatprep.subr.bf16.mxu0 0
      %7417 = vmatpush1.bf16.xpose.msra.mxu0 0
      %7418 = vmatprep.mubr.bf16.mxu0 0
      %7419 = vmatmul.mubr.bf16.gmra.mrb[0].mxu0 %v7381
      %v7420 = vpop.f32.mrb[0].mxu0
      %v7421 = vadd.f32 0.0, %v7420
      %v7422 = vpop.f32.mrb[0].mxu0
      %v7423 = vpop.f32.mrb[0].mxu0
      %v7424 = vpop.f32.mrb[0].mxu0
      %7425 = vdwg.mxu0
      %7426 = vrot.lane.b32.xlu0 %v3000, 32
      %v7427 = vpop.permute.xlu0 %7426
      %v7429 = vsel %vm370, %v7427, 0
      %v7432 = vsel %vm370, %v6971, 0
      %7434 = vmatprep.subr.bf16.mxu0 0
      %7435 = vmatpush1.bf16.xpose.msra.mxu0 %v7432
      %7436 = vmatprep.subr.bf16.mxu0 0
      %7437 = vmatpush1.bf16.xpose.msra.mxu0 0
      %7438 = vmatprep.subr.bf16.mxu0 0
      %7439 = vmatpush1.bf16.xpose.msra.mxu0 0
      %7440 = vmatprep.subr.bf16.mxu0 0
      %7441 = vmatpush1.bf16.xpose.msra.mxu0 0
      %7442 = vmatprep.subr.bf16.mxu0 0
      %7443 = vmatpush1.bf16.xpose.msra.mxu0 0
      %7444 = vmatprep.subr.bf16.mxu0 0
      %7445 = vmatpush1.bf16.xpose.msra.mxu0 0
      %7446 = vmatprep.subr.bf16.mxu0 0
      %7447 = vmatpush1.bf16.xpose.msra.mxu0 0
      %7448 = vmatprep.subr.bf16.mxu0 0
      %7449 = vmatpush1.bf16.xpose.msra.mxu0 0
      %7450 = vmatprep.subr.bf16.mxu0 0
      %7451 = vmatpush1.bf16.xpose.msra.mxu0 0
      %7452 = vmatprep.subr.bf16.mxu0 0
      %7453 = vmatpush1.bf16.xpose.msra.mxu0 0
      %7454 = vmatprep.subr.bf16.mxu0 0
      %7455 = vmatpush1.bf16.xpose.msra.mxu0 0
      %7456 = vmatprep.subr.bf16.mxu0 0
      %7457 = vmatpush1.bf16.xpose.msra.mxu0 0
      %7458 = vmatprep.subr.bf16.mxu0 0
      %7459 = vmatpush1.bf16.xpose.msra.mxu0 0
      %7460 = vmatprep.subr.bf16.mxu0 0
      %7461 = vmatpush1.bf16.xpose.msra.mxu0 0
      %7462 = vmatprep.subr.bf16.mxu0 0
      %7463 = vmatpush1.bf16.xpose.msra.mxu0 0
      %7464 = vmatprep.subr.bf16.mxu0 0
      %7465 = vmatpush1.bf16.xpose.msra.mxu0 0
      %7466 = vmatprep.mubr.bf16.mxu0 0
      %7467 = vmatmul.mubr.bf16.gmra.mrb[0].mxu0 %v7429
      %v7468 = vpop.f32.mrb[0].mxu0
      %v7469 = vadd.f32 0.0, %v7468
      %v7470 = vpop.f32.mrb[0].mxu0
      %v7471 = vpop.f32.mrb[0].mxu0
      %v7472 = vpop.f32.mrb[0].mxu0
      %7473 = vdwg.mxu0
      %7474 = vrot.lane.b32.xlu0 %v3001, 32
      %v7475 = vpop.permute.xlu0 %7474
      %v7477 = vsel %vm370, %v7475, 0
      %v7480 = vsel %vm370, %v6972, 0
      %7482 = vmatprep.subr.bf16.mxu0 0
      %7483 = vmatpush1.bf16.xpose.msra.mxu0 %v7480
      %7484 = vmatprep.subr.bf16.mxu0 0
      %7485 = vmatpush1.bf16.xpose.msra.mxu0 0
      %7486 = vmatprep.subr.bf16.mxu0 0
      %7487 = vmatpush1.bf16.xpose.msra.mxu0 0
      %7488 = vmatprep.subr.bf16.mxu0 0
      %7489 = vmatpush1.bf16.xpose.msra.mxu0 0
      %7490 = vmatprep.subr.bf16.mxu0 0
      %7491 = vmatpush1.bf16.xpose.msra.mxu0 0
      %7492 = vmatprep.subr.bf16.mxu0 0
      %7493 = vmatpush1.bf16.xpose.msra.mxu0 0
      %7494 = vmatprep.subr.bf16.mxu0 0
      %7495 = vmatpush1.bf16.xpose.msra.mxu0 0
      %7496 = vmatprep.subr.bf16.mxu0 0
      %7497 = vmatpush1.bf16.xpose.msra.mxu0 0
      %7498 = vmatprep.subr.bf16.mxu0 0
      %7499 = vmatpush1.bf16.xpose.msra.mxu0 0
      %7500 = vmatprep.subr.bf16.mxu0 0
      %7501 = vmatpush1.bf16.xpose.msra.mxu0 0
      %7502 = vmatprep.subr.bf16.mxu0 0
      %7503 = vmatpush1.bf16.xpose.msra.mxu0 0
      %7504 = vmatprep.subr.bf16.mxu0 0
      %7505 = vmatpush1.bf16.xpose.msra.mxu0 0
      %7506 = vmatprep.subr.bf16.mxu0 0
      %7507 = vmatpush1.bf16.xpose.msra.mxu0 0
      %7508 = vmatprep.subr.bf16.mxu0 0
      %7509 = vmatpush1.bf16.xpose.msra.mxu0 0
      %7510 = vmatprep.subr.bf16.mxu0 0
      %7511 = vmatpush1.bf16.xpose.msra.mxu0 0
      %7512 = vmatprep.subr.bf16.mxu0 0
      %7513 = vmatpush1.bf16.xpose.msra.mxu0 0
      %7514 = vmatprep.mubr.bf16.mxu0 0
      %7515 = vmatmul.mubr.bf16.gmra.mrb[0].mxu0 %v7477
      %v7516 = vpop.f32.mrb[0].mxu0
      %v7517 = vadd.f32 0.0, %v7516
      %v7518 = vpop.f32.mrb[0].mxu0
      %v7519 = vpop.f32.mrb[0].mxu0
      %v7520 = vpop.f32.mrb[0].mxu0
      %7521 = vdwg.mxu0
      %7522 = vrot.lane.b32.xlu0 %v3002, 32
      %v7523 = vpop.permute.xlu0 %7522
      %v7525 = vsel %vm370, %v7523, 0
      %v7528 = vsel %vm370, %v6973, 0
      %7530 = vmatprep.subr.bf16.mxu0 0
      %7531 = vmatpush1.bf16.xpose.msra.mxu0 %v7528
      %7532 = vmatprep.subr.bf16.mxu0 0
      %7533 = vmatpush1.bf16.xpose.msra.mxu0 0
      %7534 = vmatprep.subr.bf16.mxu0 0
      %7535 = vmatpush1.bf16.xpose.msra.mxu0 0
      %7536 = vmatprep.subr.bf16.mxu0 0
      %7537 = vmatpush1.bf16.xpose.msra.mxu0 0
      %7538 = vmatprep.subr.bf16.mxu0 0
      %7539 = vmatpush1.bf16.xpose.msra.mxu0 0
      %7540 = vmatprep.subr.bf16.mxu0 0
      %7541 = vmatpush1.bf16.xpose.msra.mxu0 0
      %7542 = vmatprep.subr.bf16.mxu0 0
      %7543 = vmatpush1.bf16.xpose.msra.mxu0 0
      %7544 = vmatprep.subr.bf16.mxu0 0
      %7545 = vmatpush1.bf16.xpose.msra.mxu0 0
      %7546 = vmatprep.subr.bf16.mxu0 0
      %7547 = vmatpush1.bf16.xpose.msra.mxu0 0
      %7548 = vmatprep.subr.bf16.mxu0 0
      %7549 = vmatpush1.bf16.xpose.msra.mxu0 0
      %7550 = vmatprep.subr.bf16.mxu0 0
      %7551 = vmatpush1.bf16.xpose.msra.mxu0 0
      %7552 = vmatprep.subr.bf16.mxu0 0
      %7553 = vmatpush1.bf16.xpose.msra.mxu0 0
      %7554 = vmatprep.subr.bf16.mxu0 0
      %7555 = vmatpush1.bf16.xpose.msra.mxu0 0
      %7556 = vmatprep.subr.bf16.mxu0 0
      %7557 = vmatpush1.bf16.xpose.msra.mxu0 0
      %7558 = vmatprep.subr.bf16.mxu0 0
      %7559 = vmatpush1.bf16.xpose.msra.mxu0 0
      %7560 = vmatprep.subr.bf16.mxu0 0
      %7561 = vmatpush1.bf16.xpose.msra.mxu0 0
      %7562 = vmatprep.mubr.bf16.mxu0 0
      %7563 = vmatmul.mubr.bf16.gmra.mrb[0].mxu0 %v7525
      %v7564 = vpop.f32.mrb[0].mxu0
      %v7565 = vadd.f32 0.0, %v7564
      %v7566 = vpop.f32.mrb[0].mxu0
      %v7567 = vpop.f32.mrb[0].mxu0
      %v7568 = vpop.f32.mrb[0].mxu0
      %7569 = vdwg.mxu0
      %7570 = vrot.lane.b32.xlu0 %v3003, 32
      %v7571 = vpop.permute.xlu0 %7570
      %v7573 = vsel %vm370, %v7571, 0
      %v7576 = vsel %vm370, %v6974, 0
      %7578 = vmatprep.subr.bf16.mxu0 0
      %7579 = vmatpush1.bf16.xpose.msra.mxu0 %v7576
      %7580 = vmatprep.subr.bf16.mxu0 0
      %7581 = vmatpush1.bf16.xpose.msra.mxu0 0
      %7582 = vmatprep.subr.bf16.mxu0 0
      %7583 = vmatpush1.bf16.xpose.msra.mxu0 0
      %7584 = vmatprep.subr.bf16.mxu0 0
      %7585 = vmatpush1.bf16.xpose.msra.mxu0 0
      %7586 = vmatprep.subr.bf16.mxu0 0
      %7587 = vmatpush1.bf16.xpose.msra.mxu0 0
      %7588 = vmatprep.subr.bf16.mxu0 0
      %7589 = vmatpush1.bf16.xpose.msra.mxu0 0
      %7590 = vmatprep.subr.bf16.mxu0 0
      %7591 = vmatpush1.bf16.xpose.msra.mxu0 0
      %7592 = vmatprep.subr.bf16.mxu0 0
      %7593 = vmatpush1.bf16.xpose.msra.mxu0 0
      %7594 = vmatprep.subr.bf16.mxu0 0
      %7595 = vmatpush1.bf16.xpose.msra.mxu0 0
      %7596 = vmatprep.subr.bf16.mxu0 0
      %7597 = vmatpush1.bf16.xpose.msra.mxu0 0
      %7598 = vmatprep.subr.bf16.mxu0 0
      %7599 = vmatpush1.bf16.xpose.msra.mxu0 0
      %7600 = vmatprep.subr.bf16.mxu0 0
      %7601 = vmatpush1.bf16.xpose.msra.mxu0 0
      %7602 = vmatprep.subr.bf16.mxu0 0
      %7603 = vmatpush1.bf16.xpose.msra.mxu0 0
      %7604 = vmatprep.subr.bf16.mxu0 0
      %7605 = vmatpush1.bf16.xpose.msra.mxu0 0
      %7606 = vmatprep.subr.bf16.mxu0 0
      %7607 = vmatpush1.bf16.xpose.msra.mxu0 0
      %7608 = vmatprep.subr.bf16.mxu0 0
      %7609 = vmatpush1.bf16.xpose.msra.mxu0 0
      %7610 = vmatprep.mubr.bf16.mxu0 0
      %7611 = vmatmul.mubr.bf16.gmra.mrb[0].mxu0 %v7573
      %v7612 = vpop.f32.mrb[0].mxu0
      %v7613 = vadd.f32 0.0, %v7612
      %v7614 = vpop.f32.mrb[0].mxu0
      %v7615 = vpop.f32.mrb[0].mxu0
      %v7616 = vpop.f32.mrb[0].mxu0
      %7617 = vdwg.mxu0
      %7618 = vrot.lane.b32.xlu0 %v3004, 32
      %v7619 = vpop.permute.xlu0 %7618
      %v7621 = vsel %vm370, %v7619, 0
      %v7624 = vsel %vm370, %v6975, 0
      %7626 = vmatprep.subr.bf16.mxu0 0
      %7627 = vmatpush1.bf16.xpose.msra.mxu0 %v7624
      %7628 = vmatprep.subr.bf16.mxu0 0
      %7629 = vmatpush1.bf16.xpose.msra.mxu0 0
      %7630 = vmatprep.subr.bf16.mxu0 0
      %7631 = vmatpush1.bf16.xpose.msra.mxu0 0
      %7632 = vmatprep.subr.bf16.mxu0 0
      %7633 = vmatpush1.bf16.xpose.msra.mxu0 0
      %7634 = vmatprep.subr.bf16.mxu0 0
      %7635 = vmatpush1.bf16.xpose.msra.mxu0 0
      %7636 = vmatprep.subr.bf16.mxu0 0
      %7637 = vmatpush1.bf16.xpose.msra.mxu0 0
      %7638 = vmatprep.subr.bf16.mxu0 0
      %7639 = vmatpush1.bf16.xpose.msra.mxu0 0
      %7640 = vmatprep.subr.bf16.mxu0 0
      %7641 = vmatpush1.bf16.xpose.msra.mxu0 0
      %7642 = vmatprep.subr.bf16.mxu0 0
      %7643 = vmatpush1.bf16.xpose.msra.mxu0 0
      %7644 = vmatprep.subr.bf16.mxu0 0
      %7645 = vmatpush1.bf16.xpose.msra.mxu0 0
      %7646 = vmatprep.subr.bf16.mxu0 0
      %7647 = vmatpush1.bf16.xpose.msra.mxu0 0
      %7648 = vmatprep.subr.bf16.mxu0 0
      %7649 = vmatpush1.bf16.xpose.msra.mxu0 0
      %7650 = vmatprep.subr.bf16.mxu0 0
      %7651 = vmatpush1.bf16.xpose.msra.mxu0 0
      %7652 = vmatprep.subr.bf16.mxu0 0
      %7653 = vmatpush1.bf16.xpose.msra.mxu0 0
      %7654 = vmatprep.subr.bf16.mxu0 0
      %7655 = vmatpush1.bf16.xpose.msra.mxu0 0
      %7656 = vmatprep.subr.bf16.mxu0 0
      %7657 = vmatpush1.bf16.xpose.msra.mxu0 0
      %7658 = vmatprep.mubr.bf16.mxu0 0
      %7659 = vmatmul.mubr.bf16.gmra.mrb[0].mxu0 %v7621
      %v7660 = vpop.f32.mrb[0].mxu0
      %v7661 = vadd.f32 0.0, %v7660
      %v7662 = vpop.f32.mrb[0].mxu0
      %v7663 = vpop.f32.mrb[0].mxu0
      %v7664 = vpop.f32.mrb[0].mxu0
      %7665 = vdwg.mxu0
      %7666 = vrot.lane.b32.xlu0 %v3005, 32
      %v7667 = vpop.permute.xlu0 %7666
      %v7669 = vsel %vm370, %v7667, 0
      %v7672 = vsel %vm370, %v6976, 0
      %7674 = vmatprep.subr.bf16.mxu0 0
      %7675 = vmatpush1.bf16.xpose.msra.mxu0 %v7672
      %7676 = vmatprep.subr.bf16.mxu0 0
      %7677 = vmatpush1.bf16.xpose.msra.mxu0 0
      %7678 = vmatprep.subr.bf16.mxu0 0
      %7679 = vmatpush1.bf16.xpose.msra.mxu0 0
      %7680 = vmatprep.subr.bf16.mxu0 0
      %7681 = vmatpush1.bf16.xpose.msra.mxu0 0
      %7682 = vmatprep.subr.bf16.mxu0 0
      %7683 = vmatpush1.bf16.xpose.msra.mxu0 0
      %7684 = vmatprep.subr.bf16.mxu0 0
      %7685 = vmatpush1.bf16.xpose.msra.mxu0 0
      %7686 = vmatprep.subr.bf16.mxu0 0
      %7687 = vmatpush1.bf16.xpose.msra.mxu0 0
      %7688 = vmatprep.subr.bf16.mxu0 0
      %7689 = vmatpush1.bf16.xpose.msra.mxu0 0
      %7690 = vmatprep.subr.bf16.mxu0 0
      %7691 = vmatpush1.bf16.xpose.msra.mxu0 0
      %7692 = vmatprep.subr.bf16.mxu0 0
      %7693 = vmatpush1.bf16.xpose.msra.mxu0 0
      %7694 = vmatprep.subr.bf16.mxu0 0
      %7695 = vmatpush1.bf16.xpose.msra.mxu0 0
      %7696 = vmatprep.subr.bf16.mxu0 0
      %7697 = vmatpush1.bf16.xpose.msra.mxu0 0
      %7698 = vmatprep.subr.bf16.mxu0 0
      %7699 = vmatpush1.bf16.xpose.msra.mxu0 0
      %7700 = vmatprep.subr.bf16.mxu0 0
      %7701 = vmatpush1.bf16.xpose.msra.mxu0 0
      %7702 = vmatprep.subr.bf16.mxu0 0
      %7703 = vmatpush1.bf16.xpose.msra.mxu0 0
      %7704 = vmatprep.subr.bf16.mxu0 0
      %7705 = vmatpush1.bf16.xpose.msra.mxu0 0
      %7706 = vmatprep.mubr.bf16.mxu0 0
      %7707 = vmatmul.mubr.bf16.gmra.mrb[0].mxu0 %v7669
      %v7708 = vpop.f32.mrb[0].mxu0
      %v7709 = vadd.f32 0.0, %v7708
      %v7710 = vpop.f32.mrb[0].mxu0
      %v7711 = vpop.f32.mrb[0].mxu0
      %v7712 = vpop.f32.mrb[0].mxu0
      %7713 = vdwg.mxu0
      %7714 = vrot.lane.b32.xlu0 %v3006, 32
      %v7715 = vpop.permute.xlu0 %7714
      %v7717 = vsel %vm370, %v7715, 0
      %v7720 = vsel %vm370, %v6977, 0
      %7722 = vmatprep.subr.bf16.mxu0 0
      %7723 = vmatpush1.bf16.xpose.msra.mxu0 %v7720
      %7724 = vmatprep.subr.bf16.mxu0 0
      %7725 = vmatpush1.bf16.xpose.msra.mxu0 0
      %7726 = vmatprep.subr.bf16.mxu0 0
      %7727 = vmatpush1.bf16.xpose.msra.mxu0 0
      %7728 = vmatprep.subr.bf16.mxu0 0
      %7729 = vmatpush1.bf16.xpose.msra.mxu0 0
      %7730 = vmatprep.subr.bf16.mxu0 0
      %7731 = vmatpush1.bf16.xpose.msra.mxu0 0
      %7732 = vmatprep.subr.bf16.mxu0 0
      %7733 = vmatpush1.bf16.xpose.msra.mxu0 0
      %7734 = vmatprep.subr.bf16.mxu0 0
      %7735 = vmatpush1.bf16.xpose.msra.mxu0 0
      %7736 = vmatprep.subr.bf16.mxu0 0
      %7737 = vmatpush1.bf16.xpose.msra.mxu0 0
      %7738 = vmatprep.subr.bf16.mxu0 0
      %7739 = vmatpush1.bf16.xpose.msra.mxu0 0
      %7740 = vmatprep.subr.bf16.mxu0 0
      %7741 = vmatpush1.bf16.xpose.msra.mxu0 0
      %7742 = vmatprep.subr.bf16.mxu0 0
      %7743 = vmatpush1.bf16.xpose.msra.mxu0 0
      %7744 = vmatprep.subr.bf16.mxu0 0
      %7745 = vmatpush1.bf16.xpose.msra.mxu0 0
      %7746 = vmatprep.subr.bf16.mxu0 0
      %7747 = vmatpush1.bf16.xpose.msra.mxu0 0
      %7748 = vmatprep.subr.bf16.mxu0 0
      %7749 = vmatpush1.bf16.xpose.msra.mxu0 0
      %7750 = vmatprep.subr.bf16.mxu0 0
      %7751 = vmatpush1.bf16.xpose.msra.mxu0 0
      %7752 = vmatprep.subr.bf16.mxu0 0
      %7753 = vmatpush1.bf16.xpose.msra.mxu0 0
      %7754 = vmatprep.mubr.bf16.mxu0 0
      %7755 = vmatmul.mubr.bf16.gmra.mrb[0].mxu0 %v7717
      %v7756 = vpop.f32.mrb[0].mxu0
      %v7757 = vadd.f32 0.0, %v7756
      %v7758 = vpop.f32.mrb[0].mxu0
      %v7759 = vpop.f32.mrb[0].mxu0
      %v7760 = vpop.f32.mrb[0].mxu0
      %7761 = vdwg.mxu0
      %7762 = vrot.lane.b32.xlu0 %v3007, 32
      %v7763 = vpop.permute.xlu0 %7762
      %v7765 = vsel %vm370, %v7763, 0
      %v7768 = vsel %vm370, %v6978, 0
      %7770 = vmatprep.subr.bf16.mxu0 0
      %7771 = vmatpush1.bf16.xpose.msra.mxu0 %v7768
      %7772 = vmatprep.subr.bf16.mxu0 0
      %7773 = vmatpush1.bf16.xpose.msra.mxu0 0
      %7774 = vmatprep.subr.bf16.mxu0 0
      %7775 = vmatpush1.bf16.xpose.msra.mxu0 0
      %7776 = vmatprep.subr.bf16.mxu0 0
      %7777 = vmatpush1.bf16.xpose.msra.mxu0 0
      %7778 = vmatprep.subr.bf16.mxu0 0
      %7779 = vmatpush1.bf16.xpose.msra.mxu0 0
      %7780 = vmatprep.subr.bf16.mxu0 0
      %7781 = vmatpush1.bf16.xpose.msra.mxu0 0
      %7782 = vmatprep.subr.bf16.mxu0 0
      %7783 = vmatpush1.bf16.xpose.msra.mxu0 0
      %7784 = vmatprep.subr.bf16.mxu0 0
      %7785 = vmatpush1.bf16.xpose.msra.mxu0 0
      %7786 = vmatprep.subr.bf16.mxu0 0
      %7787 = vmatpush1.bf16.xpose.msra.mxu0 0
      %7788 = vmatprep.subr.bf16.mxu0 0
      %7789 = vmatpush1.bf16.xpose.msra.mxu0 0
      %7790 = vmatprep.subr.bf16.mxu0 0
      %7791 = vmatpush1.bf16.xpose.msra.mxu0 0
      %7792 = vmatprep.subr.bf16.mxu0 0
      %7793 = vmatpush1.bf16.xpose.msra.mxu0 0
      %7794 = vmatprep.subr.bf16.mxu0 0
      %7795 = vmatpush1.bf16.xpose.msra.mxu0 0
      %7796 = vmatprep.subr.bf16.mxu0 0
      %7797 = vmatpush1.bf16.xpose.msra.mxu0 0
      %7798 = vmatprep.subr.bf16.mxu0 0
      %7799 = vmatpush1.bf16.xpose.msra.mxu0 0
      %7800 = vmatprep.subr.bf16.mxu0 0
      %7801 = vmatpush1.bf16.xpose.msra.mxu0 0
      %7802 = vmatprep.mubr.bf16.mxu0 0
      %7803 = vmatmul.mubr.bf16.gmra.mrb[0].mxu0 %v7765
      %v7804 = vpop.f32.mrb[0].mxu0
      %v7805 = vadd.f32 0.0, %v7804
      %v7806 = vpop.f32.mrb[0].mxu0
      %v7807 = vpop.f32.mrb[0].mxu0
      %v7808 = vpop.f32.mrb[0].mxu0
      %7809 = vdwg.mxu0
      %7810 = vrot.lane.b32.xlu0 %v3008, 32
      %v7811 = vpop.permute.xlu0 %7810
      %v7813 = vsel %vm370, %v7811, 0
      %v7816 = vsel %vm370, %v6979, 0
      %7818 = vmatprep.subr.bf16.mxu0 0
      %7819 = vmatpush1.bf16.xpose.msra.mxu0 %v7816
      %7820 = vmatprep.subr.bf16.mxu0 0
      %7821 = vmatpush1.bf16.xpose.msra.mxu0 0
      %7822 = vmatprep.subr.bf16.mxu0 0
      %7823 = vmatpush1.bf16.xpose.msra.mxu0 0
      %7824 = vmatprep.subr.bf16.mxu0 0
      %7825 = vmatpush1.bf16.xpose.msra.mxu0 0
      %7826 = vmatprep.subr.bf16.mxu0 0
      %7827 = vmatpush1.bf16.xpose.msra.mxu0 0
      %7828 = vmatprep.subr.bf16.mxu0 0
      %7829 = vmatpush1.bf16.xpose.msra.mxu0 0
      %7830 = vmatprep.subr.bf16.mxu0 0
      %7831 = vmatpush1.bf16.xpose.msra.mxu0 0
      %7832 = vmatprep.subr.bf16.mxu0 0
      %7833 = vmatpush1.bf16.xpose.msra.mxu0 0
      %7834 = vmatprep.subr.bf16.mxu0 0
      %7835 = vmatpush1.bf16.xpose.msra.mxu0 0
      %7836 = vmatprep.subr.bf16.mxu0 0
      %7837 = vmatpush1.bf16.xpose.msra.mxu0 0
      %7838 = vmatprep.subr.bf16.mxu0 0
      %7839 = vmatpush1.bf16.xpose.msra.mxu0 0
      %7840 = vmatprep.subr.bf16.mxu0 0
      %7841 = vmatpush1.bf16.xpose.msra.mxu0 0
      %7842 = vmatprep.subr.bf16.mxu0 0
      %7843 = vmatpush1.bf16.xpose.msra.mxu0 0
      %7844 = vmatprep.subr.bf16.mxu0 0
      %7845 = vmatpush1.bf16.xpose.msra.mxu0 0
      %7846 = vmatprep.subr.bf16.mxu0 0
      %7847 = vmatpush1.bf16.xpose.msra.mxu0 0
      %7848 = vmatprep.subr.bf16.mxu0 0
      %7849 = vmatpush1.bf16.xpose.msra.mxu0 0
      %7850 = vmatprep.mubr.bf16.mxu0 0
      %7851 = vmatmul.mubr.bf16.gmra.mrb[0].mxu0 %v7813
      %v7852 = vpop.f32.mrb[0].mxu0
      %v7853 = vadd.f32 0.0, %v7852
      %v7854 = vpop.f32.mrb[0].mxu0
      %v7855 = vpop.f32.mrb[0].mxu0
      %v7856 = vpop.f32.mrb[0].mxu0
      %7857 = vdwg.mxu0
      %7858 = vrot.lane.b32.xlu0 %v3009, 32
      %v7859 = vpop.permute.xlu0 %7858
      %v7861 = vsel %vm370, %v7859, 0
      %v7864 = vsel %vm370, %v6980, 0
      %7866 = vmatprep.subr.bf16.mxu0 0
      %7867 = vmatpush1.bf16.xpose.msra.mxu0 %v7864
      %7868 = vmatprep.subr.bf16.mxu0 0
      %7869 = vmatpush1.bf16.xpose.msra.mxu0 0
      %7870 = vmatprep.subr.bf16.mxu0 0
      %7871 = vmatpush1.bf16.xpose.msra.mxu0 0
      %7872 = vmatprep.subr.bf16.mxu0 0
      %7873 = vmatpush1.bf16.xpose.msra.mxu0 0
      %7874 = vmatprep.subr.bf16.mxu0 0
      %7875 = vmatpush1.bf16.xpose.msra.mxu0 0
      %7876 = vmatprep.subr.bf16.mxu0 0
      %7877 = vmatpush1.bf16.xpose.msra.mxu0 0
      %7878 = vmatprep.subr.bf16.mxu0 0
      %7879 = vmatpush1.bf16.xpose.msra.mxu0 0
      %7880 = vmatprep.subr.bf16.mxu0 0
      %7881 = vmatpush1.bf16.xpose.msra.mxu0 0
      %7882 = vmatprep.subr.bf16.mxu0 0
      %7883 = vmatpush1.bf16.xpose.msra.mxu0 0
      %7884 = vmatprep.subr.bf16.mxu0 0
      %7885 = vmatpush1.bf16.xpose.msra.mxu0 0
      %7886 = vmatprep.subr.bf16.mxu0 0
      %7887 = vmatpush1.bf16.xpose.msra.mxu0 0
      %7888 = vmatprep.subr.bf16.mxu0 0
      %7889 = vmatpush1.bf16.xpose.msra.mxu0 0
      %7890 = vmatprep.subr.bf16.mxu0 0
      %7891 = vmatpush1.bf16.xpose.msra.mxu0 0
      %7892 = vmatprep.subr.bf16.mxu0 0
      %7893 = vmatpush1.bf16.xpose.msra.mxu0 0
      %7894 = vmatprep.subr.bf16.mxu0 0
      %7895 = vmatpush1.bf16.xpose.msra.mxu0 0
      %7896 = vmatprep.subr.bf16.mxu0 0
      %7897 = vmatpush1.bf16.xpose.msra.mxu0 0
      %7898 = vmatprep.mubr.bf16.mxu0 0
      %7899 = vmatmul.mubr.bf16.gmra.mrb[0].mxu0 %v7861
      %v7900 = vpop.f32.mrb[0].mxu0
      %v7901 = vadd.f32 0.0, %v7900
      %v7902 = vpop.f32.mrb[0].mxu0
      %v7903 = vpop.f32.mrb[0].mxu0
      %v7904 = vpop.f32.mrb[0].mxu0
      %7905 = vdwg.mxu0
      %7906 = vrot.lane.b32.xlu0 %v3010, 32
      %v7907 = vpop.permute.xlu0 %7906
      %v7909 = vsel %vm370, %v7907, 0
      %v7912 = vsel %vm370, %v6981, 0
      %7914 = vmatprep.subr.bf16.mxu0 0
      %7915 = vmatpush1.bf16.xpose.msra.mxu0 %v7912
      %7916 = vmatprep.subr.bf16.mxu0 0
      %7917 = vmatpush1.bf16.xpose.msra.mxu0 0
      %7918 = vmatprep.subr.bf16.mxu0 0
      %7919 = vmatpush1.bf16.xpose.msra.mxu0 0
      %7920 = vmatprep.subr.bf16.mxu0 0
      %7921 = vmatpush1.bf16.xpose.msra.mxu0 0
      %7922 = vmatprep.subr.bf16.mxu0 0
      %7923 = vmatpush1.bf16.xpose.msra.mxu0 0
      %7924 = vmatprep.subr.bf16.mxu0 0
      %7925 = vmatpush1.bf16.xpose.msra.mxu0 0
      %7926 = vmatprep.subr.bf16.mxu0 0
      %7927 = vmatpush1.bf16.xpose.msra.mxu0 0
      %7928 = vmatprep.subr.bf16.mxu0 0
      %7929 = vmatpush1.bf16.xpose.msra.mxu0 0
      %7930 = vmatprep.subr.bf16.mxu0 0
      %7931 = vmatpush1.bf16.xpose.msra.mxu0 0
      %7932 = vmatprep.subr.bf16.mxu0 0
      %7933 = vmatpush1.bf16.xpose.msra.mxu0 0
      %7934 = vmatprep.subr.bf16.mxu0 0
      %7935 = vmatpush1.bf16.xpose.msra.mxu0 0
      %7936 = vmatprep.subr.bf16.mxu0 0
      %7937 = vmatpush1.bf16.xpose.msra.mxu0 0
      %7938 = vmatprep.subr.bf16.mxu0 0
      %7939 = vmatpush1.bf16.xpose.msra.mxu0 0
      %7940 = vmatprep.subr.bf16.mxu0 0
      %7941 = vmatpush1.bf16.xpose.msra.mxu0 0
      %7942 = vmatprep.subr.bf16.mxu0 0
      %7943 = vmatpush1.bf16.xpose.msra.mxu0 0
      %7944 = vmatprep.subr.bf16.mxu0 0
      %7945 = vmatpush1.bf16.xpose.msra.mxu0 0
      %7946 = vmatprep.mubr.bf16.mxu0 0
      %7947 = vmatmul.mubr.bf16.gmra.mrb[0].mxu0 %v7909
      %v7948 = vpop.f32.mrb[0].mxu0
      %v7949 = vadd.f32 0.0, %v7948
      %v7950 = vpop.f32.mrb[0].mxu0
      %v7951 = vpop.f32.mrb[0].mxu0
      %v7952 = vpop.f32.mrb[0].mxu0
      %7953 = vdwg.mxu0
      %7954 = vrot.lane.b32.xlu0 %v3011, 32
      %v7955 = vpop.permute.xlu0 %7954
      %v7957 = vsel %vm370, %v7955, 0
      %v7960 = vsel %vm370, %v6982, 0
      %7962 = vmatprep.subr.bf16.mxu0 0
      %7963 = vmatpush1.bf16.xpose.msra.mxu0 %v7960
      %7964 = vmatprep.subr.bf16.mxu0 0
      %7965 = vmatpush1.bf16.xpose.msra.mxu0 0
      %7966 = vmatprep.subr.bf16.mxu0 0
      %7967 = vmatpush1.bf16.xpose.msra.mxu0 0
      %7968 = vmatprep.subr.bf16.mxu0 0
      %7969 = vmatpush1.bf16.xpose.msra.mxu0 0
      %7970 = vmatprep.subr.bf16.mxu0 0
      %7971 = vmatpush1.bf16.xpose.msra.mxu0 0
      %7972 = vmatprep.subr.bf16.mxu0 0
      %7973 = vmatpush1.bf16.xpose.msra.mxu0 0
      %7974 = vmatprep.subr.bf16.mxu0 0
      %7975 = vmatpush1.bf16.xpose.msra.mxu0 0
      %7976 = vmatprep.subr.bf16.mxu0 0
      %7977 = vmatpush1.bf16.xpose.msra.mxu0 0
      %7978 = vmatprep.subr.bf16.mxu0 0
      %7979 = vmatpush1.bf16.xpose.msra.mxu0 0
      %7980 = vmatprep.subr.bf16.mxu0 0
      %7981 = vmatpush1.bf16.xpose.msra.mxu0 0
      %7982 = vmatprep.subr.bf16.mxu0 0
      %7983 = vmatpush1.bf16.xpose.msra.mxu0 0
      %7984 = vmatprep.subr.bf16.mxu0 0
      %7985 = vmatpush1.bf16.xpose.msra.mxu0 0
      %7986 = vmatprep.subr.bf16.mxu0 0
      %7987 = vmatpush1.bf16.xpose.msra.mxu0 0
      %7988 = vmatprep.subr.bf16.mxu0 0
      %7989 = vmatpush1.bf16.xpose.msra.mxu0 0
      %7990 = vmatprep.subr.bf16.mxu0 0
      %7991 = vmatpush1.bf16.xpose.msra.mxu0 0
      %7992 = vmatprep.subr.bf16.mxu0 0
      %7993 = vmatpush1.bf16.xpose.msra.mxu0 0
      %7994 = vmatprep.mubr.bf16.mxu0 0
      %7995 = vmatmul.mubr.bf16.gmra.mrb[0].mxu0 %v7957
      %v7996 = vpop.f32.mrb[0].mxu0
      %v7997 = vadd.f32 0.0, %v7996
      %v7998 = vpop.f32.mrb[0].mxu0
      %v7999 = vpop.f32.mrb[0].mxu0
      %v8000 = vpop.f32.mrb[0].mxu0
      %8001 = vdwg.mxu0
      %8002 = vrot.lane.b32.xlu0 %v3012, 32
      %v8003 = vpop.permute.xlu0 %8002
      %v8005 = vsel %vm370, %v8003, 0
      %v8008 = vsel %vm370, %v6983, 0
      %8010 = vmatprep.subr.bf16.mxu0 0
      %8011 = vmatpush1.bf16.xpose.msra.mxu0 %v8008
      %8012 = vmatprep.subr.bf16.mxu0 0
      %8013 = vmatpush1.bf16.xpose.msra.mxu0 0
      %8014 = vmatprep.subr.bf16.mxu0 0
      %8015 = vmatpush1.bf16.xpose.msra.mxu0 0
      %8016 = vmatprep.subr.bf16.mxu0 0
      %8017 = vmatpush1.bf16.xpose.msra.mxu0 0
      %8018 = vmatprep.subr.bf16.mxu0 0
      %8019 = vmatpush1.bf16.xpose.msra.mxu0 0
      %8020 = vmatprep.subr.bf16.mxu0 0
      %8021 = vmatpush1.bf16.xpose.msra.mxu0 0
      %8022 = vmatprep.subr.bf16.mxu0 0
      %8023 = vmatpush1.bf16.xpose.msra.mxu0 0
      %8024 = vmatprep.subr.bf16.mxu0 0
      %8025 = vmatpush1.bf16.xpose.msra.mxu0 0
      %8026 = vmatprep.subr.bf16.mxu0 0
      %8027 = vmatpush1.bf16.xpose.msra.mxu0 0
      %8028 = vmatprep.subr.bf16.mxu0 0
      %8029 = vmatpush1.bf16.xpose.msra.mxu0 0
      %8030 = vmatprep.subr.bf16.mxu0 0
      %8031 = vmatpush1.bf16.xpose.msra.mxu0 0
      %8032 = vmatprep.subr.bf16.mxu0 0
      %8033 = vmatpush1.bf16.xpose.msra.mxu0 0
      %8034 = vmatprep.subr.bf16.mxu0 0
      %8035 = vmatpush1.bf16.xpose.msra.mxu0 0
      %8036 = vmatprep.subr.bf16.mxu0 0
      %8037 = vmatpush1.bf16.xpose.msra.mxu0 0
      %8038 = vmatprep.subr.bf16.mxu0 0
      %8039 = vmatpush1.bf16.xpose.msra.mxu0 0
      %8040 = vmatprep.subr.bf16.mxu0 0
      %8041 = vmatpush1.bf16.xpose.msra.mxu0 0
      %8042 = vmatprep.mubr.bf16.mxu0 0
      %8043 = vmatmul.mubr.bf16.gmra.mrb[0].mxu0 %v8005
      %v8044 = vpop.f32.mrb[0].mxu0
      %v8045 = vadd.f32 0.0, %v8044
      %v8046 = vpop.f32.mrb[0].mxu0
      %v8047 = vpop.f32.mrb[0].mxu0
      %v8048 = vpop.f32.mrb[0].mxu0
      %8049 = vdwg.mxu0
      %8050 = vrot.lane.b32.xlu0 %v3013, 32
      %v8051 = vpop.permute.xlu0 %8050
      %v8053 = vsel %vm370, %v8051, 0
      %v8056 = vsel %vm370, %v6984, 0
      %8058 = vmatprep.subr.bf16.mxu0 0
      %8059 = vmatpush1.bf16.xpose.msra.mxu0 %v8056
      %8060 = vmatprep.subr.bf16.mxu0 0
      %8061 = vmatpush1.bf16.xpose.msra.mxu0 0
      %8062 = vmatprep.subr.bf16.mxu0 0
      %8063 = vmatpush1.bf16.xpose.msra.mxu0 0
      %8064 = vmatprep.subr.bf16.mxu0 0
      %8065 = vmatpush1.bf16.xpose.msra.mxu0 0
      %8066 = vmatprep.subr.bf16.mxu0 0
      %8067 = vmatpush1.bf16.xpose.msra.mxu0 0
      %8068 = vmatprep.subr.bf16.mxu0 0
      %8069 = vmatpush1.bf16.xpose.msra.mxu0 0
      %8070 = vmatprep.subr.bf16.mxu0 0
      %8071 = vmatpush1.bf16.xpose.msra.mxu0 0
      %8072 = vmatprep.subr.bf16.mxu0 0
      %8073 = vmatpush1.bf16.xpose.msra.mxu0 0
      %8074 = vmatprep.subr.bf16.mxu0 0
      %8075 = vmatpush1.bf16.xpose.msra.mxu0 0
      %8076 = vmatprep.subr.bf16.mxu0 0
      %8077 = vmatpush1.bf16.xpose.msra.mxu0 0
      %8078 = vmatprep.subr.bf16.mxu0 0
      %8079 = vmatpush1.bf16.xpose.msra.mxu0 0
      %8080 = vmatprep.subr.bf16.mxu0 0
      %8081 = vmatpush1.bf16.xpose.msra.mxu0 0
      %8082 = vmatprep.subr.bf16.mxu0 0
      %8083 = vmatpush1.bf16.xpose.msra.mxu0 0
      %8084 = vmatprep.subr.bf16.mxu0 0
      %8085 = vmatpush1.bf16.xpose.msra.mxu0 0
      %8086 = vmatprep.subr.bf16.mxu0 0
      %8087 = vmatpush1.bf16.xpose.msra.mxu0 0
      %8088 = vmatprep.subr.bf16.mxu0 0
      %8089 = vmatpush1.bf16.xpose.msra.mxu0 0
      %8090 = vmatprep.mubr.bf16.mxu0 0
      %8091 = vmatmul.mubr.bf16.gmra.mrb[0].mxu0 %v8053
      %v8092 = vpop.f32.mrb[0].mxu0
      %v8093 = vadd.f32 0.0, %v8092
      %v8094 = vpop.f32.mrb[0].mxu0
      %v8095 = vpop.f32.mrb[0].mxu0
      %v8096 = vpop.f32.mrb[0].mxu0
      %8097 = vdwg.mxu0
      %8098 = vrot.lane.b32.xlu0 %v3014, 32
      %v8099 = vpop.permute.xlu0 %8098
      %v8101 = vsel %vm370, %v8099, 0
      %v8104 = vsel %vm370, %v6985, 0
      %8106 = vmatprep.subr.bf16.mxu0 0
      %8107 = vmatpush1.bf16.xpose.msra.mxu0 %v8104
      %8108 = vmatprep.subr.bf16.mxu0 0
      %8109 = vmatpush1.bf16.xpose.msra.mxu0 0
      %8110 = vmatprep.subr.bf16.mxu0 0
      %8111 = vmatpush1.bf16.xpose.msra.mxu0 0
      %8112 = vmatprep.subr.bf16.mxu0 0
      %8113 = vmatpush1.bf16.xpose.msra.mxu0 0
      %8114 = vmatprep.subr.bf16.mxu0 0
      %8115 = vmatpush1.bf16.xpose.msra.mxu0 0
      %8116 = vmatprep.subr.bf16.mxu0 0
      %8117 = vmatpush1.bf16.xpose.msra.mxu0 0
      %8118 = vmatprep.subr.bf16.mxu0 0
      %8119 = vmatpush1.bf16.xpose.msra.mxu0 0
      %8120 = vmatprep.subr.bf16.mxu0 0
      %8121 = vmatpush1.bf16.xpose.msra.mxu0 0
      %8122 = vmatprep.subr.bf16.mxu0 0
      %8123 = vmatpush1.bf16.xpose.msra.mxu0 0
      %8124 = vmatprep.subr.bf16.mxu0 0
      %8125 = vmatpush1.bf16.xpose.msra.mxu0 0
      %8126 = vmatprep.subr.bf16.mxu0 0
      %8127 = vmatpush1.bf16.xpose.msra.mxu0 0
      %8128 = vmatprep.subr.bf16.mxu0 0
      %8129 = vmatpush1.bf16.xpose.msra.mxu0 0
      %8130 = vmatprep.subr.bf16.mxu0 0
      %8131 = vmatpush1.bf16.xpose.msra.mxu0 0
      %8132 = vmatprep.subr.bf16.mxu0 0
      %8133 = vmatpush1.bf16.xpose.msra.mxu0 0
      %8134 = vmatprep.subr.bf16.mxu0 0
      %8135 = vmatpush1.bf16.xpose.msra.mxu0 0
      %8136 = vmatprep.subr.bf16.mxu0 0
      %8137 = vmatpush1.bf16.xpose.msra.mxu0 0
      %8138 = vmatprep.mubr.bf16.mxu0 0
      %8139 = vmatmul.mubr.bf16.gmra.mrb[0].mxu0 %v8101
      %v8140 = vpop.f32.mrb[0].mxu0
      %v8141 = vadd.f32 0.0, %v8140
      %v8142 = vpop.f32.mrb[0].mxu0
      %v8143 = vpop.f32.mrb[0].mxu0
      %v8144 = vpop.f32.mrb[0].mxu0
      %8145 = vdwg.mxu0
      %8146 = vrot.lane.b32.xlu0 %v3015, 32
      %v8147 = vpop.permute.xlu0 %8146
      %v8149 = vsel %vm370, %v8147, 0
      %v8152 = vsel %vm370, %v6986, 0
      %8154 = vmatprep.subr.bf16.mxu0 0
      %8155 = vmatpush1.bf16.xpose.msra.mxu0 %v8152
      %8156 = vmatprep.subr.bf16.mxu0 0
      %8157 = vmatpush1.bf16.xpose.msra.mxu0 0
      %8158 = vmatprep.subr.bf16.mxu0 0
      %8159 = vmatpush1.bf16.xpose.msra.mxu0 0
      %8160 = vmatprep.subr.bf16.mxu0 0
      %8161 = vmatpush1.bf16.xpose.msra.mxu0 0
      %8162 = vmatprep.subr.bf16.mxu0 0
      %8163 = vmatpush1.bf16.xpose.msra.mxu0 0
      %8164 = vmatprep.subr.bf16.mxu0 0
      %8165 = vmatpush1.bf16.xpose.msra.mxu0 0
      %8166 = vmatprep.subr.bf16.mxu0 0
      %8167 = vmatpush1.bf16.xpose.msra.mxu0 0
      %8168 = vmatprep.subr.bf16.mxu0 0
      %8169 = vmatpush1.bf16.xpose.msra.mxu0 0
      %8170 = vmatprep.subr.bf16.mxu0 0
      %8171 = vmatpush1.bf16.xpose.msra.mxu0 0
      %8172 = vmatprep.subr.bf16.mxu0 0
      %8173 = vmatpush1.bf16.xpose.msra.mxu0 0
      %8174 = vmatprep.subr.bf16.mxu0 0
      %8175 = vmatpush1.bf16.xpose.msra.mxu0 0
      %8176 = vmatprep.subr.bf16.mxu0 0
      %8177 = vmatpush1.bf16.xpose.msra.mxu0 0
      %8178 = vmatprep.subr.bf16.mxu0 0
      %8179 = vmatpush1.bf16.xpose.msra.mxu0 0
      %8180 = vmatprep.subr.bf16.mxu0 0
      %8181 = vmatpush1.bf16.xpose.msra.mxu0 0
      %8182 = vmatprep.subr.bf16.mxu0 0
      %8183 = vmatpush1.bf16.xpose.msra.mxu0 0
      %8184 = vmatprep.subr.bf16.mxu0 0
      %8185 = vmatpush1.bf16.xpose.msra.mxu0 0
      %8186 = vmatprep.mubr.bf16.mxu0 0
      %8187 = vmatmul.mubr.bf16.gmra.mrb[0].mxu0 %v8149
      %v8188 = vpop.f32.mrb[0].mxu0
      %v8189 = vadd.f32 0.0, %v8188
      %v8190 = vpop.f32.mrb[0].mxu0
      %v8191 = vpop.f32.mrb[0].mxu0
      %v8192 = vpop.f32.mrb[0].mxu0
      %8193 = vdwg.mxu0
      %8194 = vrot.lane.b32.xlu0 %v3016, 32
      %v8195 = vpop.permute.xlu0 %8194
      %v8197 = vsel %vm370, %v8195, 0
      %v8200 = vsel %vm370, %v6987, 0
      %8202 = vmatprep.subr.bf16.mxu0 0
      %8203 = vmatpush1.bf16.xpose.msra.mxu0 %v8200
      %8204 = vmatprep.subr.bf16.mxu0 0
      %8205 = vmatpush1.bf16.xpose.msra.mxu0 0
      %8206 = vmatprep.subr.bf16.mxu0 0
      %8207 = vmatpush1.bf16.xpose.msra.mxu0 0
      %8208 = vmatprep.subr.bf16.mxu0 0
      %8209 = vmatpush1.bf16.xpose.msra.mxu0 0
      %8210 = vmatprep.subr.bf16.mxu0 0
      %8211 = vmatpush1.bf16.xpose.msra.mxu0 0
      %8212 = vmatprep.subr.bf16.mxu0 0
      %8213 = vmatpush1.bf16.xpose.msra.mxu0 0
      %8214 = vmatprep.subr.bf16.mxu0 0
      %8215 = vmatpush1.bf16.xpose.msra.mxu0 0
      %8216 = vmatprep.subr.bf16.mxu0 0
      %8217 = vmatpush1.bf16.xpose.msra.mxu0 0
      %8218 = vmatprep.subr.bf16.mxu0 0
      %8219 = vmatpush1.bf16.xpose.msra.mxu0 0
      %8220 = vmatprep.subr.bf16.mxu0 0
      %8221 = vmatpush1.bf16.xpose.msra.mxu0 0
      %8222 = vmatprep.subr.bf16.mxu0 0
      %8223 = vmatpush1.bf16.xpose.msra.mxu0 0
      %8224 = vmatprep.subr.bf16.mxu0 0
      %8225 = vmatpush1.bf16.xpose.msra.mxu0 0
      %8226 = vmatprep.subr.bf16.mxu0 0
      %8227 = vmatpush1.bf16.xpose.msra.mxu0 0
      %8228 = vmatprep.subr.bf16.mxu0 0
      %8229 = vmatpush1.bf16.xpose.msra.mxu0 0
      %8230 = vmatprep.subr.bf16.mxu0 0
      %8231 = vmatpush1.bf16.xpose.msra.mxu0 0
      %8232 = vmatprep.subr.bf16.mxu0 0
      %8233 = vmatpush1.bf16.xpose.msra.mxu0 0
      %8234 = vmatprep.mubr.bf16.mxu0 0
      %8235 = vmatmul.mubr.bf16.gmra.mrb[0].mxu0 %v8197
      %v8236 = vpop.f32.mrb[0].mxu0
      %v8237 = vadd.f32 0.0, %v8236
      %v8238 = vpop.f32.mrb[0].mxu0
      %v8239 = vpop.f32.mrb[0].mxu0
      %v8240 = vpop.f32.mrb[0].mxu0
      %8241 = vdwg.mxu0
      %8242 = vrot.lane.b32.xlu0 %v3017, 32
      %v8243 = vpop.permute.xlu0 %8242
      %v8245 = vsel %vm370, %v8243, 0
      %v8248 = vsel %vm370, %v6988, 0
      %8250 = vmatprep.subr.bf16.mxu0 0
      %8251 = vmatpush1.bf16.xpose.msra.mxu0 %v8248
      %8252 = vmatprep.subr.bf16.mxu0 0
      %8253 = vmatpush1.bf16.xpose.msra.mxu0 0
      %8254 = vmatprep.subr.bf16.mxu0 0
      %8255 = vmatpush1.bf16.xpose.msra.mxu0 0
      %8256 = vmatprep.subr.bf16.mxu0 0
      %8257 = vmatpush1.bf16.xpose.msra.mxu0 0
      %8258 = vmatprep.subr.bf16.mxu0 0
      %8259 = vmatpush1.bf16.xpose.msra.mxu0 0
      %8260 = vmatprep.subr.bf16.mxu0 0
      %8261 = vmatpush1.bf16.xpose.msra.mxu0 0
      %8262 = vmatprep.subr.bf16.mxu0 0
      %8263 = vmatpush1.bf16.xpose.msra.mxu0 0
      %8264 = vmatprep.subr.bf16.mxu0 0
      %8265 = vmatpush1.bf16.xpose.msra.mxu0 0
      %8266 = vmatprep.subr.bf16.mxu0 0
      %8267 = vmatpush1.bf16.xpose.msra.mxu0 0
      %8268 = vmatprep.subr.bf16.mxu0 0
      %8269 = vmatpush1.bf16.xpose.msra.mxu0 0
      %8270 = vmatprep.subr.bf16.mxu0 0
      %8271 = vmatpush1.bf16.xpose.msra.mxu0 0
      %8272 = vmatprep.subr.bf16.mxu0 0
      %8273 = vmatpush1.bf16.xpose.msra.mxu0 0
      %8274 = vmatprep.subr.bf16.mxu0 0
      %8275 = vmatpush1.bf16.xpose.msra.mxu0 0
      %8276 = vmatprep.subr.bf16.mxu0 0
      %8277 = vmatpush1.bf16.xpose.msra.mxu0 0
      %8278 = vmatprep.subr.bf16.mxu0 0
      %8279 = vmatpush1.bf16.xpose.msra.mxu0 0
      %8280 = vmatprep.subr.bf16.mxu0 0
      %8281 = vmatpush1.bf16.xpose.msra.mxu0 0
      %8282 = vmatprep.mubr.bf16.mxu0 0
      %8283 = vmatmul.mubr.bf16.gmra.mrb[0].mxu0 %v8245
      %v8284 = vpop.f32.mrb[0].mxu0
      %v8285 = vadd.f32 0.0, %v8284
      %v8286 = vpop.f32.mrb[0].mxu0
      %v8287 = vpop.f32.mrb[0].mxu0
      %v8288 = vpop.f32.mrb[0].mxu0
      %8289 = vdwg.mxu0
      %8290 = vrot.lane.b32.xlu0 %v3018, 32
      %v8291 = vpop.permute.xlu0 %8290
      %v8293 = vsel %vm370, %v8291, 0
      %v8296 = vsel %vm370, %v6989, 0
      %8298 = vmatprep.subr.bf16.mxu0 0
      %8299 = vmatpush1.bf16.xpose.msra.mxu0 %v8296
      %8300 = vmatprep.subr.bf16.mxu0 0
      %8301 = vmatpush1.bf16.xpose.msra.mxu0 0
      %8302 = vmatprep.subr.bf16.mxu0 0
      %8303 = vmatpush1.bf16.xpose.msra.mxu0 0
      %8304 = vmatprep.subr.bf16.mxu0 0
      %8305 = vmatpush1.bf16.xpose.msra.mxu0 0
      %8306 = vmatprep.subr.bf16.mxu0 0
      %8307 = vmatpush1.bf16.xpose.msra.mxu0 0
      %8308 = vmatprep.subr.bf16.mxu0 0
      %8309 = vmatpush1.bf16.xpose.msra.mxu0 0
      %8310 = vmatprep.subr.bf16.mxu0 0
      %8311 = vmatpush1.bf16.xpose.msra.mxu0 0
      %8312 = vmatprep.subr.bf16.mxu0 0
      %8313 = vmatpush1.bf16.xpose.msra.mxu0 0
      %8314 = vmatprep.subr.bf16.mxu0 0
      %8315 = vmatpush1.bf16.xpose.msra.mxu0 0
      %8316 = vmatprep.subr.bf16.mxu0 0
      %8317 = vmatpush1.bf16.xpose.msra.mxu0 0
      %8318 = vmatprep.subr.bf16.mxu0 0
      %8319 = vmatpush1.bf16.xpose.msra.mxu0 0
      %8320 = vmatprep.subr.bf16.mxu0 0
      %8321 = vmatpush1.bf16.xpose.msra.mxu0 0
      %8322 = vmatprep.subr.bf16.mxu0 0
      %8323 = vmatpush1.bf16.xpose.msra.mxu0 0
      %8324 = vmatprep.subr.bf16.mxu0 0
      %8325 = vmatpush1.bf16.xpose.msra.mxu0 0
      %8326 = vmatprep.subr.bf16.mxu0 0
      %8327 = vmatpush1.bf16.xpose.msra.mxu0 0
      %8328 = vmatprep.subr.bf16.mxu0 0
      %8329 = vmatpush1.bf16.xpose.msra.mxu0 0
      %8330 = vmatprep.mubr.bf16.mxu0 0
      %8331 = vmatmul.mubr.bf16.gmra.mrb[0].mxu0 %v8293
      %v8332 = vpop.f32.mrb[0].mxu0
      %v8333 = vadd.f32 0.0, %v8332
      %v8334 = vpop.f32.mrb[0].mxu0
      %v8335 = vpop.f32.mrb[0].mxu0
      %v8336 = vpop.f32.mrb[0].mxu0
      %8337 = vdwg.mxu0
      %8338 = vrot.lane.b32.xlu0 %v3019, 32
      %v8339 = vpop.permute.xlu0 %8338
      %v8341 = vsel %vm370, %v8339, 0
      %v8344 = vsel %vm370, %v6990, 0
      %8346 = vmatprep.subr.bf16.mxu0 0
      %8347 = vmatpush1.bf16.xpose.msra.mxu0 %v8344
      %8348 = vmatprep.subr.bf16.mxu0 0
      %8349 = vmatpush1.bf16.xpose.msra.mxu0 0
      %8350 = vmatprep.subr.bf16.mxu0 0
      %8351 = vmatpush1.bf16.xpose.msra.mxu0 0
      %8352 = vmatprep.subr.bf16.mxu0 0
      %8353 = vmatpush1.bf16.xpose.msra.mxu0 0
      %8354 = vmatprep.subr.bf16.mxu0 0
      %8355 = vmatpush1.bf16.xpose.msra.mxu0 0
      %8356 = vmatprep.subr.bf16.mxu0 0
      %8357 = vmatpush1.bf16.xpose.msra.mxu0 0
      %8358 = vmatprep.subr.bf16.mxu0 0
      %8359 = vmatpush1.bf16.xpose.msra.mxu0 0
      %8360 = vmatprep.subr.bf16.mxu0 0
      %8361 = vmatpush1.bf16.xpose.msra.mxu0 0
      %8362 = vmatprep.subr.bf16.mxu0 0
      %8363 = vmatpush1.bf16.xpose.msra.mxu0 0
      %8364 = vmatprep.subr.bf16.mxu0 0
      %8365 = vmatpush1.bf16.xpose.msra.mxu0 0
      %8366 = vmatprep.subr.bf16.mxu0 0
      %8367 = vmatpush1.bf16.xpose.msra.mxu0 0
      %8368 = vmatprep.subr.bf16.mxu0 0
      %8369 = vmatpush1.bf16.xpose.msra.mxu0 0
      %8370 = vmatprep.subr.bf16.mxu0 0
      %8371 = vmatpush1.bf16.xpose.msra.mxu0 0
      %8372 = vmatprep.subr.bf16.mxu0 0
      %8373 = vmatpush1.bf16.xpose.msra.mxu0 0
      %8374 = vmatprep.subr.bf16.mxu0 0
      %8375 = vmatpush1.bf16.xpose.msra.mxu0 0
      %8376 = vmatprep.subr.bf16.mxu0 0
      %8377 = vmatpush1.bf16.xpose.msra.mxu0 0
      %8378 = vmatprep.mubr.bf16.mxu0 0
      %8379 = vmatmul.mubr.bf16.gmra.mrb[0].mxu0 %v8341
      %v8380 = vpop.f32.mrb[0].mxu0
      %v8381 = vadd.f32 0.0, %v8380
      %v8382 = vpop.f32.mrb[0].mxu0
      %v8383 = vpop.f32.mrb[0].mxu0
      %v8384 = vpop.f32.mrb[0].mxu0
      %8385 = vdwg.mxu0
      %8386 = vrot.lane.b32.xlu0 %v3020, 32
      %v8387 = vpop.permute.xlu0 %8386
      %v8389 = vsel %vm370, %v8387, 0
      %v8392 = vsel %vm370, %v6991, 0
      %8394 = vmatprep.subr.bf16.mxu0 0
      %8395 = vmatpush1.bf16.xpose.msra.mxu0 %v8392
      %8396 = vmatprep.subr.bf16.mxu0 0
      %8397 = vmatpush1.bf16.xpose.msra.mxu0 0
      %8398 = vmatprep.subr.bf16.mxu0 0
      %8399 = vmatpush1.bf16.xpose.msra.mxu0 0
      %8400 = vmatprep.subr.bf16.mxu0 0
      %8401 = vmatpush1.bf16.xpose.msra.mxu0 0
      %8402 = vmatprep.subr.bf16.mxu0 0
      %8403 = vmatpush1.bf16.xpose.msra.mxu0 0
      %8404 = vmatprep.subr.bf16.mxu0 0
      %8405 = vmatpush1.bf16.xpose.msra.mxu0 0
      %8406 = vmatprep.subr.bf16.mxu0 0
      %8407 = vmatpush1.bf16.xpose.msra.mxu0 0
      %8408 = vmatprep.subr.bf16.mxu0 0
      %8409 = vmatpush1.bf16.xpose.msra.mxu0 0
      %8410 = vmatprep.subr.bf16.mxu0 0
      %8411 = vmatpush1.bf16.xpose.msra.mxu0 0
      %8412 = vmatprep.subr.bf16.mxu0 0
      %8413 = vmatpush1.bf16.xpose.msra.mxu0 0
      %8414 = vmatprep.subr.bf16.mxu0 0
      %8415 = vmatpush1.bf16.xpose.msra.mxu0 0
      %8416 = vmatprep.subr.bf16.mxu0 0
      %8417 = vmatpush1.bf16.xpose.msra.mxu0 0
      %8418 = vmatprep.subr.bf16.mxu0 0
      %8419 = vmatpush1.bf16.xpose.msra.mxu0 0
      %8420 = vmatprep.subr.bf16.mxu0 0
      %8421 = vmatpush1.bf16.xpose.msra.mxu0 0
      %8422 = vmatprep.subr.bf16.mxu0 0
      %8423 = vmatpush1.bf16.xpose.msra.mxu0 0
      %8424 = vmatprep.subr.bf16.mxu0 0
      %8425 = vmatpush1.bf16.xpose.msra.mxu0 0
      %8426 = vmatprep.mubr.bf16.mxu0 0
      %8427 = vmatmul.mubr.bf16.gmra.mrb[0].mxu0 %v8389
      %v8428 = vpop.f32.mrb[0].mxu0
      %v8429 = vadd.f32 0.0, %v8428
      %v8430 = vpop.f32.mrb[0].mxu0
      %v8431 = vpop.f32.mrb[0].mxu0
      %v8432 = vpop.f32.mrb[0].mxu0
      %8433 = vdwg.mxu0
      %8434 = vrot.lane.b32.xlu0 %v3021, 32
      %v8435 = vpop.permute.xlu0 %8434
      %v8437 = vsel %vm370, %v8435, 0
      %v8440 = vsel %vm370, %v6992, 0
      %8442 = vmatprep.subr.bf16.mxu0 0
      %8443 = vmatpush1.bf16.xpose.msra.mxu0 %v8440
      %8444 = vmatprep.subr.bf16.mxu0 0
      %8445 = vmatpush1.bf16.xpose.msra.mxu0 0
      %8446 = vmatprep.subr.bf16.mxu0 0
      %8447 = vmatpush1.bf16.xpose.msra.mxu0 0
      %8448 = vmatprep.subr.bf16.mxu0 0
      %8449 = vmatpush1.bf16.xpose.msra.mxu0 0
      %8450 = vmatprep.subr.bf16.mxu0 0
      %8451 = vmatpush1.bf16.xpose.msra.mxu0 0
      %8452 = vmatprep.subr.bf16.mxu0 0
      %8453 = vmatpush1.bf16.xpose.msra.mxu0 0
      %8454 = vmatprep.subr.bf16.mxu0 0
      %8455 = vmatpush1.bf16.xpose.msra.mxu0 0
      %8456 = vmatprep.subr.bf16.mxu0 0
      %8457 = vmatpush1.bf16.xpose.msra.mxu0 0
      %8458 = vmatprep.subr.bf16.mxu0 0
      %8459 = vmatpush1.bf16.xpose.msra.mxu0 0
      %8460 = vmatprep.subr.bf16.mxu0 0
      %8461 = vmatpush1.bf16.xpose.msra.mxu0 0
      %8462 = vmatprep.subr.bf16.mxu0 0
      %8463 = vmatpush1.bf16.xpose.msra.mxu0 0
      %8464 = vmatprep.subr.bf16.mxu0 0
      %8465 = vmatpush1.bf16.xpose.msra.mxu0 0
      %8466 = vmatprep.subr.bf16.mxu0 0
      %8467 = vmatpush1.bf16.xpose.msra.mxu0 0
      %8468 = vmatprep.subr.bf16.mxu0 0
      %8469 = vmatpush1.bf16.xpose.msra.mxu0 0
      %8470 = vmatprep.subr.bf16.mxu0 0
      %8471 = vmatpush1.bf16.xpose.msra.mxu0 0
      %8472 = vmatprep.subr.bf16.mxu0 0
      %8473 = vmatpush1.bf16.xpose.msra.mxu0 0
      %8474 = vmatprep.mubr.bf16.mxu0 0
      %8475 = vmatmul.mubr.bf16.gmra.mrb[0].mxu0 %v8437
      %v8476 = vpop.f32.mrb[0].mxu0
      %v8477 = vadd.f32 0.0, %v8476
      %v8478 = vpop.f32.mrb[0].mxu0
      %v8479 = vpop.f32.mrb[0].mxu0
      %v8480 = vpop.f32.mrb[0].mxu0
      %8481 = vdwg.mxu0
      %8482 = vrot.lane.b32.xlu0 %v3022, 32
      %v8483 = vpop.permute.xlu0 %8482
      %v8485 = vsel %vm370, %v8483, 0
      %v8488 = vsel %vm370, %v6993, 0
      %8490 = vmatprep.subr.bf16.mxu0 0
      %8491 = vmatpush1.bf16.xpose.msra.mxu0 %v8488
      %8492 = vmatprep.subr.bf16.mxu0 0
      %8493 = vmatpush1.bf16.xpose.msra.mxu0 0
      %8494 = vmatprep.subr.bf16.mxu0 0
      %8495 = vmatpush1.bf16.xpose.msra.mxu0 0
      %8496 = vmatprep.subr.bf16.mxu0 0
      %8497 = vmatpush1.bf16.xpose.msra.mxu0 0
      %8498 = vmatprep.subr.bf16.mxu0 0
      %8499 = vmatpush1.bf16.xpose.msra.mxu0 0
      %8500 = vmatprep.subr.bf16.mxu0 0
      %8501 = vmatpush1.bf16.xpose.msra.mxu0 0
      %8502 = vmatprep.subr.bf16.mxu0 0
      %8503 = vmatpush1.bf16.xpose.msra.mxu0 0
      %8504 = vmatprep.subr.bf16.mxu0 0
      %8505 = vmatpush1.bf16.xpose.msra.mxu0 0
      %8506 = vmatprep.subr.bf16.mxu0 0
      %8507 = vmatpush1.bf16.xpose.msra.mxu0 0
      %8508 = vmatprep.subr.bf16.mxu0 0
      %8509 = vmatpush1.bf16.xpose.msra.mxu0 0
      %8510 = vmatprep.subr.bf16.mxu0 0
      %8511 = vmatpush1.bf16.xpose.msra.mxu0 0
      %8512 = vmatprep.subr.bf16.mxu0 0
      %8513 = vmatpush1.bf16.xpose.msra.mxu0 0
      %8514 = vmatprep.subr.bf16.mxu0 0
      %8515 = vmatpush1.bf16.xpose.msra.mxu0 0
      %8516 = vmatprep.subr.bf16.mxu0 0
      %8517 = vmatpush1.bf16.xpose.msra.mxu0 0
      %8518 = vmatprep.subr.bf16.mxu0 0
      %8519 = vmatpush1.bf16.xpose.msra.mxu0 0
      %8520 = vmatprep.subr.bf16.mxu0 0
      %8521 = vmatpush1.bf16.xpose.msra.mxu0 0
      %8522 = vmatprep.mubr.bf16.mxu0 0
      %8523 = vmatmul.mubr.bf16.gmra.mrb[0].mxu0 %v8485
      %v8524 = vpop.f32.mrb[0].mxu0
      %v8525 = vadd.f32 0.0, %v8524
      %v8526 = vpop.f32.mrb[0].mxu0
      %v8527 = vpop.f32.mrb[0].mxu0
      %v8528 = vpop.f32.mrb[0].mxu0
      %8529 = vdwg.mxu0
      %v8530 = vmul.f32 %v7037, 0.35355338
      %v8531 = vmul.f32 %v7085, 0.35355338
      %v8532 = vmul.f32 %v7133, 0.35355338
      %v8533 = vmul.f32 %v7181, 0.35355338
      %v8534 = vmul.f32 %v7229, 0.35355338
      %v8535 = vmul.f32 %v7277, 0.35355338
      %v8536 = vmul.f32 %v7325, 0.35355338
      %v8537 = vmul.f32 %v7373, 0.35355338
      %v8538 = vmul.f32 %v7421, 0.35355338
      %v8539 = vmul.f32 %v7469, 0.35355338
      %v8540 = vmul.f32 %v7517, 0.35355338
      %v8541 = vmul.f32 %v7565, 0.35355338
      %v8542 = vmul.f32 %v7613, 0.35355338
      %v8543 = vmul.f32 %v7661, 0.35355338
      %v8544 = vmul.f32 %v7709, 0.35355338
      %v8545 = vmul.f32 %v7757, 0.35355338
      %v8546 = vmul.f32 %v7805, 0.35355338
      %v8547 = vmul.f32 %v7853, 0.35355338
      %v8548 = vmul.f32 %v7901, 0.35355338
      %v8549 = vmul.f32 %v7949, 0.35355338
      %v8550 = vmul.f32 %v7997, 0.35355338
      %v8551 = vmul.f32 %v8045, 0.35355338
      %v8552 = vmul.f32 %v8093, 0.35355338
      %v8553 = vmul.f32 %v8141, 0.35355338
      %v8554 = vmul.f32 %v8189, 0.35355338
      %v8555 = vmul.f32 %v8237, 0.35355338
      %v8556 = vmul.f32 %v8285, 0.35355338
      %v8557 = vmul.f32 %v8333, 0.35355338
      %v8558 = vmul.f32 %v8381, 0.35355338
      %v8559 = vmul.f32 %v8429, 0.35355338
      %v8560 = vmul.f32 %v8477, 0.35355338
      %v8561 = vmul.f32 %v8525, 0.35355338
      %vm8562 = vcmask 11264
      %v8563 = vsel %vm8562, %v8530, -inf
      %8564 = vmax.xlane.f32.xlu0 %v8563
      %v8565 = vpop.xlane.xlu0 %8564
      %v8566 = vsel %vm8562, %v8531, -inf
      %8567 = vmax.xlane.f32.xlu0 %v8566
      %v8568 = vpop.xlane.xlu0 %8567
      %v8569 = vsel %vm8562, %v8532, -inf
      %8570 = vmax.xlane.f32.xlu0 %v8569
      %v8571 = vpop.xlane.xlu0 %8570
      %v8572 = vsel %vm8562, %v8533, -inf
      %8573 = vmax.xlane.f32.xlu0 %v8572
      %v8574 = vpop.xlane.xlu0 %8573
      %v8575 = vsel %vm8562, %v8534, -inf
      %8576 = vmax.xlane.f32.xlu0 %v8575
      %v8577 = vpop.xlane.xlu0 %8576
      %v8578 = vsel %vm8562, %v8535, -inf
      %8579 = vmax.xlane.f32.xlu0 %v8578
      %v8580 = vpop.xlane.xlu0 %8579
      %v8581 = vsel %vm8562, %v8536, -inf
      %8582 = vmax.xlane.f32.xlu0 %v8581
      %v8583 = vpop.xlane.xlu0 %8582
      %v8584 = vsel %vm8562, %v8537, -inf
      %8585 = vmax.xlane.f32.xlu0 %v8584
      %v8586 = vpop.xlane.xlu0 %8585
      %v8587 = vsel %vm8562, %v8538, -inf
      %8588 = vmax.xlane.f32.xlu0 %v8587
      %v8589 = vpop.xlane.xlu0 %8588
      %v8590 = vsel %vm8562, %v8539, -inf
      %8591 = vmax.xlane.f32.xlu0 %v8590
      %v8592 = vpop.xlane.xlu0 %8591
      %v8593 = vsel %vm8562, %v8540, -inf
      %8594 = vmax.xlane.f32.xlu0 %v8593
      %v8595 = vpop.xlane.xlu0 %8594
      %v8596 = vsel %vm8562, %v8541, -inf
      %8597 = vmax.xlane.f32.xlu0 %v8596
      %v8598 = vpop.xlane.xlu0 %8597
      %v8599 = vsel %vm8562, %v8542, -inf
      %8600 = vmax.xlane.f32.xlu0 %v8599
      %v8601 = vpop.xlane.xlu0 %8600
      %v8602 = vsel %vm8562, %v8543, -inf
      %8603 = vmax.xlane.f32.xlu0 %v8602
      %v8604 = vpop.xlane.xlu0 %8603
      %v8605 = vsel %vm8562, %v8544, -inf
      %8606 = vmax.xlane.f32.xlu0 %v8605
      %v8607 = vpop.xlane.xlu0 %8606
      %v8608 = vsel %vm8562, %v8545, -inf
      %8609 = vmax.xlane.f32.xlu0 %v8608
      %v8610 = vpop.xlane.xlu0 %8609
      %v8611 = vsel %vm8562, %v8546, -inf
      %8612 = vmax.xlane.f32.xlu0 %v8611
      %v8613 = vpop.xlane.xlu0 %8612
      %v8614 = vsel %vm8562, %v8547, -inf
      %8615 = vmax.xlane.f32.xlu0 %v8614
      %v8616 = vpop.xlane.xlu0 %8615
      %v8617 = vsel %vm8562, %v8548, -inf
      %8618 = vmax.xlane.f32.xlu0 %v8617
      %v8619 = vpop.xlane.xlu0 %8618
      %v8620 = vsel %vm8562, %v8549, -inf
      %8621 = vmax.xlane.f32.xlu0 %v8620
      %v8622 = vpop.xlane.xlu0 %8621
      %v8623 = vsel %vm8562, %v8550, -inf
      %8624 = vmax.xlane.f32.xlu0 %v8623
      %v8625 = vpop.xlane.xlu0 %8624
      %v8626 = vsel %vm8562, %v8551, -inf
      %8627 = vmax.xlane.f32.xlu0 %v8626
      %v8628 = vpop.xlane.xlu0 %8627
      %v8629 = vsel %vm8562, %v8552, -inf
      %8630 = vmax.xlane.f32.xlu0 %v8629
      %v8631 = vpop.xlane.xlu0 %8630
      %v8632 = vsel %vm8562, %v8553, -inf
      %8633 = vmax.xlane.f32.xlu0 %v8632
      %v8634 = vpop.xlane.xlu0 %8633
      %v8635 = vsel %vm8562, %v8554, -inf
      %8636 = vmax.xlane.f32.xlu0 %v8635
      %v8637 = vpop.xlane.xlu0 %8636
      %v8638 = vsel %vm8562, %v8555, -inf
      %8639 = vmax.xlane.f32.xlu0 %v8638
      %v8640 = vpop.xlane.xlu0 %8639
      %v8641 = vsel %vm8562, %v8556, -inf
      %8642 = vmax.xlane.f32.xlu0 %v8641
      %v8643 = vpop.xlane.xlu0 %8642
      %v8644 = vsel %vm8562, %v8557, -inf
      %8645 = vmax.xlane.f32.xlu0 %v8644
      %v8646 = vpop.xlane.xlu0 %8645
      %v8647 = vsel %vm8562, %v8558, -inf
      %8648 = vmax.xlane.f32.xlu0 %v8647
      %v8649 = vpop.xlane.xlu0 %8648
      %v8650 = vsel %vm8562, %v8559, -inf
      %8651 = vmax.xlane.f32.xlu0 %v8650
      %v8652 = vpop.xlane.xlu0 %8651
      %v8653 = vsel %vm8562, %v8560, -inf
      %8654 = vmax.xlane.f32.xlu0 %v8653
      %v8655 = vpop.xlane.xlu0 %8654
      %v8656 = vsel %vm8562, %v8561, -inf
      %8657 = vmax.xlane.f32.xlu0 %v8656
      %v8658 = vpop.xlane.xlu0 %8657
      %v8659 = vsub.f32 %v8530, %v8565
      %v8660 = vsub.f32 %v8531, %v8568
      %v8661 = vsub.f32 %v8532, %v8571
      %v8662 = vsub.f32 %v8533, %v8574
      %v8663 = vsub.f32 %v8534, %v8577
      %v8664 = vsub.f32 %v8535, %v8580
      %v8665 = vsub.f32 %v8536, %v8583
      %v8666 = vsub.f32 %v8537, %v8586
      %v8667 = vsub.f32 %v8538, %v8589
      %v8668 = vsub.f32 %v8539, %v8592
      %v8669 = vsub.f32 %v8540, %v8595
      %v8670 = vsub.f32 %v8541, %v8598
      %v8671 = vsub.f32 %v8542, %v8601
      %v8672 = vsub.f32 %v8543, %v8604
      %v8673 = vsub.f32 %v8544, %v8607
      %v8674 = vsub.f32 %v8545, %v8610
      %v8675 = vsub.f32 %v8546, %v8613
      %v8676 = vsub.f32 %v8547, %v8616
      %v8677 = vsub.f32 %v8548, %v8619
      %v8678 = vsub.f32 %v8549, %v8622
      %v8679 = vsub.f32 %v8550, %v8625
      %v8680 = vsub.f32 %v8551, %v8628
      %v8681 = vsub.f32 %v8552, %v8631
      %v8682 = vsub.f32 %v8553, %v8634
      %v8683 = vsub.f32 %v8554, %v8637
      %v8684 = vsub.f32 %v8555, %v8640
      %v8685 = vsub.f32 %v8556, %v8643
      %v8686 = vsub.f32 %v8557, %v8646
      %v8687 = vsub.f32 %v8558, %v8649
      %v8688 = vsub.f32 %v8559, %v8652
      %v8689 = vsub.f32 %v8560, %v8655
      %v8690 = vsub.f32 %v8561, %v8658
      %v8691 = vmul.f32 %v8659, 1.442695
      %v8692 = vpow.pop %v8691
      %v8693 = vmul.f32 %v8660, 1.442695
      %v8694 = vpow.pop %v8693
      %v8695 = vmul.f32 %v8661, 1.442695
      %v8696 = vpow.pop %v8695
      %v8697 = vmul.f32 %v8662, 1.442695
      %v8698 = vpow.pop %v8697
      %v8699 = vmul.f32 %v8663, 1.442695
      %v8700 = vpow.pop %v8699
      %v8701 = vmul.f32 %v8664, 1.442695
      %v8702 = vpow.pop %v8701
      %v8703 = vmul.f32 %v8665, 1.442695
      %v8704 = vpow.pop %v8703
      %v8705 = vmul.f32 %v8666, 1.442695
      %v8706 = vpow.pop %v8705
      %v8707 = vmul.f32 %v8667, 1.442695
      %v8708 = vpow.pop %v8707
      %v8709 = vmul.f32 %v8668, 1.442695
      %v8710 = vpow.pop %v8709
      %v8711 = vmul.f32 %v8669, 1.442695
      %v8712 = vpow.pop %v8711
      %v8713 = vmul.f32 %v8670, 1.442695
      %v8714 = vpow.pop %v8713
      %v8715 = vmul.f32 %v8671, 1.442695
      %v8716 = vpow.pop %v8715
      %v8717 = vmul.f32 %v8672, 1.442695
      %v8718 = vpow.pop %v8717
      %v8719 = vmul.f32 %v8673, 1.442695
      %v8720 = vpow.pop %v8719
      %v8721 = vmul.f32 %v8674, 1.442695
      %v8722 = vpow.pop %v8721
      %v8723 = vmul.f32 %v8675, 1.442695
      %v8724 = vpow.pop %v8723
      %v8725 = vmul.f32 %v8676, 1.442695
      %v8726 = vpow.pop %v8725
      %v8727 = vmul.f32 %v8677, 1.442695
      %v8728 = vpow.pop %v8727
      %v8729 = vmul.f32 %v8678, 1.442695
      %v8730 = vpow.pop %v8729
      %v8731 = vmul.f32 %v8679, 1.442695
      %v8732 = vpow.pop %v8731
      %v8733 = vmul.f32 %v8680, 1.442695
      %v8734 = vpow.pop %v8733
      %v8735 = vmul.f32 %v8681, 1.442695
      %v8736 = vpow.pop %v8735
      %v8737 = vmul.f32 %v8682, 1.442695
      %v8738 = vpow.pop %v8737
      %v8739 = vmul.f32 %v8683, 1.442695
      %v8740 = vpow.pop %v8739
      %v8741 = vmul.f32 %v8684, 1.442695
      %v8742 = vpow.pop %v8741
      %v8743 = vmul.f32 %v8685, 1.442695
      %v8744 = vpow.pop %v8743
      %v8745 = vmul.f32 %v8686, 1.442695
      %v8746 = vpow.pop %v8745
      %v8747 = vmul.f32 %v8687, 1.442695
      %v8748 = vpow.pop %v8747
      %v8749 = vmul.f32 %v8688, 1.442695
      %v8750 = vpow.pop %v8749
      %v8751 = vmul.f32 %v8689, 1.442695
      %v8752 = vpow.pop %v8751
      %v8753 = vmul.f32 %v8690, 1.442695
      %v8754 = vpow.pop %v8753
      %v8755 = vsel %vm8562, %v8692, 0.0
      %8756 = vadd.xlane.f32.xlu0 %v8755
      %v8757 = vpop.xlane.xlu0 %8756
      %v8758 = vsel %vm8562, %v8694, 0.0
      %8759 = vadd.xlane.f32.xlu0 %v8758
      %v8760 = vpop.xlane.xlu0 %8759
      %v8761 = vsel %vm8562, %v8696, 0.0
      %8762 = vadd.xlane.f32.xlu0 %v8761
      %v8763 = vpop.xlane.xlu0 %8762
      %v8764 = vsel %vm8562, %v8698, 0.0
      %8765 = vadd.xlane.f32.xlu0 %v8764
      %v8766 = vpop.xlane.xlu0 %8765
      %v8767 = vsel %vm8562, %v8700, 0.0
      %8768 = vadd.xlane.f32.xlu0 %v8767
      %v8769 = vpop.xlane.xlu0 %8768
      %v8770 = vsel %vm8562, %v8702, 0.0
      %8771 = vadd.xlane.f32.xlu0 %v8770
      %v8772 = vpop.xlane.xlu0 %8771
      %v8773 = vsel %vm8562, %v8704, 0.0
      %8774 = vadd.xlane.f32.xlu0 %v8773
      %v8775 = vpop.xlane.xlu0 %8774
      %v8776 = vsel %vm8562, %v8706, 0.0
      %8777 = vadd.xlane.f32.xlu0 %v8776
      %v8778 = vpop.xlane.xlu0 %8777
      %v8779 = vsel %vm8562, %v8708, 0.0
      %8780 = vadd.xlane.f32.xlu0 %v8779
      %v8781 = vpop.xlane.xlu0 %8780
      %v8782 = vsel %vm8562, %v8710, 0.0
      %8783 = vadd.xlane.f32.xlu0 %v8782
      %v8784 = vpop.xlane.xlu0 %8783
      %v8785 = vsel %vm8562, %v8712, 0.0
      %8786 = vadd.xlane.f32.xlu0 %v8785
      %v8787 = vpop.xlane.xlu0 %8786
      %v8788 = vsel %vm8562, %v8714, 0.0
      %8789 = vadd.xlane.f32.xlu0 %v8788
      %v8790 = vpop.xlane.xlu0 %8789
      %v8791 = vsel %vm8562, %v8716, 0.0
      %8792 = vadd.xlane.f32.xlu0 %v8791
      %v8793 = vpop.xlane.xlu0 %8792
      %v8794 = vsel %vm8562, %v8718, 0.0
      %8795 = vadd.xlane.f32.xlu0 %v8794
      %v8796 = vpop.xlane.xlu0 %8795
      %v8797 = vsel %vm8562, %v8720, 0.0
      %8798 = vadd.xlane.f32.xlu0 %v8797
      %v8799 = vpop.xlane.xlu0 %8798
      %v8800 = vsel %vm8562, %v8722, 0.0
      %8801 = vadd.xlane.f32.xlu0 %v8800
      %v8802 = vpop.xlane.xlu0 %8801
      %v8803 = vsel %vm8562, %v8724, 0.0
      %8804 = vadd.xlane.f32.xlu0 %v8803
      %v8805 = vpop.xlane.xlu0 %8804
      %v8806 = vsel %vm8562, %v8726, 0.0
      %8807 = vadd.xlane.f32.xlu0 %v8806
      %v8808 = vpop.xlane.xlu0 %8807
      %v8809 = vsel %vm8562, %v8728, 0.0
      %8810 = vadd.xlane.f32.xlu0 %v8809
      %v8811 = vpop.xlane.xlu0 %8810
      %v8812 = vsel %vm8562, %v8730, 0.0
      %8813 = vadd.xlane.f32.xlu0 %v8812
      %v8814 = vpop.xlane.xlu0 %8813
      %v8815 = vsel %vm8562, %v8732, 0.0
      %8816 = vadd.xlane.f32.xlu0 %v8815
      %v8817 = vpop.xlane.xlu0 %8816
      %v8818 = vsel %vm8562, %v8734, 0.0
      %8819 = vadd.xlane.f32.xlu0 %v8818
      %v8820 = vpop.xlane.xlu0 %8819
      %v8821 = vsel %vm8562, %v8736, 0.0
      %8822 = vadd.xlane.f32.xlu0 %v8821
      %v8823 = vpop.xlane.xlu0 %8822
      %v8824 = vsel %vm8562, %v8738, 0.0
      %8825 = vadd.xlane.f32.xlu0 %v8824
      %v8826 = vpop.xlane.xlu0 %8825
      %v8827 = vsel %vm8562, %v8740, 0.0
      %8828 = vadd.xlane.f32.xlu0 %v8827
      %v8829 = vpop.xlane.xlu0 %8828
      %v8830 = vsel %vm8562, %v8742, 0.0
      %8831 = vadd.xlane.f32.xlu0 %v8830
      %v8832 = vpop.xlane.xlu0 %8831
      %v8833 = vsel %vm8562, %v8744, 0.0
      %8834 = vadd.xlane.f32.xlu0 %v8833
      %v8835 = vpop.xlane.xlu0 %8834
      %v8836 = vsel %vm8562, %v8746, 0.0
      %8837 = vadd.xlane.f32.xlu0 %v8836
      %v8838 = vpop.xlane.xlu0 %8837
      %v8839 = vsel %vm8562, %v8748, 0.0
      %8840 = vadd.xlane.f32.xlu0 %v8839
      %v8841 = vpop.xlane.xlu0 %8840
      %v8842 = vsel %vm8562, %v8750, 0.0
      %8843 = vadd.xlane.f32.xlu0 %v8842
      %v8844 = vpop.xlane.xlu0 %8843
      %v8845 = vsel %vm8562, %v8752, 0.0
      %8846 = vadd.xlane.f32.xlu0 %v8845
      %v8847 = vpop.xlane.xlu0 %8846
      %v8848 = vsel %vm8562, %v8754, 0.0
      %8849 = vadd.xlane.f32.xlu0 %v8848
      %v8850 = vpop.xlane.xlu0 %8849
      %v8851 = vrcp.pop %v8757
      %v8852 = vrcp.pop %v8760
      %v8853 = vrcp.pop %v8763
      %v8854 = vrcp.pop %v8766
      %v8855 = vrcp.pop %v8769
      %v8856 = vrcp.pop %v8772
      %v8857 = vrcp.pop %v8775
      %v8858 = vrcp.pop %v8778
      %v8859 = vrcp.pop %v8781
      %v8860 = vrcp.pop %v8784
      %v8861 = vrcp.pop %v8787
      %v8862 = vrcp.pop %v8790
      %v8863 = vrcp.pop %v8793
      %v8864 = vrcp.pop %v8796
      %v8865 = vrcp.pop %v8799
      %v8866 = vrcp.pop %v8802
      %v8867 = vrcp.pop %v8805
      %v8868 = vrcp.pop %v8808
      %v8869 = vrcp.pop %v8811
      %v8870 = vrcp.pop %v8814
      %v8871 = vrcp.pop %v8817
      %v8872 = vrcp.pop %v8820
      %v8873 = vrcp.pop %v8823
      %v8874 = vrcp.pop %v8826
      %v8875 = vrcp.pop %v8829
      %v8876 = vrcp.pop %v8832
      %v8877 = vrcp.pop %v8835
      %v8878 = vrcp.pop %v8838
      %v8879 = vrcp.pop %v8841
      %v8880 = vrcp.pop %v8844
      %v8881 = vrcp.pop %v8847
      %v8882 = vrcp.pop %v8850
      %v8883 = vmul.f32 %v8692, %v8851
      %v8884 = vmul.f32 %v8694, %v8852
      %v8885 = vmul.f32 %v8696, %v8853
      %v8886 = vmul.f32 %v8698, %v8854
      %v8887 = vmul.f32 %v8700, %v8855
      %v8888 = vmul.f32 %v8702, %v8856
      %v8889 = vmul.f32 %v8704, %v8857
      %v8890 = vmul.f32 %v8706, %v8858
      %v8891 = vmul.f32 %v8708, %v8859
      %v8892 = vmul.f32 %v8710, %v8860
      %v8893 = vmul.f32 %v8712, %v8861
      %v8894 = vmul.f32 %v8714, %v8862
      %v8895 = vmul.f32 %v8716, %v8863
      %v8896 = vmul.f32 %v8718, %v8864
      %v8897 = vmul.f32 %v8720, %v8865
      %v8898 = vmul.f32 %v8722, %v8866
      %v8899 = vmul.f32 %v8724, %v8867
      %v8900 = vmul.f32 %v8726, %v8868
      %v8901 = vmul.f32 %v8728, %v8869
      %v8902 = vmul.f32 %v8730, %v8870
      %v8903 = vmul.f32 %v8732, %v8871
      %v8904 = vmul.f32 %v8734, %v8872
      %v8905 = vmul.f32 %v8736, %v8873
      %v8906 = vmul.f32 %v8738, %v8874
      %v8907 = vmul.f32 %v8740, %v8875
      %v8908 = vmul.f32 %v8742, %v8876
      %v8909 = vmul.f32 %v8744, %v8877
      %v8910 = vmul.f32 %v8746, %v8878
      %v8911 = vmul.f32 %v8748, %v8879
      %v8912 = vmul.f32 %v8750, %v8880
      %v8913 = vmul.f32 %v8752, %v8881
      %v8914 = vmul.f32 %v8754, %v8882
      %v8915 = vpack.c.bf16 %v8883, %v8883
      %v8916 = vpack.c.bf16 %v8884, %v8884
      %v8917 = vpack.c.bf16 %v8885, %v8885
      %v8918 = vpack.c.bf16 %v8886, %v8886
      %v8919 = vpack.c.bf16 %v8887, %v8887
      %v8920 = vpack.c.bf16 %v8888, %v8888
      %v8921 = vpack.c.bf16 %v8889, %v8889
      %v8922 = vpack.c.bf16 %v8890, %v8890
      %v8923 = vpack.c.bf16 %v8891, %v8891
      %v8924 = vpack.c.bf16 %v8892, %v8892
      %v8925 = vpack.c.bf16 %v8893, %v8893
      %v8926 = vpack.c.bf16 %v8894, %v8894
      %v8927 = vpack.c.bf16 %v8895, %v8895
      %v8928 = vpack.c.bf16 %v8896, %v8896
      %v8929 = vpack.c.bf16 %v8897, %v8897
      %v8930 = vpack.c.bf16 %v8898, %v8898
      %v8931 = vpack.c.bf16 %v8899, %v8899
      %v8932 = vpack.c.bf16 %v8900, %v8900
      %v8933 = vpack.c.bf16 %v8901, %v8901
      %v8934 = vpack.c.bf16 %v8902, %v8902
      %v8935 = vpack.c.bf16 %v8903, %v8903
      %v8936 = vpack.c.bf16 %v8904, %v8904
      %v8937 = vpack.c.bf16 %v8905, %v8905
      %v8938 = vpack.c.bf16 %v8906, %v8906
      %v8939 = vpack.c.bf16 %v8907, %v8907
      %v8940 = vpack.c.bf16 %v8908, %v8908
      %v8941 = vpack.c.bf16 %v8909, %v8909
      %v8942 = vpack.c.bf16 %v8910, %v8910
      %v8943 = vpack.c.bf16 %v8911, %v8911
      %v8944 = vpack.c.bf16 %v8912, %v8912
      %v8945 = vpack.c.bf16 %v8913, %v8913
      %v8946 = vpack.c.bf16 %v8914, %v8914
      %8948 = vrot.lane.b32.xlu0 %v6962, 96
      %v8949 = vpop.permute.xlu0 %8948
      %vm8950 = vcmask 15360
      %v8952 = vsel %vm8950, %v8915, 0
      %vm8954 = vcmask 1040384
      %v8956 = vsel %vm8954, %v8949, 0
      %8958 = vmatprep.subr.bf16.mxu0 0
      %8959 = vmatpush1.bf16.msra.mxu0 %v8956
      %8960 = vmatprep.subr.bf16.mxu0 0
      %8961 = vmatpush1.bf16.msra.mxu0 0
      %8962 = vmatprep.subr.bf16.mxu0 0
      %8963 = vmatpush1.bf16.msra.mxu0 0
      %8964 = vmatprep.subr.bf16.mxu0 0
      %8965 = vmatpush1.bf16.msra.mxu0 0
      %8966 = vmatprep.subr.bf16.mxu0 0
      %8967 = vmatpush1.bf16.msra.mxu0 0
      %8968 = vmatprep.subr.bf16.mxu0 0
      %8969 = vmatpush1.bf16.msra.mxu0 0
      %8970 = vmatprep.subr.bf16.mxu0 0
      %8971 = vmatpush1.bf16.msra.mxu0 0
      %8972 = vmatprep.subr.bf16.mxu0 0
      %8973 = vmatpush1.bf16.msra.mxu0 0
      %8974 = vmatprep.subr.bf16.mxu0 0
      %8975 = vmatpush1.bf16.msra.mxu0 0
      %8976 = vmatprep.subr.bf16.mxu0 0
      %8977 = vmatpush1.bf16.msra.mxu0 0
      %8978 = vmatprep.subr.bf16.mxu0 0
      %8979 = vmatpush1.bf16.msra.mxu0 0
      %8980 = vmatprep.subr.bf16.mxu0 0
      %8981 = vmatpush1.bf16.msra.mxu0 0
      %8982 = vmatprep.subr.bf16.mxu0 0
      %8983 = vmatpush1.bf16.msra.mxu0 0
      %8984 = vmatprep.subr.bf16.mxu0 0
      %8985 = vmatpush1.bf16.msra.mxu0 0
      %8986 = vmatprep.subr.bf16.mxu0 0
      %8987 = vmatpush1.bf16.msra.mxu0 0
      %8988 = vmatprep.subr.bf16.mxu0 0
      %8989 = vmatpush1.bf16.msra.mxu0 0
      %8990 = vmatprep.mubr.bf16.mxu0 0
      %8991 = vmatmul.mubr.bf16.gmra.mrb[0].mxu0 %v8952
      %v8992 = vpop.f32.mrb[0].mxu0
      %v8993 = vadd.f32 0.0, %v8992
      %v8994 = vpop.f32.mrb[0].mxu0
      %v8995 = vpop.f32.mrb[0].mxu0
      %v8996 = vpop.f32.mrb[0].mxu0
      %8997 = vdwg.mxu0
      %8999 = vrot.lane.b32.xlu0 %v6963, 96
      %v9000 = vpop.permute.xlu0 %8999
      %v9002 = vsel %vm8950, %v8916, 0
      %v9005 = vsel %vm8954, %v9000, 0
      %9007 = vmatprep.subr.bf16.mxu0 0
      %9008 = vmatpush1.bf16.msra.mxu0 %v9005
      %9009 = vmatprep.subr.bf16.mxu0 0
      %9010 = vmatpush1.bf16.msra.mxu0 0
      %9011 = vmatprep.subr.bf16.mxu0 0
      %9012 = vmatpush1.bf16.msra.mxu0 0
      %9013 = vmatprep.subr.bf16.mxu0 0
      %9014 = vmatpush1.bf16.msra.mxu0 0
      %9015 = vmatprep.subr.bf16.mxu0 0
      %9016 = vmatpush1.bf16.msra.mxu0 0
      %9017 = vmatprep.subr.bf16.mxu0 0
      %9018 = vmatpush1.bf16.msra.mxu0 0
      %9019 = vmatprep.subr.bf16.mxu0 0
      %9020 = vmatpush1.bf16.msra.mxu0 0
      %9021 = vmatprep.subr.bf16.mxu0 0
      %9022 = vmatpush1.bf16.msra.mxu0 0
      %9023 = vmatprep.subr.bf16.mxu0 0
      %9024 = vmatpush1.bf16.msra.mxu0 0
      %9025 = vmatprep.subr.bf16.mxu0 0
      %9026 = vmatpush1.bf16.msra.mxu0 0
      %9027 = vmatprep.subr.bf16.mxu0 0
      %9028 = vmatpush1.bf16.msra.mxu0 0
      %9029 = vmatprep.subr.bf16.mxu0 0
      %9030 = vmatpush1.bf16.msra.mxu0 0
      %9031 = vmatprep.subr.bf16.mxu0 0
      %9032 = vmatpush1.bf16.msra.mxu0 0
      %9033 = vmatprep.subr.bf16.mxu0 0
      %9034 = vmatpush1.bf16.msra.mxu0 0
      %9035 = vmatprep.subr.bf16.mxu0 0
      %9036 = vmatpush1.bf16.msra.mxu0 0
      %9037 = vmatprep.subr.bf16.mxu0 0
      %9038 = vmatpush1.bf16.msra.mxu0 0
      %9039 = vmatprep.mubr.bf16.mxu0 0
      %9040 = vmatmul.mubr.bf16.gmra.mrb[0].mxu0 %v9002
      %v9041 = vpop.f32.mrb[0].mxu0
      %v9042 = vadd.f32 0.0, %v9041
      %v9043 = vpop.f32.mrb[0].mxu0
      %v9044 = vpop.f32.mrb[0].mxu0
      %v9045 = vpop.f32.mrb[0].mxu0
      %9046 = vdwg.mxu0
      %9048 = vrot.lane.b32.xlu0 %v6964, 96
      %v9049 = vpop.permute.xlu0 %9048
      %v9051 = vsel %vm8950, %v8917, 0
      %v9054 = vsel %vm8954, %v9049, 0
      %9056 = vmatprep.subr.bf16.mxu0 0
      %9057 = vmatpush1.bf16.msra.mxu0 %v9054
      %9058 = vmatprep.subr.bf16.mxu0 0
      %9059 = vmatpush1.bf16.msra.mxu0 0
      %9060 = vmatprep.subr.bf16.mxu0 0
      %9061 = vmatpush1.bf16.msra.mxu0 0
      %9062 = vmatprep.subr.bf16.mxu0 0
      %9063 = vmatpush1.bf16.msra.mxu0 0
      %9064 = vmatprep.subr.bf16.mxu0 0
      %9065 = vmatpush1.bf16.msra.mxu0 0
      %9066 = vmatprep.subr.bf16.mxu0 0
      %9067 = vmatpush1.bf16.msra.mxu0 0
      %9068 = vmatprep.subr.bf16.mxu0 0
      %9069 = vmatpush1.bf16.msra.mxu0 0
      %9070 = vmatprep.subr.bf16.mxu0 0
      %9071 = vmatpush1.bf16.msra.mxu0 0
      %9072 = vmatprep.subr.bf16.mxu0 0
      %9073 = vmatpush1.bf16.msra.mxu0 0
      %9074 = vmatprep.subr.bf16.mxu0 0
      %9075 = vmatpush1.bf16.msra.mxu0 0
      %9076 = vmatprep.subr.bf16.mxu0 0
      %9077 = vmatpush1.bf16.msra.mxu0 0
      %9078 = vmatprep.subr.bf16.mxu0 0
      %9079 = vmatpush1.bf16.msra.mxu0 0
      %9080 = vmatprep.subr.bf16.mxu0 0
      %9081 = vmatpush1.bf16.msra.mxu0 0
      %9082 = vmatprep.subr.bf16.mxu0 0
      %9083 = vmatpush1.bf16.msra.mxu0 0
      %9084 = vmatprep.subr.bf16.mxu0 0
      %9085 = vmatpush1.bf16.msra.mxu0 0
      %9086 = vmatprep.subr.bf16.mxu0 0
      %9087 = vmatpush1.bf16.msra.mxu0 0
      %9088 = vmatprep.mubr.bf16.mxu0 0
      %9089 = vmatmul.mubr.bf16.gmra.mrb[0].mxu0 %v9051
      %v9090 = vpop.f32.mrb[0].mxu0
      %v9091 = vadd.f32 0.0, %v9090
      %v9092 = vpop.f32.mrb[0].mxu0
      %v9093 = vpop.f32.mrb[0].mxu0
      %v9094 = vpop.f32.mrb[0].mxu0
      %9095 = vdwg.mxu0
      %9097 = vrot.lane.b32.xlu0 %v6965, 96
      %v9098 = vpop.permute.xlu0 %9097
      %v9100 = vsel %vm8950, %v8918, 0
      %v9103 = vsel %vm8954, %v9098, 0
      %9105 = vmatprep.subr.bf16.mxu0 0
      %9106 = vmatpush1.bf16.msra.mxu0 %v9103
      %9107 = vmatprep.subr.bf16.mxu0 0
      %9108 = vmatpush1.bf16.msra.mxu0 0
      %9109 = vmatprep.subr.bf16.mxu0 0
      %9110 = vmatpush1.bf16.msra.mxu0 0
      %9111 = vmatprep.subr.bf16.mxu0 0
      %9112 = vmatpush1.bf16.msra.mxu0 0
      %9113 = vmatprep.subr.bf16.mxu0 0
      %9114 = vmatpush1.bf16.msra.mxu0 0
      %9115 = vmatprep.subr.bf16.mxu0 0
      %9116 = vmatpush1.bf16.msra.mxu0 0
      %9117 = vmatprep.subr.bf16.mxu0 0
      %9118 = vmatpush1.bf16.msra.mxu0 0
      %9119 = vmatprep.subr.bf16.mxu0 0
      %9120 = vmatpush1.bf16.msra.mxu0 0
      %9121 = vmatprep.subr.bf16.mxu0 0
      %9122 = vmatpush1.bf16.msra.mxu0 0
      %9123 = vmatprep.subr.bf16.mxu0 0
      %9124 = vmatpush1.bf16.msra.mxu0 0
      %9125 = vmatprep.subr.bf16.mxu0 0
      %9126 = vmatpush1.bf16.msra.mxu0 0
      %9127 = vmatprep.subr.bf16.mxu0 0
      %9128 = vmatpush1.bf16.msra.mxu0 0
      %9129 = vmatprep.subr.bf16.mxu0 0
      %9130 = vmatpush1.bf16.msra.mxu0 0
      %9131 = vmatprep.subr.bf16.mxu0 0
      %9132 = vmatpush1.bf16.msra.mxu0 0
      %9133 = vmatprep.subr.bf16.mxu0 0
      %9134 = vmatpush1.bf16.msra.mxu0 0
      %9135 = vmatprep.subr.bf16.mxu0 0
      %9136 = vmatpush1.bf16.msra.mxu0 0
      %9137 = vmatprep.mubr.bf16.mxu0 0
      %9138 = vmatmul.mubr.bf16.gmra.mrb[0].mxu0 %v9100
      %v9139 = vpop.f32.mrb[0].mxu0
      %v9140 = vadd.f32 0.0, %v9139
      %v9141 = vpop.f32.mrb[0].mxu0
      %v9142 = vpop.f32.mrb[0].mxu0
      %v9143 = vpop.f32.mrb[0].mxu0
      %9144 = vdwg.mxu0
      %9146 = vrot.lane.b32.xlu0 %v6966, 96
      %v9147 = vpop.permute.xlu0 %9146
      %v9149 = vsel %vm8950, %v8919, 0
      %v9152 = vsel %vm8954, %v9147, 0
      %9154 = vmatprep.subr.bf16.mxu0 0
      %9155 = vmatpush1.bf16.msra.mxu0 %v9152
      %9156 = vmatprep.subr.bf16.mxu0 0
      %9157 = vmatpush1.bf16.msra.mxu0 0
      %9158 = vmatprep.subr.bf16.mxu0 0
      %9159 = vmatpush1.bf16.msra.mxu0 0
      %9160 = vmatprep.subr.bf16.mxu0 0
      %9161 = vmatpush1.bf16.msra.mxu0 0
      %9162 = vmatprep.subr.bf16.mxu0 0
      %9163 = vmatpush1.bf16.msra.mxu0 0
      %9164 = vmatprep.subr.bf16.mxu0 0
      %9165 = vmatpush1.bf16.msra.mxu0 0
      %9166 = vmatprep.subr.bf16.mxu0 0
      %9167 = vmatpush1.bf16.msra.mxu0 0
      %9168 = vmatprep.subr.bf16.mxu0 0
      %9169 = vmatpush1.bf16.msra.mxu0 0
      %9170 = vmatprep.subr.bf16.mxu0 0
      %9171 = vmatpush1.bf16.msra.mxu0 0
      %9172 = vmatprep.subr.bf16.mxu0 0
      %9173 = vmatpush1.bf16.msra.mxu0 0
      %9174 = vmatprep.subr.bf16.mxu0 0
      %9175 = vmatpush1.bf16.msra.mxu0 0
      %9176 = vmatprep.subr.bf16.mxu0 0
      %9177 = vmatpush1.bf16.msra.mxu0 0
      %9178 = vmatprep.subr.bf16.mxu0 0
      %9179 = vmatpush1.bf16.msra.mxu0 0
      %9180 = vmatprep.subr.bf16.mxu0 0
      %9181 = vmatpush1.bf16.msra.mxu0 0
      %9182 = vmatprep.subr.bf16.mxu0 0
      %9183 = vmatpush1.bf16.msra.mxu0 0
      %9184 = vmatprep.subr.bf16.mxu0 0
      %9185 = vmatpush1.bf16.msra.mxu0 0
      %9186 = vmatprep.mubr.bf16.mxu0 0
      %9187 = vmatmul.mubr.bf16.gmra.mrb[0].mxu0 %v9149
      %v9188 = vpop.f32.mrb[0].mxu0
      %v9189 = vadd.f32 0.0, %v9188
      %v9190 = vpop.f32.mrb[0].mxu0
      %v9191 = vpop.f32.mrb[0].mxu0
      %v9192 = vpop.f32.mrb[0].mxu0
      %9193 = vdwg.mxu0
      %9195 = vrot.lane.b32.xlu0 %v6967, 96
      %v9196 = vpop.permute.xlu0 %9195
      %v9198 = vsel %vm8950, %v8920, 0
      %v9201 = vsel %vm8954, %v9196, 0
      %9203 = vmatprep.subr.bf16.mxu0 0
      %9204 = vmatpush1.bf16.msra.mxu0 %v9201
      %9205 = vmatprep.subr.bf16.mxu0 0
      %9206 = vmatpush1.bf16.msra.mxu0 0
      %9207 = vmatprep.subr.bf16.mxu0 0
      %9208 = vmatpush1.bf16.msra.mxu0 0
      %9209 = vmatprep.subr.bf16.mxu0 0
      %9210 = vmatpush1.bf16.msra.mxu0 0
      %9211 = vmatprep.subr.bf16.mxu0 0
      %9212 = vmatpush1.bf16.msra.mxu0 0
      %9213 = vmatprep.subr.bf16.mxu0 0
      %9214 = vmatpush1.bf16.msra.mxu0 0
      %9215 = vmatprep.subr.bf16.mxu0 0
      %9216 = vmatpush1.bf16.msra.mxu0 0
      %9217 = vmatprep.subr.bf16.mxu0 0
      %9218 = vmatpush1.bf16.msra.mxu0 0
      %9219 = vmatprep.subr.bf16.mxu0 0
      %9220 = vmatpush1.bf16.msra.mxu0 0
      %9221 = vmatprep.subr.bf16.mxu0 0
      %9222 = vmatpush1.bf16.msra.mxu0 0
      %9223 = vmatprep.subr.bf16.mxu0 0
      %9224 = vmatpush1.bf16.msra.mxu0 0
      %9225 = vmatprep.subr.bf16.mxu0 0
      %9226 = vmatpush1.bf16.msra.mxu0 0
      %9227 = vmatprep.subr.bf16.mxu0 0
      %9228 = vmatpush1.bf16.msra.mxu0 0
      %9229 = vmatprep.subr.bf16.mxu0 0
      %9230 = vmatpush1.bf16.msra.mxu0 0
      %9231 = vmatprep.subr.bf16.mxu0 0
      %9232 = vmatpush1.bf16.msra.mxu0 0
      %9233 = vmatprep.subr.bf16.mxu0 0
      %9234 = vmatpush1.bf16.msra.mxu0 0
      %9235 = vmatprep.mubr.bf16.mxu0 0
      %9236 = vmatmul.mubr.bf16.gmra.mrb[0].mxu0 %v9198
      %v9237 = vpop.f32.mrb[0].mxu0
      %v9238 = vadd.f32 0.0, %v9237
      %v9239 = vpop.f32.mrb[0].mxu0
      %v9240 = vpop.f32.mrb[0].mxu0
      %v9241 = vpop.f32.mrb[0].mxu0
      %9242 = vdwg.mxu0
      %9244 = vrot.lane.b32.xlu0 %v6968, 96
      %v9245 = vpop.permute.xlu0 %9244
      %v9247 = vsel %vm8950, %v8921, 0
      %v9250 = vsel %vm8954, %v9245, 0
      %9252 = vmatprep.subr.bf16.mxu0 0
      %9253 = vmatpush1.bf16.msra.mxu0 %v9250
      %9254 = vmatprep.subr.bf16.mxu0 0
      %9255 = vmatpush1.bf16.msra.mxu0 0
      %9256 = vmatprep.subr.bf16.mxu0 0
      %9257 = vmatpush1.bf16.msra.mxu0 0
      %9258 = vmatprep.subr.bf16.mxu0 0
      %9259 = vmatpush1.bf16.msra.mxu0 0
      %9260 = vmatprep.subr.bf16.mxu0 0
      %9261 = vmatpush1.bf16.msra.mxu0 0
      %9262 = vmatprep.subr.bf16.mxu0 0
      %9263 = vmatpush1.bf16.msra.mxu0 0
      %9264 = vmatprep.subr.bf16.mxu0 0
      %9265 = vmatpush1.bf16.msra.mxu0 0
      %9266 = vmatprep.subr.bf16.mxu0 0
      %9267 = vmatpush1.bf16.msra.mxu0 0
      %9268 = vmatprep.subr.bf16.mxu0 0
      %9269 = vmatpush1.bf16.msra.mxu0 0
      %9270 = vmatprep.subr.bf16.mxu0 0
      %9271 = vmatpush1.bf16.msra.mxu0 0
      %9272 = vmatprep.subr.bf16.mxu0 0
      %9273 = vmatpush1.bf16.msra.mxu0 0
      %9274 = vmatprep.subr.bf16.mxu0 0
      %9275 = vmatpush1.bf16.msra.mxu0 0
      %9276 = vmatprep.subr.bf16.mxu0 0
      %9277 = vmatpush1.bf16.msra.mxu0 0
      %9278 = vmatprep.subr.bf16.mxu0 0
      %9279 = vmatpush1.bf16.msra.mxu0 0
      %9280 = vmatprep.subr.bf16.mxu0 0
      %9281 = vmatpush1.bf16.msra.mxu0 0
      %9282 = vmatprep.subr.bf16.mxu0 0
      %9283 = vmatpush1.bf16.msra.mxu0 0
      %9284 = vmatprep.mubr.bf16.mxu0 0
      %9285 = vmatmul.mubr.bf16.gmra.mrb[0].mxu0 %v9247
      %v9286 = vpop.f32.mrb[0].mxu0
      %v9287 = vadd.f32 0.0, %v9286
      %v9288 = vpop.f32.mrb[0].mxu0
      %v9289 = vpop.f32.mrb[0].mxu0
      %v9290 = vpop.f32.mrb[0].mxu0
      %9291 = vdwg.mxu0
      %9293 = vrot.lane.b32.xlu0 %v6969, 96
      %v9294 = vpop.permute.xlu0 %9293
      %v9296 = vsel %vm8950, %v8922, 0
      %v9299 = vsel %vm8954, %v9294, 0
      %9301 = vmatprep.subr.bf16.mxu0 0
      %9302 = vmatpush1.bf16.msra.mxu0 %v9299
      %9303 = vmatprep.subr.bf16.mxu0 0
      %9304 = vmatpush1.bf16.msra.mxu0 0
      %9305 = vmatprep.subr.bf16.mxu0 0
      %9306 = vmatpush1.bf16.msra.mxu0 0
      %9307 = vmatprep.subr.bf16.mxu0 0
      %9308 = vmatpush1.bf16.msra.mxu0 0
      %9309 = vmatprep.subr.bf16.mxu0 0
      %9310 = vmatpush1.bf16.msra.mxu0 0
      %9311 = vmatprep.subr.bf16.mxu0 0
      %9312 = vmatpush1.bf16.msra.mxu0 0
      %9313 = vmatprep.subr.bf16.mxu0 0
      %9314 = vmatpush1.bf16.msra.mxu0 0
      %9315 = vmatprep.subr.bf16.mxu0 0
      %9316 = vmatpush1.bf16.msra.mxu0 0
      %9317 = vmatprep.subr.bf16.mxu0 0
      %9318 = vmatpush1.bf16.msra.mxu0 0
      %9319 = vmatprep.subr.bf16.mxu0 0
      %9320 = vmatpush1.bf16.msra.mxu0 0
      %9321 = vmatprep.subr.bf16.mxu0 0
      %9322 = vmatpush1.bf16.msra.mxu0 0
      %9323 = vmatprep.subr.bf16.mxu0 0
      %9324 = vmatpush1.bf16.msra.mxu0 0
      %9325 = vmatprep.subr.bf16.mxu0 0
      %9326 = vmatpush1.bf16.msra.mxu0 0
      %9327 = vmatprep.subr.bf16.mxu0 0
      %9328 = vmatpush1.bf16.msra.mxu0 0
      %9329 = vmatprep.subr.bf16.mxu0 0
      %9330 = vmatpush1.bf16.msra.mxu0 0
      %9331 = vmatprep.subr.bf16.mxu0 0
      %9332 = vmatpush1.bf16.msra.mxu0 0
      %9333 = vmatprep.mubr.bf16.mxu0 0
      %9334 = vmatmul.mubr.bf16.gmra.mrb[0].mxu0 %v9296
      %v9335 = vpop.f32.mrb[0].mxu0
      %v9336 = vadd.f32 0.0, %v9335
      %v9337 = vpop.f32.mrb[0].mxu0
      %v9338 = vpop.f32.mrb[0].mxu0
      %v9339 = vpop.f32.mrb[0].mxu0
      %9340 = vdwg.mxu0
      %9342 = vrot.lane.b32.xlu0 %v6970, 96
      %v9343 = vpop.permute.xlu0 %9342
      %v9345 = vsel %vm8950, %v8923, 0
      %v9348 = vsel %vm8954, %v9343, 0
      %9350 = vmatprep.subr.bf16.mxu0 0
      %9351 = vmatpush1.bf16.msra.mxu0 %v9348
      %9352 = vmatprep.subr.bf16.mxu0 0
      %9353 = vmatpush1.bf16.msra.mxu0 0
      %9354 = vmatprep.subr.bf16.mxu0 0
      %9355 = vmatpush1.bf16.msra.mxu0 0
      %9356 = vmatprep.subr.bf16.mxu0 0
      %9357 = vmatpush1.bf16.msra.mxu0 0
      %9358 = vmatprep.subr.bf16.mxu0 0
      %9359 = vmatpush1.bf16.msra.mxu0 0
      %9360 = vmatprep.subr.bf16.mxu0 0
      %9361 = vmatpush1.bf16.msra.mxu0 0
      %9362 = vmatprep.subr.bf16.mxu0 0
      %9363 = vmatpush1.bf16.msra.mxu0 0
      %9364 = vmatprep.subr.bf16.mxu0 0
      %9365 = vmatpush1.bf16.msra.mxu0 0
      %9366 = vmatprep.subr.bf16.mxu0 0
      %9367 = vmatpush1.bf16.msra.mxu0 0
      %9368 = vmatprep.subr.bf16.mxu0 0
      %9369 = vmatpush1.bf16.msra.mxu0 0
      %9370 = vmatprep.subr.bf16.mxu0 0
      %9371 = vmatpush1.bf16.msra.mxu0 0
      %9372 = vmatprep.subr.bf16.mxu0 0
      %9373 = vmatpush1.bf16.msra.mxu0 0
      %9374 = vmatprep.subr.bf16.mxu0 0
      %9375 = vmatpush1.bf16.msra.mxu0 0
      %9376 = vmatprep.subr.bf16.mxu0 0
      %9377 = vmatpush1.bf16.msra.mxu0 0
      %9378 = vmatprep.subr.bf16.mxu0 0
      %9379 = vmatpush1.bf16.msra.mxu0 0
      %9380 = vmatprep.subr.bf16.mxu0 0
      %9381 = vmatpush1.bf16.msra.mxu0 0
      %9382 = vmatprep.mubr.bf16.mxu0 0
      %9383 = vmatmul.mubr.bf16.gmra.mrb[0].mxu0 %v9345
      %v9384 = vpop.f32.mrb[0].mxu0
      %v9385 = vadd.f32 0.0, %v9384
      %v9386 = vpop.f32.mrb[0].mxu0
      %v9387 = vpop.f32.mrb[0].mxu0
      %v9388 = vpop.f32.mrb[0].mxu0
      %9389 = vdwg.mxu0
      %9391 = vrot.lane.b32.xlu0 %v6971, 96
      %v9392 = vpop.permute.xlu0 %9391
      %v9394 = vsel %vm8950, %v8924, 0
      %v9397 = vsel %vm8954, %v9392, 0
      %9399 = vmatprep.subr.bf16.mxu0 0
      %9400 = vmatpush1.bf16.msra.mxu0 %v9397
      %9401 = vmatprep.subr.bf16.mxu0 0
      %9402 = vmatpush1.bf16.msra.mxu0 0
      %9403 = vmatprep.subr.bf16.mxu0 0
      %9404 = vmatpush1.bf16.msra.mxu0 0
      %9405 = vmatprep.subr.bf16.mxu0 0
      %9406 = vmatpush1.bf16.msra.mxu0 0
      %9407 = vmatprep.subr.bf16.mxu0 0
      %9408 = vmatpush1.bf16.msra.mxu0 0
      %9409 = vmatprep.subr.bf16.mxu0 0
      %9410 = vmatpush1.bf16.msra.mxu0 0
      %9411 = vmatprep.subr.bf16.mxu0 0
      %9412 = vmatpush1.bf16.msra.mxu0 0
      %9413 = vmatprep.subr.bf16.mxu0 0
      %9414 = vmatpush1.bf16.msra.mxu0 0
      %9415 = vmatprep.subr.bf16.mxu0 0
      %9416 = vmatpush1.bf16.msra.mxu0 0
      %9417 = vmatprep.subr.bf16.mxu0 0
      %9418 = vmatpush1.bf16.msra.mxu0 0
      %9419 = vmatprep.subr.bf16.mxu0 0
      %9420 = vmatpush1.bf16.msra.mxu0 0
      %9421 = vmatprep.subr.bf16.mxu0 0
      %9422 = vmatpush1.bf16.msra.mxu0 0
      %9423 = vmatprep.subr.bf16.mxu0 0
      %9424 = vmatpush1.bf16.msra.mxu0 0
      %9425 = vmatprep.subr.bf16.mxu0 0
      %9426 = vmatpush1.bf16.msra.mxu0 0
      %9427 = vmatprep.subr.bf16.mxu0 0
      %9428 = vmatpush1.bf16.msra.mxu0 0
      %9429 = vmatprep.subr.bf16.mxu0 0
      %9430 = vmatpush1.bf16.msra.mxu0 0
      %9431 = vmatprep.mubr.bf16.mxu0 0
      %9432 = vmatmul.mubr.bf16.gmra.mrb[0].mxu0 %v9394
      %v9433 = vpop.f32.mrb[0].mxu0
      %v9434 = vadd.f32 0.0, %v9433
      %v9435 = vpop.f32.mrb[0].mxu0
      %v9436 = vpop.f32.mrb[0].mxu0
      %v9437 = vpop.f32.mrb[0].mxu0
      %9438 = vdwg.mxu0
      %9440 = vrot.lane.b32.xlu0 %v6972, 96
      %v9441 = vpop.permute.xlu0 %9440
      %v9443 = vsel %vm8950, %v8925, 0
      %v9446 = vsel %vm8954, %v9441, 0
      %9448 = vmatprep.subr.bf16.mxu0 0
      %9449 = vmatpush1.bf16.msra.mxu0 %v9446
      %9450 = vmatprep.subr.bf16.mxu0 0
      %9451 = vmatpush1.bf16.msra.mxu0 0
      %9452 = vmatprep.subr.bf16.mxu0 0
      %9453 = vmatpush1.bf16.msra.mxu0 0
      %9454 = vmatprep.subr.bf16.mxu0 0
      %9455 = vmatpush1.bf16.msra.mxu0 0
      %9456 = vmatprep.subr.bf16.mxu0 0
      %9457 = vmatpush1.bf16.msra.mxu0 0
      %9458 = vmatprep.subr.bf16.mxu0 0
      %9459 = vmatpush1.bf16.msra.mxu0 0
      %9460 = vmatprep.subr.bf16.mxu0 0
      %9461 = vmatpush1.bf16.msra.mxu0 0
      %9462 = vmatprep.subr.bf16.mxu0 0
      %9463 = vmatpush1.bf16.msra.mxu0 0
      %9464 = vmatprep.subr.bf16.mxu0 0
      %9465 = vmatpush1.bf16.msra.mxu0 0
      %9466 = vmatprep.subr.bf16.mxu0 0
      %9467 = vmatpush1.bf16.msra.mxu0 0
      %9468 = vmatprep.subr.bf16.mxu0 0
      %9469 = vmatpush1.bf16.msra.mxu0 0
      %9470 = vmatprep.subr.bf16.mxu0 0
      %9471 = vmatpush1.bf16.msra.mxu0 0
      %9472 = vmatprep.subr.bf16.mxu0 0
      %9473 = vmatpush1.bf16.msra.mxu0 0
      %9474 = vmatprep.subr.bf16.mxu0 0
      %9475 = vmatpush1.bf16.msra.mxu0 0
      %9476 = vmatprep.subr.bf16.mxu0 0
      %9477 = vmatpush1.bf16.msra.mxu0 0
      %9478 = vmatprep.subr.bf16.mxu0 0
      %9479 = vmatpush1.bf16.msra.mxu0 0
      %9480 = vmatprep.mubr.bf16.mxu0 0
      %9481 = vmatmul.mubr.bf16.gmra.mrb[0].mxu0 %v9443
      %v9482 = vpop.f32.mrb[0].mxu0
      %v9483 = vadd.f32 0.0, %v9482
      %v9484 = vpop.f32.mrb[0].mxu0
      %v9485 = vpop.f32.mrb[0].mxu0
      %v9486 = vpop.f32.mrb[0].mxu0
      %9487 = vdwg.mxu0
      %9489 = vrot.lane.b32.xlu0 %v6973, 96
      %v9490 = vpop.permute.xlu0 %9489
      %v9492 = vsel %vm8950, %v8926, 0
      %v9495 = vsel %vm8954, %v9490, 0
      %9497 = vmatprep.subr.bf16.mxu0 0
      %9498 = vmatpush1.bf16.msra.mxu0 %v9495
      %9499 = vmatprep.subr.bf16.mxu0 0
      %9500 = vmatpush1.bf16.msra.mxu0 0
      %9501 = vmatprep.subr.bf16.mxu0 0
      %9502 = vmatpush1.bf16.msra.mxu0 0
      %9503 = vmatprep.subr.bf16.mxu0 0
      %9504 = vmatpush1.bf16.msra.mxu0 0
      %9505 = vmatprep.subr.bf16.mxu0 0
      %9506 = vmatpush1.bf16.msra.mxu0 0
      %9507 = vmatprep.subr.bf16.mxu0 0
      %9508 = vmatpush1.bf16.msra.mxu0 0
      %9509 = vmatprep.subr.bf16.mxu0 0
      %9510 = vmatpush1.bf16.msra.mxu0 0
      %9511 = vmatprep.subr.bf16.mxu0 0
      %9512 = vmatpush1.bf16.msra.mxu0 0
      %9513 = vmatprep.subr.bf16.mxu0 0
      %9514 = vmatpush1.bf16.msra.mxu0 0
      %9515 = vmatprep.subr.bf16.mxu0 0
      %9516 = vmatpush1.bf16.msra.mxu0 0
      %9517 = vmatprep.subr.bf16.mxu0 0
      %9518 = vmatpush1.bf16.msra.mxu0 0
      %9519 = vmatprep.subr.bf16.mxu0 0
      %9520 = vmatpush1.bf16.msra.mxu0 0
      %9521 = vmatprep.subr.bf16.mxu0 0
      %9522 = vmatpush1.bf16.msra.mxu0 0
      %9523 = vmatprep.subr.bf16.mxu0 0
      %9524 = vmatpush1.bf16.msra.mxu0 0
      %9525 = vmatprep.subr.bf16.mxu0 0
      %9526 = vmatpush1.bf16.msra.mxu0 0
      %9527 = vmatprep.subr.bf16.mxu0 0
      %9528 = vmatpush1.bf16.msra.mxu0 0
      %9529 = vmatprep.mubr.bf16.mxu0 0
      %9530 = vmatmul.mubr.bf16.gmra.mrb[0].mxu0 %v9492
      %v9531 = vpop.f32.mrb[0].mxu0
      %v9532 = vadd.f32 0.0, %v9531
      %v9533 = vpop.f32.mrb[0].mxu0
      %v9534 = vpop.f32.mrb[0].mxu0
      %v9535 = vpop.f32.mrb[0].mxu0
      %9536 = vdwg.mxu0
      %9538 = vrot.lane.b32.xlu0 %v6974, 96
      %v9539 = vpop.permute.xlu0 %9538
      %v9541 = vsel %vm8950, %v8927, 0
      %v9544 = vsel %vm8954, %v9539, 0
      %9546 = vmatprep.subr.bf16.mxu0 0
      %9547 = vmatpush1.bf16.msra.mxu0 %v9544
      %9548 = vmatprep.subr.bf16.mxu0 0
      %9549 = vmatpush1.bf16.msra.mxu0 0
      %9550 = vmatprep.subr.bf16.mxu0 0
      %9551 = vmatpush1.bf16.msra.mxu0 0
      %9552 = vmatprep.subr.bf16.mxu0 0
      %9553 = vmatpush1.bf16.msra.mxu0 0
      %9554 = vmatprep.subr.bf16.mxu0 0
      %9555 = vmatpush1.bf16.msra.mxu0 0
      %9556 = vmatprep.subr.bf16.mxu0 0
      %9557 = vmatpush1.bf16.msra.mxu0 0
      %9558 = vmatprep.subr.bf16.mxu0 0
      %9559 = vmatpush1.bf16.msra.mxu0 0
      %9560 = vmatprep.subr.bf16.mxu0 0
      %9561 = vmatpush1.bf16.msra.mxu0 0
      %9562 = vmatprep.subr.bf16.mxu0 0
      %9563 = vmatpush1.bf16.msra.mxu0 0
      %9564 = vmatprep.subr.bf16.mxu0 0
      %9565 = vmatpush1.bf16.msra.mxu0 0
      %9566 = vmatprep.subr.bf16.mxu0 0
      %9567 = vmatpush1.bf16.msra.mxu0 0
      %9568 = vmatprep.subr.bf16.mxu0 0
      %9569 = vmatpush1.bf16.msra.mxu0 0
      %9570 = vmatprep.subr.bf16.mxu0 0
      %9571 = vmatpush1.bf16.msra.mxu0 0
      %9572 = vmatprep.subr.bf16.mxu0 0
      %9573 = vmatpush1.bf16.msra.mxu0 0
      %9574 = vmatprep.subr.bf16.mxu0 0
      %9575 = vmatpush1.bf16.msra.mxu0 0
      %9576 = vmatprep.subr.bf16.mxu0 0
      %9577 = vmatpush1.bf16.msra.mxu0 0
      %9578 = vmatprep.mubr.bf16.mxu0 0
      %9579 = vmatmul.mubr.bf16.gmra.mrb[0].mxu0 %v9541
      %v9580 = vpop.f32.mrb[0].mxu0
      %v9581 = vadd.f32 0.0, %v9580
      %v9582 = vpop.f32.mrb[0].mxu0
      %v9583 = vpop.f32.mrb[0].mxu0
      %v9584 = vpop.f32.mrb[0].mxu0
      %9585 = vdwg.mxu0
      %9587 = vrot.lane.b32.xlu0 %v6975, 96
      %v9588 = vpop.permute.xlu0 %9587
      %v9590 = vsel %vm8950, %v8928, 0
      %v9593 = vsel %vm8954, %v9588, 0
      %9595 = vmatprep.subr.bf16.mxu0 0
      %9596 = vmatpush1.bf16.msra.mxu0 %v9593
      %9597 = vmatprep.subr.bf16.mxu0 0
      %9598 = vmatpush1.bf16.msra.mxu0 0
      %9599 = vmatprep.subr.bf16.mxu0 0
      %9600 = vmatpush1.bf16.msra.mxu0 0
      %9601 = vmatprep.subr.bf16.mxu0 0
      %9602 = vmatpush1.bf16.msra.mxu0 0
      %9603 = vmatprep.subr.bf16.mxu0 0
      %9604 = vmatpush1.bf16.msra.mxu0 0
      %9605 = vmatprep.subr.bf16.mxu0 0
      %9606 = vmatpush1.bf16.msra.mxu0 0
      %9607 = vmatprep.subr.bf16.mxu0 0
      %9608 = vmatpush1.bf16.msra.mxu0 0
      %9609 = vmatprep.subr.bf16.mxu0 0
      %9610 = vmatpush1.bf16.msra.mxu0 0
      %9611 = vmatprep.subr.bf16.mxu0 0
      %9612 = vmatpush1.bf16.msra.mxu0 0
      %9613 = vmatprep.subr.bf16.mxu0 0
      %9614 = vmatpush1.bf16.msra.mxu0 0
      %9615 = vmatprep.subr.bf16.mxu0 0
      %9616 = vmatpush1.bf16.msra.mxu0 0
      %9617 = vmatprep.subr.bf16.mxu0 0
      %9618 = vmatpush1.bf16.msra.mxu0 0
      %9619 = vmatprep.subr.bf16.mxu0 0
      %9620 = vmatpush1.bf16.msra.mxu0 0
      %9621 = vmatprep.subr.bf16.mxu0 0
      %9622 = vmatpush1.bf16.msra.mxu0 0
      %9623 = vmatprep.subr.bf16.mxu0 0
      %9624 = vmatpush1.bf16.msra.mxu0 0
      %9625 = vmatprep.subr.bf16.mxu0 0
      %9626 = vmatpush1.bf16.msra.mxu0 0
      %9627 = vmatprep.mubr.bf16.mxu0 0
      %9628 = vmatmul.mubr.bf16.gmra.mrb[0].mxu0 %v9590
      %v9629 = vpop.f32.mrb[0].mxu0
      %v9630 = vadd.f32 0.0, %v9629
      %v9631 = vpop.f32.mrb[0].mxu0
      %v9632 = vpop.f32.mrb[0].mxu0
      %v9633 = vpop.f32.mrb[0].mxu0
      %9634 = vdwg.mxu0
      %9636 = vrot.lane.b32.xlu0 %v6976, 96
      %v9637 = vpop.permute.xlu0 %9636
      %v9639 = vsel %vm8950, %v8929, 0
      %v9642 = vsel %vm8954, %v9637, 0
      %9644 = vmatprep.subr.bf16.mxu0 0
      %9645 = vmatpush1.bf16.msra.mxu0 %v9642
      %9646 = vmatprep.subr.bf16.mxu0 0
      %9647 = vmatpush1.bf16.msra.mxu0 0
      %9648 = vmatprep.subr.bf16.mxu0 0
      %9649 = vmatpush1.bf16.msra.mxu0 0
      %9650 = vmatprep.subr.bf16.mxu0 0
      %9651 = vmatpush1.bf16.msra.mxu0 0
      %9652 = vmatprep.subr.bf16.mxu0 0
      %9653 = vmatpush1.bf16.msra.mxu0 0
      %9654 = vmatprep.subr.bf16.mxu0 0
      %9655 = vmatpush1.bf16.msra.mxu0 0
      %9656 = vmatprep.subr.bf16.mxu0 0
      %9657 = vmatpush1.bf16.msra.mxu0 0
      %9658 = vmatprep.subr.bf16.mxu0 0
      %9659 = vmatpush1.bf16.msra.mxu0 0
      %9660 = vmatprep.subr.bf16.mxu0 0
      %9661 = vmatpush1.bf16.msra.mxu0 0
      %9662 = vmatprep.subr.bf16.mxu0 0
      %9663 = vmatpush1.bf16.msra.mxu0 0
      %9664 = vmatprep.subr.bf16.mxu0 0
      %9665 = vmatpush1.bf16.msra.mxu0 0
      %9666 = vmatprep.subr.bf16.mxu0 0
      %9667 = vmatpush1.bf16.msra.mxu0 0
      %9668 = vmatprep.subr.bf16.mxu0 0
      %9669 = vmatpush1.bf16.msra.mxu0 0
      %9670 = vmatprep.subr.bf16.mxu0 0
      %9671 = vmatpush1.bf16.msra.mxu0 0
      %9672 = vmatprep.subr.bf16.mxu0 0
      %9673 = vmatpush1.bf16.msra.mxu0 0
      %9674 = vmatprep.subr.bf16.mxu0 0
      %9675 = vmatpush1.bf16.msra.mxu0 0
      %9676 = vmatprep.mubr.bf16.mxu0 0
      %9677 = vmatmul.mubr.bf16.gmra.mrb[0].mxu0 %v9639
      %v9678 = vpop.f32.mrb[0].mxu0
      %v9679 = vadd.f32 0.0, %v9678
      %v9680 = vpop.f32.mrb[0].mxu0
      %v9681 = vpop.f32.mrb[0].mxu0
      %v9682 = vpop.f32.mrb[0].mxu0
      %9683 = vdwg.mxu0
      %9685 = vrot.lane.b32.xlu0 %v6977, 96
      %v9686 = vpop.permute.xlu0 %9685
      %v9688 = vsel %vm8950, %v8930, 0
      %v9691 = vsel %vm8954, %v9686, 0
      %9693 = vmatprep.subr.bf16.mxu0 0
      %9694 = vmatpush1.bf16.msra.mxu0 %v9691
      %9695 = vmatprep.subr.bf16.mxu0 0
      %9696 = vmatpush1.bf16.msra.mxu0 0
      %9697 = vmatprep.subr.bf16.mxu0 0
      %9698 = vmatpush1.bf16.msra.mxu0 0
      %9699 = vmatprep.subr.bf16.mxu0 0
      %9700 = vmatpush1.bf16.msra.mxu0 0
      %9701 = vmatprep.subr.bf16.mxu0 0
      %9702 = vmatpush1.bf16.msra.mxu0 0
      %9703 = vmatprep.subr.bf16.mxu0 0
      %9704 = vmatpush1.bf16.msra.mxu0 0
      %9705 = vmatprep.subr.bf16.mxu0 0
      %9706 = vmatpush1.bf16.msra.mxu0 0
      %9707 = vmatprep.subr.bf16.mxu0 0
      %9708 = vmatpush1.bf16.msra.mxu0 0
      %9709 = vmatprep.subr.bf16.mxu0 0
      %9710 = vmatpush1.bf16.msra.mxu0 0
      %9711 = vmatprep.subr.bf16.mxu0 0
      %9712 = vmatpush1.bf16.msra.mxu0 0
      %9713 = vmatprep.subr.bf16.mxu0 0
      %9714 = vmatpush1.bf16.msra.mxu0 0
      %9715 = vmatprep.subr.bf16.mxu0 0
      %9716 = vmatpush1.bf16.msra.mxu0 0
      %9717 = vmatprep.subr.bf16.mxu0 0
      %9718 = vmatpush1.bf16.msra.mxu0 0
      %9719 = vmatprep.subr.bf16.mxu0 0
      %9720 = vmatpush1.bf16.msra.mxu0 0
      %9721 = vmatprep.subr.bf16.mxu0 0
      %9722 = vmatpush1.bf16.msra.mxu0 0
      %9723 = vmatprep.subr.bf16.mxu0 0
      %9724 = vmatpush1.bf16.msra.mxu0 0
      %9725 = vmatprep.mubr.bf16.mxu0 0
      %9726 = vmatmul.mubr.bf16.gmra.mrb[0].mxu0 %v9688
      %v9727 = vpop.f32.mrb[0].mxu0
      %v9728 = vadd.f32 0.0, %v9727
      %v9729 = vpop.f32.mrb[0].mxu0
      %v9730 = vpop.f32.mrb[0].mxu0
      %v9731 = vpop.f32.mrb[0].mxu0
      %9732 = vdwg.mxu0
      %9734 = vrot.lane.b32.xlu0 %v6978, 96
      %v9735 = vpop.permute.xlu0 %9734
      %v9737 = vsel %vm8950, %v8931, 0
      %v9740 = vsel %vm8954, %v9735, 0
      %9742 = vmatprep.subr.bf16.mxu0 0
      %9743 = vmatpush1.bf16.msra.mxu0 %v9740
      %9744 = vmatprep.subr.bf16.mxu0 0
      %9745 = vmatpush1.bf16.msra.mxu0 0
      %9746 = vmatprep.subr.bf16.mxu0 0
      %9747 = vmatpush1.bf16.msra.mxu0 0
      %9748 = vmatprep.subr.bf16.mxu0 0
      %9749 = vmatpush1.bf16.msra.mxu0 0
      %9750 = vmatprep.subr.bf16.mxu0 0
      %9751 = vmatpush1.bf16.msra.mxu0 0
      %9752 = vmatprep.subr.bf16.mxu0 0
      %9753 = vmatpush1.bf16.msra.mxu0 0
      %9754 = vmatprep.subr.bf16.mxu0 0
      %9755 = vmatpush1.bf16.msra.mxu0 0
      %9756 = vmatprep.subr.bf16.mxu0 0
      %9757 = vmatpush1.bf16.msra.mxu0 0
      %9758 = vmatprep.subr.bf16.mxu0 0
      %9759 = vmatpush1.bf16.msra.mxu0 0
      %9760 = vmatprep.subr.bf16.mxu0 0
      %9761 = vmatpush1.bf16.msra.mxu0 0
      %9762 = vmatprep.subr.bf16.mxu0 0
      %9763 = vmatpush1.bf16.msra.mxu0 0
      %9764 = vmatprep.subr.bf16.mxu0 0
      %9765 = vmatpush1.bf16.msra.mxu0 0
      %9766 = vmatprep.subr.bf16.mxu0 0
      %9767 = vmatpush1.bf16.msra.mxu0 0
      %9768 = vmatprep.subr.bf16.mxu0 0
      %9769 = vmatpush1.bf16.msra.mxu0 0
      %9770 = vmatprep.subr.bf16.mxu0 0
      %9771 = vmatpush1.bf16.msra.mxu0 0
      %9772 = vmatprep.subr.bf16.mxu0 0
      %9773 = vmatpush1.bf16.msra.mxu0 0
      %9774 = vmatprep.mubr.bf16.mxu0 0
      %9775 = vmatmul.mubr.bf16.gmra.mrb[0].mxu0 %v9737
      %v9776 = vpop.f32.mrb[0].mxu0
      %v9777 = vadd.f32 0.0, %v9776
      %v9778 = vpop.f32.mrb[0].mxu0
      %v9779 = vpop.f32.mrb[0].mxu0
      %v9780 = vpop.f32.mrb[0].mxu0
      %9781 = vdwg.mxu0
      %9783 = vrot.lane.b32.xlu0 %v6979, 96
      %v9784 = vpop.permute.xlu0 %9783
      %v9786 = vsel %vm8950, %v8932, 0
      %v9789 = vsel %vm8954, %v9784, 0
      %9791 = vmatprep.subr.bf16.mxu0 0
      %9792 = vmatpush1.bf16.msra.mxu0 %v9789
      %9793 = vmatprep.subr.bf16.mxu0 0
      %9794 = vmatpush1.bf16.msra.mxu0 0
      %9795 = vmatprep.subr.bf16.mxu0 0
      %9796 = vmatpush1.bf16.msra.mxu0 0
      %9797 = vmatprep.subr.bf16.mxu0 0
      %9798 = vmatpush1.bf16.msra.mxu0 0
      %9799 = vmatprep.subr.bf16.mxu0 0
      %9800 = vmatpush1.bf16.msra.mxu0 0
      %9801 = vmatprep.subr.bf16.mxu0 0
      %9802 = vmatpush1.bf16.msra.mxu0 0
      %9803 = vmatprep.subr.bf16.mxu0 0
      %9804 = vmatpush1.bf16.msra.mxu0 0
      %9805 = vmatprep.subr.bf16.mxu0 0
      %9806 = vmatpush1.bf16.msra.mxu0 0
      %9807 = vmatprep.subr.bf16.mxu0 0
      %9808 = vmatpush1.bf16.msra.mxu0 0
      %9809 = vmatprep.subr.bf16.mxu0 0
      %9810 = vmatpush1.bf16.msra.mxu0 0
      %9811 = vmatprep.subr.bf16.mxu0 0
      %9812 = vmatpush1.bf16.msra.mxu0 0
      %9813 = vmatprep.subr.bf16.mxu0 0
      %9814 = vmatpush1.bf16.msra.mxu0 0
      %9815 = vmatprep.subr.bf16.mxu0 0
      %9816 = vmatpush1.bf16.msra.mxu0 0
      %9817 = vmatprep.subr.bf16.mxu0 0
      %9818 = vmatpush1.bf16.msra.mxu0 0
      %9819 = vmatprep.subr.bf16.mxu0 0
      %9820 = vmatpush1.bf16.msra.mxu0 0
      %9821 = vmatprep.subr.bf16.mxu0 0
      %9822 = vmatpush1.bf16.msra.mxu0 0
      %9823 = vmatprep.mubr.bf16.mxu0 0
      %9824 = vmatmul.mubr.bf16.gmra.mrb[0].mxu0 %v9786
      %v9825 = vpop.f32.mrb[0].mxu0
      %v9826 = vadd.f32 0.0, %v9825
      %v9827 = vpop.f32.mrb[0].mxu0
      %v9828 = vpop.f32.mrb[0].mxu0
      %v9829 = vpop.f32.mrb[0].mxu0
      %9830 = vdwg.mxu0
      %9832 = vrot.lane.b32.xlu0 %v6980, 96
      %v9833 = vpop.permute.xlu0 %9832
      %v9835 = vsel %vm8950, %v8933, 0
      %v9838 = vsel %vm8954, %v9833, 0
      %9840 = vmatprep.subr.bf16.mxu0 0
      %9841 = vmatpush1.bf16.msra.mxu0 %v9838
      %9842 = vmatprep.subr.bf16.mxu0 0
      %9843 = vmatpush1.bf16.msra.mxu0 0
      %9844 = vmatprep.subr.bf16.mxu0 0
      %9845 = vmatpush1.bf16.msra.mxu0 0
      %9846 = vmatprep.subr.bf16.mxu0 0
      %9847 = vmatpush1.bf16.msra.mxu0 0
      %9848 = vmatprep.subr.bf16.mxu0 0
      %9849 = vmatpush1.bf16.msra.mxu0 0
      %9850 = vmatprep.subr.bf16.mxu0 0
      %9851 = vmatpush1.bf16.msra.mxu0 0
      %9852 = vmatprep.subr.bf16.mxu0 0
      %9853 = vmatpush1.bf16.msra.mxu0 0
      %9854 = vmatprep.subr.bf16.mxu0 0
      %9855 = vmatpush1.bf16.msra.mxu0 0
      %9856 = vmatprep.subr.bf16.mxu0 0
      %9857 = vmatpush1.bf16.msra.mxu0 0
      %9858 = vmatprep.subr.bf16.mxu0 0
      %9859 = vmatpush1.bf16.msra.mxu0 0
      %9860 = vmatprep.subr.bf16.mxu0 0
      %9861 = vmatpush1.bf16.msra.mxu0 0
      %9862 = vmatprep.subr.bf16.mxu0 0
      %9863 = vmatpush1.bf16.msra.mxu0 0
      %9864 = vmatprep.subr.bf16.mxu0 0
      %9865 = vmatpush1.bf16.msra.mxu0 0
      %9866 = vmatprep.subr.bf16.mxu0 0
      %9867 = vmatpush1.bf16.msra.mxu0 0
      %9868 = vmatprep.subr.bf16.mxu0 0
      %9869 = vmatpush1.bf16.msra.mxu0 0
      %9870 = vmatprep.subr.bf16.mxu0 0
      %9871 = vmatpush1.bf16.msra.mxu0 0
      %9872 = vmatprep.mubr.bf16.mxu0 0
      %9873 = vmatmul.mubr.bf16.gmra.mrb[0].mxu0 %v9835
      %v9874 = vpop.f32.mrb[0].mxu0
      %v9875 = vadd.f32 0.0, %v9874
      %v9876 = vpop.f32.mrb[0].mxu0
      %v9877 = vpop.f32.mrb[0].mxu0
      %v9878 = vpop.f32.mrb[0].mxu0
      %9879 = vdwg.mxu0
      %9881 = vrot.lane.b32.xlu0 %v6981, 96
      %v9882 = vpop.permute.xlu0 %9881
      %v9884 = vsel %vm8950, %v8934, 0
      %v9887 = vsel %vm8954, %v9882, 0
      %9889 = vmatprep.subr.bf16.mxu0 0
      %9890 = vmatpush1.bf16.msra.mxu0 %v9887
      %9891 = vmatprep.subr.bf16.mxu0 0
      %9892 = vmatpush1.bf16.msra.mxu0 0
      %9893 = vmatprep.subr.bf16.mxu0 0
      %9894 = vmatpush1.bf16.msra.mxu0 0
      %9895 = vmatprep.subr.bf16.mxu0 0
      %9896 = vmatpush1.bf16.msra.mxu0 0
      %9897 = vmatprep.subr.bf16.mxu0 0
      %9898 = vmatpush1.bf16.msra.mxu0 0
      %9899 = vmatprep.subr.bf16.mxu0 0
      %9900 = vmatpush1.bf16.msra.mxu0 0
      %9901 = vmatprep.subr.bf16.mxu0 0
      %9902 = vmatpush1.bf16.msra.mxu0 0
      %9903 = vmatprep.subr.bf16.mxu0 0
      %9904 = vmatpush1.bf16.msra.mxu0 0
      %9905 = vmatprep.subr.bf16.mxu0 0
      %9906 = vmatpush1.bf16.msra.mxu0 0
      %9907 = vmatprep.subr.bf16.mxu0 0
      %9908 = vmatpush1.bf16.msra.mxu0 0
      %9909 = vmatprep.subr.bf16.mxu0 0
      %9910 = vmatpush1.bf16.msra.mxu0 0
      %9911 = vmatprep.subr.bf16.mxu0 0
      %9912 = vmatpush1.bf16.msra.mxu0 0
      %9913 = vmatprep.subr.bf16.mxu0 0
      %9914 = vmatpush1.bf16.msra.mxu0 0
      %9915 = vmatprep.subr.bf16.mxu0 0
      %9916 = vmatpush1.bf16.msra.mxu0 0
      %9917 = vmatprep.subr.bf16.mxu0 0
      %9918 = vmatpush1.bf16.msra.mxu0 0
      %9919 = vmatprep.subr.bf16.mxu0 0
      %9920 = vmatpush1.bf16.msra.mxu0 0
      %9921 = vmatprep.mubr.bf16.mxu0 0
      %9922 = vmatmul.mubr.bf16.gmra.mrb[0].mxu0 %v9884
      %v9923 = vpop.f32.mrb[0].mxu0
      %v9924 = vadd.f32 0.0, %v9923
      %v9925 = vpop.f32.mrb[0].mxu0
      %v9926 = vpop.f32.mrb[0].mxu0
      %v9927 = vpop.f32.mrb[0].mxu0
      %9928 = vdwg.mxu0
      %9930 = vrot.lane.b32.xlu0 %v6982, 96
      %v9931 = vpop.permute.xlu0 %9930
      %v9933 = vsel %vm8950, %v8935, 0
      %v9936 = vsel %vm8954, %v9931, 0
      %9938 = vmatprep.subr.bf16.mxu0 0
      %9939 = vmatpush1.bf16.msra.mxu0 %v9936
      %9940 = vmatprep.subr.bf16.mxu0 0
      %9941 = vmatpush1.bf16.msra.mxu0 0
      %9942 = vmatprep.subr.bf16.mxu0 0
      %9943 = vmatpush1.bf16.msra.mxu0 0
      %9944 = vmatprep.subr.bf16.mxu0 0
      %9945 = vmatpush1.bf16.msra.mxu0 0
      %9946 = vmatprep.subr.bf16.mxu0 0
      %9947 = vmatpush1.bf16.msra.mxu0 0
      %9948 = vmatprep.subr.bf16.mxu0 0
      %9949 = vmatpush1.bf16.msra.mxu0 0
      %9950 = vmatprep.subr.bf16.mxu0 0
      %9951 = vmatpush1.bf16.msra.mxu0 0
      %9952 = vmatprep.subr.bf16.mxu0 0
      %9953 = vmatpush1.bf16.msra.mxu0 0
      %9954 = vmatprep.subr.bf16.mxu0 0
      %9955 = vmatpush1.bf16.msra.mxu0 0
      %9956 = vmatprep.subr.bf16.mxu0 0
      %9957 = vmatpush1.bf16.msra.mxu0 0
      %9958 = vmatprep.subr.bf16.mxu0 0
      %9959 = vmatpush1.bf16.msra.mxu0 0
      %9960 = vmatprep.subr.bf16.mxu0 0
      %9961 = vmatpush1.bf16.msra.mxu0 0
      %9962 = vmatprep.subr.bf16.mxu0 0
      %9963 = vmatpush1.bf16.msra.mxu0 0
      %9964 = vmatprep.subr.bf16.mxu0 0
      %9965 = vmatpush1.bf16.msra.mxu0 0
      %9966 = vmatprep.subr.bf16.mxu0 0
      %9967 = vmatpush1.bf16.msra.mxu0 0
      %9968 = vmatprep.subr.bf16.mxu0 0
      %9969 = vmatpush1.bf16.msra.mxu0 0
      %9970 = vmatprep.mubr.bf16.mxu0 0
      %9971 = vmatmul.mubr.bf16.gmra.mrb[0].mxu0 %v9933
      %v9972 = vpop.f32.mrb[0].mxu0
      %v9973 = vadd.f32 0.0, %v9972
      %v9974 = vpop.f32.mrb[0].mxu0
      %v9975 = vpop.f32.mrb[0].mxu0
      %v9976 = vpop.f32.mrb[0].mxu0
      %9977 = vdwg.mxu0
      %9979 = vrot.lane.b32.xlu0 %v6983, 96
      %v9980 = vpop.permute.xlu0 %9979
      %v9982 = vsel %vm8950, %v8936, 0
      %v9985 = vsel %vm8954, %v9980, 0
      %9987 = vmatprep.subr.bf16.mxu0 0
      %9988 = vmatpush1.bf16.msra.mxu0 %v9985
      %9989 = vmatprep.subr.bf16.mxu0 0
      %9990 = vmatpush1.bf16.msra.mxu0 0
      %9991 = vmatprep.subr.bf16.mxu0 0
      %9992 = vmatpush1.bf16.msra.mxu0 0
      %9993 = vmatprep.subr.bf16.mxu0 0
      %9994 = vmatpush1.bf16.msra.mxu0 0
      %9995 = vmatprep.subr.bf16.mxu0 0
      %9996 = vmatpush1.bf16.msra.mxu0 0
      %9997 = vmatprep.subr.bf16.mxu0 0
      %9998 = vmatpush1.bf16.msra.mxu0 0
      %9999 = vmatprep.subr.bf16.mxu0 0
      %10000 = vmatpush1.bf16.msra.mxu0 0
      %10001 = vmatprep.subr.bf16.mxu0 0
      %10002 = vmatpush1.bf16.msra.mxu0 0
      %10003 = vmatprep.subr.bf16.mxu0 0
      %10004 = vmatpush1.bf16.msra.mxu0 0
      %10005 = vmatprep.subr.bf16.mxu0 0
      %10006 = vmatpush1.bf16.msra.mxu0 0
      %10007 = vmatprep.subr.bf16.mxu0 0
      %10008 = vmatpush1.bf16.msra.mxu0 0
      %10009 = vmatprep.subr.bf16.mxu0 0
      %10010 = vmatpush1.bf16.msra.mxu0 0
      %10011 = vmatprep.subr.bf16.mxu0 0
      %10012 = vmatpush1.bf16.msra.mxu0 0
      %10013 = vmatprep.subr.bf16.mxu0 0
      %10014 = vmatpush1.bf16.msra.mxu0 0
      %10015 = vmatprep.subr.bf16.mxu0 0
      %10016 = vmatpush1.bf16.msra.mxu0 0
      %10017 = vmatprep.subr.bf16.mxu0 0
      %10018 = vmatpush1.bf16.msra.mxu0 0
      %10019 = vmatprep.mubr.bf16.mxu0 0
      %10020 = vmatmul.mubr.bf16.gmra.mrb[0].mxu0 %v9982
      %v10021 = vpop.f32.mrb[0].mxu0
      %v10022 = vadd.f32 0.0, %v10021
      %v10023 = vpop.f32.mrb[0].mxu0
      %v10024 = vpop.f32.mrb[0].mxu0
      %v10025 = vpop.f32.mrb[0].mxu0
      %10026 = vdwg.mxu0
      %10028 = vrot.lane.b32.xlu0 %v6984, 96
      %v10029 = vpop.permute.xlu0 %10028
      %v10031 = vsel %vm8950, %v8937, 0
      %v10034 = vsel %vm8954, %v10029, 0
      %10036 = vmatprep.subr.bf16.mxu0 0
      %10037 = vmatpush1.bf16.msra.mxu0 %v10034
      %10038 = vmatprep.subr.bf16.mxu0 0
      %10039 = vmatpush1.bf16.msra.mxu0 0
      %10040 = vmatprep.subr.bf16.mxu0 0
      %10041 = vmatpush1.bf16.msra.mxu0 0
      %10042 = vmatprep.subr.bf16.mxu0 0
      %10043 = vmatpush1.bf16.msra.mxu0 0
      %10044 = vmatprep.subr.bf16.mxu0 0
      %10045 = vmatpush1.bf16.msra.mxu0 0
      %10046 = vmatprep.subr.bf16.mxu0 0
      %10047 = vmatpush1.bf16.msra.mxu0 0
      %10048 = vmatprep.subr.bf16.mxu0 0
      %10049 = vmatpush1.bf16.msra.mxu0 0
      %10050 = vmatprep.subr.bf16.mxu0 0
      %10051 = vmatpush1.bf16.msra.mxu0 0
      %10052 = vmatprep.subr.bf16.mxu0 0
      %10053 = vmatpush1.bf16.msra.mxu0 0
      %10054 = vmatprep.subr.bf16.mxu0 0
      %10055 = vmatpush1.bf16.msra.mxu0 0
      %10056 = vmatprep.subr.bf16.mxu0 0
      %10057 = vmatpush1.bf16.msra.mxu0 0
      %10058 = vmatprep.subr.bf16.mxu0 0
      %10059 = vmatpush1.bf16.msra.mxu0 0
      %10060 = vmatprep.subr.bf16.mxu0 0
      %10061 = vmatpush1.bf16.msra.mxu0 0
      %10062 = vmatprep.subr.bf16.mxu0 0
      %10063 = vmatpush1.bf16.msra.mxu0 0
      %10064 = vmatprep.subr.bf16.mxu0 0
      %10065 = vmatpush1.bf16.msra.mxu0 0
      %10066 = vmatprep.subr.bf16.mxu0 0
      %10067 = vmatpush1.bf16.msra.mxu0 0
      %10068 = vmatprep.mubr.bf16.mxu0 0
      %10069 = vmatmul.mubr.bf16.gmra.mrb[0].mxu0 %v10031
      %v10070 = vpop.f32.mrb[0].mxu0
      %v10071 = vadd.f32 0.0, %v10070
      %v10072 = vpop.f32.mrb[0].mxu0
      %v10073 = vpop.f32.mrb[0].mxu0
      %v10074 = vpop.f32.mrb[0].mxu0
      %10075 = vdwg.mxu0
      %10077 = vrot.lane.b32.xlu0 %v6985, 96
      %v10078 = vpop.permute.xlu0 %10077
      %v10080 = vsel %vm8950, %v8938, 0
      %v10083 = vsel %vm8954, %v10078, 0
      %10085 = vmatprep.subr.bf16.mxu0 0
      %10086 = vmatpush1.bf16.msra.mxu0 %v10083
      %10087 = vmatprep.subr.bf16.mxu0 0
      %10088 = vmatpush1.bf16.msra.mxu0 0
      %10089 = vmatprep.subr.bf16.mxu0 0
      %10090 = vmatpush1.bf16.msra.mxu0 0
      %10091 = vmatprep.subr.bf16.mxu0 0
      %10092 = vmatpush1.bf16.msra.mxu0 0
      %10093 = vmatprep.subr.bf16.mxu0 0
      %10094 = vmatpush1.bf16.msra.mxu0 0
      %10095 = vmatprep.subr.bf16.mxu0 0
      %10096 = vmatpush1.bf16.msra.mxu0 0
      %10097 = vmatprep.subr.bf16.mxu0 0
      %10098 = vmatpush1.bf16.msra.mxu0 0
      %10099 = vmatprep.subr.bf16.mxu0 0
      %10100 = vmatpush1.bf16.msra.mxu0 0
      %10101 = vmatprep.subr.bf16.mxu0 0
      %10102 = vmatpush1.bf16.msra.mxu0 0
      %10103 = vmatprep.subr.bf16.mxu0 0
      %10104 = vmatpush1.bf16.msra.mxu0 0
      %10105 = vmatprep.subr.bf16.mxu0 0
      %10106 = vmatpush1.bf16.msra.mxu0 0
      %10107 = vmatprep.subr.bf16.mxu0 0
      %10108 = vmatpush1.bf16.msra.mxu0 0
      %10109 = vmatprep.subr.bf16.mxu0 0
      %10110 = vmatpush1.bf16.msra.mxu0 0
      %10111 = vmatprep.subr.bf16.mxu0 0
      %10112 = vmatpush1.bf16.msra.mxu0 0
      %10113 = vmatprep.subr.bf16.mxu0 0
      %10114 = vmatpush1.bf16.msra.mxu0 0
      %10115 = vmatprep.subr.bf16.mxu0 0
      %10116 = vmatpush1.bf16.msra.mxu0 0
      %10117 = vmatprep.mubr.bf16.mxu0 0
      %10118 = vmatmul.mubr.bf16.gmra.mrb[0].mxu0 %v10080
      %v10119 = vpop.f32.mrb[0].mxu0
      %v10120 = vadd.f32 0.0, %v10119
      %v10121 = vpop.f32.mrb[0].mxu0
      %v10122 = vpop.f32.mrb[0].mxu0
      %v10123 = vpop.f32.mrb[0].mxu0
      %10124 = vdwg.mxu0
      %10126 = vrot.lane.b32.xlu0 %v6986, 96
      %v10127 = vpop.permute.xlu0 %10126
      %v10129 = vsel %vm8950, %v8939, 0
      %v10132 = vsel %vm8954, %v10127, 0
      %10134 = vmatprep.subr.bf16.mxu0 0
      %10135 = vmatpush1.bf16.msra.mxu0 %v10132
      %10136 = vmatprep.subr.bf16.mxu0 0
      %10137 = vmatpush1.bf16.msra.mxu0 0
      %10138 = vmatprep.subr.bf16.mxu0 0
      %10139 = vmatpush1.bf16.msra.mxu0 0
      %10140 = vmatprep.subr.bf16.mxu0 0
      %10141 = vmatpush1.bf16.msra.mxu0 0
      %10142 = vmatprep.subr.bf16.mxu0 0
      %10143 = vmatpush1.bf16.msra.mxu0 0
      %10144 = vmatprep.subr.bf16.mxu0 0
      %10145 = vmatpush1.bf16.msra.mxu0 0
      %10146 = vmatprep.subr.bf16.mxu0 0
      %10147 = vmatpush1.bf16.msra.mxu0 0
      %10148 = vmatprep.subr.bf16.mxu0 0
      %10149 = vmatpush1.bf16.msra.mxu0 0
      %10150 = vmatprep.subr.bf16.mxu0 0
      %10151 = vmatpush1.bf16.msra.mxu0 0
      %10152 = vmatprep.subr.bf16.mxu0 0
      %10153 = vmatpush1.bf16.msra.mxu0 0
      %10154 = vmatprep.subr.bf16.mxu0 0
      %10155 = vmatpush1.bf16.msra.mxu0 0
      %10156 = vmatprep.subr.bf16.mxu0 0
      %10157 = vmatpush1.bf16.msra.mxu0 0
      %10158 = vmatprep.subr.bf16.mxu0 0
      %10159 = vmatpush1.bf16.msra.mxu0 0
      %10160 = vmatprep.subr.bf16.mxu0 0
      %10161 = vmatpush1.bf16.msra.mxu0 0
      %10162 = vmatprep.subr.bf16.mxu0 0
      %10163 = vmatpush1.bf16.msra.mxu0 0
      %10164 = vmatprep.subr.bf16.mxu0 0
      %10165 = vmatpush1.bf16.msra.mxu0 0
      %10166 = vmatprep.mubr.bf16.mxu0 0
      %10167 = vmatmul.mubr.bf16.gmra.mrb[0].mxu0 %v10129
      %v10168 = vpop.f32.mrb[0].mxu0
      %v10169 = vadd.f32 0.0, %v10168
      %v10170 = vpop.f32.mrb[0].mxu0
      %v10171 = vpop.f32.mrb[0].mxu0
      %v10172 = vpop.f32.mrb[0].mxu0
      %10173 = vdwg.mxu0
      %10175 = vrot.lane.b32.xlu0 %v6987, 96
      %v10176 = vpop.permute.xlu0 %10175
      %v10178 = vsel %vm8950, %v8940, 0
      %v10181 = vsel %vm8954, %v10176, 0
      %10183 = vmatprep.subr.bf16.mxu0 0
      %10184 = vmatpush1.bf16.msra.mxu0 %v10181
      %10185 = vmatprep.subr.bf16.mxu0 0
      %10186 = vmatpush1.bf16.msra.mxu0 0
      %10187 = vmatprep.subr.bf16.mxu0 0
      %10188 = vmatpush1.bf16.msra.mxu0 0
      %10189 = vmatprep.subr.bf16.mxu0 0
      %10190 = vmatpush1.bf16.msra.mxu0 0
      %10191 = vmatprep.subr.bf16.mxu0 0
      %10192 = vmatpush1.bf16.msra.mxu0 0
      %10193 = vmatprep.subr.bf16.mxu0 0
      %10194 = vmatpush1.bf16.msra.mxu0 0
      %10195 = vmatprep.subr.bf16.mxu0 0
      %10196 = vmatpush1.bf16.msra.mxu0 0
      %10197 = vmatprep.subr.bf16.mxu0 0
      %10198 = vmatpush1.bf16.msra.mxu0 0
      %10199 = vmatprep.subr.bf16.mxu0 0
      %10200 = vmatpush1.bf16.msra.mxu0 0
      %10201 = vmatprep.subr.bf16.mxu0 0
      %10202 = vmatpush1.bf16.msra.mxu0 0
      %10203 = vmatprep.subr.bf16.mxu0 0
      %10204 = vmatpush1.bf16.msra.mxu0 0
      %10205 = vmatprep.subr.bf16.mxu0 0
      %10206 = vmatpush1.bf16.msra.mxu0 0
      %10207 = vmatprep.subr.bf16.mxu0 0
      %10208 = vmatpush1.bf16.msra.mxu0 0
      %10209 = vmatprep.subr.bf16.mxu0 0
      %10210 = vmatpush1.bf16.msra.mxu0 0
      %10211 = vmatprep.subr.bf16.mxu0 0
      %10212 = vmatpush1.bf16.msra.mxu0 0
      %10213 = vmatprep.subr.bf16.mxu0 0
      %10214 = vmatpush1.bf16.msra.mxu0 0
      %10215 = vmatprep.mubr.bf16.mxu0 0
      %10216 = vmatmul.mubr.bf16.gmra.mrb[0].mxu0 %v10178
      %v10217 = vpop.f32.mrb[0].mxu0
      %v10218 = vadd.f32 0.0, %v10217
      %v10219 = vpop.f32.mrb[0].mxu0
      %v10220 = vpop.f32.mrb[0].mxu0
      %v10221 = vpop.f32.mrb[0].mxu0
      %10222 = vdwg.mxu0
      %10224 = vrot.lane.b32.xlu0 %v6988, 96
      %v10225 = vpop.permute.xlu0 %10224
      %v10227 = vsel %vm8950, %v8941, 0
      %v10230 = vsel %vm8954, %v10225, 0
      %10232 = vmatprep.subr.bf16.mxu0 0
      %10233 = vmatpush1.bf16.msra.mxu0 %v10230
      %10234 = vmatprep.subr.bf16.mxu0 0
      %10235 = vmatpush1.bf16.msra.mxu0 0
      %10236 = vmatprep.subr.bf16.mxu0 0
      %10237 = vmatpush1.bf16.msra.mxu0 0
      %10238 = vmatprep.subr.bf16.mxu0 0
      %10239 = vmatpush1.bf16.msra.mxu0 0
      %10240 = vmatprep.subr.bf16.mxu0 0
      %10241 = vmatpush1.bf16.msra.mxu0 0
      %10242 = vmatprep.subr.bf16.mxu0 0
      %10243 = vmatpush1.bf16.msra.mxu0 0
      %10244 = vmatprep.subr.bf16.mxu0 0
      %10245 = vmatpush1.bf16.msra.mxu0 0
      %10246 = vmatprep.subr.bf16.mxu0 0
      %10247 = vmatpush1.bf16.msra.mxu0 0
      %10248 = vmatprep.subr.bf16.mxu0 0
      %10249 = vmatpush1.bf16.msra.mxu0 0
      %10250 = vmatprep.subr.bf16.mxu0 0
      %10251 = vmatpush1.bf16.msra.mxu0 0
      %10252 = vmatprep.subr.bf16.mxu0 0
      %10253 = vmatpush1.bf16.msra.mxu0 0
      %10254 = vmatprep.subr.bf16.mxu0 0
      %10255 = vmatpush1.bf16.msra.mxu0 0
      %10256 = vmatprep.subr.bf16.mxu0 0
      %10257 = vmatpush1.bf16.msra.mxu0 0
      %10258 = vmatprep.subr.bf16.mxu0 0
      %10259 = vmatpush1.bf16.msra.mxu0 0
      %10260 = vmatprep.subr.bf16.mxu0 0
      %10261 = vmatpush1.bf16.msra.mxu0 0
      %10262 = vmatprep.subr.bf16.mxu0 0
      %10263 = vmatpush1.bf16.msra.mxu0 0
      %10264 = vmatprep.mubr.bf16.mxu0 0
      %10265 = vmatmul.mubr.bf16.gmra.mrb[0].mxu0 %v10227
      %v10266 = vpop.f32.mrb[0].mxu0
      %v10267 = vadd.f32 0.0, %v10266
      %v10268 = vpop.f32.mrb[0].mxu0
      %v10269 = vpop.f32.mrb[0].mxu0
      %v10270 = vpop.f32.mrb[0].mxu0
      %10271 = vdwg.mxu0
      %10273 = vrot.lane.b32.xlu0 %v6989, 96
      %v10274 = vpop.permute.xlu0 %10273
      %v10276 = vsel %vm8950, %v8942, 0
      %v10279 = vsel %vm8954, %v10274, 0
      %10281 = vmatprep.subr.bf16.mxu0 0
      %10282 = vmatpush1.bf16.msra.mxu0 %v10279
      %10283 = vmatprep.subr.bf16.mxu0 0
      %10284 = vmatpush1.bf16.msra.mxu0 0
      %10285 = vmatprep.subr.bf16.mxu0 0
      %10286 = vmatpush1.bf16.msra.mxu0 0
      %10287 = vmatprep.subr.bf16.mxu0 0
      %10288 = vmatpush1.bf16.msra.mxu0 0
      %10289 = vmatprep.subr.bf16.mxu0 0
      %10290 = vmatpush1.bf16.msra.mxu0 0
      %10291 = vmatprep.subr.bf16.mxu0 0
      %10292 = vmatpush1.bf16.msra.mxu0 0
      %10293 = vmatprep.subr.bf16.mxu0 0
      %10294 = vmatpush1.bf16.msra.mxu0 0
      %10295 = vmatprep.subr.bf16.mxu0 0
      %10296 = vmatpush1.bf16.msra.mxu0 0
      %10297 = vmatprep.subr.bf16.mxu0 0
      %10298 = vmatpush1.bf16.msra.mxu0 0
      %10299 = vmatprep.subr.bf16.mxu0 0
      %10300 = vmatpush1.bf16.msra.mxu0 0
      %10301 = vmatprep.subr.bf16.mxu0 0
      %10302 = vmatpush1.bf16.msra.mxu0 0
      %10303 = vmatprep.subr.bf16.mxu0 0
      %10304 = vmatpush1.bf16.msra.mxu0 0
      %10305 = vmatprep.subr.bf16.mxu0 0
      %10306 = vmatpush1.bf16.msra.mxu0 0
      %10307 = vmatprep.subr.bf16.mxu0 0
      %10308 = vmatpush1.bf16.msra.mxu0 0
      %10309 = vmatprep.subr.bf16.mxu0 0
      %10310 = vmatpush1.bf16.msra.mxu0 0
      %10311 = vmatprep.subr.bf16.mxu0 0
      %10312 = vmatpush1.bf16.msra.mxu0 0
      %10313 = vmatprep.mubr.bf16.mxu0 0
      %10314 = vmatmul.mubr.bf16.gmra.mrb[0].mxu0 %v10276
      %v10315 = vpop.f32.mrb[0].mxu0
      %v10316 = vadd.f32 0.0, %v10315
      %v10317 = vpop.f32.mrb[0].mxu0
      %v10318 = vpop.f32.mrb[0].mxu0
      %v10319 = vpop.f32.mrb[0].mxu0
      %10320 = vdwg.mxu0
      %10322 = vrot.lane.b32.xlu0 %v6990, 96
      %v10323 = vpop.permute.xlu0 %10322
      %v10325 = vsel %vm8950, %v8943, 0
      %v10328 = vsel %vm8954, %v10323, 0
      %10330 = vmatprep.subr.bf16.mxu0 0
      %10331 = vmatpush1.bf16.msra.mxu0 %v10328
      %10332 = vmatprep.subr.bf16.mxu0 0
      %10333 = vmatpush1.bf16.msra.mxu0 0
      %10334 = vmatprep.subr.bf16.mxu0 0
      %10335 = vmatpush1.bf16.msra.mxu0 0
      %10336 = vmatprep.subr.bf16.mxu0 0
      %10337 = vmatpush1.bf16.msra.mxu0 0
      %10338 = vmatprep.subr.bf16.mxu0 0
      %10339 = vmatpush1.bf16.msra.mxu0 0
      %10340 = vmatprep.subr.bf16.mxu0 0
      %10341 = vmatpush1.bf16.msra.mxu0 0
      %10342 = vmatprep.subr.bf16.mxu0 0
      %10343 = vmatpush1.bf16.msra.mxu0 0
      %10344 = vmatprep.subr.bf16.mxu0 0
      %10345 = vmatpush1.bf16.msra.mxu0 0
      %10346 = vmatprep.subr.bf16.mxu0 0
      %10347 = vmatpush1.bf16.msra.mxu0 0
      %10348 = vmatprep.subr.bf16.mxu0 0
      %10349 = vmatpush1.bf16.msra.mxu0 0
      %10350 = vmatprep.subr.bf16.mxu0 0
      %10351 = vmatpush1.bf16.msra.mxu0 0
      %10352 = vmatprep.subr.bf16.mxu0 0
      %10353 = vmatpush1.bf16.msra.mxu0 0
      %10354 = vmatprep.subr.bf16.mxu0 0
      %10355 = vmatpush1.bf16.msra.mxu0 0
      %10356 = vmatprep.subr.bf16.mxu0 0
      %10357 = vmatpush1.bf16.msra.mxu0 0
      %10358 = vmatprep.subr.bf16.mxu0 0
      %10359 = vmatpush1.bf16.msra.mxu0 0
      %10360 = vmatprep.subr.bf16.mxu0 0
      %10361 = vmatpush1.bf16.msra.mxu0 0
      %10362 = vmatprep.mubr.bf16.mxu0 0
      %10363 = vmatmul.mubr.bf16.gmra.mrb[0].mxu0 %v10325
      %v10364 = vpop.f32.mrb[0].mxu0
      %v10365 = vadd.f32 0.0, %v10364
      %v10366 = vpop.f32.mrb[0].mxu0
      %v10367 = vpop.f32.mrb[0].mxu0
      %v10368 = vpop.f32.mrb[0].mxu0
      %10369 = vdwg.mxu0
      %10371 = vrot.lane.b32.xlu0 %v6991, 96
      %v10372 = vpop.permute.xlu0 %10371
      %v10374 = vsel %vm8950, %v8944, 0
      %v10377 = vsel %vm8954, %v10372, 0
      %10379 = vmatprep.subr.bf16.mxu0 0
      %10380 = vmatpush1.bf16.msra.mxu0 %v10377
      %10381 = vmatprep.subr.bf16.mxu0 0
      %10382 = vmatpush1.bf16.msra.mxu0 0
      %10383 = vmatprep.subr.bf16.mxu0 0
      %10384 = vmatpush1.bf16.msra.mxu0 0
      %10385 = vmatprep.subr.bf16.mxu0 0
      %10386 = vmatpush1.bf16.msra.mxu0 0
      %10387 = vmatprep.subr.bf16.mxu0 0
      %10388 = vmatpush1.bf16.msra.mxu0 0
      %10389 = vmatprep.subr.bf16.mxu0 0
      %10390 = vmatpush1.bf16.msra.mxu0 0
      %10391 = vmatprep.subr.bf16.mxu0 0
      %10392 = vmatpush1.bf16.msra.mxu0 0
      %10393 = vmatprep.subr.bf16.mxu0 0
      %10394 = vmatpush1.bf16.msra.mxu0 0
      %10395 = vmatprep.subr.bf16.mxu0 0
      %10396 = vmatpush1.bf16.msra.mxu0 0
      %10397 = vmatprep.subr.bf16.mxu0 0
      %10398 = vmatpush1.bf16.msra.mxu0 0
      %10399 = vmatprep.subr.bf16.mxu0 0
      %10400 = vmatpush1.bf16.msra.mxu0 0
      %10401 = vmatprep.subr.bf16.mxu0 0
      %10402 = vmatpush1.bf16.msra.mxu0 0
      %10403 = vmatprep.subr.bf16.mxu0 0
      %10404 = vmatpush1.bf16.msra.mxu0 0
      %10405 = vmatprep.subr.bf16.mxu0 0
      %10406 = vmatpush1.bf16.msra.mxu0 0
      %10407 = vmatprep.subr.bf16.mxu0 0
      %10408 = vmatpush1.bf16.msra.mxu0 0
      %10409 = vmatprep.subr.bf16.mxu0 0
      %10410 = vmatpush1.bf16.msra.mxu0 0
      %10411 = vmatprep.mubr.bf16.mxu0 0
      %10412 = vmatmul.mubr.bf16.gmra.mrb[0].mxu0 %v10374
      %v10413 = vpop.f32.mrb[0].mxu0
      %v10414 = vadd.f32 0.0, %v10413
      %v10415 = vpop.f32.mrb[0].mxu0
      %v10416 = vpop.f32.mrb[0].mxu0
      %v10417 = vpop.f32.mrb[0].mxu0
      %10418 = vdwg.mxu0
      %10420 = vrot.lane.b32.xlu0 %v6992, 96
      %v10421 = vpop.permute.xlu0 %10420
      %v10423 = vsel %vm8950, %v8945, 0
      %v10426 = vsel %vm8954, %v10421, 0
      %10428 = vmatprep.subr.bf16.mxu0 0
      %10429 = vmatpush1.bf16.msra.mxu0 %v10426
      %10430 = vmatprep.subr.bf16.mxu0 0
      %10431 = vmatpush1.bf16.msra.mxu0 0
      %10432 = vmatprep.subr.bf16.mxu0 0
      %10433 = vmatpush1.bf16.msra.mxu0 0
      %10434 = vmatprep.subr.bf16.mxu0 0
      %10435 = vmatpush1.bf16.msra.mxu0 0
      %10436 = vmatprep.subr.bf16.mxu0 0
      %10437 = vmatpush1.bf16.msra.mxu0 0
      %10438 = vmatprep.subr.bf16.mxu0 0
      %10439 = vmatpush1.bf16.msra.mxu0 0
      %10440 = vmatprep.subr.bf16.mxu0 0
      %10441 = vmatpush1.bf16.msra.mxu0 0
      %10442 = vmatprep.subr.bf16.mxu0 0
      %10443 = vmatpush1.bf16.msra.mxu0 0
      %10444 = vmatprep.subr.bf16.mxu0 0
      %10445 = vmatpush1.bf16.msra.mxu0 0
      %10446 = vmatprep.subr.bf16.mxu0 0
      %10447 = vmatpush1.bf16.msra.mxu0 0
      %10448 = vmatprep.subr.bf16.mxu0 0
      %10449 = vmatpush1.bf16.msra.mxu0 0
      %10450 = vmatprep.subr.bf16.mxu0 0
      %10451 = vmatpush1.bf16.msra.mxu0 0
      %10452 = vmatprep.subr.bf16.mxu0 0
      %10453 = vmatpush1.bf16.msra.mxu0 0
      %10454 = vmatprep.subr.bf16.mxu0 0
      %10455 = vmatpush1.bf16.msra.mxu0 0
      %10456 = vmatprep.subr.bf16.mxu0 0
      %10457 = vmatpush1.bf16.msra.mxu0 0
      %10458 = vmatprep.subr.bf16.mxu0 0
      %10459 = vmatpush1.bf16.msra.mxu0 0
      %10460 = vmatprep.mubr.bf16.mxu0 0
      %10461 = vmatmul.mubr.bf16.gmra.mrb[0].mxu0 %v10423
      %v10462 = vpop.f32.mrb[0].mxu0
      %v10463 = vadd.f32 0.0, %v10462
      %v10464 = vpop.f32.mrb[0].mxu0
      %v10465 = vpop.f32.mrb[0].mxu0
      %v10466 = vpop.f32.mrb[0].mxu0
      %10467 = vdwg.mxu0
      %10469 = vrot.lane.b32.xlu0 %v6993, 96
      %v10470 = vpop.permute.xlu0 %10469
      %v10472 = vsel %vm8950, %v8946, 0
      %v10475 = vsel %vm8954, %v10470, 0
      %10477 = vmatprep.subr.bf16.mxu0 0
      %10478 = vmatpush1.bf16.msra.mxu0 %v10475
      %10479 = vmatprep.subr.bf16.mxu0 0
      %10480 = vmatpush1.bf16.msra.mxu0 0
      %10481 = vmatprep.subr.bf16.mxu0 0
      %10482 = vmatpush1.bf16.msra.mxu0 0
      %10483 = vmatprep.subr.bf16.mxu0 0
      %10484 = vmatpush1.bf16.msra.mxu0 0
      %10485 = vmatprep.subr.bf16.mxu0 0
      %10486 = vmatpush1.bf16.msra.mxu0 0
      %10487 = vmatprep.subr.bf16.mxu0 0
      %10488 = vmatpush1.bf16.msra.mxu0 0
      %10489 = vmatprep.subr.bf16.mxu0 0
      %10490 = vmatpush1.bf16.msra.mxu0 0
      %10491 = vmatprep.subr.bf16.mxu0 0
      %10492 = vmatpush1.bf16.msra.mxu0 0
      %10493 = vmatprep.subr.bf16.mxu0 0
      %10494 = vmatpush1.bf16.msra.mxu0 0
      %10495 = vmatprep.subr.bf16.mxu0 0
      %10496 = vmatpush1.bf16.msra.mxu0 0
      %10497 = vmatprep.subr.bf16.mxu0 0
      %10498 = vmatpush1.bf16.msra.mxu0 0
      %10499 = vmatprep.subr.bf16.mxu0 0
      %10500 = vmatpush1.bf16.msra.mxu0 0
      %10501 = vmatprep.subr.bf16.mxu0 0
      %10502 = vmatpush1.bf16.msra.mxu0 0
      %10503 = vmatprep.subr.bf16.mxu0 0
      %10504 = vmatpush1.bf16.msra.mxu0 0
      %10505 = vmatprep.subr.bf16.mxu0 0
      %10506 = vmatpush1.bf16.msra.mxu0 0
      %10507 = vmatprep.subr.bf16.mxu0 0
      %10508 = vmatpush1.bf16.msra.mxu0 0
      %10509 = vmatprep.mubr.bf16.mxu0 0
      %10510 = vmatmul.mubr.bf16.gmra.mrb[0].mxu0 %v10472
      %v10511 = vpop.f32.mrb[0].mxu0
      %v10512 = vadd.f32 0.0, %v10511
      %v10513 = vpop.f32.mrb[0].mxu0
      %v10514 = vpop.f32.mrb[0].mxu0
      %v10515 = vpop.f32.mrb[0].mxu0
      %10516 = vdwg.mxu0
      %10525 = vrot.lane.b32.xlu0 %v9385, 8
      %v10526 = vpop.permute.xlu0 %10525
      %10527 = vrot.lane.b32.xlu0 %v9434, 8
      %v10528 = vpop.permute.xlu0 %10527
      %10529 = vrot.lane.b32.xlu0 %v9483, 8
      %v10530 = vpop.permute.xlu0 %10529
      %10531 = vrot.lane.b32.xlu0 %v9532, 8
      %v10532 = vpop.permute.xlu0 %10531
      %10533 = vrot.lane.b32.xlu0 %v9581, 8
      %v10534 = vpop.permute.xlu0 %10533
      %10535 = vrot.lane.b32.xlu0 %v9630, 8
      %v10536 = vpop.permute.xlu0 %10535
      %10537 = vrot.lane.b32.xlu0 %v9679, 8
      %v10538 = vpop.permute.xlu0 %10537
      %10539 = vrot.lane.b32.xlu0 %v9728, 8
      %v10540 = vpop.permute.xlu0 %10539
      %10557 = vrot.lane.b32.xlu0 %v9777, 16
      %v10558 = vpop.permute.xlu0 %10557
      %10559 = vrot.lane.b32.xlu0 %v9826, 16
      %v10560 = vpop.permute.xlu0 %10559
      %10561 = vrot.lane.b32.xlu0 %v9875, 16
      %v10562 = vpop.permute.xlu0 %10561
      %10563 = vrot.lane.b32.xlu0 %v9924, 16
      %v10564 = vpop.permute.xlu0 %10563
      %10565 = vrot.lane.b32.xlu0 %v9973, 16
      %v10566 = vpop.permute.xlu0 %10565
      %10567 = vrot.lane.b32.xlu0 %v10022, 16
      %v10568 = vpop.permute.xlu0 %10567
      %10569 = vrot.lane.b32.xlu0 %v10071, 16
      %v10570 = vpop.permute.xlu0 %10569
      %10571 = vrot.lane.b32.xlu0 %v10120, 16
      %v10572 = vpop.permute.xlu0 %10571
      %10589 = vrot.lane.b32.xlu0 %v10169, 24
      %v10590 = vpop.permute.xlu0 %10589
      %10591 = vrot.lane.b32.xlu0 %v10218, 24
      %v10592 = vpop.permute.xlu0 %10591
      %10593 = vrot.lane.b32.xlu0 %v10267, 24
      %v10594 = vpop.permute.xlu0 %10593
      %10595 = vrot.lane.b32.xlu0 %v10316, 24
      %v10596 = vpop.permute.xlu0 %10595
      %10597 = vrot.lane.b32.xlu0 %v10365, 24
      %v10598 = vpop.permute.xlu0 %10597
      %10599 = vrot.lane.b32.xlu0 %v10414, 24
      %v10600 = vpop.permute.xlu0 %10599
      %10601 = vrot.lane.b32.xlu0 %v10463, 24
      %v10602 = vpop.permute.xlu0 %10601
      %10603 = vrot.lane.b32.xlu0 %v10512, 24
      %v10604 = vpop.permute.xlu0 %10603
      %v10613 = vsel %vm370, %v8993, %v10526
      %v10614 = vsel %vm370, %v9042, %v10528
      %v10615 = vsel %vm370, %v9091, %v10530
      %v10616 = vsel %vm370, %v9140, %v10532
      %v10617 = vsel %vm370, %v9189, %v10534
      %v10618 = vsel %vm370, %v9238, %v10536
      %v10619 = vsel %vm370, %v9287, %v10538
      %v10620 = vsel %vm370, %v9336, %v10540
      %v10621 = vsel %vm2181, %v10613, %v10558
      %v10622 = vsel %vm2181, %v10614, %v10560
      %v10623 = vsel %vm2181, %v10615, %v10562
      %v10624 = vsel %vm2181, %v10616, %v10564
      %v10625 = vsel %vm2181, %v10617, %v10566
      %v10626 = vsel %vm2181, %v10618, %v10568
      %v10627 = vsel %vm2181, %v10619, %v10570
      %v10628 = vsel %vm2181, %v10620, %v10572
      %v10629 = vsel %vm2186, %v10621, %v10590
      %v10630 = vsel %vm2186, %v10622, %v10592
      %v10631 = vsel %vm2186, %v10623, %v10594
      %v10632 = vsel %vm2186, %v10624, %v10596
      %v10633 = vsel %vm2186, %v10625, %v10598
      %v10634 = vsel %vm2186, %v10626, %v10600
      %v10635 = vsel %vm2186, %v10627, %v10602
      %v10636 = vsel %vm2186, %v10628, %v10604
      %v10645 = vcombine.low %v10629, %v10630
      %v10646 = vcombine.low %v10631, %v10632
      %v10647 = vcombine.low %v10633, %v10634
      %v10648 = vcombine.low %v10635, %v10636
      %v10653 = vpack.c.bf16 %v10646, %v10645
      %v10654 = vpack.c.bf16 %v10648, %v10647
      %v10655 = vld [vmem:[%s2 + $0xc] sm:$0xf]
      %v10656 = vld [vmem:[%s2 + $0x20] sm:$0xf]
      %v10657 = vld [vmem:[%s2 + $0x34] sm:$0xf]
      %v10658 = vld [vmem:[%s2 + $0x48] sm:$0xf]
      %v10659 = vld [vmem:[%s4 + $0x4] sm:$0x1]
      %v10661 = vlaneseq
      %v10662 = vshrl.u32 %v10661, 7
      %v10663 = vsub.s32 0, %v10662
      %v10664 = vrot.slane %v10659, %v10663
      %v10669 = vunpack.c.l.b16 %v10655
      %v10670 = vunpack.c.l.b16 %v10656
      %v10671 = vunpack.c.l.b16 %v10657
      %v10672 = vunpack.c.l.b16 %v10658
      %v10673 = vpack.c.b16 %v10670, %v10669
      %v10674 = vpack.c.b16 %v10672, %v10671
      %10675 = vrot.lane.b32.xlu0 %v10673, 64
      %v10676 = vpop.permute.xlu0 %10675
      %10677 = vrot.lane.b32.xlu0 %v10674, 64
      %v10678 = vpop.permute.xlu0 %10677
      %10681 = vrot.lane.b32.xlu0 %v10664, 32
      %v10682 = vpop.permute.xlu0 %10681
      %v10685 = vsel %vm255, %v10653, 0
      %v10688 = vsel %vm255, %v10654, 0
      %10690 = vmatprep.subr.bf16.mxu0 0
      %10691 = vmatpush1.bf16.msra.mxu0 %v10676
      %10692 = vmatprep.subr.bf16.mxu0 0
      %10693 = vmatpush1.bf16.msra.mxu0 %v10678
      %10694 = vmatprep.subr.bf16.mxu0 0
      %10695 = vmatpush1.bf16.msra.mxu0 0
      %10696 = vmatprep.subr.bf16.mxu0 0
      %10697 = vmatpush1.bf16.msra.mxu0 0
      %10698 = vmatprep.subr.bf16.mxu0 0
      %10699 = vmatpush1.bf16.msra.mxu0 0
      %10700 = vmatprep.subr.bf16.mxu0 0
      %10701 = vmatpush1.bf16.msra.mxu0 0
      %10702 = vmatprep.subr.bf16.mxu0 0
      %10703 = vmatpush1.bf16.msra.mxu0 0
      %10704 = vmatprep.subr.bf16.mxu0 0
      %10705 = vmatpush1.bf16.msra.mxu0 0
      %10706 = vmatprep.subr.bf16.mxu0 0
      %10707 = vmatpush1.bf16.msra.mxu0 0
      %10708 = vmatprep.subr.bf16.mxu0 0
      %10709 = vmatpush1.bf16.msra.mxu0 0
      %10710 = vmatprep.subr.bf16.mxu0 0
      %10711 = vmatpush1.bf16.msra.mxu0 0
      %10712 = vmatprep.subr.bf16.mxu0 0
      %10713 = vmatpush1.bf16.msra.mxu0 0
      %10714 = vmatprep.subr.bf16.mxu0 0
      %10715 = vmatpush1.bf16.msra.mxu0 0
      %10716 = vmatprep.subr.bf16.mxu0 0
      %10717 = vmatpush1.bf16.msra.mxu0 0
      %10718 = vmatprep.subr.bf16.mxu0 0
      %10719 = vmatpush1.bf16.msra.mxu0 0
      %10720 = vmatprep.subr.bf16.mxu0 0
      %10721 = vmatpush1.bf16.msra.mxu0 0
      %10722 = vmatprep.mubr.bf16.mxu0 0
      %10723 = vmatmul.mubr.bf16.gmra.mrb[0].mxu0 %v10685
      %v10724 = vpop.f32.mrb[0].mxu0
      %v10725 = vadd.f32 %v10682, %v10724
      %v10726 = vpop.f32.mrb[0].mxu0
      %v10727 = vpop.f32.mrb[0].mxu0
      %v10728 = vadd.f32 %v10682, %v10727
      %v10729 = vpop.f32.mrb[0].mxu0
      %10730 = vmatprep.mubr.bf16.mxu0 0
      %10731 = vmatmul.mubr.bf16.gmra.mrb[0].mxu0 %v10688
      %v10732 = vpop.f32.mrb[0].mxu0
      %v10733 = vadd.f32 %v10682, %v10732
      %v10734 = vpop.f32.mrb[0].mxu0
      %v10735 = vpop.f32.mrb[0].mxu0
      %v10736 = vadd.f32 %v10682, %v10735
      %v10737 = vpop.f32.mrb[0].mxu0
      %10738 = vdwg.mxu0
      %v10743 = vcombine.high %v10725, %v10725
      %v10744 = vcombine.high %v10728, %v10728
      %v10745 = vcombine.high %v10733, %v10733
      %v10746 = vcombine.high %v10736, %v10736
      %v10751 = vadd.f32 %v2776, %v10725
      %v10752 = vadd.f32 %v2778, %v10743
      %v10753 = vadd.f32 %v2780, %v10728
      %v10754 = vadd.f32 %v2782, %v10744
      %v10755 = vadd.f32 %v2784, %v10733
      %v10756 = vadd.f32 %v2786, %v10745
      %v10757 = vadd.f32 %v2788, %v10736
      %v10758 = vadd.f32 %v2790, %v10746
      %v10759 = vld [vmem:[%s4 + $0x5] sm:$0x1]
      %v10768 = vcombine.low %v10751, %v10752
      %v10769 = vcombine.low %v10753, %v10754
      %v10770 = vcombine.low %v10755, %v10756
      %v10771 = vcombine.low %v10757, %v10758
      %v10776 = vsel %vm255, %v10768, 0.0
      %10777 = vadd.xlane.f32.xlu0 %v10776
      %v10778 = vpop.xlane.xlu0 %10777
      %v10779 = vsel %vm255, %v10769, 0.0
      %10780 = vadd.xlane.f32.xlu0 %v10779
      %v10781 = vpop.xlane.xlu0 %10780
      %v10782 = vsel %vm255, %v10770, 0.0
      %10783 = vadd.xlane.f32.xlu0 %v10782
      %v10784 = vpop.xlane.xlu0 %10783
      %v10785 = vsel %vm255, %v10771, 0.0
      %10786 = vadd.xlane.f32.xlu0 %v10785
      %v10787 = vpop.xlane.xlu0 %10786
      %v10788 = vmul.f32 %v10778, %v2294
      %v10789 = vmul.f32 %v10781, %v2294
      %v10790 = vmul.f32 %v10784, %v2294
      %v10791 = vmul.f32 %v10787, %v2294
      %v10797 = vunpack.c.l.s4 839922192
      %v10798 = vunpack.c.0.s8 %v10797
      %v10799 = vlaneseq
      %v10800 = vshrl.u32 %v10799, 7
      %v10801 = vsub.s32 %v10798, %v10800
      %v10802 = vrot.slane %v10788, %v10801
      %v10804 = vunpack.c.l.s4 1985246804
      %v10805 = vunpack.c.0.s8 %v10804
      %v10806 = vlaneseq
      %v10807 = vshrl.u32 %v10806, 7
      %v10808 = vsub.s32 %v10805, %v10807
      %v10809 = vrot.slane %v10788, %v10808
      %v10811 = vunpack.c.l.s4 839922192
      %v10812 = vunpack.c.0.s8 %v10811
      %v10813 = vlaneseq
      %v10814 = vshrl.u32 %v10813, 7
      %v10815 = vsub.s32 %v10812, %v10814
      %v10816 = vrot.slane %v10789, %v10815
      %v10818 = vunpack.c.l.s4 1985246804
      %v10819 = vunpack.c.0.s8 %v10818
      %v10820 = vlaneseq
      %v10821 = vshrl.u32 %v10820, 7
      %v10822 = vsub.s32 %v10819, %v10821
      %v10823 = vrot.slane %v10789, %v10822
      %v10825 = vunpack.c.l.s4 839922192
      %v10826 = vunpack.c.0.s8 %v10825
      %v10827 = vlaneseq
      %v10828 = vshrl.u32 %v10827, 7
      %v10829 = vsub.s32 %v10826, %v10828
      %v10830 = vrot.slane %v10790, %v10829
      %v10832 = vunpack.c.l.s4 1985246804
      %v10833 = vunpack.c.0.s8 %v10832
      %v10834 = vlaneseq
      %v10835 = vshrl.u32 %v10834, 7
      %v10836 = vsub.s32 %v10833, %v10835
      %v10837 = vrot.slane %v10790, %v10836
      %v10839 = vunpack.c.l.s4 839922192
      %v10840 = vunpack.c.0.s8 %v10839
      %v10841 = vlaneseq
      %v10842 = vshrl.u32 %v10841, 7
      %v10843 = vsub.s32 %v10840, %v10842
      %v10844 = vrot.slane %v10791, %v10843
      %v10846 = vunpack.c.l.s4 1985246804
      %v10847 = vunpack.c.0.s8 %v10846
      %v10848 = vlaneseq
      %v10849 = vshrl.u32 %v10848, 7
      %v10850 = vsub.s32 %v10847, %v10849
      %v10851 = vrot.slane %v10791, %v10850
      %v10860 = vsub.f32 %v10751, %v10802
      %v10861 = vsub.f32 %v10752, %v10809
      %v10862 = vsub.f32 %v10753, %v10816
      %v10863 = vsub.f32 %v10754, %v10823
      %v10864 = vsub.f32 %v10755, %v10830
      %v10865 = vsub.f32 %v10756, %v10837
      %v10866 = vsub.f32 %v10757, %v10844
      %v10867 = vsub.f32 %v10758, %v10851
      %v10868 = vmul.f32 %v10860, %v10860
      %v10869 = vmul.f32 %v10861, %v10861
      %v10870 = vmul.f32 %v10862, %v10862
      %v10871 = vmul.f32 %v10863, %v10863
      %v10872 = vmul.f32 %v10864, %v10864
      %v10873 = vmul.f32 %v10865, %v10865
      %v10874 = vmul.f32 %v10866, %v10866
      %v10875 = vmul.f32 %v10867, %v10867
      %v10884 = vcombine.low %v10868, %v10869
      %v10885 = vcombine.low %v10870, %v10871
      %v10886 = vcombine.low %v10872, %v10873
      %v10887 = vcombine.low %v10874, %v10875
      %v10892 = vsel %vm255, %v10884, 0.0
      %10893 = vadd.xlane.f32.xlu0 %v10892
      %v10894 = vpop.xlane.xlu0 %10893
      %v10895 = vsel %vm255, %v10885, 0.0
      %10896 = vadd.xlane.f32.xlu0 %v10895
      %v10897 = vpop.xlane.xlu0 %10896
      %v10898 = vsel %vm255, %v10886, 0.0
      %10899 = vadd.xlane.f32.xlu0 %v10898
      %v10900 = vpop.xlane.xlu0 %10899
      %v10901 = vsel %vm255, %v10887, 0.0
      %10902 = vadd.xlane.f32.xlu0 %v10901
      %v10903 = vpop.xlane.xlu0 %10902
      %v10904 = vmul.f32 %v10894, %v2294
      %v10905 = vmul.f32 %v10897, %v2294
      %v10906 = vmul.f32 %v10900, %v2294
      %v10907 = vmul.f32 %v10903, %v2294
      %v10908 = vadd.f32 %v10904, 1e-05
      %v10909 = vadd.f32 %v10905, 1e-05
      %v10910 = vadd.f32 %v10906, 1e-05
      %v10911 = vadd.f32 %v10907, 1e-05
      %v10912 = vrsqrt.pop %v10908
      %v10913 = vrsqrt.pop %v10909
      %v10914 = vrsqrt.pop %v10910
      %v10915 = vrsqrt.pop %v10911
      %v10921 = vunpack.c.l.s4 839922192
      %v10922 = vunpack.c.0.s8 %v10921
      %v10923 = vlaneseq
      %v10924 = vshrl.u32 %v10923, 7
      %v10925 = vsub.s32 %v10922, %v10924
      %v10926 = vrot.slane %v10912, %v10925
      %v10928 = vunpack.c.l.s4 1985246804
      %v10929 = vunpack.c.0.s8 %v10928
      %v10930 = vlaneseq
      %v10931 = vshrl.u32 %v10930, 7
      %v10932 = vsub.s32 %v10929, %v10931
      %v10933 = vrot.slane %v10912, %v10932
      %v10935 = vunpack.c.l.s4 839922192
      %v10936 = vunpack.c.0.s8 %v10935
      %v10937 = vlaneseq
      %v10938 = vshrl.u32 %v10937, 7
      %v10939 = vsub.s32 %v10936, %v10938
      %v10940 = vrot.slane %v10913, %v10939
      %v10942 = vunpack.c.l.s4 1985246804
      %v10943 = vunpack.c.0.s8 %v10942
      %v10944 = vlaneseq
      %v10945 = vshrl.u32 %v10944, 7
      %v10946 = vsub.s32 %v10943, %v10945
      %v10947 = vrot.slane %v10913, %v10946
      %v10949 = vunpack.c.l.s4 839922192
      %v10950 = vunpack.c.0.s8 %v10949
      %v10951 = vlaneseq
      %v10952 = vshrl.u32 %v10951, 7
      %v10953 = vsub.s32 %v10950, %v10952
      %v10954 = vrot.slane %v10914, %v10953
      %v10956 = vunpack.c.l.s4 1985246804
      %v10957 = vunpack.c.0.s8 %v10956
      %v10958 = vlaneseq
      %v10959 = vshrl.u32 %v10958, 7
      %v10960 = vsub.s32 %v10957, %v10959
      %v10961 = vrot.slane %v10914, %v10960
      %v10963 = vunpack.c.l.s4 839922192
      %v10964 = vunpack.c.0.s8 %v10963
      %v10965 = vlaneseq
      %v10966 = vshrl.u32 %v10965, 7
      %v10967 = vsub.s32 %v10964, %v10966
      %v10968 = vrot.slane %v10915, %v10967
      %v10970 = vunpack.c.l.s4 1985246804
      %v10971 = vunpack.c.0.s8 %v10970
      %v10972 = vlaneseq
      %v10973 = vshrl.u32 %v10972, 7
      %v10974 = vsub.s32 %v10971, %v10973
      %v10975 = vrot.slane %v10915, %v10974
      %v10984 = vmul.f32 %v10860, %v10926
      %v10985 = vmul.f32 %v10861, %v10933
      %v10986 = vmul.f32 %v10862, %v10940
      %v10987 = vmul.f32 %v10863, %v10947
      %v10988 = vmul.f32 %v10864, %v10954
      %v10989 = vmul.f32 %v10865, %v10961
      %v10990 = vmul.f32 %v10866, %v10968
      %v10991 = vmul.f32 %v10867, %v10975
      %v10993 = vlaneseq
      %v10994 = vshrl.u32 %v10993, 7
      %v10995 = vsub.s32 0, %v10994
      %v10996 = vrot.slane %v10759, %v10995
      %v10998 = vcombine.high %v10996, %v10996
      %v11000 = vmul.f32 %v10984, %v10996
      %v11001 = vmul.f32 %v10985, %v10998
      %v11002 = vmul.f32 %v10986, %v10996
      %v11003 = vmul.f32 %v10987, %v10998
      %v11004 = vmul.f32 %v10988, %v10996
      %v11005 = vmul.f32 %v10989, %v10998
      %v11006 = vmul.f32 %v10990, %v10996
      %v11007 = vmul.f32 %v10991, %v10998
      %11008 = vrot.lane.b32.xlu0 %v10996, 96
      %v11009 = vpop.permute.xlu0 %11008
      %11010 = vrot.lane.b32.xlu0 %v10998, 96
      %v11011 = vpop.permute.xlu0 %11010
      %v11014 = vadd.f32 %v11000, %v11009
      %v11015 = vadd.f32 %v11001, %v11011
      %v11016 = vadd.f32 %v11002, %v11009
      %v11017 = vadd.f32 %v11003, %v11011
      %v11018 = vadd.f32 %v11004, %v11009
      %v11019 = vadd.f32 %v11005, %v11011
      %v11020 = vadd.f32 %v11006, %v11009
      %v11021 = vadd.f32 %v11007, %v11011
      %v11030 = vcombine.low %v11014, %v11015
      %v11031 = vcombine.low %v11016, %v11017
      %v11032 = vcombine.low %v11018, %v11019
      %v11033 = vcombine.low %v11020, %v11021
      %v11038 = vpack.c.bf16 %v11031, %v11030
      %v11039 = vpack.c.bf16 %v11033, %v11032
      %v11040 = vld [vmem:[%s2 + $0xc] sm:$0xff]
      %v11041 = vld [vmem:[%s2 + $0x20] sm:$0xff]
      %v11042 = vld [vmem:[%s2 + $0x34] sm:$0xff]
      %v11043 = vld [vmem:[%s2 + $0x48] sm:$0xff]
      %v11044 = vld [vmem:[%s4 + $0x5] sm:$0x3]
      %v11046 = vlaneseq
      %v11047 = vshrl.u32 %v11046, 7
      %v11048 = vsub.s32 0, %v11047
      %v11049 = vrot.slane %v11044, %v11048
      %v11050 = vlaneseq
      %v11051 = vshrl.u32 %v11050, 7
      %v11052 = vsub.s32 1, %v11051
      %v11053 = vrot.slane %v11044, %v11052
      %v11058 = vunpack.c.l.b16 %v11040
      %v11059 = vunpack.c.h.b16 %v11040
      %v11060 = vunpack.c.l.b16 %v11041
      %v11061 = vunpack.c.h.b16 %v11041
      %v11062 = vunpack.c.l.b16 %v11042
      %v11063 = vunpack.c.h.b16 %v11042
      %v11064 = vunpack.c.l.b16 %v11043
      %v11065 = vunpack.c.h.b16 %v11043
      %v11066 = vpack.c.b16 %v11060, %v11058
      %v11067 = vpack.c.b16 %v11061, %v11059
      %v11068 = vpack.c.b16 %v11064, %v11062
      %v11069 = vpack.c.b16 %v11065, %v11063
      %11070 = vrot.lane.b32.xlu0 %v11066, 32
      %v11071 = vpop.permute.xlu0 %11070
      %11072 = vrot.lane.b32.xlu0 %v11067, 32
      %v11073 = vpop.permute.xlu0 %11072
      %11074 = vrot.lane.b32.xlu0 %v11068, 32
      %v11075 = vpop.permute.xlu0 %11074
      %11076 = vrot.lane.b32.xlu0 %v11069, 32
      %v11077 = vpop.permute.xlu0 %11076
      %vm11078 = vcmask 261120
      %v11079 = vsel %vm11078, %v11071, %v11073
      %v11080 = vsel %vm11078, %v11075, %v11077
      %11083 = vrot.lane.b32.xlu0 %v11049, 64
      %v11084 = vpop.permute.xlu0 %11083
      %11085 = vrot.lane.b32.xlu0 %v11053, 64
      %v11086 = vpop.permute.xlu0 %11085
      %v11087 = vsel %vm2384, %v11084, %v11086
      %v11090 = vsel %vm255, %v11038, 0
      %v11093 = vsel %vm255, %v11039, 0
      %11095 = vmatprep.subr.bf16.mxu0 0
      %11096 = vmatpush1.bf16.msra.mxu0 %v11079
      %11097 = vmatprep.subr.bf16.mxu0 0
      %11098 = vmatpush1.bf16.msra.mxu0 %v11080
      %11099 = vmatprep.subr.bf16.mxu0 0
      %11100 = vmatpush1.bf16.msra.mxu0 0
      %11101 = vmatprep.subr.bf16.mxu0 0
      %11102 = vmatpush1.bf16.msra.mxu0 0
      %11103 = vmatprep.subr.bf16.mxu0 0
      %11104 = vmatpush1.bf16.msra.mxu0 0
      %11105 = vmatprep.subr.bf16.mxu0 0
      %11106 = vmatpush1.bf16.msra.mxu0 0
      %11107 = vmatprep.subr.bf16.mxu0 0
      %11108 = vmatpush1.bf16.msra.mxu0 0
      %11109 = vmatprep.subr.bf16.mxu0 0
      %11110 = vmatpush1.bf16.msra.mxu0 0
      %11111 = vmatprep.subr.bf16.mxu0 0
      %11112 = vmatpush1.bf16.msra.mxu0 0
      %11113 = vmatprep.subr.bf16.mxu0 0
      %11114 = vmatpush1.bf16.msra.mxu0 0
      %11115 = vmatprep.subr.bf16.mxu0 0
      %11116 = vmatpush1.bf16.msra.mxu0 0
      %11117 = vmatprep.subr.bf16.mxu0 0
      %11118 = vmatpush1.bf16.msra.mxu0 0
      %11119 = vmatprep.subr.bf16.mxu0 0
      %11120 = vmatpush1.bf16.msra.mxu0 0
      %11121 = vmatprep.subr.bf16.mxu0 0
      %11122 = vmatpush1.bf16.msra.mxu0 0
      %11123 = vmatprep.subr.bf16.mxu0 0
      %11124 = vmatpush1.bf16.msra.mxu0 0
      %11125 = vmatprep.subr.bf16.mxu0 0
      %11126 = vmatpush1.bf16.msra.mxu0 0
      %11127 = vmatprep.mubr.bf16.mxu0 0
      %11128 = vmatmul.mubr.bf16.gmra.mrb[0].mxu0 %v11090
      %v11129 = vpop.f32.mrb[0].mxu0
      %v11130 = vadd.f32 %v11087, %v11129
      %v11131 = vpop.f32.mrb[0].mxu0
      %v11132 = vpop.f32.mrb[0].mxu0
      %v11133 = vadd.f32 %v11087, %v11132
      %v11134 = vpop.f32.mrb[0].mxu0
      %11135 = vmatprep.mubr.bf16.mxu0 0
      %11136 = vmatmul.mubr.bf16.gmra.mrb[0].mxu0 %v11093
      %v11137 = vpop.f32.mrb[0].mxu0
      %v11138 = vadd.f32 %v11087, %v11137
      %v11139 = vpop.f32.mrb[0].mxu0
      %v11140 = vpop.f32.mrb[0].mxu0
      %v11141 = vadd.f32 %v11087, %v11140
      %v11142 = vpop.f32.mrb[0].mxu0
      %11143 = vdwg.mxu0
      %v11144 = vmul.f32 %v11130, %v11130
      %v11145 = vmul.f32 %v11133, %v11133
      %v11146 = vmul.f32 %v11138, %v11138
      %v11147 = vmul.f32 %v11141, %v11141
      %v11148 = vmul.f32 %v11130, %v11144
      %v11149 = vmul.f32 %v11133, %v11145
      %v11150 = vmul.f32 %v11138, %v11146
      %v11151 = vmul.f32 %v11141, %v11147
      %v11152 = vmul.f32 %v11148, 0.044715
      %v11153 = vmul.f32 %v11149, 0.044715
      %v11154 = vmul.f32 %v11150, 0.044715
      %v11155 = vmul.f32 %v11151, 0.044715
      %v11156 = vadd.f32 %v11130, %v11152
      %v11157 = vadd.f32 %v11133, %v11153
      %v11158 = vadd.f32 %v11138, %v11154
      %v11159 = vadd.f32 %v11141, %v11155
      %v11160 = vmul.f32 %v11156, 0.7978846
      %v11161 = vmul.f32 %v11157, 0.7978846
      %v11162 = vmul.f32 %v11158, 0.7978846
      %v11163 = vmul.f32 %v11159, 0.7978846
      %v11164 = vtanh.pop %v11160
      %v11165 = vtanh.pop %v11161
      %v11166 = vtanh.pop %v11162
      %v11167 = vtanh.pop %v11163
      %v11168 = vadd.f32 %v11164, 1.0
      %v11169 = vadd.f32 %v11165, 1.0
      %v11170 = vadd.f32 %v11166, 1.0
      %v11171 = vadd.f32 %v11167, 1.0
      %v11172 = vmul.f32 %v11168, 0.5
      %v11173 = vmul.f32 %v11169, 0.5
      %v11174 = vmul.f32 %v11170, 0.5
      %v11175 = vmul.f32 %v11171, 0.5
      %v11176 = vmul.f32 %v11130, %v11172
      %v11177 = vmul.f32 %v11133, %v11173
      %v11178 = vmul.f32 %v11138, %v11174
      %v11179 = vmul.f32 %v11141, %v11175
      %v11180 = vpack.c.bf16 %v11177, %v11176
      %v11181 = vpack.c.bf16 %v11179, %v11178
      %v11182 = vld [vmem:[%s3] sm:$0xf]
      %v11183 = vld [vmem:[%s3 + $0x4] sm:$0xf]
      %v11184 = vld [vmem:[%s3 + $0x8] sm:$0xf]
      %v11185 = vld [vmem:[%s3 + $0xc] sm:$0xf]
      %v11186 = vld [vmem:[%s3 + $0x10] sm:$0xf]
      %v11187 = vld [vmem:[%s3 + $0x14] sm:$0xf]
      %v11188 = vld [vmem:[%s3 + $0x18] sm:$0xf]
      %v11189 = vld [vmem:[%s3 + $0x1c] sm:$0xf]
      %v11190 = vld [vmem:[%s3 + $0x20] sm:$0xf]
      %v11191 = vld [vmem:[%s3 + $0x24] sm:$0xf]
      %v11192 = vld [vmem:[%s3 + $0x28] sm:$0xf]
      %v11193 = vld [vmem:[%s3 + $0x2c] sm:$0xf]
      %v11194 = vld [vmem:[%s3 + $0x30] sm:$0xf]
      %v11195 = vld [vmem:[%s3 + $0x34] sm:$0xf]
      %v11196 = vld [vmem:[%s3 + $0x38] sm:$0xf]
      %v11197 = vld [vmem:[%s3 + $0x3c] sm:$0xf]
      %v11198 = vld [vmem:[%s4 + $0x6] sm:$0x1]
      %v11200 = vlaneseq
      %v11201 = vshrl.u32 %v11200, 7
      %v11202 = vsub.s32 0, %v11201
      %v11203 = vrot.slane %v11198, %v11202
      %v11220 = vunpack.c.l.b16 %v11182
      %v11221 = vunpack.c.l.b16 %v11183
      %v11222 = vunpack.c.l.b16 %v11184
      %v11223 = vunpack.c.l.b16 %v11185
      %v11224 = vunpack.c.l.b16 %v11186
      %v11225 = vunpack.c.l.b16 %v11187
      %v11226 = vunpack.c.l.b16 %v11188
      %v11227 = vunpack.c.l.b16 %v11189
      %v11228 = vunpack.c.l.b16 %v11190
      %v11229 = vunpack.c.l.b16 %v11191
      %v11230 = vunpack.c.l.b16 %v11192
      %v11231 = vunpack.c.l.b16 %v11193
      %v11232 = vunpack.c.l.b16 %v11194
      %v11233 = vunpack.c.l.b16 %v11195
      %v11234 = vunpack.c.l.b16 %v11196
      %v11235 = vunpack.c.l.b16 %v11197
      %v11236 = vpack.c.b16 %v11221, %v11220
      %v11237 = vpack.c.b16 %v11223, %v11222
      %v11238 = vpack.c.b16 %v11225, %v11224
      %v11239 = vpack.c.b16 %v11227, %v11226
      %v11240 = vpack.c.b16 %v11229, %v11228
      %v11241 = vpack.c.b16 %v11231, %v11230
      %v11242 = vpack.c.b16 %v11233, %v11232
      %v11243 = vpack.c.b16 %v11235, %v11234
      %11244 = vrot.lane.b32.xlu0 %v11236, 96
      %v11245 = vpop.permute.xlu0 %11244
      %11246 = vrot.lane.b32.xlu0 %v11237, 96
      %v11247 = vpop.permute.xlu0 %11246
      %11248 = vrot.lane.b32.xlu0 %v11238, 96
      %v11249 = vpop.permute.xlu0 %11248
      %11250 = vrot.lane.b32.xlu0 %v11239, 96
      %v11251 = vpop.permute.xlu0 %11250
      %11252 = vrot.lane.b32.xlu0 %v11240, 96
      %v11253 = vpop.permute.xlu0 %11252
      %11254 = vrot.lane.b32.xlu0 %v11241, 96
      %v11255 = vpop.permute.xlu0 %11254
      %11256 = vrot.lane.b32.xlu0 %v11242, 96
      %v11257 = vpop.permute.xlu0 %11256
      %11258 = vrot.lane.b32.xlu0 %v11243, 96
      %v11259 = vpop.permute.xlu0 %11258
      %11268 = vrot.lane.b32.xlu0 %v11203, 64
      %v11269 = vpop.permute.xlu0 %11268
      %11271 = vmatprep.subr.bf16.mxu0 0
      %11272 = vmatpush1.bf16.msra.mxu0 %v11245
      %11273 = vmatprep.subr.bf16.mxu0 0
      %11274 = vmatpush1.bf16.msra.mxu0 %v11247
      %11275 = vmatprep.subr.bf16.mxu0 0
      %11276 = vmatpush1.bf16.msra.mxu0 %v11249
      %11277 = vmatprep.subr.bf16.mxu0 0
      %11278 = vmatpush1.bf16.msra.mxu0 %v11251
      %11279 = vmatprep.subr.bf16.mxu0 0
      %11280 = vmatpush1.bf16.msra.mxu0 %v11253
      %11281 = vmatprep.subr.bf16.mxu0 0
      %11282 = vmatpush1.bf16.msra.mxu0 %v11255
      %11283 = vmatprep.subr.bf16.mxu0 0
      %11284 = vmatpush1.bf16.msra.mxu0 %v11257
      %11285 = vmatprep.subr.bf16.mxu0 0
      %11286 = vmatpush1.bf16.msra.mxu0 %v11259
      %11287 = vmatprep.subr.bf16.mxu0 0
      %11288 = vmatpush1.bf16.msra.mxu0 0
      %11289 = vmatprep.subr.bf16.mxu0 0
      %11290 = vmatpush1.bf16.msra.mxu0 0
      %11291 = vmatprep.subr.bf16.mxu0 0
      %11292 = vmatpush1.bf16.msra.mxu0 0
      %11293 = vmatprep.subr.bf16.mxu0 0
      %11294 = vmatpush1.bf16.msra.mxu0 0
      %11295 = vmatprep.subr.bf16.mxu0 0
      %11296 = vmatpush1.bf16.msra.mxu0 0
      %11297 = vmatprep.subr.bf16.mxu0 0
      %11298 = vmatpush1.bf16.msra.mxu0 0
      %11299 = vmatprep.subr.bf16.mxu0 0
      %11300 = vmatpush1.bf16.msra.mxu0 0
      %11301 = vmatprep.subr.bf16.mxu0 0
      %11302 = vmatpush1.bf16.msra.mxu0 0
      %11303 = vmatprep.mubr.bf16.mxu0 0
      %11304 = vmatmul.mubr.bf16.gmra.mrb[0].mxu0 %v11180
      %v11305 = vpop.f32.mrb[0].mxu0
      %v11306 = vadd.f32 %v11269, %v11305
      %v11307 = vpop.f32.mrb[0].mxu0
      %v11308 = vpop.f32.mrb[0].mxu0
      %v11309 = vadd.f32 %v11269, %v11308
      %v11310 = vpop.f32.mrb[0].mxu0
      %11311 = vmatprep.mubr.bf16.mxu0 0
      %11312 = vmatmul.mubr.bf16.gmra.mrb[0].mxu0 %v11181
      %v11313 = vpop.f32.mrb[0].mxu0
      %v11314 = vadd.f32 %v11269, %v11313
      %v11315 = vpop.f32.mrb[0].mxu0
      %v11316 = vpop.f32.mrb[0].mxu0
      %v11317 = vadd.f32 %v11269, %v11316
      %v11318 = vpop.f32.mrb[0].mxu0
      %11319 = vdwg.mxu0
      %v11320 = vadd.f32 %v11306, %v11306
      %v11321 = vadd.f32 %v11309, %v11309
      %v11322 = vadd.f32 %v11314, %v11314
      %v11323 = vadd.f32 %v11317, %v11317
      %v11324 = vld [vmem:[%s4 + $0x7] sm:$0x1]
      %v11325 = vsel %vm255, %v11320, 0.0
      %11326 = vadd.xlane.f32.xlu0 %v11325
      %v11327 = vpop.xlane.xlu0 %11326
      %v11328 = vsel %vm255, %v11321, 0.0
      %11329 = vadd.xlane.f32.xlu0 %v11328
      %v11330 = vpop.xlane.xlu0 %11329
      %v11331 = vsel %vm255, %v11322, 0.0
      %11332 = vadd.xlane.f32.xlu0 %v11331
      %v11333 = vpop.xlane.xlu0 %11332
      %v11334 = vsel %vm255, %v11323, 0.0
      %11335 = vadd.xlane.f32.xlu0 %v11334
      %v11336 = vpop.xlane.xlu0 %11335
      %v11337 = vmul.f32 %v11327, %v2294
      %v11338 = vmul.f32 %v11330, %v2294
      %v11339 = vmul.f32 %v11333, %v2294
      %v11340 = vmul.f32 %v11336, %v2294
      %v11341 = vsub.f32 %v11320, %v11337
      %v11342 = vsub.f32 %v11321, %v11338
      %v11343 = vsub.f32 %v11322, %v11339
      %v11344 = vsub.f32 %v11323, %v11340
      %v11345 = vmul.f32 %v11341, %v11341
      %v11346 = vmul.f32 %v11342, %v11342
      %v11347 = vmul.f32 %v11343, %v11343
      %v11348 = vmul.f32 %v11344, %v11344
      %v11349 = vsel %vm255, %v11345, 0.0
      %11350 = vadd.xlane.f32.xlu0 %v11349
      %v11351 = vpop.xlane.xlu0 %11350
      %v11352 = vsel %vm255, %v11346, 0.0
      %11353 = vadd.xlane.f32.xlu0 %v11352
      %v11354 = vpop.xlane.xlu0 %11353
      %v11355 = vsel %vm255, %v11347, 0.0
      %11356 = vadd.xlane.f32.xlu0 %v11355
      %v11357 = vpop.xlane.xlu0 %11356
      %v11358 = vsel %vm255, %v11348, 0.0
      %11359 = vadd.xlane.f32.xlu0 %v11358
      %v11360 = vpop.xlane.xlu0 %11359
      %v11361 = vmul.f32 %v11351, %v2294
      %v11362 = vmul.f32 %v11354, %v2294
      %v11363 = vmul.f32 %v11357, %v2294
      %v11364 = vmul.f32 %v11360, %v2294
      %v11365 = vadd.f32 %v11361, 1e-05
      %v11366 = vadd.f32 %v11362, 1e-05
      %v11367 = vadd.f32 %v11363, 1e-05
      %v11368 = vadd.f32 %v11364, 1e-05
      %v11369 = vrsqrt.pop %v11365
      %v11370 = vrsqrt.pop %v11366
      %v11371 = vrsqrt.pop %v11367
      %v11372 = vrsqrt.pop %v11368
      %v11373 = vmul.f32 %v11341, %v11369
      %v11374 = vmul.f32 %v11342, %v11370
      %v11375 = vmul.f32 %v11343, %v11371
      %v11376 = vmul.f32 %v11344, %v11372
      %11377 = vrot.lane.b32.xlu0 %v11203, 32
      %v11378 = vpop.permute.xlu0 %11377
      %v11380 = vmul.f32 %v11373, %v11378
      %v11381 = vmul.f32 %v11374, %v11378
      %v11382 = vmul.f32 %v11375, %v11378
      %v11383 = vmul.f32 %v11376, %v11378
      %v11385 = vlaneseq
      %v11386 = vshrl.u32 %v11385, 7
      %v11387 = vsub.s32 0, %v11386
      %v11388 = vrot.slane %v11324, %v11387
      %v11390 = vadd.f32 %v11380, %v11388
      %v11391 = vadd.f32 %v11381, %v11388
      %v11392 = vadd.f32 %v11382, %v11388
      %v11393 = vadd.f32 %v11383, %v11388
      %11394 = vst.msk [vmem:[%s224] sm:$0xff] %vm255, %v11390
      %11395 = vst.msk [vmem:[%s224 + $0x8] sm:$0xff] %vm255, %v11391
      %11396 = vst.msk [vmem:[%s224 + $0x10] sm:$0xff] %vm255, %v11392
      %11397 = vst.msk [vmem:[%s224 + $0x18] sm:$0xff] %vm255, %v11393
      %p11398 = scmp.lt.s32.totalorder %s16, 1
      %s11399 = scalar_select %p11398, %s16, 1
      %s11400 = smul.addr %s11399, 4
      %s11401 = smul.addr %s11400, 8
      %s11402 = scalar_lea.vmem %s5, %s11401
      // Predicated region
      $region41: #{two_stage_attention.1} parent=39 // pred_check
        %p11403 = pneg %p144
      $region42: #{two_stage_attention.1} parent=39 // pred_check_branch
        %11405 = sbr.rel (%p11403) target = $region44
      $region43: #{two_stage_attention.1} parent=39 // pred_region
        _
      $region44: #{two_stage_attention.1} parent=39 // pred_fallthru
        _
    $region40: #{two_stage_attention.1} parent=5 // pred_fallthru
      _
    %p11406 = scmp.le.s32.totalorder 2, %s11
    // Predicated region
    $region45: #{two_stage_attention.1} parent=5 // pred_check
      %p11407 = pneg %p11406
    $region46: #{two_stage_attention.1} parent=5 // pred_check_branch
      %11409 = sbr.rel (%p11407) target = $region48
    $region47: #{two_stage_attention.1} parent=5 // pred_region
      %s11410 = ssub.s32 %s11, 2
      // Predicated region
      $region49: #{two_stage_attention.1} parent=47 // pred_check
        %p11411 = pneg %p150
      $region50: #{two_stage_attention.1} parent=47 // pred_check_branch
        %11413 = sbr.rel (%p11411) target = $region52
      $region51: #{two_stage_attention.1} parent=47 // pred_region
        %p11414 = scmp.lt.s32.totalorder %s17, 1
        %s11415 = scalar_select %p11414, %s17, 1
        %s11416 = smul.addr %s11415, 4
        %s11417 = smul.addr %s11416, 8
        %s11418 = scalar_lea.vmem %s5, %s11417
      $region52: #{two_stage_attention.1} parent=47 // pred_fallthru
        _
    $region48: #{two_stage_attention.1} parent=5 // pred_fallthru
      _
  $region6: #{two_stage_attention.1} parent=0 // loop_footer
    %s15 = sadd.s32 1, %s11
  $region7: #{two_stage_attention.1} parent=0 // loop_footer_branch
    %10 = sbr.rel target = $region3
  $region8: #{two_stage_attention.1} parent=0 // loop_exit
    _

</llo_original>
